<compile_context>
chip_gen: v7x
topology: tpu7x:2x2x1
jax: 0.10.0
libtpu: 0.0.40
codegen_flags: <defaults>
</compile_context>

<pallas_src>
import jax
import jax.numpy as jnp
from jax import lax
from jax.experimental import pallas as pl
from jax.experimental.pallas import tpu as pltpu


def _drl4tsp_kernel(static_ref, dynamic_ref, wf_ref, ad_ref, wb_ref, wh_ref,
                    tour_idx_ref, tour_logp_ref):
    # static_ref : (S, F, Bt)   dynamic_ref : (S, D, Bt)
    # wf_ref     : (6H, F)  = [a_s; p1_w; p2_w; w_gi]
    # ad_ref     : (H, D)   = a_d
    # wb_ref     : (11H, 1) = [b_a; p1_b; p2_b; b_gi; b_hh; v_a; v_p]
    # wh_ref     : (4H, H)  = [w_hh; wa_h]
    S, F_, Bt = static_ref.shape
    D = dynamic_ref.shape[1]
    H = ad_ref.shape[0]
    f32 = jnp.float32

    def mm(a, b):
        return jnp.dot(a, b, preferred_element_type=f32)

    static = static_ref[...]           # (S, F, Bt)
    dynamic = dynamic_ref[...]         # (S, D, Bt)

    # ---- unpack fused weights (all slices are sublane-aligned: H % 8 == 0) ----
    a_s = wf_ref[0 * H:1 * H, :]       # (H, F)
    p1_w = wf_ref[1 * H:2 * H, :]
    p2_w = wf_ref[2 * H:3 * H, :]
    w_gi = wf_ref[3 * H:6 * H, :]      # (3H, F)
    a_d = ad_ref[...]                  # (H, D)

    b_a = wb_ref[0 * H:1 * H, :]       # (H, 1)
    p1_b = wb_ref[1 * H:2 * H, :]
    p2_b = wb_ref[2 * H:3 * H, :]
    b_gi = wb_ref[3 * H:6 * H, :]      # (3H, 1)
    b_hh = wb_ref[6 * H:9 * H, :]      # (3H, 1)
    v_a = wb_ref[9 * H:10 * H, :]      # (H, 1)
    v_p = wb_ref[10 * H:11 * H, :]     # (H, 1)

    wh_full = wh_ref[...]              # (4H, H) = [w_hh ; wa_h]

    # ---- loop-invariant lane broadcasts, hoisted out of the decode loop ----
    b_gi_b = jnp.broadcast_to(b_gi, (3 * H, Bt))
    b_hh_b = jnp.broadcast_to(b_hh, (3 * H, Bt))
    v_a_b = jnp.broadcast_to(v_a, (H, Bt))
    v_p_b = jnp.broadcast_to(v_p, (H, Bt))
    wgi_cols = [jnp.broadcast_to(w_gi[:, f:f + 1], (3 * H, Bt)) for f in range(F_)]

    # ---- prologue: step-invariant (S, H, Bt) energy slabs (small-F contraction, VPU)
    def feat_contract(w_cols, bias, x, nfeat):
        # (H', nfeat) x (S, nfeat, Bt) -> (S, H', Bt), plus per-row bias.
        acc = w_cols[:, 0:1][None, :, :] * x[:, 0:1, :]
        for f in range(1, nfeat):
            acc = acc + w_cols[:, f:f + 1][None, :, :] * x[:, f:f + 1, :]
        return acc + bias[None, :, :]

    att = feat_contract(a_s, b_a, static, F_)            # wa_s@sh (+ wa_d@dh below)
    for f in range(D):
        att = att + a_d[:, f:f + 1][None, :, :] * dynamic[:, f:f + 1, :]
    p1 = feat_contract(p1_w, p1_b, static, F_)            # wp_s @ static_hidden
    p2 = feat_contract(p2_w, p2_b, static, F_)            # wp_c @ static_hidden

    # S-chunking plan (static): avoids materializing (S, H, Bt) tanh temporaries.
    SC = 8 if S >= 8 else S
    chunks = []
    s0 = 0
    while s0 < S:
        chunks.append((s0, min(SC, S - s0)))
        s0 += SC

    iota_s = lax.broadcasted_iota(jnp.int32, (S, Bt), 0)   # node index along S

    def step(t, carry):
        h, gh, dec_in = carry          # (H,Bt), (3H,Bt) precomputed w_hh@h + b_hh, (F,Bt)

        # --- single-step GRU (PyTorch gate order r, z, n); decoder conv pre-fused.
        gi = b_gi_b
        for f in range(F_):
            gi = gi + wgi_cols[f] * dec_in[f:f + 1, :]            # (3H, Bt)
        r = jax.nn.sigmoid(gi[0:H] + gh[0:H])
        z = jax.nn.sigmoid(gi[H:2 * H] + gh[H:2 * H])
        n = jnp.tanh(gi[2 * H:3 * H] + r * gh[2 * H:3 * H])
        h_new = (1.0 - z) * n + z * h                             # (H, Bt)

        # --- one fused MXU push: rows 0:3H -> next step's gh, rows 3H:4H -> wa_h@h_new
        proj = mm(wh_full, h_new)                                  # (4H, Bt)
        gh_new = proj[0:3 * H] + b_hh_b                            # (3H, Bt)
        wh_h = proj[3 * H:4 * H]                                   # (H, Bt)

        # --- attention logits over nodes, chunked over S (no (S,H,Bt) temporary).
        alog_parts = []
        for (c0, cs) in chunks:
            e = jnp.tanh(att[c0:c0 + cs] + wh_h[None, :, :])       # (cs, H, Bt)
            alog_parts.append(jnp.sum(v_a_b[None, :, :] * e, axis=1))   # (cs, Bt)
        alog = alog_parts[0] if len(alog_parts) == 1 else jnp.concatenate(alog_parts, axis=0)

        amax = jnp.max(alog, axis=0, keepdims=True)                # (1, Bt)
        aexp = jnp.exp(alog - amax)                                # (S, Bt)
        attn = aexp / jnp.sum(aexp, axis=0, keepdims=True)         # exact softmax

        # --- context = sum_s attn[s] * p2[s]   (wp_c @ context pre-folded into P2)
        ctx = jnp.zeros((H, Bt), f32)
        for (c0, cs) in chunks:
            ctx = ctx + jnp.sum(p2[c0:c0 + cs] * attn[c0:c0 + cs][:, None, :], axis=0)

        # --- pointer logits, chunked over S.
        plog_parts = []
        for (c0, cs) in chunks:
            energy = jnp.tanh(p1[c0:c0 + cs] + ctx[None, :, :])    # (cs, H, Bt)
            plog_parts.append(jnp.sum(v_p_b[None, :, :] * energy, axis=1))
        plog = plog_parts[0] if len(plog_parts) == 1 else jnp.concatenate(plog_parts, axis=0)

        # --- greedy (eval) selection; logp = log_softmax at the argmax (= -log sum exp).
        pmax = jnp.max(plog, axis=0, keepdims=True)                # (1, Bt)
        ptr = jnp.min(jnp.where(plog >= pmax, iota_s, S), axis=0, keepdims=True)
        ptr = jnp.minimum(ptr, S - 1)                              # guard
        esum = jnp.sum(jnp.exp(plog - pmax), axis=0, keepdims=True)
        logp = -jnp.log(esum)                                      # (1, Bt)

        # --- next decoder input: static gathered at ptr per batch column.
        onehot = (iota_s == ptr).astype(f32)                       # (S, Bt)
        dec_new = jnp.sum(static * onehot[:, None, :], axis=0)     # (F, Bt)

        # --- write this step's row straight to the lane-dense outputs.
        tour_idx_ref[pl.ds(t, 1), :] = ptr
        tour_logp_ref[pl.ds(t, 1), :] = logp

        return (h_new, gh_new, dec_new)

    carry0 = (jnp.zeros((H, Bt), f32),                     # last_hh = None -> zeros
              jnp.broadcast_to(b_hh, (3 * H, Bt)),         # gh for h=0 is just b_hh
              jnp.zeros((F_, Bt), f32))                    # x0 decoder input is zeros

    # Unroll only when the per-step streamed working set is register-scale.
    unroll = bool(S <= 8 and (S * H * Bt * 4) <= (1 << 18))
    lax.fori_loop(0, S, step, carry0, unroll=unroll)


def drl4tsp_forward(static, dynamic, params, b_tile=128):
    """static/dynamic: (B, feats, seq). Returns (tour_idx (B,S) i32, tour_logp (B,S) f32)."""
    B, F_, S = static.shape
    D = dynamic.shape[1]
    H = params["w_se"].shape[0]
    assert H % 8 == 0, "hidden_size should be a multiple of 8 for aligned slicing"
    f32 = jnp.float32

    w_se, b_se = params["w_se"], params["b_se"]
    w_de, b_de = params["w_de"], params["b_de"]
    w_dec, b_dec = params["w_dec"], params["b_dec"]
    w_ih, w_hh = params["w_ih"], params["w_hh"]
    b_ih, b_hh = params["b_ih"], params["b_hh"]
    v_a, wa_s, wa_d, wa_h = params["v_a"], params["wa_s"], params["wa_d"], params["wa_h"]
    v_p, wp_s, wp_c = params["v_p"], params["wp_s"], params["wp_c"]

    # ---- one-time weight fusion (tiny matmuls, outside the kernel) ----
    a_s = wa_s @ w_se                       # (H, F)
    a_d = wa_d @ w_de                       # (H, D)
    b_a = wa_s @ b_se + wa_d @ b_de         # (H, 1)
    p1_w = wp_s @ w_se                      # (H, F)
    p1_b = wp_s @ b_se                      # (H, 1)
    p2_w = wp_c @ w_se                      # (H, F)
    p2_b = wp_c @ b_se                      # (H, 1)
    w_gi = w_ih @ w_dec                     # (3H, F)  decoder conv folded into GRU
    b_gi = w_ih @ b_dec + b_ih              # (3H, 1)

    wf = jnp.concatenate([a_s, p1_w, p2_w, w_gi], axis=0).astype(f32)        # (6H, F)
    wb = jnp.concatenate([b_a, p1_b, p2_b, b_gi, b_hh,
                          jnp.reshape(v_a, (H, 1)),
                          jnp.reshape(v_p, (H, 1))], axis=0).astype(f32)     # (11H, 1)
    wh = jnp.concatenate([w_hh, wa_h], axis=0).astype(f32)                   # (4H, H)
    ad = a_d.astype(f32)                                                     # (H, D)

    # ---- batch on lanes: (B, F, S) -> (S, F, B), pad B to a multiple of b_tile ----
    # For v7x (2 TensorCores), supply B >= 2*b_tile per call so both cores get a tile.
    n_tiles = (B + b_tile - 1) // b_tile
    Bp = n_tiles * b_tile
    st = jnp.transpose(static.astype(f32), (2, 1, 0))    # (S, F, B)
    dy = jnp.transpose(dynamic.astype(f32), (2, 1, 0))   # (S, D, B)
    if Bp != B:
        st = jnp.pad(st, ((0, 0), (0, 0), (0, Bp - B)))
        dy = jnp.pad(dy, ((0, 0), (0, 0), (0, Bp - B)))

    # ---- explicit VMEM budget: 3 resident (S,H,Bt) f32 slabs + double-buffered
    #      I/O tiles + per-step chunk temporaries + headroom.
    SC = 8 if S >= 8 else S
    slab_bytes = 3 * S * H * b_tile * 4
    in_tile_bytes = S * (F_ + D) * b_tile * 4
    out_tile_bytes = 2 * S * b_tile * 4
    w_bytes = (6 * H * F_ + H * D + 11 * H + 4 * H * H) * 4
    step_tmp_bytes = 2 * SC * H * b_tile * 4 + (12 * H + 6 * S + 4 * F_) * b_tile * 4
    need = slab_bytes + 2 * (in_tile_bytes + out_tile_bytes + w_bytes) + step_tmp_bytes
    vmem_limit = int(min(64 << 20, max(32 << 20, int(need * 1.5))))

    in_specs = [
        pl.BlockSpec((S, F_, b_tile), lambda i: (0, 0, i)),
        pl.BlockSpec((S, D, b_tile), lambda i: (0, 0, i)),
        pl.BlockSpec((6 * H, F_), lambda i: (0, 0)),
        pl.BlockSpec((H, D), lambda i: (0, 0)),
        pl.BlockSpec((11 * H, 1), lambda i: (0, 0)),
        pl.BlockSpec((4 * H, H), lambda i: (0, 0)),
    ]
    out_specs = (pl.BlockSpec((S, b_tile), lambda i: (0, i)),
                 pl.BlockSpec((S, b_tile), lambda i: (0, i)))
    out_shape = (jax.ShapeDtypeStruct((S, Bp), jnp.int32),
                 jax.ShapeDtypeStruct((S, Bp), jnp.float32))

    idx_sb, logp_sb = pl.pallas_call(
        _drl4tsp_kernel,
        grid=(n_tiles,),
        in_specs=in_specs,
        out_specs=out_specs,
        out_shape=out_shape,
        compiler_params=pltpu.CompilerParams(
            dimension_semantics=("parallel",),
            vmem_limit_bytes=vmem_limit),
    )(st, dy, wf, ad, wb, wh)

    tour_idx = jnp.transpose(idx_sb[:, :B], (1, 0))      # (B, S)
    tour_logp = jnp.transpose(logp_sb[:, :B], (1, 0))    # (B, S)
    return tour_idx, tour_logp


def init_params(key, static_size, dynamic_size, hidden_size):
    H = hidden_size

    def xavier(k, shape):
        fan_out, fan_in = shape[0], shape[1]
        limit = (6.0 / (fan_in + fan_out)) ** 0.5
        return jax.random.uniform(k, shape, jnp.float32, -limit, limit)

    ks = list(jax.random.split(key, 12))
    w_a = xavier(ks[0], (H, 3 * H))       # Attention.W  (1, H, 3H) squeezed
    w_p = xavier(ks[1], (H, 2 * H))       # Pointer.W    (1, H, 2H) squeezed
    params = {
        "w_se": xavier(ks[2], (H, static_size)),    # Conv1d weight (H, F, 1) squeezed
        "b_se": jnp.zeros((H, 1), jnp.float32),
        "w_de": xavier(ks[3], (H, dynamic_size)),
        "b_de": jnp.zeros((H, 1), jnp.float32),
        "w_dec": xavier(ks[4], (H, static_size)),
        "b_dec": jnp.zeros((H, 1), jnp.float32),
        "w_ih": xavier(ks[5], (3 * H, H)),          # GRU weight_ih_l0
        "w_hh": xavier(ks[6], (3 * H, H)),          # GRU weight_hh_l0
        "b_ih": jnp.zeros((3 * H, 1), jnp.float32),
        "b_hh": jnp.zeros((3 * H, 1), jnp.float32),
        "v_a": xavier(ks[7], (1, H)),               # Attention.v (1,1,H) squeezed
        "wa_s": w_a[:, :H], "wa_d": w_a[:, H:2 * H], "wa_h": w_a[:, 2 * H:],
        "v_p": xavier(ks[8], (1, H)),               # Pointer.v
        "wp_s": w_p[:, :H], "wp_c": w_p[:, H:],
    }
    return params


if __name__ == "__main__":
    B, static_size, dynamic_size, S, H = 2, 2, 2, 8, 32
    key = jax.random.PRNGKey(0)
    k_static, k_dynamic, k_params = jax.random.split(key, 3)
    static = jax.random.uniform(k_static, (B, static_size, S), jnp.float32)
    dynamic = jax.random.uniform(k_dynamic, (B, dynamic_size, S), jnp.float32)
    params = init_params(k_params, static_size, dynamic_size, H)

    tour_idx, tour_logp = drl4tsp_forward(static, dynamic, params)
    jax.block_until_ready((tour_idx, tour_logp))

    assert tour_idx.shape == (B, S) and tour_logp.shape == (B, S)
    assert bool(jnp.all((tour_idx >= 0) & (tour_idx < S)))
    assert bool(jnp.all(jnp.isfinite(tour_logp)))
    assert bool(jnp.all(tour_logp <= 1e-5))
    print("KERNEL_OK")
</pallas_src>

<mosaic_0001>
module attributes {stable_mosaic.version = 11 : i64} {
  func.func @_drl4tsp_kernel(%arg0: i32, %arg1: memref<8x2x128xf32, #tpu.memory_space<vmem>>, %arg2: memref<8x2x128xf32, #tpu.memory_space<vmem>>, %arg3: memref<192x2xf32, #tpu.memory_space<vmem>>, %arg4: memref<32x2xf32, #tpu.memory_space<vmem>>, %arg5: memref<352x1xf32, #tpu.memory_space<vmem>>, %arg6: memref<128x32xf32, #tpu.memory_space<vmem>>, %arg7: memref<8x128xi32, #tpu.memory_space<vmem>>, %arg8: memref<8x128xf32, #tpu.memory_space<vmem>>) attributes {dimension_semantics = [#tpu.dimension_semantics<parallel>], iteration_bounds = array<i64: 1>, scalar_prefetch = 0 : i64, scratch_operands = 0 : i64, tpu.core_type = #tpu.core_type<tc>, window_params = [{transform_indices = @transform_0, window_bounds = array<i64: 8, 2, 128>}, {transform_indices = @transform_1, window_bounds = array<i64: 8, 2, 128>}, {pipeline_mode = #tpu.pipeline_mode<synchronous>, transform_indices = @transform_2, window_bounds = array<i64: 192, 2>}, {pipeline_mode = #tpu.pipeline_mode<synchronous>, transform_indices = @transform_3, window_bounds = array<i64: 32, 2>}, {pipeline_mode = #tpu.pipeline_mode<synchronous>, transform_indices = @transform_4, window_bounds = array<i64: 352, 1>}, {pipeline_mode = #tpu.pipeline_mode<synchronous>, transform_indices = @transform_5, window_bounds = array<i64: 128, 32>}, {transform_indices = @transform_6, window_bounds = array<i64: 8, 128>}, {transform_indices = @transform_7, window_bounds = array<i64: 8, 128>}]} {
    %c0 = arith.constant 0 : index
    %c0_0 = arith.constant 0 : index
    %c0_1 = arith.constant 0 : index
    %0 = vector.load %arg1[%c0, %c0_0, %c0_1] : memref<8x2x128xf32, #tpu.memory_space<vmem>>, vector<8x2x128xf32>
    %c0_2 = arith.constant 0 : index
    %c0_3 = arith.constant 0 : index
    %c0_4 = arith.constant 0 : index
    %1 = vector.load %arg2[%c0_2, %c0_3, %c0_4] : memref<8x2x128xf32, #tpu.memory_space<vmem>>, vector<8x2x128xf32>
    %c0_5 = arith.constant 0 : index
    %c0_6 = arith.constant 0 : index
    %2 = vector.load %arg3[%c0_5, %c0_6] : memref<192x2xf32, #tpu.memory_space<vmem>>, vector<32x2xf32>
    %c32 = arith.constant 32 : index
    %c0_7 = arith.constant 0 : index
    %3 = vector.load %arg3[%c32, %c0_7] : memref<192x2xf32, #tpu.memory_space<vmem>>, vector<32x2xf32>
    %c64 = arith.constant 64 : index
    %c0_8 = arith.constant 0 : index
    %4 = vector.load %arg3[%c64, %c0_8] : memref<192x2xf32, #tpu.memory_space<vmem>>, vector<32x2xf32>
    %c96 = arith.constant 96 : index
    %c0_9 = arith.constant 0 : index
    %5 = vector.load %arg3[%c96, %c0_9] : memref<192x2xf32, #tpu.memory_space<vmem>>, vector<96x2xf32>
    %c0_10 = arith.constant 0 : index
    %c0_11 = arith.constant 0 : index
    %6 = vector.load %arg4[%c0_10, %c0_11] : memref<32x2xf32, #tpu.memory_space<vmem>>, vector<32x2xf32>
    %c0_12 = arith.constant 0 : index
    %c0_13 = arith.constant 0 : index
    %7 = vector.load %arg5[%c0_12, %c0_13] : memref<352x1xf32, #tpu.memory_space<vmem>>, vector<32x1xf32>
    %c32_14 = arith.constant 32 : index
    %c0_15 = arith.constant 0 : index
    %8 = vector.load %arg5[%c32_14, %c0_15] : memref<352x1xf32, #tpu.memory_space<vmem>>, vector<32x1xf32>
    %c64_16 = arith.constant 64 : index
    %c0_17 = arith.constant 0 : index
    %9 = vector.load %arg5[%c64_16, %c0_17] : memref<352x1xf32, #tpu.memory_space<vmem>>, vector<32x1xf32>
    %c96_18 = arith.constant 96 : index
    %c0_19 = arith.constant 0 : index
    %10 = vector.load %arg5[%c96_18, %c0_19] : memref<352x1xf32, #tpu.memory_space<vmem>>, vector<96x1xf32>
    %c192 = arith.constant 192 : index
    %c0_20 = arith.constant 0 : index
    %11 = vector.load %arg5[%c192, %c0_20] : memref<352x1xf32, #tpu.memory_space<vmem>>, vector<96x1xf32>
    %c288 = arith.constant 288 : index
    %c0_21 = arith.constant 0 : index
    %12 = vector.load %arg5[%c288, %c0_21] : memref<352x1xf32, #tpu.memory_space<vmem>>, vector<32x1xf32>
    %c320 = arith.constant 320 : index
    %c0_22 = arith.constant 0 : index
    %13 = vector.load %arg5[%c320, %c0_22] : memref<352x1xf32, #tpu.memory_space<vmem>>, vector<32x1xf32>
    %c0_23 = arith.constant 0 : index
    %c0_24 = arith.constant 0 : index
    %14 = vector.load %arg6[%c0_23, %c0_24] : memref<128x32xf32, #tpu.memory_space<vmem>>, vector<128x32xf32>
    %15 = vector.shape_cast %10 : vector<96x1xf32> to vector<96x1xf32>
    %16 = vector.broadcast %15 : vector<96x1xf32> to vector<96x128xf32>
    %17 = vector.shape_cast %11 : vector<96x1xf32> to vector<96x1xf32>
    %18 = vector.broadcast %17 : vector<96x1xf32> to vector<96x128xf32>
    %19 = vector.shape_cast %12 : vector<32x1xf32> to vector<32x1xf32>
    %20 = vector.broadcast %19 : vector<32x1xf32> to vector<32x128xf32>
    %21 = vector.shape_cast %13 : vector<32x1xf32> to vector<32x1xf32>
    %22 = vector.broadcast %21 : vector<32x1xf32> to vector<32x128xf32>
    %23 = vector.extract_strided_slice %5 {offsets = [0, 0], sizes = [96, 1], strides = [1, 1]} : vector<96x2xf32> to vector<96x1xf32>
    %24 = vector.shape_cast %23 : vector<96x1xf32> to vector<96x1xf32>
    %25 = vector.broadcast %24 : vector<96x1xf32> to vector<96x128xf32>
    %26 = vector.extract_strided_slice %5 {offsets = [0, 1], sizes = [96, 1], strides = [1, 1]} : vector<96x2xf32> to vector<96x1xf32>
    %27 = vector.shape_cast %26 : vector<96x1xf32> to vector<96x1xf32>
    %28 = vector.broadcast %27 : vector<96x1xf32> to vector<96x128xf32>
    %29 = vector.extract_strided_slice %2 {offsets = [0, 0], sizes = [32, 1], strides = [1, 1]} : vector<32x2xf32> to vector<32x1xf32>
    %30 = vector.shape_cast %29 : vector<32x1xf32> to vector<1x32x1xf32>
    %31 = vector.extract_strided_slice %0 {offsets = [0, 0, 0], sizes = [8, 1, 128], strides = [1, 1, 1]} : vector<8x2x128xf32> to vector<8x1x128xf32>
    %32 = vector.broadcast %30 : vector<1x32x1xf32> to vector<8x32x128xf32>
    %33 = vector.broadcast %31 : vector<8x1x128xf32> to vector<8x32x128xf32>
    %34 = arith.mulf %32, %33 : vector<8x32x128xf32>
    %35 = vector.extract_strided_slice %2 {offsets = [0, 1], sizes = [32, 1], strides = [1, 1]} : vector<32x2xf32> to vector<32x1xf32>
    %36 = vector.shape_cast %35 : vector<32x1xf32> to vector<1x32x1xf32>
    %37 = vector.extract_strided_slice %0 {offsets = [0, 1, 0], sizes = [8, 1, 128], strides = [1, 1, 1]} : vector<8x2x128xf32> to vector<8x1x128xf32>
    %38 = vector.broadcast %36 : vector<1x32x1xf32> to vector<8x32x128xf32>
    %39 = vector.broadcast %37 : vector<8x1x128xf32> to vector<8x32x128xf32>
    %40 = arith.mulf %38, %39 : vector<8x32x128xf32>
    %41 = arith.addf %34, %40 : vector<8x32x128xf32>
    %42 = vector.shape_cast %7 : vector<32x1xf32> to vector<1x32x1xf32>
    %43 = vector.broadcast %42 : vector<1x32x1xf32> to vector<8x32x128xf32>
    %44 = arith.addf %41, %43 : vector<8x32x128xf32>
    %45 = vector.extract_strided_slice %6 {offsets = [0, 0], sizes = [32, 1], strides = [1, 1]} : vector<32x2xf32> to vector<32x1xf32>
    %46 = vector.shape_cast %45 : vector<32x1xf32> to vector<1x32x1xf32>
    %47 = vector.extract_strided_slice %1 {offsets = [0, 0, 0], sizes = [8, 1, 128], strides = [1, 1, 1]} : vector<8x2x128xf32> to vector<8x1x128xf32>
    %48 = vector.broadcast %46 : vector<1x32x1xf32> to vector<8x32x128xf32>
    %49 = vector.broadcast %47 : vector<8x1x128xf32> to vector<8x32x128xf32>
    %50 = arith.mulf %48, %49 : vector<8x32x128xf32>
    %51 = arith.addf %44, %50 : vector<8x32x128xf32>
    %52 = vector.extract_strided_slice %6 {offsets = [0, 1], sizes = [32, 1], strides = [1, 1]} : vector<32x2xf32> to vector<32x1xf32>
    %53 = vector.shape_cast %52 : vector<32x1xf32> to vector<1x32x1xf32>
    %54 = vector.extract_strided_slice %1 {offsets = [0, 1, 0], sizes = [8, 1, 128], strides = [1, 1, 1]} : vector<8x2x128xf32> to vector<8x1x128xf32>
    %55 = vector.broadcast %53 : vector<1x32x1xf32> to vector<8x32x128xf32>
    %56 = vector.broadcast %54 : vector<8x1x128xf32> to vector<8x32x128xf32>
    %57 = arith.mulf %55, %56 : vector<8x32x128xf32>
    %58 = arith.addf %51, %57 : vector<8x32x128xf32>
    %59 = vector.extract_strided_slice %3 {offsets = [0, 0], sizes = [32, 1], strides = [1, 1]} : vector<32x2xf32> to vector<32x1xf32>
    %60 = vector.shape_cast %59 : vector<32x1xf32> to vector<1x32x1xf32>
    %61 = vector.extract_strided_slice %0 {offsets = [0, 0, 0], sizes = [8, 1, 128], strides = [1, 1, 1]} : vector<8x2x128xf32> to vector<8x1x128xf32>
    %62 = vector.broadcast %60 : vector<1x32x1xf32> to vector<8x32x128xf32>
    %63 = vector.broadcast %61 : vector<8x1x128xf32> to vector<8x32x128xf32>
    %64 = arith.mulf %62, %63 : vector<8x32x128xf32>
    %65 = vector.extract_strided_slice %3 {offsets = [0, 1], sizes = [32, 1], strides = [1, 1]} : vector<32x2xf32> to vector<32x1xf32>
    %66 = vector.shape_cast %65 : vector<32x1xf32> to vector<1x32x1xf32>
    %67 = vector.extract_strided_slice %0 {offsets = [0, 1, 0], sizes = [8, 1, 128], strides = [1, 1, 1]} : vector<8x2x128xf32> to vector<8x1x128xf32>
    %68 = vector.broadcast %66 : vector<1x32x1xf32> to vector<8x32x128xf32>
    %69 = vector.broadcast %67 : vector<8x1x128xf32> to vector<8x32x128xf32>
    %70 = arith.mulf %68, %69 : vector<8x32x128xf32>
    %71 = arith.addf %64, %70 : vector<8x32x128xf32>
    %72 = vector.shape_cast %8 : vector<32x1xf32> to vector<1x32x1xf32>
    %73 = vector.broadcast %72 : vector<1x32x1xf32> to vector<8x32x128xf32>
    %74 = arith.addf %71, %73 : vector<8x32x128xf32>
    %75 = vector.extract_strided_slice %4 {offsets = [0, 0], sizes = [32, 1], strides = [1, 1]} : vector<32x2xf32> to vector<32x1xf32>
    %76 = vector.shape_cast %75 : vector<32x1xf32> to vector<1x32x1xf32>
    %77 = vector.extract_strided_slice %0 {offsets = [0, 0, 0], sizes = [8, 1, 128], strides = [1, 1, 1]} : vector<8x2x128xf32> to vector<8x1x128xf32>
    %78 = vector.broadcast %76 : vector<1x32x1xf32> to vector<8x32x128xf32>
    %79 = vector.broadcast %77 : vector<8x1x128xf32> to vector<8x32x128xf32>
    %80 = arith.mulf %78, %79 : vector<8x32x128xf32>
    %81 = vector.extract_strided_slice %4 {offsets = [0, 1], sizes = [32, 1], strides = [1, 1]} : vector<32x2xf32> to vector<32x1xf32>
    %82 = vector.shape_cast %81 : vector<32x1xf32> to vector<1x32x1xf32>
    %83 = vector.extract_strided_slice %0 {offsets = [0, 1, 0], sizes = [8, 1, 128], strides = [1, 1, 1]} : vector<8x2x128xf32> to vector<8x1x128xf32>
    %84 = vector.broadcast %82 : vector<1x32x1xf32> to vector<8x32x128xf32>
    %85 = vector.broadcast %83 : vector<8x1x128xf32> to vector<8x32x128xf32>
    %86 = arith.mulf %84, %85 : vector<8x32x128xf32>
    %87 = arith.addf %80, %86 : vector<8x32x128xf32>
    %88 = vector.shape_cast %9 : vector<32x1xf32> to vector<1x32x1xf32>
    %89 = vector.broadcast %88 : vector<1x32x1xf32> to vector<8x32x128xf32>
    %90 = arith.addf %87, %89 : vector<8x32x128xf32>
    %91 = tpu.iota {dimensions = array<i32: 0>} : vector<8x128xi32>
    %cst = arith.constant 0.000000e+00 : f32
    %92 = vector.broadcast %cst : f32 to vector<32x128xf32>
    %93 = vector.shape_cast %11 : vector<96x1xf32> to vector<96x1xf32>
    %94 = vector.broadcast %93 : vector<96x1xf32> to vector<96x128xf32>
    %cst_25 = arith.constant 0.000000e+00 : f32
    %95 = vector.broadcast %cst_25 : f32 to vector<2x128xf32>
    %c0_i32 = arith.constant 0 : i32
    %96 = vector.extract_strided_slice %95 {offsets = [0, 0], sizes = [1, 128], strides = [1, 1]} : vector<2x128xf32> to vector<1x128xf32>
    %97 = vector.broadcast %96 : vector<1x128xf32> to vector<96x128xf32>
    %98 = arith.mulf %25, %97 : vector<96x128xf32>
    %99 = arith.addf %16, %98 : vector<96x128xf32>
    %100 = vector.extract_strided_slice %95 {offsets = [1, 0], sizes = [1, 128], strides = [1, 1]} : vector<2x128xf32> to vector<1x128xf32>
    %101 = vector.broadcast %100 : vector<1x128xf32> to vector<96x128xf32>
    %102 = arith.mulf %28, %101 : vector<96x128xf32>
    %103 = arith.addf %99, %102 : vector<96x128xf32>
    %104 = vector.extract_strided_slice %103 {offsets = [0, 0], sizes = [32, 128], strides = [1, 1]} : vector<96x128xf32> to vector<32x128xf32>
    %105 = vector.extract_strided_slice %94 {offsets = [0, 0], sizes = [32, 128], strides = [1, 1]} : vector<96x128xf32> to vector<32x128xf32>
    %106 = arith.addf %104, %105 : vector<32x128xf32>
    %107 = arith.negf %106 : vector<32x128xf32>
    %108 = math.exp %107 : vector<32x128xf32>
    %cst_26 = arith.constant 1.000000e+00 : f32
    %109 = vector.broadcast %cst_26 : f32 to vector<32x128xf32>
    %110 = arith.addf %109, %108 : vector<32x128xf32>
    %111 = arith.divf %109, %110 : vector<32x128xf32>
    %112 = vector.extract_strided_slice %103 {offsets = [32, 0], sizes = [32, 128], strides = [1, 1]} : vector<96x128xf32> to vector<32x128xf32>
    %113 = vector.extract_strided_slice %94 {offsets = [32, 0], sizes = [32, 128], strides = [1, 1]} : vector<96x128xf32> to vector<32x128xf32>
    %114 = arith.addf %112, %113 : vector<32x128xf32>
    %115 = arith.negf %114 : vector<32x128xf32>
    %116 = math.exp %115 : vector<32x128xf32>
    %cst_27 = arith.constant 1.000000e+00 : f32
    %117 = vector.broadcast %cst_27 : f32 to vector<32x128xf32>
    %118 = arith.addf %117, %116 : vector<32x128xf32>
    %119 = arith.divf %117, %118 : vector<32x128xf32>
    %120 = vector.extract_strided_slice %103 {offsets = [64, 0], sizes = [32, 128], strides = [1, 1]} : vector<96x128xf32> to vector<32x128xf32>
    %121 = vector.extract_strided_slice %94 {offsets = [64, 0], sizes = [32, 128], strides = [1, 1]} : vector<96x128xf32> to vector<32x128xf32>
    %122 = arith.mulf %111, %121 : vector<32x128xf32>
    %123 = arith.addf %120, %122 : vector<32x128xf32>
    %124 = math.tanh %123 : vector<32x128xf32>
    %cst_28 = arith.constant 1.000000e+00 : f32
    %125 = vector.broadcast %cst_28 : f32 to vector<32x128xf32>
    %126 = arith.subf %125, %119 : vector<32x128xf32>
    %127 = arith.mulf %126, %124 : vector<32x128xf32>
    %128 = arith.mulf %119, %92 : vector<32x128xf32>
    %129 = arith.addf %127, %128 : vector<32x128xf32>
    %cst_29 = arith.constant dense<0.000000e+00> : vector<128x128xf32>
    %130 = tpu.matmul %14, %129, %cst_29 {dimension_numbers = #tpu.dot_dimension_numbers<[1], [0], [0], [1], [0, 0, 1, 1], [], []>} : vector<128x32xf32>, vector<32x128xf32>, vector<128x128xf32> -> vector<128x128xf32>
    %131 = vector.extract_strided_slice %130 {offsets = [0, 0], sizes = [96, 128], strides = [1, 1]} : vector<128x128xf32> to vector<96x128xf32>
    %132 = arith.addf %131, %18 : vector<96x128xf32>
    %133 = vector.extract_strided_slice %130 {offsets = [96, 0], sizes = [32, 128], strides = [1, 1]} : vector<128x128xf32> to vector<32x128xf32>
    %134 = vector.shape_cast %133 : vector<32x128xf32> to vector<1x32x128xf32>
    %135 = vector.broadcast %134 : vector<1x32x128xf32> to vector<8x32x128xf32>
    %136 = arith.addf %58, %135 : vector<8x32x128xf32>
    %137 = math.tanh %136 : vector<8x32x128xf32>
    %138 = vector.shape_cast %20 : vector<32x128xf32> to vector<1x32x128xf32>
    %139 = vector.broadcast %138 : vector<1x32x128xf32> to vector<8x32x128xf32>
    %140 = arith.mulf %139, %137 : vector<8x32x128xf32>
    %cst_30 = arith.constant dense<0.000000e+00> : vector<8x128xf32>
    %141 = vector.multi_reduction <add>, %140, %cst_30 [1] : vector<8x32x128xf32> to vector<8x128xf32>
    %cst_31 = arith.constant dense<0xFF800000> : vector<128xf32>
    %142 = vector.multi_reduction <maximumf>, %141, %cst_31 [0] : vector<8x128xf32> to vector<128xf32>
    %143 = vector.shape_cast %142 : vector<128xf32> to vector<1x128xf32>
    %144 = vector.broadcast %143 : vector<1x128xf32> to vector<8x128xf32>
    %145 = arith.subf %141, %144 : vector<8x128xf32>
    %146 = math.exp %145 : vector<8x128xf32>
    %cst_32 = arith.constant dense<0.000000e+00> : vector<128xf32>
    %147 = vector.multi_reduction <add>, %146, %cst_32 [0] : vector<8x128xf32> to vector<128xf32>
    %148 = vector.shape_cast %147 : vector<128xf32> to vector<1x128xf32>
    %149 = vector.broadcast %148 : vector<1x128xf32> to vector<8x128xf32>
    %150 = arith.divf %146, %149 : vector<8x128xf32>
    %cst_33 = arith.constant 0.000000e+00 : f32
    %151 = vector.broadcast %cst_33 : f32 to vector<32x128xf32>
    %152 = vector.shape_cast %150 : vector<8x128xf32> to vector<8x1x128xf32>
    %153 = vector.broadcast %152 : vector<8x1x128xf32> to vector<8x32x128xf32>
    %154 = arith.mulf %90, %153 : vector<8x32x128xf32>
    %cst_34 = arith.constant dense<0.000000e+00> : vector<32x128xf32>
    %155 = vector.multi_reduction <add>, %154, %cst_34 [0] : vector<8x32x128xf32> to vector<32x128xf32>
    %156 = arith.addf %151, %155 : vector<32x128xf32>
    %157 = vector.shape_cast %156 : vector<32x128xf32> to vector<1x32x128xf32>
    %158 = vector.broadcast %157 : vector<1x32x128xf32> to vector<8x32x128xf32>
    %159 = arith.addf %74, %158 : vector<8x32x128xf32>
    %160 = math.tanh %159 : vector<8x32x128xf32>
    %161 = vector.shape_cast %22 : vector<32x128xf32> to vector<1x32x128xf32>
    %162 = vector.broadcast %161 : vector<1x32x128xf32> to vector<8x32x128xf32>
    %163 = arith.mulf %162, %160 : vector<8x32x128xf32>
    %cst_35 = arith.constant dense<0.000000e+00> : vector<8x128xf32>
    %164 = vector.multi_reduction <add>, %163, %cst_35 [1] : vector<8x32x128xf32> to vector<8x128xf32>
    %cst_36 = arith.constant dense<0xFF800000> : vector<128xf32>
    %165 = vector.multi_reduction <maximumf>, %164, %cst_36 [0] : vector<8x128xf32> to vector<128xf32>
    %166 = vector.shape_cast %165 : vector<128xf32> to vector<1x128xf32>
    %167 = vector.broadcast %166 : vector<1x128xf32> to vector<8x128xf32>
    %168 = arith.cmpf oge, %164, %167 : vector<8x128xf32>
    %c8_i32 = arith.constant 8 : i32
    %169 = vector.broadcast %c8_i32 : i32 to vector<8x128xi32>
    %170 = arith.select %168, %91, %169 : vector<8x128xi1>, vector<8x128xi32>
    %cst_37 = arith.constant dense<2147483647> : vector<128xi32>
    %171 = vector.multi_reduction <minsi>, %170, %cst_37 [0] : vector<8x128xi32> to vector<128xi32>
    %172 = vector.shape_cast %171 : vector<128xi32> to vector<1x128xi32>
    %c7_i32 = arith.constant 7 : i32
    %173 = vector.broadcast %c7_i32 : i32 to vector<1x128xi32>
    %174 = arith.minsi %172, %173 : vector<1x128xi32>
    %175 = vector.broadcast %166 : vector<1x128xf32> to vector<8x128xf32>
    %176 = arith.subf %164, %175 : vector<8x128xf32>
    %177 = math.exp %176 : vector<8x128xf32>
    %cst_38 = arith.constant dense<0.000000e+00> : vector<128xf32>
    %178 = vector.multi_reduction <add>, %177, %cst_38 [0] : vector<8x128xf32> to vector<128xf32>
    %179 = vector.shape_cast %178 : vector<128xf32> to vector<1x128xf32>
    %180 = math.log %179 : vector<1x128xf32>
    %cst_39 = arith.constant 0.000000e+00 : f32
    %181 = vector.broadcast %cst_39 : f32 to vector<1x128xf32>
    %182 = arith.subf %181, %180 : vector<1x128xf32>
    %183 = vector.broadcast %174 : vector<1x128xi32> to vector<8x128xi32>
    %184 = arith.cmpi eq, %91, %183 : vector<8x128xi32>
    %185 = arith.extui %184 : vector<8x128xi1> to vector<8x128xi32>
    %186 = arith.sitofp %185 : vector<8x128xi32> to vector<8x128xf32>
    %187 = vector.shape_cast %186 : vector<8x128xf32> to vector<8x1x128xf32>
    %188 = vector.broadcast %187 : vector<8x1x128xf32> to vector<8x2x128xf32>
    %189 = arith.mulf %0, %188 : vector<8x2x128xf32>
    %cst_40 = arith.constant dense<0.000000e+00> : vector<2x128xf32>
    %190 = vector.multi_reduction <add>, %189, %cst_40 [0] : vector<8x2x128xf32> to vector<2x128xf32>
    %191 = arith.index_cast %c0_i32 : i32 to index
    %c0_41 = arith.constant 0 : index
    %192 = vector.load %arg7[%191, %c0_41] : memref<8x128xi32, #tpu.memory_space<vmem>>, vector<1x128xi32>
    tpu.vector_store %arg7[%191, %c0_41], %174 {strides = array<i32>} : memref<8x128xi32, #tpu.memory_space<vmem>>, vector<1x128xi32>,
    %193 = arith.index_cast %c0_i32 : i32 to index
    %c0_42 = arith.constant 0 : index
    %194 = vector.load %arg8[%193, %c0_42] : memref<8x128xf32, #tpu.memory_space<vmem>>, vector<1x128xf32>
    tpu.vector_store %arg8[%193, %c0_42], %182 {strides = array<i32>} : memref<8x128xf32, #tpu.memory_space<vmem>>, vector<1x128xf32>,
    %c1_i32 = arith.constant 1 : i32
    %195 = vector.extract_strided_slice %190 {offsets = [0, 0], sizes = [1, 128], strides = [1, 1]} : vector<2x128xf32> to vector<1x128xf32>
    %196 = vector.broadcast %195 : vector<1x128xf32> to vector<96x128xf32>
    %197 = arith.mulf %25, %196 : vector<96x128xf32>
    %198 = arith.addf %16, %197 : vector<96x128xf32>
    %199 = vector.extract_strided_slice %190 {offsets = [1, 0], sizes = [1, 128], strides = [1, 1]} : vector<2x128xf32> to vector<1x128xf32>
    %200 = vector.broadcast %199 : vector<1x128xf32> to vector<96x128xf32>
    %201 = arith.mulf %28, %200 : vector<96x128xf32>
    %202 = arith.addf %198, %201 : vector<96x128xf32>
    %203 = vector.extract_strided_slice %202 {offsets = [0, 0], sizes = [32, 128], strides = [1, 1]} : vector<96x128xf32> to vector<32x128xf32>
    %204 = vector.extract_strided_slice %132 {offsets = [0, 0], sizes = [32, 128], strides = [1, 1]} : vector<96x128xf32> to vector<32x128xf32>
    %205 = arith.addf %203, %204 : vector<32x128xf32>
    %206 = arith.negf %205 : vector<32x128xf32>
    %207 = math.exp %206 : vector<32x128xf32>
    %cst_43 = arith.constant 1.000000e+00 : f32
    %208 = vector.broadcast %cst_43 : f32 to vector<32x128xf32>
    %209 = arith.addf %208, %207 : vector<32x128xf32>
    %210 = arith.divf %208, %209 : vector<32x128xf32>
    %211 = vector.extract_strided_slice %202 {offsets = [32, 0], sizes = [32, 128], strides = [1, 1]} : vector<96x128xf32> to vector<32x128xf32>
    %212 = vector.extract_strided_slice %132 {offsets = [32, 0], sizes = [32, 128], strides = [1, 1]} : vector<96x128xf32> to vector<32x128xf32>
    %213 = arith.addf %211, %212 : vector<32x128xf32>
    %214 = arith.negf %213 : vector<32x128xf32>
    %215 = math.exp %214 : vector<32x128xf32>
    %cst_44 = arith.constant 1.000000e+00 : f32
    %216 = vector.broadcast %cst_44 : f32 to vector<32x128xf32>
    %217 = arith.addf %216, %215 : vector<32x128xf32>
    %218 = arith.divf %216, %217 : vector<32x128xf32>
    %219 = vector.extract_strided_slice %202 {offsets = [64, 0], sizes = [32, 128], strides = [1, 1]} : vector<96x128xf32> to vector<32x128xf32>
    %220 = vector.extract_strided_slice %132 {offsets = [64, 0], sizes = [32, 128], strides = [1, 1]} : vector<96x128xf32> to vector<32x128xf32>
    %221 = arith.mulf %210, %220 : vector<32x128xf32>
    %222 = arith.addf %219, %221 : vector<32x128xf32>
    %223 = math.tanh %222 : vector<32x128xf32>
    %cst_45 = arith.constant 1.000000e+00 : f32
    %224 = vector.broadcast %cst_45 : f32 to vector<32x128xf32>
    %225 = arith.subf %224, %218 : vector<32x128xf32>
    %226 = arith.mulf %225, %223 : vector<32x128xf32>
    %227 = arith.mulf %218, %129 : vector<32x128xf32>
    %228 = arith.addf %226, %227 : vector<32x128xf32>
    %cst_46 = arith.constant dense<0.000000e+00> : vector<128x128xf32>
    %229 = tpu.matmul %14, %228, %cst_46 {dimension_numbers = #tpu.dot_dimension_numbers<[1], [0], [0], [1], [0, 0, 1, 1], [], []>} : vector<128x32xf32>, vector<32x128xf32>, vector<128x128xf32> -> vector<128x128xf32>
    %230 = vector.extract_strided_slice %229 {offsets = [0, 0], sizes = [96, 128], strides = [1, 1]} : vector<128x128xf32> to vector<96x128xf32>
    %231 = arith.addf %230, %18 : vector<96x128xf32>
    %232 = vector.extract_strided_slice %229 {offsets = [96, 0], sizes = [32, 128], strides = [1, 1]} : vector<128x128xf32> to vector<32x128xf32>
    %233 = vector.shape_cast %232 : vector<32x128xf32> to vector<1x32x128xf32>
    %234 = vector.broadcast %233 : vector<1x32x128xf32> to vector<8x32x128xf32>
    %235 = arith.addf %58, %234 : vector<8x32x128xf32>
    %236 = math.tanh %235 : vector<8x32x128xf32>
    %237 = vector.shape_cast %20 : vector<32x128xf32> to vector<1x32x128xf32>
    %238 = vector.broadcast %237 : vector<1x32x128xf32> to vector<8x32x128xf32>
    %239 = arith.mulf %238, %236 : vector<8x32x128xf32>
    %cst_47 = arith.constant dense<0.000000e+00> : vector<8x128xf32>
    %240 = vector.multi_reduction <add>, %239, %cst_47 [1] : vector<8x32x128xf32> to vector<8x128xf32>
    %cst_48 = arith.constant dense<0xFF800000> : vector<128xf32>
    %241 = vector.multi_reduction <maximumf>, %240, %cst_48 [0] : vector<8x128xf32> to vector<128xf32>
    %242 = vector.shape_cast %241 : vector<128xf32> to vector<1x128xf32>
    %243 = vector.broadcast %242 : vector<1x128xf32> to vector<8x128xf32>
    %244 = arith.subf %240, %243 : vector<8x128xf32>
    %245 = math.exp %244 : vector<8x128xf32>
    %cst_49 = arith.constant dense<0.000000e+00> : vector<128xf32>
    %246 = vector.multi_reduction <add>, %245, %cst_49 [0] : vector<8x128xf32> to vector<128xf32>
    %247 = vector.shape_cast %246 : vector<128xf32> to vector<1x128xf32>
    %248 = vector.broadcast %247 : vector<1x128xf32> to vector<8x128xf32>
    %249 = arith.divf %245, %248 : vector<8x128xf32>
    %cst_50 = arith.constant 0.000000e+00 : f32
    %250 = vector.broadcast %cst_50 : f32 to vector<32x128xf32>
    %251 = vector.shape_cast %249 : vector<8x128xf32> to vector<8x1x128xf32>
    %252 = vector.broadcast %251 : vector<8x1x128xf32> to vector<8x32x128xf32>
    %253 = arith.mulf %90, %252 : vector<8x32x128xf32>
    %cst_51 = arith.constant dense<0.000000e+00> : vector<32x128xf32>
    %254 = vector.multi_reduction <add>, %253, %cst_51 [0] : vector<8x32x128xf32> to vector<32x128xf32>
    %255 = arith.addf %250, %254 : vector<32x128xf32>
    %256 = vector.shape_cast %255 : vector<32x128xf32> to vector<1x32x128xf32>
    %257 = vector.broadcast %256 : vector<1x32x128xf32> to vector<8x32x128xf32>
    %258 = arith.addf %74, %257 : vector<8x32x128xf32>
    %259 = math.tanh %258 : vector<8x32x128xf32>
    %260 = vector.shape_cast %22 : vector<32x128xf32> to vector<1x32x128xf32>
    %261 = vector.broadcast %260 : vector<1x32x128xf32> to vector<8x32x128xf32>
    %262 = arith.mulf %261, %259 : vector<8x32x128xf32>
    %cst_52 = arith.constant dense<0.000000e+00> : vector<8x128xf32>
    %263 = vector.multi_reduction <add>, %262, %cst_52 [1] : vector<8x32x128xf32> to vector<8x128xf32>
    %cst_53 = arith.constant dense<0xFF800000> : vector<128xf32>
    %264 = vector.multi_reduction <maximumf>, %263, %cst_53 [0] : vector<8x128xf32> to vector<128xf32>
    %265 = vector.shape_cast %264 : vector<128xf32> to vector<1x128xf32>
    %266 = vector.broadcast %265 : vector<1x128xf32> to vector<8x128xf32>
    %267 = arith.cmpf oge, %263, %266 : vector<8x128xf32>
    %c8_i32_54 = arith.constant 8 : i32
    %268 = vector.broadcast %c8_i32_54 : i32 to vector<8x128xi32>
    %269 = arith.select %267, %91, %268 : vector<8x128xi1>, vector<8x128xi32>
    %cst_55 = arith.constant dense<2147483647> : vector<128xi32>
    %270 = vector.multi_reduction <minsi>, %269, %cst_55 [0] : vector<8x128xi32> to vector<128xi32>
    %271 = vector.shape_cast %270 : vector<128xi32> to vector<1x128xi32>
    %c7_i32_56 = arith.constant 7 : i32
    %272 = vector.broadcast %c7_i32_56 : i32 to vector<1x128xi32>
    %273 = arith.minsi %271, %272 : vector<1x128xi32>
    %274 = vector.broadcast %265 : vector<1x128xf32> to vector<8x128xf32>
    %275 = arith.subf %263, %274 : vector<8x128xf32>
    %276 = math.exp %275 : vector<8x128xf32>
    %cst_57 = arith.constant dense<0.000000e+00> : vector<128xf32>
    %277 = vector.multi_reduction <add>, %276, %cst_57 [0] : vector<8x128xf32> to vector<128xf32>
    %278 = vector.shape_cast %277 : vector<128xf32> to vector<1x128xf32>
    %279 = math.log %278 : vector<1x128xf32>
    %cst_58 = arith.constant 0.000000e+00 : f32
    %280 = vector.broadcast %cst_58 : f32 to vector<1x128xf32>
    %281 = arith.subf %280, %279 : vector<1x128xf32>
    %282 = vector.broadcast %273 : vector<1x128xi32> to vector<8x128xi32>
    %283 = arith.cmpi eq, %91, %282 : vector<8x128xi32>
    %284 = arith.extui %283 : vector<8x128xi1> to vector<8x128xi32>
    %285 = arith.sitofp %284 : vector<8x128xi32> to vector<8x128xf32>
    %286 = vector.shape_cast %285 : vector<8x128xf32> to vector<8x1x128xf32>
    %287 = vector.broadcast %286 : vector<8x1x128xf32> to vector<8x2x128xf32>
    %288 = arith.mulf %0, %287 : vector<8x2x128xf32>
    %cst_59 = arith.constant dense<0.000000e+00> : vector<2x128xf32>
    %289 = vector.multi_reduction <add>, %288, %cst_59 [0] : vector<8x2x128xf32> to vector<2x128xf32>
    %290 = arith.index_cast %c1_i32 : i32 to index
    %c0_60 = arith.constant 0 : index
    %291 = vector.load %arg7[%290, %c0_60] : memref<8x128xi32, #tpu.memory_space<vmem>>, vector<1x128xi32>
    tpu.vector_store %arg7[%290, %c0_60], %273 {strides = array<i32>} : memref<8x128xi32, #tpu.memory_space<vmem>>, vector<1x128xi32>,
    %292 = arith.index_cast %c1_i32 : i32 to index
    %c0_61 = arith.constant 0 : index
    %293 = vector.load %arg8[%292, %c0_61] : memref<8x128xf32, #tpu.memory_space<vmem>>, vector<1x128xf32>
    tpu.vector_store %arg8[%292, %c0_61], %281 {strides = array<i32>} : memref<8x128xf32, #tpu.memory_space<vmem>>, vector<1x128xf32>,
    %c2_i32 = arith.constant 2 : i32
    %294 = vector.extract_strided_slice %289 {offsets = [0, 0], sizes = [1, 128], strides = [1, 1]} : vector<2x128xf32> to vector<1x128xf32>
    %295 = vector.broadcast %294 : vector<1x128xf32> to vector<96x128xf32>
    %296 = arith.mulf %25, %295 : vector<96x128xf32>
    %297 = arith.addf %16, %296 : vector<96x128xf32>
    %298 = vector.extract_strided_slice %289 {offsets = [1, 0], sizes = [1, 128], strides = [1, 1]} : vector<2x128xf32> to vector<1x128xf32>
    %299 = vector.broadcast %298 : vector<1x128xf32> to vector<96x128xf32>
    %300 = arith.mulf %28, %299 : vector<96x128xf32>
    %301 = arith.addf %297, %300 : vector<96x128xf32>
    %302 = vector.extract_strided_slice %301 {offsets = [0, 0], sizes = [32, 128], strides = [1, 1]} : vector<96x128xf32> to vector<32x128xf32>
    %303 = vector.extract_strided_slice %231 {offsets = [0, 0], sizes = [32, 128], strides = [1, 1]} : vector<96x128xf32> to vector<32x128xf32>
    %304 = arith.addf %302, %303 : vector<32x128xf32>
    %305 = arith.negf %304 : vector<32x128xf32>
    %306 = math.exp %305 : vector<32x128xf32>
    %cst_62 = arith.constant 1.000000e+00 : f32
    %307 = vector.broadcast %cst_62 : f32 to vector<32x128xf32>
    %308 = arith.addf %307, %306 : vector<32x128xf32>
    %309 = arith.divf %307, %308 : vector<32x128xf32>
    %310 = vector.extract_strided_slice %301 {offsets = [32, 0], sizes = [32, 128], strides = [1, 1]} : vector<96x128xf32> to vector<32x128xf32>
    %311 = vector.extract_strided_slice %231 {offsets = [32, 0], sizes = [32, 128], strides = [1, 1]} : vector<96x128xf32> to vector<32x128xf32>
    %312 = arith.addf %310, %311 : vector<32x128xf32>
    %313 = arith.negf %312 : vector<32x128xf32>
    %314 = math.exp %313 : vector<32x128xf32>
    %cst_63 = arith.constant 1.000000e+00 : f32
    %315 = vector.broadcast %cst_63 : f32 to vector<32x128xf32>
    %316 = arith.addf %315, %314 : vector<32x128xf32>
    %317 = arith.divf %315, %316 : vector<32x128xf32>
    %318 = vector.extract_strided_slice %301 {offsets = [64, 0], sizes = [32, 128], strides = [1, 1]} : vector<96x128xf32> to vector<32x128xf32>
    %319 = vector.extract_strided_slice %231 {offsets = [64, 0], sizes = [32, 128], strides = [1, 1]} : vector<96x128xf32> to vector<32x128xf32>
    %320 = arith.mulf %309, %319 : vector<32x128xf32>
    %321 = arith.addf %318, %320 : vector<32x128xf32>
    %322 = math.tanh %321 : vector<32x128xf32>
    %cst_64 = arith.constant 1.000000e+00 : f32
    %323 = vector.broadcast %cst_64 : f32 to vector<32x128xf32>
    %324 = arith.subf %323, %317 : vector<32x128xf32>
    %325 = arith.mulf %324, %322 : vector<32x128xf32>
    %326 = arith.mulf %317, %228 : vector<32x128xf32>
    %327 = arith.addf %325, %326 : vector<32x128xf32>
    %cst_65 = arith.constant dense<0.000000e+00> : vector<128x128xf32>
    %328 = tpu.matmul %14, %327, %cst_65 {dimension_numbers = #tpu.dot_dimension_numbers<[1], [0], [0], [1], [0, 0, 1, 1], [], []>} : vector<128x32xf32>, vector<32x128xf32>, vector<128x128xf32> -> vector<128x128xf32>
    %329 = vector.extract_strided_slice %328 {offsets = [0, 0], sizes = [96, 128], strides = [1, 1]} : vector<128x128xf32> to vector<96x128xf32>
    %330 = arith.addf %329, %18 : vector<96x128xf32>
    %331 = vector.extract_strided_slice %328 {offsets = [96, 0], sizes = [32, 128], strides = [1, 1]} : vector<128x128xf32> to vector<32x128xf32>
    %332 = vector.shape_cast %331 : vector<32x128xf32> to vector<1x32x128xf32>
    %333 = vector.broadcast %332 : vector<1x32x128xf32> to vector<8x32x128xf32>
    %334 = arith.addf %58, %333 : vector<8x32x128xf32>
    %335 = math.tanh %334 : vector<8x32x128xf32>
    %336 = vector.shape_cast %20 : vector<32x128xf32> to vector<1x32x128xf32>
    %337 = vector.broadcast %336 : vector<1x32x128xf32> to vector<8x32x128xf32>
    %338 = arith.mulf %337, %335 : vector<8x32x128xf32>
    %cst_66 = arith.constant dense<0.000000e+00> : vector<8x128xf32>
    %339 = vector.multi_reduction <add>, %338, %cst_66 [1] : vector<8x32x128xf32> to vector<8x128xf32>
    %cst_67 = arith.constant dense<0xFF800000> : vector<128xf32>
    %340 = vector.multi_reduction <maximumf>, %339, %cst_67 [0] : vector<8x128xf32> to vector<128xf32>
    %341 = vector.shape_cast %340 : vector<128xf32> to vector<1x128xf32>
    %342 = vector.broadcast %341 : vector<1x128xf32> to vector<8x128xf32>
    %343 = arith.subf %339, %342 : vector<8x128xf32>
    %344 = math.exp %343 : vector<8x128xf32>
    %cst_68 = arith.constant dense<0.000000e+00> : vector<128xf32>
    %345 = vector.multi_reduction <add>, %344, %cst_68 [0] : vector<8x128xf32> to vector<128xf32>
    %346 = vector.shape_cast %345 : vector<128xf32> to vector<1x128xf32>
    %347 = vector.broadcast %346 : vector<1x128xf32> to vector<8x128xf32>
    %348 = arith.divf %344, %347 : vector<8x128xf32>
    %cst_69 = arith.constant 0.000000e+00 : f32
    %349 = vector.broadcast %cst_69 : f32 to vector<32x128xf32>
    %350 = vector.shape_cast %348 : vector<8x128xf32> to vector<8x1x128xf32>
    %351 = vector.broadcast %350 : vector<8x1x128xf32> to vector<8x32x128xf32>
    %352 = arith.mulf %90, %351 : vector<8x32x128xf32>
    %cst_70 = arith.constant dense<0.000000e+00> : vector<32x128xf32>
    %353 = vector.multi_reduction <add>, %352, %cst_70 [0] : vector<8x32x128xf32> to vector<32x128xf32>
    %354 = arith.addf %349, %353 : vector<32x128xf32>
    %355 = vector.shape_cast %354 : vector<32x128xf32> to vector<1x32x128xf32>
    %356 = vector.broadcast %355 : vector<1x32x128xf32> to vector<8x32x128xf32>
    %357 = arith.addf %74, %356 : vector<8x32x128xf32>
    %358 = math.tanh %357 : vector<8x32x128xf32>
    %359 = vector.shape_cast %22 : vector<32x128xf32> to vector<1x32x128xf32>
    %360 = vector.broadcast %359 : vector<1x32x128xf32> to vector<8x32x128xf32>
    %361 = arith.mulf %360, %358 : vector<8x32x128xf32>
    %cst_71 = arith.constant dense<0.000000e+00> : vector<8x128xf32>
    %362 = vector.multi_reduction <add>, %361, %cst_71 [1] : vector<8x32x128xf32> to vector<8x128xf32>
    %cst_72 = arith.constant dense<0xFF800000> : vector<128xf32>
    %363 = vector.multi_reduction <maximumf>, %362, %cst_72 [0] : vector<8x128xf32> to vector<128xf32>
    %364 = vector.shape_cast %363 : vector<128xf32> to vector<1x128xf32>
    %365 = vector.broadcast %364 : vector<1x128xf32> to vector<8x128xf32>
    %366 = arith.cmpf oge, %362, %365 : vector<8x128xf32>
    %c8_i32_73 = arith.constant 8 : i32
    %367 = vector.broadcast %c8_i32_73 : i32 to vector<8x128xi32>
    %368 = arith.select %366, %91, %367 : vector<8x128xi1>, vector<8x128xi32>
    %cst_74 = arith.constant dense<2147483647> : vector<128xi32>
    %369 = vector.multi_reduction <minsi>, %368, %cst_74 [0] : vector<8x128xi32> to vector<128xi32>
    %370 = vector.shape_cast %369 : vector<128xi32> to vector<1x128xi32>
    %c7_i32_75 = arith.constant 7 : i32
    %371 = vector.broadcast %c7_i32_75 : i32 to vector<1x128xi32>
    %372 = arith.minsi %370, %371 : vector<1x128xi32>
    %373 = vector.broadcast %364 : vector<1x128xf32> to vector<8x128xf32>
    %374 = arith.subf %362, %373 : vector<8x128xf32>
    %375 = math.exp %374 : vector<8x128xf32>
    %cst_76 = arith.constant dense<0.000000e+00> : vector<128xf32>
    %376 = vector.multi_reduction <add>, %375, %cst_76 [0] : vector<8x128xf32> to vector<128xf32>
    %377 = vector.shape_cast %376 : vector<128xf32> to vector<1x128xf32>
    %378 = math.log %377 : vector<1x128xf32>
    %cst_77 = arith.constant 0.000000e+00 : f32
    %379 = vector.broadcast %cst_77 : f32 to vector<1x128xf32>
    %380 = arith.subf %379, %378 : vector<1x128xf32>
    %381 = vector.broadcast %372 : vector<1x128xi32> to vector<8x128xi32>
    %382 = arith.cmpi eq, %91, %381 : vector<8x128xi32>
    %383 = arith.extui %382 : vector<8x128xi1> to vector<8x128xi32>
    %384 = arith.sitofp %383 : vector<8x128xi32> to vector<8x128xf32>
    %385 = vector.shape_cast %384 : vector<8x128xf32> to vector<8x1x128xf32>
    %386 = vector.broadcast %385 : vector<8x1x128xf32> to vector<8x2x128xf32>
    %387 = arith.mulf %0, %386 : vector<8x2x128xf32>
    %cst_78 = arith.constant dense<0.000000e+00> : vector<2x128xf32>
    %388 = vector.multi_reduction <add>, %387, %cst_78 [0] : vector<8x2x128xf32> to vector<2x128xf32>
    %389 = arith.index_cast %c2_i32 : i32 to index
    %c0_79 = arith.constant 0 : index
    %390 = vector.load %arg7[%389, %c0_79] : memref<8x128xi32, #tpu.memory_space<vmem>>, vector<1x128xi32>
    tpu.vector_store %arg7[%389, %c0_79], %372 {strides = array<i32>} : memref<8x128xi32, #tpu.memory_space<vmem>>, vector<1x128xi32>,
    %391 = arith.index_cast %c2_i32 : i32 to index
    %c0_80 = arith.constant 0 : index
    %392 = vector.load %arg8[%391, %c0_80] : memref<8x128xf32, #tpu.memory_space<vmem>>, vector<1x128xf32>
    tpu.vector_store %arg8[%391, %c0_80], %380 {strides = array<i32>} : memref<8x128xf32, #tpu.memory_space<vmem>>, vector<1x128xf32>,
    %c3_i32 = arith.constant 3 : i32
    %393 = vector.extract_strided_slice %388 {offsets = [0, 0], sizes = [1, 128], strides = [1, 1]} : vector<2x128xf32> to vector<1x128xf32>
    %394 = vector.broadcast %393 : vector<1x128xf32> to vector<96x128xf32>
    %395 = arith.mulf %25, %394 : vector<96x128xf32>
    %396 = arith.addf %16, %395 : vector<96x128xf32>
    %397 = vector.extract_strided_slice %388 {offsets = [1, 0], sizes = [1, 128], strides = [1, 1]} : vector<2x128xf32> to vector<1x128xf32>
    %398 = vector.broadcast %397 : vector<1x128xf32> to vector<96x128xf32>
    %399 = arith.mulf %28, %398 : vector<96x128xf32>
    %400 = arith.addf %396, %399 : vector<96x128xf32>
    %401 = vector.extract_strided_slice %400 {offsets = [0, 0], sizes = [32, 128], strides = [1, 1]} : vector<96x128xf32> to vector<32x128xf32>
    %402 = vector.extract_strided_slice %330 {offsets = [0, 0], sizes = [32, 128], strides = [1, 1]} : vector<96x128xf32> to vector<32x128xf32>
    %403 = arith.addf %401, %402 : vector<32x128xf32>
    %404 = arith.negf %403 : vector<32x128xf32>
    %405 = math.exp %404 : vector<32x128xf32>
    %cst_81 = arith.constant 1.000000e+00 : f32
    %406 = vector.broadcast %cst_81 : f32 to vector<32x128xf32>
    %407 = arith.addf %406, %405 : vector<32x128xf32>
    %408 = arith.divf %406, %407 : vector<32x128xf32>
    %409 = vector.extract_strided_slice %400 {offsets = [32, 0], sizes = [32, 128], strides = [1, 1]} : vector<96x128xf32> to vector<32x128xf32>
    %410 = vector.extract_strided_slice %330 {offsets = [32, 0], sizes = [32, 128], strides = [1, 1]} : vector<96x128xf32> to vector<32x128xf32>
    %411 = arith.addf %409, %410 : vector<32x128xf32>
    %412 = arith.negf %411 : vector<32x128xf32>
    %413 = math.exp %412 : vector<32x128xf32>
    %cst_82 = arith.constant 1.000000e+00 : f32
    %414 = vector.broadcast %cst_82 : f32 to vector<32x128xf32>
    %415 = arith.addf %414, %413 : vector<32x128xf32>
    %416 = arith.divf %414, %415 : vector<32x128xf32>
    %417 = vector.extract_strided_slice %400 {offsets = [64, 0], sizes = [32, 128], strides = [1, 1]} : vector<96x128xf32> to vector<32x128xf32>
    %418 = vector.extract_strided_slice %330 {offsets = [64, 0], sizes = [32, 128], strides = [1, 1]} : vector<96x128xf32> to vector<32x128xf32>
    %419 = arith.mulf %408, %418 : vector<32x128xf32>
    %420 = arith.addf %417, %419 : vector<32x128xf32>
    %421 = math.tanh %420 : vector<32x128xf32>
    %cst_83 = arith.constant 1.000000e+00 : f32
    %422 = vector.broadcast %cst_83 : f32 to vector<32x128xf32>
    %423 = arith.subf %422, %416 : vector<32x128xf32>
    %424 = arith.mulf %423, %421 : vector<32x128xf32>
    %425 = arith.mulf %416, %327 : vector<32x128xf32>
    %426 = arith.addf %424, %425 : vector<32x128xf32>
    %cst_84 = arith.constant dense<0.000000e+00> : vector<128x128xf32>
    %427 = tpu.matmul %14, %426, %cst_84 {dimension_numbers = #tpu.dot_dimension_numbers<[1], [0], [0], [1], [0, 0, 1, 1], [], []>} : vector<128x32xf32>, vector<32x128xf32>, vector<128x128xf32> -> vector<128x128xf32>
    %428 = vector.extract_strided_slice %427 {offsets = [0, 0], sizes = [96, 128], strides = [1, 1]} : vector<128x128xf32> to vector<96x128xf32>
    %429 = arith.addf %428, %18 : vector<96x128xf32>
    %430 = vector.extract_strided_slice %427 {offsets = [96, 0], sizes = [32, 128], strides = [1, 1]} : vector<128x128xf32> to vector<32x128xf32>
    %431 = vector.shape_cast %430 : vector<32x128xf32> to vector<1x32x128xf32>
    %432 = vector.broadcast %431 : vector<1x32x128xf32> to vector<8x32x128xf32>
    %433 = arith.addf %58, %432 : vector<8x32x128xf32>
    %434 = math.tanh %433 : vector<8x32x128xf32>
    %435 = vector.shape_cast %20 : vector<32x128xf32> to vector<1x32x128xf32>
    %436 = vector.broadcast %435 : vector<1x32x128xf32> to vector<8x32x128xf32>
    %437 = arith.mulf %436, %434 : vector<8x32x128xf32>
    %cst_85 = arith.constant dense<0.000000e+00> : vector<8x128xf32>
    %438 = vector.multi_reduction <add>, %437, %cst_85 [1] : vector<8x32x128xf32> to vector<8x128xf32>
    %cst_86 = arith.constant dense<0xFF800000> : vector<128xf32>
    %439 = vector.multi_reduction <maximumf>, %438, %cst_86 [0] : vector<8x128xf32> to vector<128xf32>
    %440 = vector.shape_cast %439 : vector<128xf32> to vector<1x128xf32>
    %441 = vector.broadcast %440 : vector<1x128xf32> to vector<8x128xf32>
    %442 = arith.subf %438, %441 : vector<8x128xf32>
    %443 = math.exp %442 : vector<8x128xf32>
    %cst_87 = arith.constant dense<0.000000e+00> : vector<128xf32>
    %444 = vector.multi_reduction <add>, %443, %cst_87 [0] : vector<8x128xf32> to vector<128xf32>
    %445 = vector.shape_cast %444 : vector<128xf32> to vector<1x128xf32>
    %446 = vector.broadcast %445 : vector<1x128xf32> to vector<8x128xf32>
    %447 = arith.divf %443, %446 : vector<8x128xf32>
    %cst_88 = arith.constant 0.000000e+00 : f32
    %448 = vector.broadcast %cst_88 : f32 to vector<32x128xf32>
    %449 = vector.shape_cast %447 : vector<8x128xf32> to vector<8x1x128xf32>
    %450 = vector.broadcast %449 : vector<8x1x128xf32> to vector<8x32x128xf32>
    %451 = arith.mulf %90, %450 : vector<8x32x128xf32>
    %cst_89 = arith.constant dense<0.000000e+00> : vector<32x128xf32>
    %452 = vector.multi_reduction <add>, %451, %cst_89 [0] : vector<8x32x128xf32> to vector<32x128xf32>
    %453 = arith.addf %448, %452 : vector<32x128xf32>
    %454 = vector.shape_cast %453 : vector<32x128xf32> to vector<1x32x128xf32>
    %455 = vector.broadcast %454 : vector<1x32x128xf32> to vector<8x32x128xf32>
    %456 = arith.addf %74, %455 : vector<8x32x128xf32>
    %457 = math.tanh %456 : vector<8x32x128xf32>
    %458 = vector.shape_cast %22 : vector<32x128xf32> to vector<1x32x128xf32>
    %459 = vector.broadcast %458 : vector<1x32x128xf32> to vector<8x32x128xf32>
    %460 = arith.mulf %459, %457 : vector<8x32x128xf32>
    %cst_90 = arith.constant dense<0.000000e+00> : vector<8x128xf32>
    %461 = vector.multi_reduction <add>, %460, %cst_90 [1] : vector<8x32x128xf32> to vector<8x128xf32>
    %cst_91 = arith.constant dense<0xFF800000> : vector<128xf32>
    %462 = vector.multi_reduction <maximumf>, %461, %cst_91 [0] : vector<8x128xf32> to vector<128xf32>
    %463 = vector.shape_cast %462 : vector<128xf32> to vector<1x128xf32>
    %464 = vector.broadcast %463 : vector<1x128xf32> to vector<8x128xf32>
    %465 = arith.cmpf oge, %461, %464 : vector<8x128xf32>
    %c8_i32_92 = arith.constant 8 : i32
    %466 = vector.broadcast %c8_i32_92 : i32 to vector<8x128xi32>
    %467 = arith.select %465, %91, %466 : vector<8x128xi1>, vector<8x128xi32>
    %cst_93 = arith.constant dense<2147483647> : vector<128xi32>
    %468 = vector.multi_reduction <minsi>, %467, %cst_93 [0] : vector<8x128xi32> to vector<128xi32>
    %469 = vector.shape_cast %468 : vector<128xi32> to vector<1x128xi32>
    %c7_i32_94 = arith.constant 7 : i32
    %470 = vector.broadcast %c7_i32_94 : i32 to vector<1x128xi32>
    %471 = arith.minsi %469, %470 : vector<1x128xi32>
    %472 = vector.broadcast %463 : vector<1x128xf32> to vector<8x128xf32>
    %473 = arith.subf %461, %472 : vector<8x128xf32>
    %474 = math.exp %473 : vector<8x128xf32>
    %cst_95 = arith.constant dense<0.000000e+00> : vector<128xf32>
    %475 = vector.multi_reduction <add>, %474, %cst_95 [0] : vector<8x128xf32> to vector<128xf32>
    %476 = vector.shape_cast %475 : vector<128xf32> to vector<1x128xf32>
    %477 = math.log %476 : vector<1x128xf32>
    %cst_96 = arith.constant 0.000000e+00 : f32
    %478 = vector.broadcast %cst_96 : f32 to vector<1x128xf32>
    %479 = arith.subf %478, %477 : vector<1x128xf32>
    %480 = vector.broadcast %471 : vector<1x128xi32> to vector<8x128xi32>
    %481 = arith.cmpi eq, %91, %480 : vector<8x128xi32>
    %482 = arith.extui %481 : vector<8x128xi1> to vector<8x128xi32>
    %483 = arith.sitofp %482 : vector<8x128xi32> to vector<8x128xf32>
    %484 = vector.shape_cast %483 : vector<8x128xf32> to vector<8x1x128xf32>
    %485 = vector.broadcast %484 : vector<8x1x128xf32> to vector<8x2x128xf32>
    %486 = arith.mulf %0, %485 : vector<8x2x128xf32>
    %cst_97 = arith.constant dense<0.000000e+00> : vector<2x128xf32>
    %487 = vector.multi_reduction <add>, %486, %cst_97 [0] : vector<8x2x128xf32> to vector<2x128xf32>
    %488 = arith.index_cast %c3_i32 : i32 to index
    %c0_98 = arith.constant 0 : index
    %489 = vector.load %arg7[%488, %c0_98] : memref<8x128xi32, #tpu.memory_space<vmem>>, vector<1x128xi32>
    tpu.vector_store %arg7[%488, %c0_98], %471 {strides = array<i32>} : memref<8x128xi32, #tpu.memory_space<vmem>>, vector<1x128xi32>,
    %490 = arith.index_cast %c3_i32 : i32 to index
    %c0_99 = arith.constant 0 : index
    %491 = vector.load %arg8[%490, %c0_99] : memref<8x128xf32, #tpu.memory_space<vmem>>, vector<1x128xf32>
    tpu.vector_store %arg8[%490, %c0_99], %479 {strides = array<i32>} : memref<8x128xf32, #tpu.memory_space<vmem>>, vector<1x128xf32>,
    %c4_i32 = arith.constant 4 : i32
    %492 = vector.extract_strided_slice %487 {offsets = [0, 0], sizes = [1, 128], strides = [1, 1]} : vector<2x128xf32> to vector<1x128xf32>
    %493 = vector.broadcast %492 : vector<1x128xf32> to vector<96x128xf32>
    %494 = arith.mulf %25, %493 : vector<96x128xf32>
    %495 = arith.addf %16, %494 : vector<96x128xf32>
    %496 = vector.extract_strided_slice %487 {offsets = [1, 0], sizes = [1, 128], strides = [1, 1]} : vector<2x128xf32> to vector<1x128xf32>
    %497 = vector.broadcast %496 : vector<1x128xf32> to vector<96x128xf32>
    %498 = arith.mulf %28, %497 : vector<96x128xf32>
    %499 = arith.addf %495, %498 : vector<96x128xf32>
    %500 = vector.extract_strided_slice %499 {offsets = [0, 0], sizes = [32, 128], strides = [1, 1]} : vector<96x128xf32> to vector<32x128xf32>
    %501 = vector.extract_strided_slice %429 {offsets = [0, 0], sizes = [32, 128], strides = [1, 1]} : vector<96x128xf32> to vector<32x128xf32>
    %502 = arith.addf %500, %501 : vector<32x128xf32>
    %503 = arith.negf %502 : vector<32x128xf32>
    %504 = math.exp %503 : vector<32x128xf32>
    %cst_100 = arith.constant 1.000000e+00 : f32
    %505 = vector.broadcast %cst_100 : f32 to vector<32x128xf32>
    %506 = arith.addf %505, %504 : vector<32x128xf32>
    %507 = arith.divf %505, %506 : vector<32x128xf32>
    %508 = vector.extract_strided_slice %499 {offsets = [32, 0], sizes = [32, 128], strides = [1, 1]} : vector<96x128xf32> to vector<32x128xf32>
    %509 = vector.extract_strided_slice %429 {offsets = [32, 0], sizes = [32, 128], strides = [1, 1]} : vector<96x128xf32> to vector<32x128xf32>
    %510 = arith.addf %508, %509 : vector<32x128xf32>
    %511 = arith.negf %510 : vector<32x128xf32>
    %512 = math.exp %511 : vector<32x128xf32>
    %cst_101 = arith.constant 1.000000e+00 : f32
    %513 = vector.broadcast %cst_101 : f32 to vector<32x128xf32>
    %514 = arith.addf %513, %512 : vector<32x128xf32>
    %515 = arith.divf %513, %514 : vector<32x128xf32>
    %516 = vector.extract_strided_slice %499 {offsets = [64, 0], sizes = [32, 128], strides = [1, 1]} : vector<96x128xf32> to vector<32x128xf32>
    %517 = vector.extract_strided_slice %429 {offsets = [64, 0], sizes = [32, 128], strides = [1, 1]} : vector<96x128xf32> to vector<32x128xf32>
    %518 = arith.mulf %507, %517 : vector<32x128xf32>
    %519 = arith.addf %516, %518 : vector<32x128xf32>
    %520 = math.tanh %519 : vector<32x128xf32>
    %cst_102 = arith.constant 1.000000e+00 : f32
    %521 = vector.broadcast %cst_102 : f32 to vector<32x128xf32>
    %522 = arith.subf %521, %515 : vector<32x128xf32>
    %523 = arith.mulf %522, %520 : vector<32x128xf32>
    %524 = arith.mulf %515, %426 : vector<32x128xf32>
    %525 = arith.addf %523, %524 : vector<32x128xf32>
    %cst_103 = arith.constant dense<0.000000e+00> : vector<128x128xf32>
    %526 = tpu.matmul %14, %525, %cst_103 {dimension_numbers = #tpu.dot_dimension_numbers<[1], [0], [0], [1], [0, 0, 1, 1], [], []>} : vector<128x32xf32>, vector<32x128xf32>, vector<128x128xf32> -> vector<128x128xf32>
    %527 = vector.extract_strided_slice %526 {offsets = [0, 0], sizes = [96, 128], strides = [1, 1]} : vector<128x128xf32> to vector<96x128xf32>
    %528 = arith.addf %527, %18 : vector<96x128xf32>
    %529 = vector.extract_strided_slice %526 {offsets = [96, 0], sizes = [32, 128], strides = [1, 1]} : vector<128x128xf32> to vector<32x128xf32>
    %530 = vector.shape_cast %529 : vector<32x128xf32> to vector<1x32x128xf32>
    %531 = vector.broadcast %530 : vector<1x32x128xf32> to vector<8x32x128xf32>
    %532 = arith.addf %58, %531 : vector<8x32x128xf32>
    %533 = math.tanh %532 : vector<8x32x128xf32>
    %534 = vector.shape_cast %20 : vector<32x128xf32> to vector<1x32x128xf32>
    %535 = vector.broadcast %534 : vector<1x32x128xf32> to vector<8x32x128xf32>
    %536 = arith.mulf %535, %533 : vector<8x32x128xf32>
    %cst_104 = arith.constant dense<0.000000e+00> : vector<8x128xf32>
    %537 = vector.multi_reduction <add>, %536, %cst_104 [1] : vector<8x32x128xf32> to vector<8x128xf32>
    %cst_105 = arith.constant dense<0xFF800000> : vector<128xf32>
    %538 = vector.multi_reduction <maximumf>, %537, %cst_105 [0] : vector<8x128xf32> to vector<128xf32>
    %539 = vector.shape_cast %538 : vector<128xf32> to vector<1x128xf32>
    %540 = vector.broadcast %539 : vector<1x128xf32> to vector<8x128xf32>
    %541 = arith.subf %537, %540 : vector<8x128xf32>
    %542 = math.exp %541 : vector<8x128xf32>
    %cst_106 = arith.constant dense<0.000000e+00> : vector<128xf32>
    %543 = vector.multi_reduction <add>, %542, %cst_106 [0] : vector<8x128xf32> to vector<128xf32>
    %544 = vector.shape_cast %543 : vector<128xf32> to vector<1x128xf32>
    %545 = vector.broadcast %544 : vector<1x128xf32> to vector<8x128xf32>
    %546 = arith.divf %542, %545 : vector<8x128xf32>
    %cst_107 = arith.constant 0.000000e+00 : f32
    %547 = vector.broadcast %cst_107 : f32 to vector<32x128xf32>
    %548 = vector.shape_cast %546 : vector<8x128xf32> to vector<8x1x128xf32>
    %549 = vector.broadcast %548 : vector<8x1x128xf32> to vector<8x32x128xf32>
    %550 = arith.mulf %90, %549 : vector<8x32x128xf32>
    %cst_108 = arith.constant dense<0.000000e+00> : vector<32x128xf32>
    %551 = vector.multi_reduction <add>, %550, %cst_108 [0] : vector<8x32x128xf32> to vector<32x128xf32>
    %552 = arith.addf %547, %551 : vector<32x128xf32>
    %553 = vector.shape_cast %552 : vector<32x128xf32> to vector<1x32x128xf32>
    %554 = vector.broadcast %553 : vector<1x32x128xf32> to vector<8x32x128xf32>
    %555 = arith.addf %74, %554 : vector<8x32x128xf32>
    %556 = math.tanh %555 : vector<8x32x128xf32>
    %557 = vector.shape_cast %22 : vector<32x128xf32> to vector<1x32x128xf32>
    %558 = vector.broadcast %557 : vector<1x32x128xf32> to vector<8x32x128xf32>
    %559 = arith.mulf %558, %556 : vector<8x32x128xf32>
    %cst_109 = arith.constant dense<0.000000e+00> : vector<8x128xf32>
    %560 = vector.multi_reduction <add>, %559, %cst_109 [1] : vector<8x32x128xf32> to vector<8x128xf32>
    %cst_110 = arith.constant dense<0xFF800000> : vector<128xf32>
    %561 = vector.multi_reduction <maximumf>, %560, %cst_110 [0] : vector<8x128xf32> to vector<128xf32>
    %562 = vector.shape_cast %561 : vector<128xf32> to vector<1x128xf32>
    %563 = vector.broadcast %562 : vector<1x128xf32> to vector<8x128xf32>
    %564 = arith.cmpf oge, %560, %563 : vector<8x128xf32>
    %c8_i32_111 = arith.constant 8 : i32
    %565 = vector.broadcast %c8_i32_111 : i32 to vector<8x128xi32>
    %566 = arith.select %564, %91, %565 : vector<8x128xi1>, vector<8x128xi32>
    %cst_112 = arith.constant dense<2147483647> : vector<128xi32>
    %567 = vector.multi_reduction <minsi>, %566, %cst_112 [0] : vector<8x128xi32> to vector<128xi32>
    %568 = vector.shape_cast %567 : vector<128xi32> to vector<1x128xi32>
    %c7_i32_113 = arith.constant 7 : i32
    %569 = vector.broadcast %c7_i32_113 : i32 to vector<1x128xi32>
    %570 = arith.minsi %568, %569 : vector<1x128xi32>
    %571 = vector.broadcast %562 : vector<1x128xf32> to vector<8x128xf32>
    %572 = arith.subf %560, %571 : vector<8x128xf32>
    %573 = math.exp %572 : vector<8x128xf32>
    %cst_114 = arith.constant dense<0.000000e+00> : vector<128xf32>
    %574 = vector.multi_reduction <add>, %573, %cst_114 [0] : vector<8x128xf32> to vector<128xf32>
    %575 = vector.shape_cast %574 : vector<128xf32> to vector<1x128xf32>
    %576 = math.log %575 : vector<1x128xf32>
    %cst_115 = arith.constant 0.000000e+00 : f32
    %577 = vector.broadcast %cst_115 : f32 to vector<1x128xf32>
    %578 = arith.subf %577, %576 : vector<1x128xf32>
    %579 = vector.broadcast %570 : vector<1x128xi32> to vector<8x128xi32>
    %580 = arith.cmpi eq, %91, %579 : vector<8x128xi32>
    %581 = arith.extui %580 : vector<8x128xi1> to vector<8x128xi32>
    %582 = arith.sitofp %581 : vector<8x128xi32> to vector<8x128xf32>
    %583 = vector.shape_cast %582 : vector<8x128xf32> to vector<8x1x128xf32>
    %584 = vector.broadcast %583 : vector<8x1x128xf32> to vector<8x2x128xf32>
    %585 = arith.mulf %0, %584 : vector<8x2x128xf32>
    %cst_116 = arith.constant dense<0.000000e+00> : vector<2x128xf32>
    %586 = vector.multi_reduction <add>, %585, %cst_116 [0] : vector<8x2x128xf32> to vector<2x128xf32>
    %587 = arith.index_cast %c4_i32 : i32 to index
    %c0_117 = arith.constant 0 : index
    %588 = vector.load %arg7[%587, %c0_117] : memref<8x128xi32, #tpu.memory_space<vmem>>, vector<1x128xi32>
    tpu.vector_store %arg7[%587, %c0_117], %570 {strides = array<i32>} : memref<8x128xi32, #tpu.memory_space<vmem>>, vector<1x128xi32>,
    %589 = arith.index_cast %c4_i32 : i32 to index
    %c0_118 = arith.constant 0 : index
    %590 = vector.load %arg8[%589, %c0_118] : memref<8x128xf32, #tpu.memory_space<vmem>>, vector<1x128xf32>
    tpu.vector_store %arg8[%589, %c0_118], %578 {strides = array<i32>} : memref<8x128xf32, #tpu.memory_space<vmem>>, vector<1x128xf32>,
    %c5_i32 = arith.constant 5 : i32
    %591 = vector.extract_strided_slice %586 {offsets = [0, 0], sizes = [1, 128], strides = [1, 1]} : vector<2x128xf32> to vector<1x128xf32>
    %592 = vector.broadcast %591 : vector<1x128xf32> to vector<96x128xf32>
    %593 = arith.mulf %25, %592 : vector<96x128xf32>
    %594 = arith.addf %16, %593 : vector<96x128xf32>
    %595 = vector.extract_strided_slice %586 {offsets = [1, 0], sizes = [1, 128], strides = [1, 1]} : vector<2x128xf32> to vector<1x128xf32>
    %596 = vector.broadcast %595 : vector<1x128xf32> to vector<96x128xf32>
    %597 = arith.mulf %28, %596 : vector<96x128xf32>
    %598 = arith.addf %594, %597 : vector<96x128xf32>
    %599 = vector.extract_strided_slice %598 {offsets = [0, 0], sizes = [32, 128], strides = [1, 1]} : vector<96x128xf32> to vector<32x128xf32>
    %600 = vector.extract_strided_slice %528 {offsets = [0, 0], sizes = [32, 128], strides = [1, 1]} : vector<96x128xf32> to vector<32x128xf32>
    %601 = arith.addf %599, %600 : vector<32x128xf32>
    %602 = arith.negf %601 : vector<32x128xf32>
    %603 = math.exp %602 : vector<32x128xf32>
    %cst_119 = arith.constant 1.000000e+00 : f32
    %604 = vector.broadcast %cst_119 : f32 to vector<32x128xf32>
    %605 = arith.addf %604, %603 : vector<32x128xf32>
    %606 = arith.divf %604, %605 : vector<32x128xf32>
    %607 = vector.extract_strided_slice %598 {offsets = [32, 0], sizes = [32, 128], strides = [1, 1]} : vector<96x128xf32> to vector<32x128xf32>
    %608 = vector.extract_strided_slice %528 {offsets = [32, 0], sizes = [32, 128], strides = [1, 1]} : vector<96x128xf32> to vector<32x128xf32>
    %609 = arith.addf %607, %608 : vector<32x128xf32>
    %610 = arith.negf %609 : vector<32x128xf32>
    %611 = math.exp %610 : vector<32x128xf32>
    %cst_120 = arith.constant 1.000000e+00 : f32
    %612 = vector.broadcast %cst_120 : f32 to vector<32x128xf32>
    %613 = arith.addf %612, %611 : vector<32x128xf32>
    %614 = arith.divf %612, %613 : vector<32x128xf32>
    %615 = vector.extract_strided_slice %598 {offsets = [64, 0], sizes = [32, 128], strides = [1, 1]} : vector<96x128xf32> to vector<32x128xf32>
    %616 = vector.extract_strided_slice %528 {offsets = [64, 0], sizes = [32, 128], strides = [1, 1]} : vector<96x128xf32> to vector<32x128xf32>
    %617 = arith.mulf %606, %616 : vector<32x128xf32>
    %618 = arith.addf %615, %617 : vector<32x128xf32>
    %619 = math.tanh %618 : vector<32x128xf32>
    %cst_121 = arith.constant 1.000000e+00 : f32
    %620 = vector.broadcast %cst_121 : f32 to vector<32x128xf32>
    %621 = arith.subf %620, %614 : vector<32x128xf32>
    %622 = arith.mulf %621, %619 : vector<32x128xf32>
    %623 = arith.mulf %614, %525 : vector<32x128xf32>
    %624 = arith.addf %622, %623 : vector<32x128xf32>
    %cst_122 = arith.constant dense<0.000000e+00> : vector<128x128xf32>
    %625 = tpu.matmul %14, %624, %cst_122 {dimension_numbers = #tpu.dot_dimension_numbers<[1], [0], [0], [1], [0, 0, 1, 1], [], []>} : vector<128x32xf32>, vector<32x128xf32>, vector<128x128xf32> -> vector<128x128xf32>
    %626 = vector.extract_strided_slice %625 {offsets = [0, 0], sizes = [96, 128], strides = [1, 1]} : vector<128x128xf32> to vector<96x128xf32>
    %627 = arith.addf %626, %18 : vector<96x128xf32>
    %628 = vector.extract_strided_slice %625 {offsets = [96, 0], sizes = [32, 128], strides = [1, 1]} : vector<128x128xf32> to vector<32x128xf32>
    %629 = vector.shape_cast %628 : vector<32x128xf32> to vector<1x32x128xf32>
    %630 = vector.broadcast %629 : vector<1x32x128xf32> to vector<8x32x128xf32>
    %631 = arith.addf %58, %630 : vector<8x32x128xf32>
    %632 = math.tanh %631 : vector<8x32x128xf32>
    %633 = vector.shape_cast %20 : vector<32x128xf32> to vector<1x32x128xf32>
    %634 = vector.broadcast %633 : vector<1x32x128xf32> to vector<8x32x128xf32>
    %635 = arith.mulf %634, %632 : vector<8x32x128xf32>
    %cst_123 = arith.constant dense<0.000000e+00> : vector<8x128xf32>
    %636 = vector.multi_reduction <add>, %635, %cst_123 [1] : vector<8x32x128xf32> to vector<8x128xf32>
    %cst_124 = arith.constant dense<0xFF800000> : vector<128xf32>
    %637 = vector.multi_reduction <maximumf>, %636, %cst_124 [0] : vector<8x128xf32> to vector<128xf32>
    %638 = vector.shape_cast %637 : vector<128xf32> to vector<1x128xf32>
    %639 = vector.broadcast %638 : vector<1x128xf32> to vector<8x128xf32>
    %640 = arith.subf %636, %639 : vector<8x128xf32>
    %641 = math.exp %640 : vector<8x128xf32>
    %cst_125 = arith.constant dense<0.000000e+00> : vector<128xf32>
    %642 = vector.multi_reduction <add>, %641, %cst_125 [0] : vector<8x128xf32> to vector<128xf32>
    %643 = vector.shape_cast %642 : vector<128xf32> to vector<1x128xf32>
    %644 = vector.broadcast %643 : vector<1x128xf32> to vector<8x128xf32>
    %645 = arith.divf %641, %644 : vector<8x128xf32>
    %cst_126 = arith.constant 0.000000e+00 : f32
    %646 = vector.broadcast %cst_126 : f32 to vector<32x128xf32>
    %647 = vector.shape_cast %645 : vector<8x128xf32> to vector<8x1x128xf32>
    %648 = vector.broadcast %647 : vector<8x1x128xf32> to vector<8x32x128xf32>
    %649 = arith.mulf %90, %648 : vector<8x32x128xf32>
    %cst_127 = arith.constant dense<0.000000e+00> : vector<32x128xf32>
    %650 = vector.multi_reduction <add>, %649, %cst_127 [0] : vector<8x32x128xf32> to vector<32x128xf32>
    %651 = arith.addf %646, %650 : vector<32x128xf32>
    %652 = vector.shape_cast %651 : vector<32x128xf32> to vector<1x32x128xf32>
    %653 = vector.broadcast %652 : vector<1x32x128xf32> to vector<8x32x128xf32>
    %654 = arith.addf %74, %653 : vector<8x32x128xf32>
    %655 = math.tanh %654 : vector<8x32x128xf32>
    %656 = vector.shape_cast %22 : vector<32x128xf32> to vector<1x32x128xf32>
    %657 = vector.broadcast %656 : vector<1x32x128xf32> to vector<8x32x128xf32>
    %658 = arith.mulf %657, %655 : vector<8x32x128xf32>
    %cst_128 = arith.constant dense<0.000000e+00> : vector<8x128xf32>
    %659 = vector.multi_reduction <add>, %658, %cst_128 [1] : vector<8x32x128xf32> to vector<8x128xf32>
    %cst_129 = arith.constant dense<0xFF800000> : vector<128xf32>
    %660 = vector.multi_reduction <maximumf>, %659, %cst_129 [0] : vector<8x128xf32> to vector<128xf32>
    %661 = vector.shape_cast %660 : vector<128xf32> to vector<1x128xf32>
    %662 = vector.broadcast %661 : vector<1x128xf32> to vector<8x128xf32>
    %663 = arith.cmpf oge, %659, %662 : vector<8x128xf32>
    %c8_i32_130 = arith.constant 8 : i32
    %664 = vector.broadcast %c8_i32_130 : i32 to vector<8x128xi32>
    %665 = arith.select %663, %91, %664 : vector<8x128xi1>, vector<8x128xi32>
    %cst_131 = arith.constant dense<2147483647> : vector<128xi32>
    %666 = vector.multi_reduction <minsi>, %665, %cst_131 [0] : vector<8x128xi32> to vector<128xi32>
    %667 = vector.shape_cast %666 : vector<128xi32> to vector<1x128xi32>
    %c7_i32_132 = arith.constant 7 : i32
    %668 = vector.broadcast %c7_i32_132 : i32 to vector<1x128xi32>
    %669 = arith.minsi %667, %668 : vector<1x128xi32>
    %670 = vector.broadcast %661 : vector<1x128xf32> to vector<8x128xf32>
    %671 = arith.subf %659, %670 : vector<8x128xf32>
    %672 = math.exp %671 : vector<8x128xf32>
    %cst_133 = arith.constant dense<0.000000e+00> : vector<128xf32>
    %673 = vector.multi_reduction <add>, %672, %cst_133 [0] : vector<8x128xf32> to vector<128xf32>
    %674 = vector.shape_cast %673 : vector<128xf32> to vector<1x128xf32>
    %675 = math.log %674 : vector<1x128xf32>
    %cst_134 = arith.constant 0.000000e+00 : f32
    %676 = vector.broadcast %cst_134 : f32 to vector<1x128xf32>
    %677 = arith.subf %676, %675 : vector<1x128xf32>
    %678 = vector.broadcast %669 : vector<1x128xi32> to vector<8x128xi32>
    %679 = arith.cmpi eq, %91, %678 : vector<8x128xi32>
    %680 = arith.extui %679 : vector<8x128xi1> to vector<8x128xi32>
    %681 = arith.sitofp %680 : vector<8x128xi32> to vector<8x128xf32>
    %682 = vector.shape_cast %681 : vector<8x128xf32> to vector<8x1x128xf32>
    %683 = vector.broadcast %682 : vector<8x1x128xf32> to vector<8x2x128xf32>
    %684 = arith.mulf %0, %683 : vector<8x2x128xf32>
    %cst_135 = arith.constant dense<0.000000e+00> : vector<2x128xf32>
    %685 = vector.multi_reduction <add>, %684, %cst_135 [0] : vector<8x2x128xf32> to vector<2x128xf32>
    %686 = arith.index_cast %c5_i32 : i32 to index
    %c0_136 = arith.constant 0 : index
    %687 = vector.load %arg7[%686, %c0_136] : memref<8x128xi32, #tpu.memory_space<vmem>>, vector<1x128xi32>
    tpu.vector_store %arg7[%686, %c0_136], %669 {strides = array<i32>} : memref<8x128xi32, #tpu.memory_space<vmem>>, vector<1x128xi32>,
    %688 = arith.index_cast %c5_i32 : i32 to index
    %c0_137 = arith.constant 0 : index
    %689 = vector.load %arg8[%688, %c0_137] : memref<8x128xf32, #tpu.memory_space<vmem>>, vector<1x128xf32>
    tpu.vector_store %arg8[%688, %c0_137], %677 {strides = array<i32>} : memref<8x128xf32, #tpu.memory_space<vmem>>, vector<1x128xf32>,
    %c6_i32 = arith.constant 6 : i32
    %690 = vector.extract_strided_slice %685 {offsets = [0, 0], sizes = [1, 128], strides = [1, 1]} : vector<2x128xf32> to vector<1x128xf32>
    %691 = vector.broadcast %690 : vector<1x128xf32> to vector<96x128xf32>
    %692 = arith.mulf %25, %691 : vector<96x128xf32>
    %693 = arith.addf %16, %692 : vector<96x128xf32>
    %694 = vector.extract_strided_slice %685 {offsets = [1, 0], sizes = [1, 128], strides = [1, 1]} : vector<2x128xf32> to vector<1x128xf32>
    %695 = vector.broadcast %694 : vector<1x128xf32> to vector<96x128xf32>
    %696 = arith.mulf %28, %695 : vector<96x128xf32>
    %697 = arith.addf %693, %696 : vector<96x128xf32>
    %698 = vector.extract_strided_slice %697 {offsets = [0, 0], sizes = [32, 128], strides = [1, 1]} : vector<96x128xf32> to vector<32x128xf32>
    %699 = vector.extract_strided_slice %627 {offsets = [0, 0], sizes = [32, 128], strides = [1, 1]} : vector<96x128xf32> to vector<32x128xf32>
    %700 = arith.addf %698, %699 : vector<32x128xf32>
    %701 = arith.negf %700 : vector<32x128xf32>
    %702 = math.exp %701 : vector<32x128xf32>
    %cst_138 = arith.constant 1.000000e+00 : f32
    %703 = vector.broadcast %cst_138 : f32 to vector<32x128xf32>
    %704 = arith.addf %703, %702 : vector<32x128xf32>
    %705 = arith.divf %703, %704 : vector<32x128xf32>
    %706 = vector.extract_strided_slice %697 {offsets = [32, 0], sizes = [32, 128], strides = [1, 1]} : vector<96x128xf32> to vector<32x128xf32>
    %707 = vector.extract_strided_slice %627 {offsets = [32, 0], sizes = [32, 128], strides = [1, 1]} : vector<96x128xf32> to vector<32x128xf32>
    %708 = arith.addf %706, %707 : vector<32x128xf32>
    %709 = arith.negf %708 : vector<32x128xf32>
    %710 = math.exp %709 : vector<32x128xf32>
    %cst_139 = arith.constant 1.000000e+00 : f32
    %711 = vector.broadcast %cst_139 : f32 to vector<32x128xf32>
    %712 = arith.addf %711, %710 : vector<32x128xf32>
    %713 = arith.divf %711, %712 : vector<32x128xf32>
    %714 = vector.extract_strided_slice %697 {offsets = [64, 0], sizes = [32, 128], strides = [1, 1]} : vector<96x128xf32> to vector<32x128xf32>
    %715 = vector.extract_strided_slice %627 {offsets = [64, 0], sizes = [32, 128], strides = [1, 1]} : vector<96x128xf32> to vector<32x128xf32>
    %716 = arith.mulf %705, %715 : vector<32x128xf32>
    %717 = arith.addf %714, %716 : vector<32x128xf32>
    %718 = math.tanh %717 : vector<32x128xf32>
    %cst_140 = arith.constant 1.000000e+00 : f32
    %719 = vector.broadcast %cst_140 : f32 to vector<32x128xf32>
    %720 = arith.subf %719, %713 : vector<32x128xf32>
    %721 = arith.mulf %720, %718 : vector<32x128xf32>
    %722 = arith.mulf %713, %624 : vector<32x128xf32>
    %723 = arith.addf %721, %722 : vector<32x128xf32>
    %cst_141 = arith.constant dense<0.000000e+00> : vector<128x128xf32>
    %724 = tpu.matmul %14, %723, %cst_141 {dimension_numbers = #tpu.dot_dimension_numbers<[1], [0], [0], [1], [0, 0, 1, 1], [], []>} : vector<128x32xf32>, vector<32x128xf32>, vector<128x128xf32> -> vector<128x128xf32>
    %725 = vector.extract_strided_slice %724 {offsets = [0, 0], sizes = [96, 128], strides = [1, 1]} : vector<128x128xf32> to vector<96x128xf32>
    %726 = arith.addf %725, %18 : vector<96x128xf32>
    %727 = vector.extract_strided_slice %724 {offsets = [96, 0], sizes = [32, 128], strides = [1, 1]} : vector<128x128xf32> to vector<32x128xf32>
    %728 = vector.shape_cast %727 : vector<32x128xf32> to vector<1x32x128xf32>
    %729 = vector.broadcast %728 : vector<1x32x128xf32> to vector<8x32x128xf32>
    %730 = arith.addf %58, %729 : vector<8x32x128xf32>
    %731 = math.tanh %730 : vector<8x32x128xf32>
    %732 = vector.shape_cast %20 : vector<32x128xf32> to vector<1x32x128xf32>
    %733 = vector.broadcast %732 : vector<1x32x128xf32> to vector<8x32x128xf32>
    %734 = arith.mulf %733, %731 : vector<8x32x128xf32>
    %cst_142 = arith.constant dense<0.000000e+00> : vector<8x128xf32>
    %735 = vector.multi_reduction <add>, %734, %cst_142 [1] : vector<8x32x128xf32> to vector<8x128xf32>
    %cst_143 = arith.constant dense<0xFF800000> : vector<128xf32>
    %736 = vector.multi_reduction <maximumf>, %735, %cst_143 [0] : vector<8x128xf32> to vector<128xf32>
    %737 = vector.shape_cast %736 : vector<128xf32> to vector<1x128xf32>
    %738 = vector.broadcast %737 : vector<1x128xf32> to vector<8x128xf32>
    %739 = arith.subf %735, %738 : vector<8x128xf32>
    %740 = math.exp %739 : vector<8x128xf32>
    %cst_144 = arith.constant dense<0.000000e+00> : vector<128xf32>
    %741 = vector.multi_reduction <add>, %740, %cst_144 [0] : vector<8x128xf32> to vector<128xf32>
    %742 = vector.shape_cast %741 : vector<128xf32> to vector<1x128xf32>
    %743 = vector.broadcast %742 : vector<1x128xf32> to vector<8x128xf32>
    %744 = arith.divf %740, %743 : vector<8x128xf32>
    %cst_145 = arith.constant 0.000000e+00 : f32
    %745 = vector.broadcast %cst_145 : f32 to vector<32x128xf32>
    %746 = vector.shape_cast %744 : vector<8x128xf32> to vector<8x1x128xf32>
    %747 = vector.broadcast %746 : vector<8x1x128xf32> to vector<8x32x128xf32>
    %748 = arith.mulf %90, %747 : vector<8x32x128xf32>
    %cst_146 = arith.constant dense<0.000000e+00> : vector<32x128xf32>
    %749 = vector.multi_reduction <add>, %748, %cst_146 [0] : vector<8x32x128xf32> to vector<32x128xf32>
    %750 = arith.addf %745, %749 : vector<32x128xf32>
    %751 = vector.shape_cast %750 : vector<32x128xf32> to vector<1x32x128xf32>
    %752 = vector.broadcast %751 : vector<1x32x128xf32> to vector<8x32x128xf32>
    %753 = arith.addf %74, %752 : vector<8x32x128xf32>
    %754 = math.tanh %753 : vector<8x32x128xf32>
    %755 = vector.shape_cast %22 : vector<32x128xf32> to vector<1x32x128xf32>
    %756 = vector.broadcast %755 : vector<1x32x128xf32> to vector<8x32x128xf32>
    %757 = arith.mulf %756, %754 : vector<8x32x128xf32>
    %cst_147 = arith.constant dense<0.000000e+00> : vector<8x128xf32>
    %758 = vector.multi_reduction <add>, %757, %cst_147 [1] : vector<8x32x128xf32> to vector<8x128xf32>
    %cst_148 = arith.constant dense<0xFF800000> : vector<128xf32>
    %759 = vector.multi_reduction <maximumf>, %758, %cst_148 [0] : vector<8x128xf32> to vector<128xf32>
    %760 = vector.shape_cast %759 : vector<128xf32> to vector<1x128xf32>
    %761 = vector.broadcast %760 : vector<1x128xf32> to vector<8x128xf32>
    %762 = arith.cmpf oge, %758, %761 : vector<8x128xf32>
    %c8_i32_149 = arith.constant 8 : i32
    %763 = vector.broadcast %c8_i32_149 : i32 to vector<8x128xi32>
    %764 = arith.select %762, %91, %763 : vector<8x128xi1>, vector<8x128xi32>
    %cst_150 = arith.constant dense<2147483647> : vector<128xi32>
    %765 = vector.multi_reduction <minsi>, %764, %cst_150 [0] : vector<8x128xi32> to vector<128xi32>
    %766 = vector.shape_cast %765 : vector<128xi32> to vector<1x128xi32>
    %c7_i32_151 = arith.constant 7 : i32
    %767 = vector.broadcast %c7_i32_151 : i32 to vector<1x128xi32>
    %768 = arith.minsi %766, %767 : vector<1x128xi32>
    %769 = vector.broadcast %760 : vector<1x128xf32> to vector<8x128xf32>
    %770 = arith.subf %758, %769 : vector<8x128xf32>
    %771 = math.exp %770 : vector<8x128xf32>
    %cst_152 = arith.constant dense<0.000000e+00> : vector<128xf32>
    %772 = vector.multi_reduction <add>, %771, %cst_152 [0] : vector<8x128xf32> to vector<128xf32>
    %773 = vector.shape_cast %772 : vector<128xf32> to vector<1x128xf32>
    %774 = math.log %773 : vector<1x128xf32>
    %cst_153 = arith.constant 0.000000e+00 : f32
    %775 = vector.broadcast %cst_153 : f32 to vector<1x128xf32>
    %776 = arith.subf %775, %774 : vector<1x128xf32>
    %777 = vector.broadcast %768 : vector<1x128xi32> to vector<8x128xi32>
    %778 = arith.cmpi eq, %91, %777 : vector<8x128xi32>
    %779 = arith.extui %778 : vector<8x128xi1> to vector<8x128xi32>
    %780 = arith.sitofp %779 : vector<8x128xi32> to vector<8x128xf32>
    %781 = vector.shape_cast %780 : vector<8x128xf32> to vector<8x1x128xf32>
    %782 = vector.broadcast %781 : vector<8x1x128xf32> to vector<8x2x128xf32>
    %783 = arith.mulf %0, %782 : vector<8x2x128xf32>
    %cst_154 = arith.constant dense<0.000000e+00> : vector<2x128xf32>
    %784 = vector.multi_reduction <add>, %783, %cst_154 [0] : vector<8x2x128xf32> to vector<2x128xf32>
    %785 = arith.index_cast %c6_i32 : i32 to index
    %c0_155 = arith.constant 0 : index
    %786 = vector.load %arg7[%785, %c0_155] : memref<8x128xi32, #tpu.memory_space<vmem>>, vector<1x128xi32>
    tpu.vector_store %arg7[%785, %c0_155], %768 {strides = array<i32>} : memref<8x128xi32, #tpu.memory_space<vmem>>, vector<1x128xi32>,
    %787 = arith.index_cast %c6_i32 : i32 to index
    %c0_156 = arith.constant 0 : index
    %788 = vector.load %arg8[%787, %c0_156] : memref<8x128xf32, #tpu.memory_space<vmem>>, vector<1x128xf32>
    tpu.vector_store %arg8[%787, %c0_156], %776 {strides = array<i32>} : memref<8x128xf32, #tpu.memory_space<vmem>>, vector<1x128xf32>,
    %c7_i32_157 = arith.constant 7 : i32
    %789 = vector.extract_strided_slice %784 {offsets = [0, 0], sizes = [1, 128], strides = [1, 1]} : vector<2x128xf32> to vector<1x128xf32>
    %790 = vector.broadcast %789 : vector<1x128xf32> to vector<96x128xf32>
    %791 = arith.mulf %25, %790 : vector<96x128xf32>
    %792 = arith.addf %16, %791 : vector<96x128xf32>
    %793 = vector.extract_strided_slice %784 {offsets = [1, 0], sizes = [1, 128], strides = [1, 1]} : vector<2x128xf32> to vector<1x128xf32>
    %794 = vector.broadcast %793 : vector<1x128xf32> to vector<96x128xf32>
    %795 = arith.mulf %28, %794 : vector<96x128xf32>
    %796 = arith.addf %792, %795 : vector<96x128xf32>
    %797 = vector.extract_strided_slice %796 {offsets = [0, 0], sizes = [32, 128], strides = [1, 1]} : vector<96x128xf32> to vector<32x128xf32>
    %798 = vector.extract_strided_slice %726 {offsets = [0, 0], sizes = [32, 128], strides = [1, 1]} : vector<96x128xf32> to vector<32x128xf32>
    %799 = arith.addf %797, %798 : vector<32x128xf32>
    %800 = arith.negf %799 : vector<32x128xf32>
    %801 = math.exp %800 : vector<32x128xf32>
    %cst_158 = arith.constant 1.000000e+00 : f32
    %802 = vector.broadcast %cst_158 : f32 to vector<32x128xf32>
    %803 = arith.addf %802, %801 : vector<32x128xf32>
    %804 = arith.divf %802, %803 : vector<32x128xf32>
    %805 = vector.extract_strided_slice %796 {offsets = [32, 0], sizes = [32, 128], strides = [1, 1]} : vector<96x128xf32> to vector<32x128xf32>
    %806 = vector.extract_strided_slice %726 {offsets = [32, 0], sizes = [32, 128], strides = [1, 1]} : vector<96x128xf32> to vector<32x128xf32>
    %807 = arith.addf %805, %806 : vector<32x128xf32>
    %808 = arith.negf %807 : vector<32x128xf32>
    %809 = math.exp %808 : vector<32x128xf32>
    %cst_159 = arith.constant 1.000000e+00 : f32
    %810 = vector.broadcast %cst_159 : f32 to vector<32x128xf32>
    %811 = arith.addf %810, %809 : vector<32x128xf32>
    %812 = arith.divf %810, %811 : vector<32x128xf32>
    %813 = vector.extract_strided_slice %796 {offsets = [64, 0], sizes = [32, 128], strides = [1, 1]} : vector<96x128xf32> to vector<32x128xf32>
    %814 = vector.extract_strided_slice %726 {offsets = [64, 0], sizes = [32, 128], strides = [1, 1]} : vector<96x128xf32> to vector<32x128xf32>
    %815 = arith.mulf %804, %814 : vector<32x128xf32>
    %816 = arith.addf %813, %815 : vector<32x128xf32>
    %817 = math.tanh %816 : vector<32x128xf32>
    %cst_160 = arith.constant 1.000000e+00 : f32
    %818 = vector.broadcast %cst_160 : f32 to vector<32x128xf32>
    %819 = arith.subf %818, %812 : vector<32x128xf32>
    %820 = arith.mulf %819, %817 : vector<32x128xf32>
    %821 = arith.mulf %812, %723 : vector<32x128xf32>
    %822 = arith.addf %820, %821 : vector<32x128xf32>
    %cst_161 = arith.constant dense<0.000000e+00> : vector<128x128xf32>
    %823 = tpu.matmul %14, %822, %cst_161 {dimension_numbers = #tpu.dot_dimension_numbers<[1], [0], [0], [1], [0, 0, 1, 1], [], []>} : vector<128x32xf32>, vector<32x128xf32>, vector<128x128xf32> -> vector<128x128xf32>
    %824 = vector.extract_strided_slice %823 {offsets = [0, 0], sizes = [96, 128], strides = [1, 1]} : vector<128x128xf32> to vector<96x128xf32>
    %825 = arith.addf %824, %18 : vector<96x128xf32>
    %826 = vector.extract_strided_slice %823 {offsets = [96, 0], sizes = [32, 128], strides = [1, 1]} : vector<128x128xf32> to vector<32x128xf32>
    %827 = vector.shape_cast %826 : vector<32x128xf32> to vector<1x32x128xf32>
    %828 = vector.broadcast %827 : vector<1x32x128xf32> to vector<8x32x128xf32>
    %829 = arith.addf %58, %828 : vector<8x32x128xf32>
    %830 = math.tanh %829 : vector<8x32x128xf32>
    %831 = vector.shape_cast %20 : vector<32x128xf32> to vector<1x32x128xf32>
    %832 = vector.broadcast %831 : vector<1x32x128xf32> to vector<8x32x128xf32>
    %833 = arith.mulf %832, %830 : vector<8x32x128xf32>
    %cst_162 = arith.constant dense<0.000000e+00> : vector<8x128xf32>
    %834 = vector.multi_reduction <add>, %833, %cst_162 [1] : vector<8x32x128xf32> to vector<8x128xf32>
    %cst_163 = arith.constant dense<0xFF800000> : vector<128xf32>
    %835 = vector.multi_reduction <maximumf>, %834, %cst_163 [0] : vector<8x128xf32> to vector<128xf32>
    %836 = vector.shape_cast %835 : vector<128xf32> to vector<1x128xf32>
    %837 = vector.broadcast %836 : vector<1x128xf32> to vector<8x128xf32>
    %838 = arith.subf %834, %837 : vector<8x128xf32>
    %839 = math.exp %838 : vector<8x128xf32>
    %cst_164 = arith.constant dense<0.000000e+00> : vector<128xf32>
    %840 = vector.multi_reduction <add>, %839, %cst_164 [0] : vector<8x128xf32> to vector<128xf32>
    %841 = vector.shape_cast %840 : vector<128xf32> to vector<1x128xf32>
    %842 = vector.broadcast %841 : vector<1x128xf32> to vector<8x128xf32>
    %843 = arith.divf %839, %842 : vector<8x128xf32>
    %cst_165 = arith.constant 0.000000e+00 : f32
    %844 = vector.broadcast %cst_165 : f32 to vector<32x128xf32>
    %845 = vector.shape_cast %843 : vector<8x128xf32> to vector<8x1x128xf32>
    %846 = vector.broadcast %845 : vector<8x1x128xf32> to vector<8x32x128xf32>
    %847 = arith.mulf %90, %846 : vector<8x32x128xf32>
    %cst_166 = arith.constant dense<0.000000e+00> : vector<32x128xf32>
    %848 = vector.multi_reduction <add>, %847, %cst_166 [0] : vector<8x32x128xf32> to vector<32x128xf32>
    %849 = arith.addf %844, %848 : vector<32x128xf32>
    %850 = vector.shape_cast %849 : vector<32x128xf32> to vector<1x32x128xf32>
    %851 = vector.broadcast %850 : vector<1x32x128xf32> to vector<8x32x128xf32>
    %852 = arith.addf %74, %851 : vector<8x32x128xf32>
    %853 = math.tanh %852 : vector<8x32x128xf32>
    %854 = vector.shape_cast %22 : vector<32x128xf32> to vector<1x32x128xf32>
    %855 = vector.broadcast %854 : vector<1x32x128xf32> to vector<8x32x128xf32>
    %856 = arith.mulf %855, %853 : vector<8x32x128xf32>
    %cst_167 = arith.constant dense<0.000000e+00> : vector<8x128xf32>
    %857 = vector.multi_reduction <add>, %856, %cst_167 [1] : vector<8x32x128xf32> to vector<8x128xf32>
    %cst_168 = arith.constant dense<0xFF800000> : vector<128xf32>
    %858 = vector.multi_reduction <maximumf>, %857, %cst_168 [0] : vector<8x128xf32> to vector<128xf32>
    %859 = vector.shape_cast %858 : vector<128xf32> to vector<1x128xf32>
    %860 = vector.broadcast %859 : vector<1x128xf32> to vector<8x128xf32>
    %861 = arith.cmpf oge, %857, %860 : vector<8x128xf32>
    %c8_i32_169 = arith.constant 8 : i32
    %862 = vector.broadcast %c8_i32_169 : i32 to vector<8x128xi32>
    %863 = arith.select %861, %91, %862 : vector<8x128xi1>, vector<8x128xi32>
    %cst_170 = arith.constant dense<2147483647> : vector<128xi32>
    %864 = vector.multi_reduction <minsi>, %863, %cst_170 [0] : vector<8x128xi32> to vector<128xi32>
    %865 = vector.shape_cast %864 : vector<128xi32> to vector<1x128xi32>
    %c7_i32_171 = arith.constant 7 : i32
    %866 = vector.broadcast %c7_i32_171 : i32 to vector<1x128xi32>
    %867 = arith.minsi %865, %866 : vector<1x128xi32>
    %868 = vector.broadcast %859 : vector<1x128xf32> to vector<8x128xf32>
    %869 = arith.subf %857, %868 : vector<8x128xf32>
    %870 = math.exp %869 : vector<8x128xf32>
    %cst_172 = arith.constant dense<0.000000e+00> : vector<128xf32>
    %871 = vector.multi_reduction <add>, %870, %cst_172 [0] : vector<8x128xf32> to vector<128xf32>
    %872 = vector.shape_cast %871 : vector<128xf32> to vector<1x128xf32>
    %873 = math.log %872 : vector<1x128xf32>
    %cst_173 = arith.constant 0.000000e+00 : f32
    %874 = vector.broadcast %cst_173 : f32 to vector<1x128xf32>
    %875 = arith.subf %874, %873 : vector<1x128xf32>
    %876 = vector.broadcast %867 : vector<1x128xi32> to vector<8x128xi32>
    %877 = arith.cmpi eq, %91, %876 : vector<8x128xi32>
    %878 = arith.extui %877 : vector<8x128xi1> to vector<8x128xi32>
    %879 = arith.sitofp %878 : vector<8x128xi32> to vector<8x128xf32>
    %880 = vector.shape_cast %879 : vector<8x128xf32> to vector<8x1x128xf32>
    %881 = vector.broadcast %880 : vector<8x1x128xf32> to vector<8x2x128xf32>
    %882 = arith.mulf %0, %881 : vector<8x2x128xf32>
    %cst_174 = arith.constant dense<0.000000e+00> : vector<2x128xf32>
    %883 = vector.multi_reduction <add>, %882, %cst_174 [0] : vector<8x2x128xf32> to vector<2x128xf32>
    %884 = arith.index_cast %c7_i32_157 : i32 to index
    %c0_175 = arith.constant 0 : index
    %885 = vector.load %arg7[%884, %c0_175] : memref<8x128xi32, #tpu.memory_space<vmem>>, vector<1x128xi32>
    tpu.vector_store %arg7[%884, %c0_175], %867 {strides = array<i32>} : memref<8x128xi32, #tpu.memory_space<vmem>>, vector<1x128xi32>,
    %886 = arith.index_cast %c7_i32_157 : i32 to index
    %c0_176 = arith.constant 0 : index
    %887 = vector.load %arg8[%886, %c0_176] : memref<8x128xf32, #tpu.memory_space<vmem>>, vector<1x128xf32>
    tpu.vector_store %arg8[%886, %c0_176], %875 {strides = array<i32>} : memref<8x128xf32, #tpu.memory_space<vmem>>, vector<1x128xf32>,
    %c8_i32_177 = arith.constant 8 : i32
    return
  }
  func.func @transform_0(%arg0: i32) -> (i32, i32, i32) {
    %c0_i32 = arith.constant 0 : i32
    %c0_i32_0 = arith.constant 0 : i32
    %c0_i32_1 = arith.constant 0 : i32
    return %c0_i32, %c0_i32_0, %arg0 : i32, i32, i32
  }
  func.func @transform_1(%arg0: i32) -> (i32, i32, i32) {
    %c0_i32 = arith.constant 0 : i32
    %c0_i32_0 = arith.constant 0 : i32
    %c0_i32_1 = arith.constant 0 : i32
    return %c0_i32, %c0_i32_0, %arg0 : i32, i32, i32
  }
  func.func @transform_2(%arg0: i32) -> (i32, i32) {
    %c0_i32 = arith.constant 0 : i32
    %c0_i32_0 = arith.constant 0 : i32
    %c0_i32_1 = arith.constant 0 : i32
    return %c0_i32, %c0_i32_0 : i32, i32
  }
  func.func @transform_3(%arg0: i32) -> (i32, i32) {
    %c0_i32 = arith.constant 0 : i32
    %c0_i32_0 = arith.constant 0 : i32
    %c0_i32_1 = arith.constant 0 : i32
    return %c0_i32, %c0_i32_0 : i32, i32
  }
  func.func @transform_4(%arg0: i32) -> (i32, i32) {
    %c0_i32 = arith.constant 0 : i32
    %c0_i32_0 = arith.constant 0 : i32
    %c0_i32_1 = arith.constant 0 : i32
    return %c0_i32, %c0_i32_0 : i32, i32
  }
  func.func @transform_5(%arg0: i32) -> (i32, i32) {
    %c0_i32 = arith.constant 0 : i32
    %c0_i32_0 = arith.constant 0 : i32
    %c0_i32_1 = arith.constant 0 : i32
    return %c0_i32, %c0_i32_0 : i32, i32
  }
  func.func @transform_6(%arg0: i32) -> (i32, i32) {
    %c0_i32 = arith.constant 0 : i32
    %c0_i32_0 = arith.constant 0 : i32
    return %c0_i32, %arg0 : i32, i32
  }
  func.func @transform_7(%arg0: i32) -> (i32, i32) {
    %c0_i32 = arith.constant 0 : i32
    %c0_i32_0 = arith.constant 0 : i32
    return %c0_i32, %arg0 : i32, i32
  }
}

</mosaic_0001>

<llo_original>
// kernel: tpu_custom_call.1
$region0: #{tpu_custom_call.1}
  #allocation0 [shape = 'u32[]', space=smem, size = 0x4, offset = 0x4, fixed_abs, tag = 'smem constant byte address 0x4 - core index']
  #allocation1 [shape = 'u32[144,128]{1,0:T(1,128)}', space=vmem, size = 0x12000, scoped, tag = 'internal scratch']
  %s0 = inlined_call_operand.vmem [shape: f32[8,2,128], index: 0, kind: input, shape index: {}]
  %s1 = inlined_call_operand.vmem [shape: f32[8,2,128], index: 1, kind: input, shape index: {}]
  %s2 = inlined_call_operand.vmem [shape: f32[192,2], index: 2, kind: input, shape index: {}]
  %s3 = inlined_call_operand.vmem [shape: f32[32,2], index: 3, kind: input, shape index: {}]
  %s4 = inlined_call_operand.vmem [shape: f32[352,1], index: 4, kind: input, shape index: {}]
  %s5 = inlined_call_operand.vmem [shape: f32[128,32], index: 5, kind: input, shape index: {}]
  %s6 = inlined_call_operand.hbm [shape: s32[8,128], index: 6, kind: output, shape index: {0}]
  %s7 = inlined_call_operand.hbm [shape: f32[8,128], index: 7, kind: output, shape index: {1}]
  %8 = xla_tuple %s6, %s7
  %s9 = sld [smem:[#allocation0]]
  $region42: #{tpu_custom_call.1} parent=0
    _
  %s11 = ssub.s32 1, %s9
  %s12 = scalar_select 0, %s11, %s9
  $region1: #{tpu_custom_call.1} parent=0
    #allocation2 [shape = 'u8[4096]{0}', space=vmem, size = 0x1000, scoped, tag = 'output window, operand 0, single buffered']
    #allocation3 [shape = 's32[1]{0}', space=sflag, size = 0x4, scoped, tag = 'scoped memory for tpu_custom_call.1']
    #allocation4 [shape = 'u8[4096]{0}', space=vmem, size = 0x1000, scoped, tag = 'output window, operand 1, single buffered']
    #allocation5 [shape = 's32[1]{0}', space=sflag, size = 0x4, scoped, tag = 'scoped memory for tpu_custom_call.1']
    %13 = vsyncpa [#allocation3], 0
    %14 = vsyncpa [#allocation5], 0
    // Predicated region
    $region2: #{tpu_custom_call.1} parent=1 // pred_check
      _
    $region3: #{tpu_custom_call.1} parent=1 // pred_check_branch
      %16 = sbr.rel (0) target = $region5
    $region4: #{tpu_custom_call.1} parent=1 // pred_region
      _
    $region5: #{tpu_custom_call.1} parent=1 // pred_fallthru
      _
    // Predicated region
    $region6: #{tpu_custom_call.1} parent=1 // pred_check
      _
    $region7: #{tpu_custom_call.1} parent=1 // pred_check_branch
      %18 = sbr.rel (0) target = $region9
    $region8: #{tpu_custom_call.1} parent=1 // pred_region
      _
    $region9: #{tpu_custom_call.1} parent=1 // pred_fallthru
      _
    // Predicated region
    $region10: #{tpu_custom_call.1} parent=1 // pred_check
      _
    $region11: #{tpu_custom_call.1} parent=1 // pred_check_branch
      %20 = sbr.rel (0) target = $region13
    $region12: #{tpu_custom_call.1} parent=1 // pred_region
      _
    $region13: #{tpu_custom_call.1} parent=1 // pred_fallthru
      _
    // Predicated region
    $region14: #{tpu_custom_call.1} parent=1 // pred_check
      _
    $region15: #{tpu_custom_call.1} parent=1 // pred_check_branch
      %22 = sbr.rel (0) target = $region17
    $region16: #{tpu_custom_call.1} parent=1 // pred_region
      _
    $region17: #{tpu_custom_call.1} parent=1 // pred_fallthru
      _
    // Predicated region
    $region18: #{tpu_custom_call.1} parent=1 // pred_check
      _
    $region19: #{tpu_custom_call.1} parent=1 // pred_check_branch
      %24 = sbr.rel (0) target = $region21
    $region20: #{tpu_custom_call.1} parent=1 // pred_region
      _
    $region21: #{tpu_custom_call.1} parent=1 // pred_fallthru
      _
    // Predicated region
    $region22: #{tpu_custom_call.1} parent=1 // pred_check
      _
    $region23: #{tpu_custom_call.1} parent=1 // pred_check_branch
      %26 = sbr.rel (0) target = $region25
    $region24: #{tpu_custom_call.1} parent=1 // pred_region
      _
    $region25: #{tpu_custom_call.1} parent=1 // pred_fallthru
      _
    %v27 = vld [vmem:[%s0] sm:$0x3]
    %v28 = vld [vmem:[%s0 + $0x2] sm:$0x3]
    %v29 = vld [vmem:[%s0 + $0x4] sm:$0x3]
    %v30 = vld [vmem:[%s0 + $0x6] sm:$0x3]
    %v31 = vld [vmem:[%s0 + $0x8] sm:$0x3]
    %v32 = vld [vmem:[%s0 + $0xa] sm:$0x3]
    %v33 = vld [vmem:[%s0 + $0xc] sm:$0x3]
    %v34 = vld [vmem:[%s0 + $0xe] sm:$0x3]
    %v35 = vld [vmem:[%s1] sm:$0x3]
    %v36 = vld [vmem:[%s1 + $0x2] sm:$0x3]
    %v37 = vld [vmem:[%s1 + $0x4] sm:$0x3]
    %v38 = vld [vmem:[%s1 + $0x6] sm:$0x3]
    %v39 = vld [vmem:[%s1 + $0x8] sm:$0x3]
    %v40 = vld [vmem:[%s1 + $0xa] sm:$0x3]
    %v41 = vld [vmem:[%s1 + $0xc] sm:$0x3]
    %v42 = vld [vmem:[%s1 + $0xe] sm:$0x3]
    %v43 = vld [vmem:[%s2] sm:$0xff]
    %v44 = vld [vmem:[%s2 + $0x8] sm:$0xff]
    %v45 = vld [vmem:[%s2 + $0x10] sm:$0xff]
    %v46 = vld [vmem:[%s2 + $0x18] sm:$0xff]
    %v47 = vld [vmem:[%s2 + $0x20] sm:$0xff]
    %v48 = vld [vmem:[%s2 + $0x28] sm:$0xff]
    %v49 = vld [vmem:[%s2 + $0x30] sm:$0xff]
    %v50 = vld [vmem:[%s2 + $0x38] sm:$0xff]
    %v51 = vld [vmem:[%s2 + $0x40] sm:$0xff]
    %v52 = vld [vmem:[%s2 + $0x48] sm:$0xff]
    %v53 = vld [vmem:[%s2 + $0x50] sm:$0xff]
    %v54 = vld [vmem:[%s2 + $0x58] sm:$0xff]
    %v55 = vld [vmem:[%s2 + $0x60] sm:$0xff]
    %v56 = vld [vmem:[%s2 + $0x68] sm:$0xff]
    %v57 = vld [vmem:[%s2 + $0x70] sm:$0xff]
    %v58 = vld [vmem:[%s2 + $0x78] sm:$0xff]
    %v59 = vld [vmem:[%s2 + $0x80] sm:$0xff]
    %v60 = vld [vmem:[%s2 + $0x88] sm:$0xff]
    %v61 = vld [vmem:[%s2 + $0x90] sm:$0xff]
    %v62 = vld [vmem:[%s2 + $0x98] sm:$0xff]
    %v63 = vld [vmem:[%s2 + $0xa0] sm:$0xff]
    %v64 = vld [vmem:[%s2 + $0xa8] sm:$0xff]
    %v65 = vld [vmem:[%s2 + $0xb0] sm:$0xff]
    %v66 = vld [vmem:[%s2 + $0xb8] sm:$0xff]
    %v67 = vld [vmem:[%s3] sm:$0xff]
    %v68 = vld [vmem:[%s3 + $0x8] sm:$0xff]
    %v69 = vld [vmem:[%s3 + $0x10] sm:$0xff]
    %v70 = vld [vmem:[%s3 + $0x18] sm:$0xff]
    %v71 = vld [vmem:[%s4] sm:$0xff]
    %v72 = vld [vmem:[%s4 + $0x8] sm:$0xff]
    %v73 = vld [vmem:[%s4 + $0x10] sm:$0xff]
    %v74 = vld [vmem:[%s4 + $0x18] sm:$0xff]
    %v75 = vld [vmem:[%s4 + $0x20] sm:$0xff]
    %v76 = vld [vmem:[%s4 + $0x28] sm:$0xff]
    %v77 = vld [vmem:[%s4 + $0x30] sm:$0xff]
    %v78 = vld [vmem:[%s4 + $0x38] sm:$0xff]
    %v79 = vld [vmem:[%s4 + $0x40] sm:$0xff]
    %v80 = vld [vmem:[%s4 + $0x48] sm:$0xff]
    %v81 = vld [vmem:[%s4 + $0x50] sm:$0xff]
    %v82 = vld [vmem:[%s4 + $0x58] sm:$0xff]
    %v83 = vld [vmem:[%s4 + $0x60] sm:$0xff]
    %v84 = vld [vmem:[%s4 + $0x68] sm:$0xff]
    %v85 = vld [vmem:[%s4 + $0x70] sm:$0xff]
    %v86 = vld [vmem:[%s4 + $0x78] sm:$0xff]
    %v87 = vld [vmem:[%s4 + $0x80] sm:$0xff]
    %v88 = vld [vmem:[%s4 + $0x88] sm:$0xff]
    %v89 = vld [vmem:[%s4 + $0x90] sm:$0xff]
    %v90 = vld [vmem:[%s4 + $0x98] sm:$0xff]
    %v91 = vld [vmem:[%s4 + $0xa0] sm:$0xff]
    %v92 = vld [vmem:[%s4 + $0xa8] sm:$0xff]
    %v93 = vld [vmem:[%s4 + $0xb0] sm:$0xff]
    %v94 = vld [vmem:[%s4 + $0xb8] sm:$0xff]
    %v95 = vld [vmem:[%s4 + $0xc0] sm:$0xff]
    %v96 = vld [vmem:[%s4 + $0xc8] sm:$0xff]
    %v97 = vld [vmem:[%s4 + $0xd0] sm:$0xff]
    %v98 = vld [vmem:[%s4 + $0xd8] sm:$0xff]
    %v99 = vld [vmem:[%s4 + $0xe0] sm:$0xff]
    %v100 = vld [vmem:[%s4 + $0xe8] sm:$0xff]
    %v101 = vld [vmem:[%s4 + $0xf0] sm:$0xff]
    %v102 = vld [vmem:[%s4 + $0xf8] sm:$0xff]
    %v103 = vld [vmem:[%s4 + $0x100] sm:$0xff]
    %v104 = vld [vmem:[%s4 + $0x108] sm:$0xff]
    %v105 = vld [vmem:[%s4 + $0x110] sm:$0xff]
    %v106 = vld [vmem:[%s4 + $0x118] sm:$0xff]
    %v107 = vld [vmem:[%s4 + $0x120] sm:$0xff]
    %v108 = vld [vmem:[%s4 + $0x128] sm:$0xff]
    %v109 = vld [vmem:[%s4 + $0x130] sm:$0xff]
    %v110 = vld [vmem:[%s4 + $0x138] sm:$0xff]
    %v111 = vld [vmem:[%s4 + $0x140] sm:$0xff]
    %v112 = vld [vmem:[%s4 + $0x148] sm:$0xff]
    %v113 = vld [vmem:[%s4 + $0x150] sm:$0xff]
    %v114 = vld [vmem:[%s4 + $0x158] sm:$0xff]
    %v115 = vld [vmem:[%s5] sm:$0xff]
    %v116 = vld [vmem:[%s5 + $0x8] sm:$0xff]
    %v117 = vld [vmem:[%s5 + $0x10] sm:$0xff]
    %v118 = vld [vmem:[%s5 + $0x18] sm:$0xff]
    %v119 = vld [vmem:[%s5 + $0x20] sm:$0xff]
    %v120 = vld [vmem:[%s5 + $0x28] sm:$0xff]
    %v121 = vld [vmem:[%s5 + $0x30] sm:$0xff]
    %v122 = vld [vmem:[%s5 + $0x38] sm:$0xff]
    %v123 = vld [vmem:[%s5 + $0x40] sm:$0xff]
    %v124 = vld [vmem:[%s5 + $0x48] sm:$0xff]
    %v125 = vld [vmem:[%s5 + $0x50] sm:$0xff]
    %v126 = vld [vmem:[%s5 + $0x58] sm:$0xff]
    %v127 = vld [vmem:[%s5 + $0x60] sm:$0xff]
    %v128 = vld [vmem:[%s5 + $0x68] sm:$0xff]
    %v129 = vld [vmem:[%s5 + $0x70] sm:$0xff]
    %v130 = vld [vmem:[%s5 + $0x78] sm:$0xff]
    %132 = vset.pattern.permute.xlu0 0
    %133 = vperm.xlu0 %132, %v83
    %v134 = vpop.permute.xlu0 %133
    %137 = vset.pattern.permute.xlu0 0
    %138 = vperm.xlu0 %137, %v84
    %v139 = vpop.permute.xlu0 %138
    %142 = vset.pattern.permute.xlu0 0
    %143 = vperm.xlu0 %142, %v85
    %v144 = vpop.permute.xlu0 %143
    %147 = vset.pattern.permute.xlu0 0
    %148 = vperm.xlu0 %147, %v86
    %v149 = vpop.permute.xlu0 %148
    %152 = vset.pattern.permute.xlu0 0
    %153 = vperm.xlu0 %152, %v87
    %v154 = vpop.permute.xlu0 %153
    %157 = vset.pattern.permute.xlu0 0
    %158 = vperm.xlu0 %157, %v88
    %v159 = vpop.permute.xlu0 %158
    %162 = vset.pattern.permute.xlu0 0
    %163 = vperm.xlu0 %162, %v89
    %v164 = vpop.permute.xlu0 %163
    %167 = vset.pattern.permute.xlu0 0
    %168 = vperm.xlu0 %167, %v90
    %v169 = vpop.permute.xlu0 %168
    %172 = vset.pattern.permute.xlu0 0
    %173 = vperm.xlu0 %172, %v91
    %v174 = vpop.permute.xlu0 %173
    %177 = vset.pattern.permute.xlu0 0
    %178 = vperm.xlu0 %177, %v92
    %v179 = vpop.permute.xlu0 %178
    %182 = vset.pattern.permute.xlu0 0
    %183 = vperm.xlu0 %182, %v93
    %v184 = vpop.permute.xlu0 %183
    %187 = vset.pattern.permute.xlu0 0
    %188 = vperm.xlu0 %187, %v94
    %v189 = vpop.permute.xlu0 %188
    %192 = vset.pattern.permute.xlu0 0
    %193 = vperm.xlu0 %192, %v95
    %v194 = vpop.permute.xlu0 %193
    %197 = vset.pattern.permute.xlu0 0
    %198 = vperm.xlu0 %197, %v96
    %v199 = vpop.permute.xlu0 %198
    %202 = vset.pattern.permute.xlu0 0
    %203 = vperm.xlu0 %202, %v97
    %v204 = vpop.permute.xlu0 %203
    %207 = vset.pattern.permute.xlu0 0
    %208 = vperm.xlu0 %207, %v98
    %v209 = vpop.permute.xlu0 %208
    %212 = vset.pattern.permute.xlu0 0
    %213 = vperm.xlu0 %212, %v99
    %v214 = vpop.permute.xlu0 %213
    %217 = vset.pattern.permute.xlu0 0
    %218 = vperm.xlu0 %217, %v100
    %v219 = vpop.permute.xlu0 %218
    %222 = vset.pattern.permute.xlu0 0
    %223 = vperm.xlu0 %222, %v101
    %v224 = vpop.permute.xlu0 %223
    %227 = vset.pattern.permute.xlu0 0
    %228 = vperm.xlu0 %227, %v102
    %v229 = vpop.permute.xlu0 %228
    %232 = vset.pattern.permute.xlu0 0
    %233 = vperm.xlu0 %232, %v103
    %v234 = vpop.permute.xlu0 %233
    %237 = vset.pattern.permute.xlu0 0
    %238 = vperm.xlu0 %237, %v104
    %v239 = vpop.permute.xlu0 %238
    %242 = vset.pattern.permute.xlu0 0
    %243 = vperm.xlu0 %242, %v105
    %v244 = vpop.permute.xlu0 %243
    %247 = vset.pattern.permute.xlu0 0
    %248 = vperm.xlu0 %247, %v106
    %v249 = vpop.permute.xlu0 %248
    %252 = vset.pattern.permute.xlu0 0
    %253 = vperm.xlu0 %252, %v55
    %v254 = vpop.permute.xlu0 %253
    %257 = vset.pattern.permute.xlu0 0
    %258 = vperm.xlu0 %257, %v56
    %v259 = vpop.permute.xlu0 %258
    %262 = vset.pattern.permute.xlu0 0
    %263 = vperm.xlu0 %262, %v57
    %v264 = vpop.permute.xlu0 %263
    %267 = vset.pattern.permute.xlu0 0
    %268 = vperm.xlu0 %267, %v58
    %v269 = vpop.permute.xlu0 %268
    %272 = vset.pattern.permute.xlu0 0
    %273 = vperm.xlu0 %272, %v59
    %v274 = vpop.permute.xlu0 %273
    %277 = vset.pattern.permute.xlu0 0
    %278 = vperm.xlu0 %277, %v60
    %v279 = vpop.permute.xlu0 %278
    %282 = vset.pattern.permute.xlu0 0
    %283 = vperm.xlu0 %282, %v61
    %v284 = vpop.permute.xlu0 %283
    %287 = vset.pattern.permute.xlu0 0
    %288 = vperm.xlu0 %287, %v62
    %v289 = vpop.permute.xlu0 %288
    %292 = vset.pattern.permute.xlu0 0
    %293 = vperm.xlu0 %292, %v63
    %v294 = vpop.permute.xlu0 %293
    %297 = vset.pattern.permute.xlu0 0
    %298 = vperm.xlu0 %297, %v64
    %v299 = vpop.permute.xlu0 %298
    %302 = vset.pattern.permute.xlu0 0
    %303 = vperm.xlu0 %302, %v65
    %v304 = vpop.permute.xlu0 %303
    %307 = vset.pattern.permute.xlu0 0
    %308 = vperm.xlu0 %307, %v66
    %v309 = vpop.permute.xlu0 %308
    %311 = vset.pattern.permute.xlu0 1
    %312 = vperm.xlu0 %311, %v55
    %v313 = vpop.permute.xlu0 %312
    %315 = vset.pattern.permute.xlu0 1
    %316 = vperm.xlu0 %315, %v56
    %v317 = vpop.permute.xlu0 %316
    %319 = vset.pattern.permute.xlu0 1
    %320 = vperm.xlu0 %319, %v57
    %v321 = vpop.permute.xlu0 %320
    %323 = vset.pattern.permute.xlu0 1
    %324 = vperm.xlu0 %323, %v58
    %v325 = vpop.permute.xlu0 %324
    %327 = vset.pattern.permute.xlu0 1
    %328 = vperm.xlu0 %327, %v59
    %v329 = vpop.permute.xlu0 %328
    %331 = vset.pattern.permute.xlu0 1
    %332 = vperm.xlu0 %331, %v60
    %v333 = vpop.permute.xlu0 %332
    %335 = vset.pattern.permute.xlu0 1
    %336 = vperm.xlu0 %335, %v61
    %v337 = vpop.permute.xlu0 %336
    %339 = vset.pattern.permute.xlu0 1
    %340 = vperm.xlu0 %339, %v62
    %v341 = vpop.permute.xlu0 %340
    %343 = vset.pattern.permute.xlu0 1
    %344 = vperm.xlu0 %343, %v63
    %v345 = vpop.permute.xlu0 %344
    %347 = vset.pattern.permute.xlu0 1
    %348 = vperm.xlu0 %347, %v64
    %v349 = vpop.permute.xlu0 %348
    %351 = vset.pattern.permute.xlu0 1
    %352 = vperm.xlu0 %351, %v65
    %v353 = vpop.permute.xlu0 %352
    %355 = vset.pattern.permute.xlu0 1
    %356 = vperm.xlu0 %355, %v66
    %v357 = vpop.permute.xlu0 %356
    %360 = vset.pattern.permute.xlu0 0
    %361 = vperm.xlu0 %360, %v43
    %v362 = vpop.permute.xlu0 %361
    %365 = vset.pattern.permute.xlu0 0
    %366 = vperm.xlu0 %365, %v44
    %v367 = vpop.permute.xlu0 %366
    %370 = vset.pattern.permute.xlu0 0
    %371 = vperm.xlu0 %370, %v45
    %v372 = vpop.permute.xlu0 %371
    %375 = vset.pattern.permute.xlu0 0
    %376 = vperm.xlu0 %375, %v46
    %v377 = vpop.permute.xlu0 %376
    %v379 = vlaneseq
    %v380 = vshrl.u32 %v379, 7
    %v381 = vsub.s32 0, %v380
    %v382 = vrot.slane %v27, %v381
    %v383 = vlaneseq
    %v384 = vshrl.u32 %v383, 7
    %v385 = vsub.s32 0, %v384
    %v386 = vrot.slane %v28, %v385
    %v387 = vlaneseq
    %v388 = vshrl.u32 %v387, 7
    %v389 = vsub.s32 0, %v388
    %v390 = vrot.slane %v29, %v389
    %v391 = vlaneseq
    %v392 = vshrl.u32 %v391, 7
    %v393 = vsub.s32 0, %v392
    %v394 = vrot.slane %v30, %v393
    %v395 = vlaneseq
    %v396 = vshrl.u32 %v395, 7
    %v397 = vsub.s32 0, %v396
    %v398 = vrot.slane %v31, %v397
    %v399 = vlaneseq
    %v400 = vshrl.u32 %v399, 7
    %v401 = vsub.s32 0, %v400
    %v402 = vrot.slane %v32, %v401
    %v403 = vlaneseq
    %v404 = vshrl.u32 %v403, 7
    %v405 = vsub.s32 0, %v404
    %v406 = vrot.slane %v33, %v405
    %v407 = vlaneseq
    %v408 = vshrl.u32 %v407, 7
    %v409 = vsub.s32 0, %v408
    %v410 = vrot.slane %v34, %v409
    %v411 = vmul.f32 %v362, %v382
    %v412 = vmul.f32 %v367, %v382
    %v413 = vmul.f32 %v372, %v382
    %v414 = vmul.f32 %v377, %v382
    %v415 = vmul.f32 %v362, %v386
    %v416 = vmul.f32 %v367, %v386
    %v417 = vmul.f32 %v372, %v386
    %v418 = vmul.f32 %v377, %v386
    %v419 = vmul.f32 %v362, %v390
    %v420 = vmul.f32 %v367, %v390
    %v421 = vmul.f32 %v372, %v390
    %v422 = vmul.f32 %v377, %v390
    %v423 = vmul.f32 %v362, %v394
    %v424 = vmul.f32 %v367, %v394
    %v425 = vmul.f32 %v372, %v394
    %v426 = vmul.f32 %v377, %v394
    %v427 = vmul.f32 %v362, %v398
    %v428 = vmul.f32 %v367, %v398
    %v429 = vmul.f32 %v372, %v398
    %v430 = vmul.f32 %v377, %v398
    %v431 = vmul.f32 %v362, %v402
    %v432 = vmul.f32 %v367, %v402
    %v433 = vmul.f32 %v372, %v402
    %v434 = vmul.f32 %v377, %v402
    %v435 = vmul.f32 %v362, %v406
    %v436 = vmul.f32 %v367, %v406
    %v437 = vmul.f32 %v372, %v406
    %v438 = vmul.f32 %v377, %v406
    %v439 = vmul.f32 %v362, %v410
    %v440 = vmul.f32 %v367, %v410
    %v441 = vmul.f32 %v372, %v410
    %v442 = vmul.f32 %v377, %v410
    %443 = vset.pattern.permute.xlu0 1
    %444 = vperm.xlu0 %443, %v43
    %v445 = vpop.permute.xlu0 %444
    %447 = vset.pattern.permute.xlu0 1
    %448 = vperm.xlu0 %447, %v44
    %v449 = vpop.permute.xlu0 %448
    %451 = vset.pattern.permute.xlu0 1
    %452 = vperm.xlu0 %451, %v45
    %v453 = vpop.permute.xlu0 %452
    %455 = vset.pattern.permute.xlu0 1
    %456 = vperm.xlu0 %455, %v46
    %v457 = vpop.permute.xlu0 %456
    %v459 = vlaneseq
    %v460 = vshrl.u32 %v459, 7
    %v461 = vsub.s32 1, %v460
    %v462 = vrot.slane %v27, %v461
    %v463 = vlaneseq
    %v464 = vshrl.u32 %v463, 7
    %v465 = vsub.s32 1, %v464
    %v466 = vrot.slane %v28, %v465
    %v467 = vlaneseq
    %v468 = vshrl.u32 %v467, 7
    %v469 = vsub.s32 1, %v468
    %v470 = vrot.slane %v29, %v469
    %v471 = vlaneseq
    %v472 = vshrl.u32 %v471, 7
    %v473 = vsub.s32 1, %v472
    %v474 = vrot.slane %v30, %v473
    %v475 = vlaneseq
    %v476 = vshrl.u32 %v475, 7
    %v477 = vsub.s32 1, %v476
    %v478 = vrot.slane %v31, %v477
    %v479 = vlaneseq
    %v480 = vshrl.u32 %v479, 7
    %v481 = vsub.s32 1, %v480
    %v482 = vrot.slane %v32, %v481
    %v483 = vlaneseq
    %v484 = vshrl.u32 %v483, 7
    %v485 = vsub.s32 1, %v484
    %v486 = vrot.slane %v33, %v485
    %v487 = vlaneseq
    %v488 = vshrl.u32 %v487, 7
    %v489 = vsub.s32 1, %v488
    %v490 = vrot.slane %v34, %v489
    %v491 = vmul.f32 %v445, %v462
    %v492 = vmul.f32 %v449, %v462
    %v493 = vmul.f32 %v453, %v462
    %v494 = vmul.f32 %v457, %v462
    %v495 = vmul.f32 %v445, %v466
    %v496 = vmul.f32 %v449, %v466
    %v497 = vmul.f32 %v453, %v466
    %v498 = vmul.f32 %v457, %v466
    %v499 = vmul.f32 %v445, %v470
    %v500 = vmul.f32 %v449, %v470
    %v501 = vmul.f32 %v453, %v470
    %v502 = vmul.f32 %v457, %v470
    %v503 = vmul.f32 %v445, %v474
    %v504 = vmul.f32 %v449, %v474
    %v505 = vmul.f32 %v453, %v474
    %v506 = vmul.f32 %v457, %v474
    %v507 = vmul.f32 %v445, %v478
    %v508 = vmul.f32 %v449, %v478
    %v509 = vmul.f32 %v453, %v478
    %v510 = vmul.f32 %v457, %v478
    %v511 = vmul.f32 %v445, %v482
    %v512 = vmul.f32 %v449, %v482
    %v513 = vmul.f32 %v453, %v482
    %v514 = vmul.f32 %v457, %v482
    %v515 = vmul.f32 %v445, %v486
    %v516 = vmul.f32 %v449, %v486
    %v517 = vmul.f32 %v453, %v486
    %v518 = vmul.f32 %v457, %v486
    %v519 = vmul.f32 %v445, %v490
    %v520 = vmul.f32 %v449, %v490
    %v521 = vmul.f32 %v453, %v490
    %v522 = vmul.f32 %v457, %v490
    %v523 = vadd.f32 %v411, %v491
    %v524 = vadd.f32 %v412, %v492
    %v525 = vadd.f32 %v413, %v493
    %v526 = vadd.f32 %v414, %v494
    %v527 = vadd.f32 %v415, %v495
    %v528 = vadd.f32 %v416, %v496
    %v529 = vadd.f32 %v417, %v497
    %v530 = vadd.f32 %v418, %v498
    %v531 = vadd.f32 %v419, %v499
    %v532 = vadd.f32 %v420, %v500
    %v533 = vadd.f32 %v421, %v501
    %v534 = vadd.f32 %v422, %v502
    %v535 = vadd.f32 %v423, %v503
    %v536 = vadd.f32 %v424, %v504
    %v537 = vadd.f32 %v425, %v505
    %v538 = vadd.f32 %v426, %v506
    %v539 = vadd.f32 %v427, %v507
    %v540 = vadd.f32 %v428, %v508
    %v541 = vadd.f32 %v429, %v509
    %v542 = vadd.f32 %v430, %v510
    %v543 = vadd.f32 %v431, %v511
    %v544 = vadd.f32 %v432, %v512
    %v545 = vadd.f32 %v433, %v513
    %v546 = vadd.f32 %v434, %v514
    %v547 = vadd.f32 %v435, %v515
    %v548 = vadd.f32 %v436, %v516
    %v549 = vadd.f32 %v437, %v517
    %v550 = vadd.f32 %v438, %v518
    %v551 = vadd.f32 %v439, %v519
    %v552 = vadd.f32 %v440, %v520
    %v553 = vadd.f32 %v441, %v521
    %v554 = vadd.f32 %v442, %v522
    %556 = vset.pattern.permute.xlu0 0
    %557 = vperm.xlu0 %556, %v71
    %v558 = vpop.permute.xlu0 %557
    %561 = vset.pattern.permute.xlu0 0
    %562 = vperm.xlu0 %561, %v72
    %v563 = vpop.permute.xlu0 %562
    %566 = vset.pattern.permute.xlu0 0
    %567 = vperm.xlu0 %566, %v73
    %v568 = vpop.permute.xlu0 %567
    %571 = vset.pattern.permute.xlu0 0
    %572 = vperm.xlu0 %571, %v74
    %v573 = vpop.permute.xlu0 %572
    %v575 = vadd.f32 %v523, %v558
    %v576 = vadd.f32 %v524, %v563
    %v577 = vadd.f32 %v525, %v568
    %v578 = vadd.f32 %v526, %v573
    %v579 = vadd.f32 %v527, %v558
    %v580 = vadd.f32 %v528, %v563
    %v581 = vadd.f32 %v529, %v568
    %v582 = vadd.f32 %v530, %v573
    %v583 = vadd.f32 %v531, %v558
    %v584 = vadd.f32 %v532, %v563
    %v585 = vadd.f32 %v533, %v568
    %v586 = vadd.f32 %v534, %v573
    %v587 = vadd.f32 %v535, %v558
    %v588 = vadd.f32 %v536, %v563
    %v589 = vadd.f32 %v537, %v568
    %v590 = vadd.f32 %v538, %v573
    %v591 = vadd.f32 %v539, %v558
    %v592 = vadd.f32 %v540, %v563
    %v593 = vadd.f32 %v541, %v568
    %v594 = vadd.f32 %v542, %v573
    %v595 = vadd.f32 %v543, %v558
    %v596 = vadd.f32 %v544, %v563
    %v597 = vadd.f32 %v545, %v568
    %v598 = vadd.f32 %v546, %v573
    %v599 = vadd.f32 %v547, %v558
    %v600 = vadd.f32 %v548, %v563
    %v601 = vadd.f32 %v549, %v568
    %v602 = vadd.f32 %v550, %v573
    %v603 = vadd.f32 %v551, %v558
    %v604 = vadd.f32 %v552, %v563
    %v605 = vadd.f32 %v553, %v568
    %v606 = vadd.f32 %v554, %v573
    %608 = vset.pattern.permute.xlu0 0
    %609 = vperm.xlu0 %608, %v67
    %v610 = vpop.permute.xlu0 %609
    %613 = vset.pattern.permute.xlu0 0
    %614 = vperm.xlu0 %613, %v68
    %v615 = vpop.permute.xlu0 %614
    %618 = vset.pattern.permute.xlu0 0
    %619 = vperm.xlu0 %618, %v69
    %v620 = vpop.permute.xlu0 %619
    %623 = vset.pattern.permute.xlu0 0
    %624 = vperm.xlu0 %623, %v70
    %v625 = vpop.permute.xlu0 %624
    %v627 = vlaneseq
    %v628 = vshrl.u32 %v627, 7
    %v629 = vsub.s32 0, %v628
    %v630 = vrot.slane %v35, %v629
    %v631 = vlaneseq
    %v632 = vshrl.u32 %v631, 7
    %v633 = vsub.s32 0, %v632
    %v634 = vrot.slane %v36, %v633
    %v635 = vlaneseq
    %v636 = vshrl.u32 %v635, 7
    %v637 = vsub.s32 0, %v636
    %v638 = vrot.slane %v37, %v637
    %v639 = vlaneseq
    %v640 = vshrl.u32 %v639, 7
    %v641 = vsub.s32 0, %v640
    %v642 = vrot.slane %v38, %v641
    %v643 = vlaneseq
    %v644 = vshrl.u32 %v643, 7
    %v645 = vsub.s32 0, %v644
    %v646 = vrot.slane %v39, %v645
    %v647 = vlaneseq
    %v648 = vshrl.u32 %v647, 7
    %v649 = vsub.s32 0, %v648
    %v650 = vrot.slane %v40, %v649
    %v651 = vlaneseq
    %v652 = vshrl.u32 %v651, 7
    %v653 = vsub.s32 0, %v652
    %v654 = vrot.slane %v41, %v653
    %v655 = vlaneseq
    %v656 = vshrl.u32 %v655, 7
    %v657 = vsub.s32 0, %v656
    %v658 = vrot.slane %v42, %v657
    %v659 = vmul.f32 %v610, %v630
    %v660 = vmul.f32 %v615, %v630
    %v661 = vmul.f32 %v620, %v630
    %v662 = vmul.f32 %v625, %v630
    %v663 = vmul.f32 %v610, %v634
    %v664 = vmul.f32 %v615, %v634
    %v665 = vmul.f32 %v620, %v634
    %v666 = vmul.f32 %v625, %v634
    %v667 = vmul.f32 %v610, %v638
    %v668 = vmul.f32 %v615, %v638
    %v669 = vmul.f32 %v620, %v638
    %v670 = vmul.f32 %v625, %v638
    %v671 = vmul.f32 %v610, %v642
    %v672 = vmul.f32 %v615, %v642
    %v673 = vmul.f32 %v620, %v642
    %v674 = vmul.f32 %v625, %v642
    %v675 = vmul.f32 %v610, %v646
    %v676 = vmul.f32 %v615, %v646
    %v677 = vmul.f32 %v620, %v646
    %v678 = vmul.f32 %v625, %v646
    %v679 = vmul.f32 %v610, %v650
    %v680 = vmul.f32 %v615, %v650
    %v681 = vmul.f32 %v620, %v650
    %v682 = vmul.f32 %v625, %v650
    %v683 = vmul.f32 %v610, %v654
    %v684 = vmul.f32 %v615, %v654
    %v685 = vmul.f32 %v620, %v654
    %v686 = vmul.f32 %v625, %v654
    %v687 = vmul.f32 %v610, %v658
    %v688 = vmul.f32 %v615, %v658
    %v689 = vmul.f32 %v620, %v658
    %v690 = vmul.f32 %v625, %v658
    %v691 = vadd.f32 %v575, %v659
    %v692 = vadd.f32 %v576, %v660
    %v693 = vadd.f32 %v577, %v661
    %v694 = vadd.f32 %v578, %v662
    %v695 = vadd.f32 %v579, %v663
    %v696 = vadd.f32 %v580, %v664
    %v697 = vadd.f32 %v581, %v665
    %v698 = vadd.f32 %v582, %v666
    %v699 = vadd.f32 %v583, %v667
    %v700 = vadd.f32 %v584, %v668
    %v701 = vadd.f32 %v585, %v669
    %v702 = vadd.f32 %v586, %v670
    %v703 = vadd.f32 %v587, %v671
    %v704 = vadd.f32 %v588, %v672
    %v705 = vadd.f32 %v589, %v673
    %v706 = vadd.f32 %v590, %v674
    %v707 = vadd.f32 %v591, %v675
    %v708 = vadd.f32 %v592, %v676
    %v709 = vadd.f32 %v593, %v677
    %v710 = vadd.f32 %v594, %v678
    %v711 = vadd.f32 %v595, %v679
    %v712 = vadd.f32 %v596, %v680
    %v713 = vadd.f32 %v597, %v681
    %v714 = vadd.f32 %v598, %v682
    %v715 = vadd.f32 %v599, %v683
    %v716 = vadd.f32 %v600, %v684
    %v717 = vadd.f32 %v601, %v685
    %v718 = vadd.f32 %v602, %v686
    %v719 = vadd.f32 %v603, %v687
    %v720 = vadd.f32 %v604, %v688
    %v721 = vadd.f32 %v605, %v689
    %v722 = vadd.f32 %v606, %v690
    %723 = vset.pattern.permute.xlu0 1
    %724 = vperm.xlu0 %723, %v67
    %v725 = vpop.permute.xlu0 %724
    %727 = vset.pattern.permute.xlu0 1
    %728 = vperm.xlu0 %727, %v68
    %v729 = vpop.permute.xlu0 %728
    %731 = vset.pattern.permute.xlu0 1
    %732 = vperm.xlu0 %731, %v69
    %v733 = vpop.permute.xlu0 %732
    %735 = vset.pattern.permute.xlu0 1
    %736 = vperm.xlu0 %735, %v70
    %v737 = vpop.permute.xlu0 %736
    %v739 = vlaneseq
    %v740 = vshrl.u32 %v739, 7
    %v741 = vsub.s32 1, %v740
    %v742 = vrot.slane %v35, %v741
    %v743 = vlaneseq
    %v744 = vshrl.u32 %v743, 7
    %v745 = vsub.s32 1, %v744
    %v746 = vrot.slane %v36, %v745
    %v747 = vlaneseq
    %v748 = vshrl.u32 %v747, 7
    %v749 = vsub.s32 1, %v748
    %v750 = vrot.slane %v37, %v749
    %v751 = vlaneseq
    %v752 = vshrl.u32 %v751, 7
    %v753 = vsub.s32 1, %v752
    %v754 = vrot.slane %v38, %v753
    %v755 = vlaneseq
    %v756 = vshrl.u32 %v755, 7
    %v757 = vsub.s32 1, %v756
    %v758 = vrot.slane %v39, %v757
    %v759 = vlaneseq
    %v760 = vshrl.u32 %v759, 7
    %v761 = vsub.s32 1, %v760
    %v762 = vrot.slane %v40, %v761
    %v763 = vlaneseq
    %v764 = vshrl.u32 %v763, 7
    %v765 = vsub.s32 1, %v764
    %v766 = vrot.slane %v41, %v765
    %v767 = vlaneseq
    %v768 = vshrl.u32 %v767, 7
    %v769 = vsub.s32 1, %v768
    %v770 = vrot.slane %v42, %v769
    %v771 = vmul.f32 %v725, %v742
    %v772 = vmul.f32 %v729, %v742
    %v773 = vmul.f32 %v733, %v742
    %v774 = vmul.f32 %v737, %v742
    %v775 = vmul.f32 %v725, %v746
    %v776 = vmul.f32 %v729, %v746
    %v777 = vmul.f32 %v733, %v746
    %v778 = vmul.f32 %v737, %v746
    %v779 = vmul.f32 %v725, %v750
    %v780 = vmul.f32 %v729, %v750
    %v781 = vmul.f32 %v733, %v750
    %v782 = vmul.f32 %v737, %v750
    %v783 = vmul.f32 %v725, %v754
    %v784 = vmul.f32 %v729, %v754
    %v785 = vmul.f32 %v733, %v754
    %v786 = vmul.f32 %v737, %v754
    %v787 = vmul.f32 %v725, %v758
    %v788 = vmul.f32 %v729, %v758
    %v789 = vmul.f32 %v733, %v758
    %v790 = vmul.f32 %v737, %v758
    %v791 = vmul.f32 %v725, %v762
    %v792 = vmul.f32 %v729, %v762
    %v793 = vmul.f32 %v733, %v762
    %v794 = vmul.f32 %v737, %v762
    %v795 = vmul.f32 %v725, %v766
    %v796 = vmul.f32 %v729, %v766
    %v797 = vmul.f32 %v733, %v766
    %v798 = vmul.f32 %v737, %v766
    %v799 = vmul.f32 %v725, %v770
    %v800 = vmul.f32 %v729, %v770
    %v801 = vmul.f32 %v733, %v770
    %v802 = vmul.f32 %v737, %v770
    %v803 = vadd.f32 %v691, %v771
    %v804 = vadd.f32 %v692, %v772
    %v805 = vadd.f32 %v693, %v773
    %v806 = vadd.f32 %v694, %v774
    %v807 = vadd.f32 %v695, %v775
    %v808 = vadd.f32 %v696, %v776
    %v809 = vadd.f32 %v697, %v777
    %v810 = vadd.f32 %v698, %v778
    %v811 = vadd.f32 %v699, %v779
    %v812 = vadd.f32 %v700, %v780
    %v813 = vadd.f32 %v701, %v781
    %v814 = vadd.f32 %v702, %v782
    %v815 = vadd.f32 %v703, %v783
    %v816 = vadd.f32 %v704, %v784
    %v817 = vadd.f32 %v705, %v785
    %v818 = vadd.f32 %v706, %v786
    %v819 = vadd.f32 %v707, %v787
    %v820 = vadd.f32 %v708, %v788
    %v821 = vadd.f32 %v709, %v789
    %v822 = vadd.f32 %v710, %v790
    %v823 = vadd.f32 %v711, %v791
    %v824 = vadd.f32 %v712, %v792
    %v825 = vadd.f32 %v713, %v793
    %v826 = vadd.f32 %v714, %v794
    %v827 = vadd.f32 %v715, %v795
    %v828 = vadd.f32 %v716, %v796
    %v829 = vadd.f32 %v717, %v797
    %v830 = vadd.f32 %v718, %v798
    %v831 = vadd.f32 %v719, %v799
    %v832 = vadd.f32 %v720, %v800
    %v833 = vadd.f32 %v721, %v801
    %v834 = vadd.f32 %v722, %v802
    %836 = vset.pattern.permute.xlu0 0
    %837 = vperm.xlu0 %836, %v47
    %v838 = vpop.permute.xlu0 %837
    %841 = vset.pattern.permute.xlu0 0
    %842 = vperm.xlu0 %841, %v48
    %v843 = vpop.permute.xlu0 %842
    %846 = vset.pattern.permute.xlu0 0
    %847 = vperm.xlu0 %846, %v49
    %v848 = vpop.permute.xlu0 %847
    %851 = vset.pattern.permute.xlu0 0
    %852 = vperm.xlu0 %851, %v50
    %v853 = vpop.permute.xlu0 %852
    %v855 = vmul.f32 %v838, %v382
    %v856 = vmul.f32 %v843, %v382
    %v857 = vmul.f32 %v848, %v382
    %v858 = vmul.f32 %v853, %v382
    %v859 = vmul.f32 %v838, %v386
    %v860 = vmul.f32 %v843, %v386
    %v861 = vmul.f32 %v848, %v386
    %v862 = vmul.f32 %v853, %v386
    %v863 = vmul.f32 %v838, %v390
    %v864 = vmul.f32 %v843, %v390
    %v865 = vmul.f32 %v848, %v390
    %v866 = vmul.f32 %v853, %v390
    %v867 = vmul.f32 %v838, %v394
    %v868 = vmul.f32 %v843, %v394
    %v869 = vmul.f32 %v848, %v394
    %v870 = vmul.f32 %v853, %v394
    %v871 = vmul.f32 %v838, %v398
    %v872 = vmul.f32 %v843, %v398
    %v873 = vmul.f32 %v848, %v398
    %v874 = vmul.f32 %v853, %v398
    %v875 = vmul.f32 %v838, %v402
    %v876 = vmul.f32 %v843, %v402
    %v877 = vmul.f32 %v848, %v402
    %v878 = vmul.f32 %v853, %v402
    %v879 = vmul.f32 %v838, %v406
    %v880 = vmul.f32 %v843, %v406
    %v881 = vmul.f32 %v848, %v406
    %v882 = vmul.f32 %v853, %v406
    %v883 = vmul.f32 %v838, %v410
    %v884 = vmul.f32 %v843, %v410
    %v885 = vmul.f32 %v848, %v410
    %v886 = vmul.f32 %v853, %v410
    %887 = vset.pattern.permute.xlu0 1
    %888 = vperm.xlu0 %887, %v47
    %v889 = vpop.permute.xlu0 %888
    %891 = vset.pattern.permute.xlu0 1
    %892 = vperm.xlu0 %891, %v48
    %v893 = vpop.permute.xlu0 %892
    %895 = vset.pattern.permute.xlu0 1
    %896 = vperm.xlu0 %895, %v49
    %v897 = vpop.permute.xlu0 %896
    %899 = vset.pattern.permute.xlu0 1
    %900 = vperm.xlu0 %899, %v50
    %v901 = vpop.permute.xlu0 %900
    %v903 = vmul.f32 %v889, %v462
    %v904 = vmul.f32 %v893, %v462
    %v905 = vmul.f32 %v897, %v462
    %v906 = vmul.f32 %v901, %v462
    %v907 = vmul.f32 %v889, %v466
    %v908 = vmul.f32 %v893, %v466
    %v909 = vmul.f32 %v897, %v466
    %v910 = vmul.f32 %v901, %v466
    %v911 = vmul.f32 %v889, %v470
    %v912 = vmul.f32 %v893, %v470
    %v913 = vmul.f32 %v897, %v470
    %v914 = vmul.f32 %v901, %v470
    %v915 = vmul.f32 %v889, %v474
    %v916 = vmul.f32 %v893, %v474
    %v917 = vmul.f32 %v897, %v474
    %v918 = vmul.f32 %v901, %v474
    %v919 = vmul.f32 %v889, %v478
    %v920 = vmul.f32 %v893, %v478
    %v921 = vmul.f32 %v897, %v478
    %v922 = vmul.f32 %v901, %v478
    %v923 = vmul.f32 %v889, %v482
    %v924 = vmul.f32 %v893, %v482
    %v925 = vmul.f32 %v897, %v482
    %v926 = vmul.f32 %v901, %v482
    %v927 = vmul.f32 %v889, %v486
    %v928 = vmul.f32 %v893, %v486
    %v929 = vmul.f32 %v897, %v486
    %v930 = vmul.f32 %v901, %v486
    %v931 = vmul.f32 %v889, %v490
    %v932 = vmul.f32 %v893, %v490
    %v933 = vmul.f32 %v897, %v490
    %v934 = vmul.f32 %v901, %v490
    %v935 = vadd.f32 %v855, %v903
    %v936 = vadd.f32 %v856, %v904
    %v937 = vadd.f32 %v857, %v905
    %v938 = vadd.f32 %v858, %v906
    %v939 = vadd.f32 %v859, %v907
    %v940 = vadd.f32 %v860, %v908
    %v941 = vadd.f32 %v861, %v909
    %v942 = vadd.f32 %v862, %v910
    %v943 = vadd.f32 %v863, %v911
    %v944 = vadd.f32 %v864, %v912
    %v945 = vadd.f32 %v865, %v913
    %v946 = vadd.f32 %v866, %v914
    %v947 = vadd.f32 %v867, %v915
    %v948 = vadd.f32 %v868, %v916
    %v949 = vadd.f32 %v869, %v917
    %v950 = vadd.f32 %v870, %v918
    %v951 = vadd.f32 %v871, %v919
    %v952 = vadd.f32 %v872, %v920
    %v953 = vadd.f32 %v873, %v921
    %v954 = vadd.f32 %v874, %v922
    %v955 = vadd.f32 %v875, %v923
    %v956 = vadd.f32 %v876, %v924
    %v957 = vadd.f32 %v877, %v925
    %v958 = vadd.f32 %v878, %v926
    %v959 = vadd.f32 %v879, %v927
    %v960 = vadd.f32 %v880, %v928
    %v961 = vadd.f32 %v881, %v929
    %v962 = vadd.f32 %v882, %v930
    %v963 = vadd.f32 %v883, %v931
    %v964 = vadd.f32 %v884, %v932
    %v965 = vadd.f32 %v885, %v933
    %v966 = vadd.f32 %v886, %v934
    %968 = vset.pattern.permute.xlu0 0
    %969 = vperm.xlu0 %968, %v75
    %v970 = vpop.permute.xlu0 %969
    %973 = vset.pattern.permute.xlu0 0
    %974 = vperm.xlu0 %973, %v76
    %v975 = vpop.permute.xlu0 %974
    %978 = vset.pattern.permute.xlu0 0
    %979 = vperm.xlu0 %978, %v77
    %v980 = vpop.permute.xlu0 %979
    %983 = vset.pattern.permute.xlu0 0
    %984 = vperm.xlu0 %983, %v78
    %v985 = vpop.permute.xlu0 %984
    %v987 = vadd.f32 %v935, %v970
    %v988 = vadd.f32 %v936, %v975
    %v989 = vadd.f32 %v937, %v980
    %v990 = vadd.f32 %v938, %v985
    %v991 = vadd.f32 %v939, %v970
    %v992 = vadd.f32 %v940, %v975
    %v993 = vadd.f32 %v941, %v980
    %v994 = vadd.f32 %v942, %v985
    %v995 = vadd.f32 %v943, %v970
    %v996 = vadd.f32 %v944, %v975
    %v997 = vadd.f32 %v945, %v980
    %v998 = vadd.f32 %v946, %v985
    %v999 = vadd.f32 %v947, %v970
    %v1000 = vadd.f32 %v948, %v975
    %v1001 = vadd.f32 %v949, %v980
    %v1002 = vadd.f32 %v950, %v985
    %v1003 = vadd.f32 %v951, %v970
    %v1004 = vadd.f32 %v952, %v975
    %v1005 = vadd.f32 %v953, %v980
    %v1006 = vadd.f32 %v954, %v985
    %v1007 = vadd.f32 %v955, %v970
    %v1008 = vadd.f32 %v956, %v975
    %v1009 = vadd.f32 %v957, %v980
    %v1010 = vadd.f32 %v958, %v985
    %v1011 = vadd.f32 %v959, %v970
    %v1012 = vadd.f32 %v960, %v975
    %v1013 = vadd.f32 %v961, %v980
    %v1014 = vadd.f32 %v962, %v985
    %v1015 = vadd.f32 %v963, %v970
    %v1016 = vadd.f32 %v964, %v975
    %v1017 = vadd.f32 %v965, %v980
    %v1018 = vadd.f32 %v966, %v985
    %1020 = vset.pattern.permute.xlu0 0
    %1021 = vperm.xlu0 %1020, %v51
    %v1022 = vpop.permute.xlu0 %1021
    %1025 = vset.pattern.permute.xlu0 0
    %1026 = vperm.xlu0 %1025, %v52
    %v1027 = vpop.permute.xlu0 %1026
    %1030 = vset.pattern.permute.xlu0 0
    %1031 = vperm.xlu0 %1030, %v53
    %v1032 = vpop.permute.xlu0 %1031
    %1035 = vset.pattern.permute.xlu0 0
    %1036 = vperm.xlu0 %1035, %v54
    %v1037 = vpop.permute.xlu0 %1036
    %v1039 = vmul.f32 %v1022, %v382
    %v1040 = vmul.f32 %v1027, %v382
    %v1041 = vmul.f32 %v1032, %v382
    %v1042 = vmul.f32 %v1037, %v382
    %v1043 = vmul.f32 %v1022, %v386
    %v1044 = vmul.f32 %v1027, %v386
    %v1045 = vmul.f32 %v1032, %v386
    %v1046 = vmul.f32 %v1037, %v386
    %v1047 = vmul.f32 %v1022, %v390
    %v1048 = vmul.f32 %v1027, %v390
    %v1049 = vmul.f32 %v1032, %v390
    %v1050 = vmul.f32 %v1037, %v390
    %v1051 = vmul.f32 %v1022, %v394
    %v1052 = vmul.f32 %v1027, %v394
    %v1053 = vmul.f32 %v1032, %v394
    %v1054 = vmul.f32 %v1037, %v394
    %v1055 = vmul.f32 %v1022, %v398
    %v1056 = vmul.f32 %v1027, %v398
    %v1057 = vmul.f32 %v1032, %v398
    %v1058 = vmul.f32 %v1037, %v398
    %v1059 = vmul.f32 %v1022, %v402
    %v1060 = vmul.f32 %v1027, %v402
    %v1061 = vmul.f32 %v1032, %v402
    %v1062 = vmul.f32 %v1037, %v402
    %v1063 = vmul.f32 %v1022, %v406
    %v1064 = vmul.f32 %v1027, %v406
    %v1065 = vmul.f32 %v1032, %v406
    %v1066 = vmul.f32 %v1037, %v406
    %v1067 = vmul.f32 %v1022, %v410
    %v1068 = vmul.f32 %v1027, %v410
    %v1069 = vmul.f32 %v1032, %v410
    %v1070 = vmul.f32 %v1037, %v410
    %1071 = vset.pattern.permute.xlu0 1
    %1072 = vperm.xlu0 %1071, %v51
    %v1073 = vpop.permute.xlu0 %1072
    %1075 = vset.pattern.permute.xlu0 1
    %1076 = vperm.xlu0 %1075, %v52
    %v1077 = vpop.permute.xlu0 %1076
    %1079 = vset.pattern.permute.xlu0 1
    %1080 = vperm.xlu0 %1079, %v53
    %v1081 = vpop.permute.xlu0 %1080
    %1083 = vset.pattern.permute.xlu0 1
    %1084 = vperm.xlu0 %1083, %v54
    %v1085 = vpop.permute.xlu0 %1084
    %v1087 = vmul.f32 %v1073, %v462
    %v1088 = vmul.f32 %v1077, %v462
    %v1089 = vmul.f32 %v1081, %v462
    %v1090 = vmul.f32 %v1085, %v462
    %v1091 = vmul.f32 %v1073, %v466
    %v1092 = vmul.f32 %v1077, %v466
    %v1093 = vmul.f32 %v1081, %v466
    %v1094 = vmul.f32 %v1085, %v466
    %v1095 = vmul.f32 %v1073, %v470
    %v1096 = vmul.f32 %v1077, %v470
    %v1097 = vmul.f32 %v1081, %v470
    %v1098 = vmul.f32 %v1085, %v470
    %v1099 = vmul.f32 %v1073, %v474
    %v1100 = vmul.f32 %v1077, %v474
    %v1101 = vmul.f32 %v1081, %v474
    %v1102 = vmul.f32 %v1085, %v474
    %v1103 = vmul.f32 %v1073, %v478
    %v1104 = vmul.f32 %v1077, %v478
    %v1105 = vmul.f32 %v1081, %v478
    %v1106 = vmul.f32 %v1085, %v478
    %v1107 = vmul.f32 %v1073, %v482
    %v1108 = vmul.f32 %v1077, %v482
    %v1109 = vmul.f32 %v1081, %v482
    %v1110 = vmul.f32 %v1085, %v482
    %v1111 = vmul.f32 %v1073, %v486
    %v1112 = vmul.f32 %v1077, %v486
    %v1113 = vmul.f32 %v1081, %v486
    %v1114 = vmul.f32 %v1085, %v486
    %v1115 = vmul.f32 %v1073, %v490
    %v1116 = vmul.f32 %v1077, %v490
    %v1117 = vmul.f32 %v1081, %v490
    %v1118 = vmul.f32 %v1085, %v490
    %v1119 = vadd.f32 %v1039, %v1087
    %v1120 = vadd.f32 %v1040, %v1088
    %v1121 = vadd.f32 %v1041, %v1089
    %v1122 = vadd.f32 %v1042, %v1090
    %v1123 = vadd.f32 %v1043, %v1091
    %v1124 = vadd.f32 %v1044, %v1092
    %v1125 = vadd.f32 %v1045, %v1093
    %v1126 = vadd.f32 %v1046, %v1094
    %v1127 = vadd.f32 %v1047, %v1095
    %v1128 = vadd.f32 %v1048, %v1096
    %v1129 = vadd.f32 %v1049, %v1097
    %v1130 = vadd.f32 %v1050, %v1098
    %v1131 = vadd.f32 %v1051, %v1099
    %v1132 = vadd.f32 %v1052, %v1100
    %v1133 = vadd.f32 %v1053, %v1101
    %v1134 = vadd.f32 %v1054, %v1102
    %v1135 = vadd.f32 %v1055, %v1103
    %v1136 = vadd.f32 %v1056, %v1104
    %v1137 = vadd.f32 %v1057, %v1105
    %v1138 = vadd.f32 %v1058, %v1106
    %v1139 = vadd.f32 %v1059, %v1107
    %v1140 = vadd.f32 %v1060, %v1108
    %v1141 = vadd.f32 %v1061, %v1109
    %v1142 = vadd.f32 %v1062, %v1110
    %v1143 = vadd.f32 %v1063, %v1111
    %v1144 = vadd.f32 %v1064, %v1112
    %v1145 = vadd.f32 %v1065, %v1113
    %v1146 = vadd.f32 %v1066, %v1114
    %v1147 = vadd.f32 %v1067, %v1115
    %v1148 = vadd.f32 %v1068, %v1116
    %v1149 = vadd.f32 %v1069, %v1117
    %v1150 = vadd.f32 %v1070, %v1118
    %1152 = vset.pattern.permute.xlu0 0
    %1153 = vperm.xlu0 %1152, %v79
    %v1154 = vpop.permute.xlu0 %1153
    %1157 = vset.pattern.permute.xlu0 0
    %1158 = vperm.xlu0 %1157, %v80
    %v1159 = vpop.permute.xlu0 %1158
    %1162 = vset.pattern.permute.xlu0 0
    %1163 = vperm.xlu0 %1162, %v81
    %v1164 = vpop.permute.xlu0 %1163
    %1167 = vset.pattern.permute.xlu0 0
    %1168 = vperm.xlu0 %1167, %v82
    %v1169 = vpop.permute.xlu0 %1168
    %v1171 = vadd.f32 %v1119, %v1154
    %v1172 = vadd.f32 %v1120, %v1159
    %v1173 = vadd.f32 %v1121, %v1164
    %v1174 = vadd.f32 %v1122, %v1169
    %v1175 = vadd.f32 %v1123, %v1154
    %v1176 = vadd.f32 %v1124, %v1159
    %v1177 = vadd.f32 %v1125, %v1164
    %v1178 = vadd.f32 %v1126, %v1169
    %v1179 = vadd.f32 %v1127, %v1154
    %v1180 = vadd.f32 %v1128, %v1159
    %v1181 = vadd.f32 %v1129, %v1164
    %v1182 = vadd.f32 %v1130, %v1169
    %v1183 = vadd.f32 %v1131, %v1154
    %v1184 = vadd.f32 %v1132, %v1159
    %v1185 = vadd.f32 %v1133, %v1164
    %v1186 = vadd.f32 %v1134, %v1169
    %v1187 = vadd.f32 %v1135, %v1154
    %v1188 = vadd.f32 %v1136, %v1159
    %v1189 = vadd.f32 %v1137, %v1164
    %v1190 = vadd.f32 %v1138, %v1169
    %v1191 = vadd.f32 %v1139, %v1154
    %v1192 = vadd.f32 %v1140, %v1159
    %v1193 = vadd.f32 %v1141, %v1164
    %v1194 = vadd.f32 %v1142, %v1169
    %v1195 = vadd.f32 %v1143, %v1154
    %v1196 = vadd.f32 %v1144, %v1159
    %v1197 = vadd.f32 %v1145, %v1164
    %v1198 = vadd.f32 %v1146, %v1169
    %v1199 = vadd.f32 %v1147, %v1154
    %v1200 = vadd.f32 %v1148, %v1159
    %v1201 = vadd.f32 %v1149, %v1164
    %v1202 = vadd.f32 %v1150, %v1169
    %v1203 = vlaneseq
    %v1204 = vshrl.u32 %v1203, 7
    %v1205 = vmul.f32 %v254, 0.0
    %v1206 = vmul.f32 %v259, 0.0
    %v1207 = vmul.f32 %v264, 0.0
    %v1208 = vmul.f32 %v269, 0.0
    %v1209 = vmul.f32 %v274, 0.0
    %v1210 = vmul.f32 %v279, 0.0
    %v1211 = vmul.f32 %v284, 0.0
    %v1212 = vmul.f32 %v289, 0.0
    %v1213 = vmul.f32 %v294, 0.0
    %v1214 = vmul.f32 %v299, 0.0
    %v1215 = vmul.f32 %v304, 0.0
    %v1216 = vmul.f32 %v309, 0.0
    %v1217 = vadd.f32 %v134, %v1205
    %v1218 = vadd.f32 %v139, %v1206
    %v1219 = vadd.f32 %v144, %v1207
    %v1220 = vadd.f32 %v149, %v1208
    %v1221 = vadd.f32 %v154, %v1209
    %v1222 = vadd.f32 %v159, %v1210
    %v1223 = vadd.f32 %v164, %v1211
    %v1224 = vadd.f32 %v169, %v1212
    %v1225 = vadd.f32 %v174, %v1213
    %v1226 = vadd.f32 %v179, %v1214
    %v1227 = vadd.f32 %v184, %v1215
    %v1228 = vadd.f32 %v189, %v1216
    %v1229 = vmul.f32 %v313, 0.0
    %v1230 = vmul.f32 %v317, 0.0
    %v1231 = vmul.f32 %v321, 0.0
    %v1232 = vmul.f32 %v325, 0.0
    %v1233 = vmul.f32 %v329, 0.0
    %v1234 = vmul.f32 %v333, 0.0
    %v1235 = vmul.f32 %v337, 0.0
    %v1236 = vmul.f32 %v341, 0.0
    %v1237 = vmul.f32 %v345, 0.0
    %v1238 = vmul.f32 %v349, 0.0
    %v1239 = vmul.f32 %v353, 0.0
    %v1240 = vmul.f32 %v357, 0.0
    %v1241 = vadd.f32 %v1217, %v1229
    %v1242 = vadd.f32 %v1218, %v1230
    %v1243 = vadd.f32 %v1219, %v1231
    %v1244 = vadd.f32 %v1220, %v1232
    %v1245 = vadd.f32 %v1221, %v1233
    %v1246 = vadd.f32 %v1222, %v1234
    %v1247 = vadd.f32 %v1223, %v1235
    %v1248 = vadd.f32 %v1224, %v1236
    %v1249 = vadd.f32 %v1225, %v1237
    %v1250 = vadd.f32 %v1226, %v1238
    %v1251 = vadd.f32 %v1227, %v1239
    %v1252 = vadd.f32 %v1228, %v1240
    %v1253 = vadd.f32 %v1241, %v194
    %v1254 = vadd.f32 %v1242, %v199
    %v1255 = vadd.f32 %v1243, %v204
    %v1256 = vadd.f32 %v1244, %v209
    %v1257 = vxor.u32 %v1253, 2147483648
    %v1258 = vxor.u32 %v1254, 2147483648
    %v1259 = vxor.u32 %v1255, 2147483648
    %v1260 = vxor.u32 %v1256, 2147483648
    %v1261 = vmul.f32 %v1257, 1.442695
    %v1262 = vpow.pop %v1261
    %v1263 = vmul.f32 %v1258, 1.442695
    %v1264 = vpow.pop %v1263
    %v1265 = vmul.f32 %v1259, 1.442695
    %v1266 = vpow.pop %v1265
    %v1267 = vmul.f32 %v1260, 1.442695
    %v1268 = vpow.pop %v1267
    %v1269 = vadd.f32 %v1262, 1.0
    %v1270 = vadd.f32 %v1264, 1.0
    %v1271 = vadd.f32 %v1266, 1.0
    %v1272 = vadd.f32 %v1268, 1.0
    %v1273 = vrcp.pop %v1269
    %v1274 = vmul.f32 1.0, %v1273
    %v1275 = vrcp.pop %v1270
    %v1276 = vmul.f32 1.0, %v1275
    %v1277 = vrcp.pop %v1271
    %v1278 = vmul.f32 1.0, %v1277
    %v1279 = vrcp.pop %v1272
    %v1280 = vmul.f32 1.0, %v1279
    %v1281 = vadd.f32 %v1245, %v214
    %v1282 = vadd.f32 %v1246, %v219
    %v1283 = vadd.f32 %v1247, %v224
    %v1284 = vadd.f32 %v1248, %v229
    %v1285 = vxor.u32 %v1281, 2147483648
    %v1286 = vxor.u32 %v1282, 2147483648
    %v1287 = vxor.u32 %v1283, 2147483648
    %v1288 = vxor.u32 %v1284, 2147483648
    %v1289 = vmul.f32 %v1285, 1.442695
    %v1290 = vpow.pop %v1289
    %v1291 = vmul.f32 %v1286, 1.442695
    %v1292 = vpow.pop %v1291
    %v1293 = vmul.f32 %v1287, 1.442695
    %v1294 = vpow.pop %v1293
    %v1295 = vmul.f32 %v1288, 1.442695
    %v1296 = vpow.pop %v1295
    %v1297 = vadd.f32 %v1290, 1.0
    %v1298 = vadd.f32 %v1292, 1.0
    %v1299 = vadd.f32 %v1294, 1.0
    %v1300 = vadd.f32 %v1296, 1.0
    %v1301 = vrcp.pop %v1297
    %v1302 = vmul.f32 1.0, %v1301
    %v1303 = vrcp.pop %v1298
    %v1304 = vmul.f32 1.0, %v1303
    %v1305 = vrcp.pop %v1299
    %v1306 = vmul.f32 1.0, %v1305
    %v1307 = vrcp.pop %v1300
    %v1308 = vmul.f32 1.0, %v1307
    %v1309 = vmul.f32 %v1274, %v234
    %v1310 = vmul.f32 %v1276, %v239
    %v1311 = vmul.f32 %v1278, %v244
    %v1312 = vmul.f32 %v1280, %v249
    %v1313 = vadd.f32 %v1249, %v1309
    %v1314 = vadd.f32 %v1250, %v1310
    %v1315 = vadd.f32 %v1251, %v1311
    %v1316 = vadd.f32 %v1252, %v1312
    %v1317 = vtanh.pop %v1313
    %v1318 = vtanh.pop %v1314
    %v1319 = vtanh.pop %v1315
    %v1320 = vtanh.pop %v1316
    %v1321 = vsub.f32 1.0, %v1302
    %v1322 = vsub.f32 1.0, %v1304
    %v1323 = vsub.f32 1.0, %v1306
    %v1324 = vsub.f32 1.0, %v1308
    %v1325 = vmul.f32 %v1321, %v1317
    %v1326 = vmul.f32 %v1322, %v1318
    %v1327 = vmul.f32 %v1323, %v1319
    %v1328 = vmul.f32 %v1324, %v1320
    %v1329 = vmul.f32 %v1302, 0.0
    %v1330 = vmul.f32 %v1304, 0.0
    %v1331 = vmul.f32 %v1306, 0.0
    %v1332 = vmul.f32 %v1308, 0.0
    %v1333 = vadd.f32 %v1325, %v1329
    %v1334 = vadd.f32 %v1326, %v1330
    %v1335 = vadd.f32 %v1327, %v1331
    %v1336 = vadd.f32 %v1328, %v1332
    %vm1337 = vcmask 261120
    %v1339 = vsel %vm1337, %v115, 0
    %v1342 = vsel %vm1337, %v116, 0
    %v1345 = vsel %vm1337, %v117, 0
    %v1348 = vsel %vm1337, %v118, 0
    %v1351 = vsel %vm1337, %v119, 0
    %v1354 = vsel %vm1337, %v120, 0
    %v1357 = vsel %vm1337, %v121, 0
    %v1360 = vsel %vm1337, %v122, 0
    %v1363 = vsel %vm1337, %v123, 0
    %v1366 = vsel %vm1337, %v124, 0
    %v1369 = vsel %vm1337, %v125, 0
    %v1372 = vsel %vm1337, %v126, 0
    %v1375 = vsel %vm1337, %v127, 0
    %v1378 = vsel %vm1337, %v128, 0
    %v1381 = vsel %vm1337, %v129, 0
    %v1384 = vsel %vm1337, %v130, 0
    %1386 = vmatprep.subr.mxu0 0.0
    %1387 = vmatpush1.msra.mxu0 %v1333
    %1388 = vmatprep.subr.mxu0 0.0
    %1389 = vmatpush1.msra.mxu0 %v1334
    %1390 = vmatprep.subr.mxu0 0.0
    %1391 = vmatpush1.msra.mxu0 %v1335
    %1392 = vmatprep.subr.mxu0 0.0
    %1393 = vmatpush1.msra.mxu0 %v1336
    %1394 = vmatprep.subr.mxu0 0.0
    %1395 = vmatpush1.msra.mxu0 0.0
    %1396 = vmatprep.subr.mxu0 0.0
    %1397 = vmatpush1.msra.mxu0 0.0
    %1398 = vmatprep.subr.mxu0 0.0
    %1399 = vmatpush1.msra.mxu0 0.0
    %1400 = vmatprep.subr.mxu0 0.0
    %1401 = vmatpush1.msra.mxu0 0.0
    %1402 = vmatprep.subr.mxu0 0.0
    %1403 = vmatpush1.msra.mxu0 0.0
    %1404 = vmatprep.subr.mxu0 0.0
    %1405 = vmatpush1.msra.mxu0 0.0
    %1406 = vmatprep.subr.mxu0 0.0
    %1407 = vmatpush1.msra.mxu0 0.0
    %1408 = vmatprep.subr.mxu0 0.0
    %1409 = vmatpush1.msra.mxu0 0.0
    %1410 = vmatprep.subr.mxu0 0.0
    %1411 = vmatpush1.msra.mxu0 0.0
    %1412 = vmatprep.subr.mxu0 0.0
    %1413 = vmatpush1.msra.mxu0 0.0
    %1414 = vmatprep.subr.mxu0 0.0
    %1415 = vmatpush1.msra.mxu0 0.0
    %1416 = vmatprep.subr.mxu0 0.0
    %1417 = vmatpush1.msra.mxu0 0.0
    %1418 = vmatprep.subr.mxu0 0.0
    %1419 = vmatpush1.msra.mxu0 0.0
    %1420 = vmatprep.subr.mxu0 0.0
    %1421 = vmatpush1.msra.mxu0 0.0
    %1422 = vmatprep.subr.mxu0 0.0
    %1423 = vmatpush1.msra.mxu0 0.0
    %1424 = vmatprep.subr.mxu0 0.0
    %1425 = vmatpush1.msra.mxu0 0.0
    %1426 = vmatprep.subr.mxu0 0.0
    %1427 = vmatpush1.msra.mxu0 0.0
    %1428 = vmatprep.subr.mxu0 0.0
    %1429 = vmatpush1.msra.mxu0 0.0
    %1430 = vmatprep.subr.mxu0 0.0
    %1431 = vmatpush1.msra.mxu0 0.0
    %1432 = vmatprep.subr.mxu0 0.0
    %1433 = vmatpush1.msra.mxu0 0.0
    %1434 = vmatprep.subr.mxu0 0.0
    %1435 = vmatpush1.msra.mxu0 0.0
    %1436 = vmatprep.subr.mxu0 0.0
    %1437 = vmatpush1.msra.mxu0 0.0
    %1438 = vmatprep.subr.mxu0 0.0
    %1439 = vmatpush1.msra.mxu0 0.0
    %1440 = vmatprep.subr.mxu0 0.0
    %1441 = vmatpush1.msra.mxu0 0.0
    %1442 = vmatprep.subr.mxu0 0.0
    %1443 = vmatpush1.msra.mxu0 0.0
    %1444 = vmatprep.subr.mxu0 0.0
    %1445 = vmatpush1.msra.mxu0 0.0
    %1446 = vmatprep.subr.mxu0 0.0
    %1447 = vmatpush1.msra.mxu0 0.0
    %1448 = vmatprep.subr.mxu0 0.0
    %1449 = vmatpush1.msra.mxu0 0.0
    %1450 = vmatprep.mubr.f32.mxu0 0.0
    %1451 = vmatmul.mubr.f32.gmra.mrb[0].mxu0 %v1339
    %v1452 = vpop.f32.mrb[0].mxu0
    %v1453 = vadd.f32 0.0, %v1452
    %v1454 = vpop.f32.mrb[0].mxu0
    %1455 = vmatprep.mubr.f32.mxu0 0.0
    %1456 = vmatmul.mubr.f32.gmra.mrb[0].mxu0 %v1342
    %v1457 = vpop.f32.mrb[0].mxu0
    %v1458 = vadd.f32 0.0, %v1457
    %v1459 = vpop.f32.mrb[0].mxu0
    %1460 = vmatprep.mubr.f32.mxu0 0.0
    %1461 = vmatmul.mubr.f32.gmra.mrb[0].mxu0 %v1345
    %v1462 = vpop.f32.mrb[0].mxu0
    %v1463 = vadd.f32 0.0, %v1462
    %v1464 = vpop.f32.mrb[0].mxu0
    %1465 = vmatprep.mubr.f32.mxu0 0.0
    %1466 = vmatmul.mubr.f32.gmra.mrb[0].mxu0 %v1348
    %v1467 = vpop.f32.mrb[0].mxu0
    %v1468 = vadd.f32 0.0, %v1467
    %v1469 = vpop.f32.mrb[0].mxu0
    %1470 = vmatprep.mubr.f32.mxu0 0.0
    %1471 = vmatmul.mubr.f32.gmra.mrb[0].mxu0 %v1351
    %v1472 = vpop.f32.mrb[0].mxu0
    %v1473 = vadd.f32 0.0, %v1472
    %v1474 = vpop.f32.mrb[0].mxu0
    %1475 = vmatprep.mubr.f32.mxu0 0.0
    %1476 = vmatmul.mubr.f32.gmra.mrb[0].mxu0 %v1354
    %v1477 = vpop.f32.mrb[0].mxu0
    %v1478 = vadd.f32 0.0, %v1477
    %v1479 = vpop.f32.mrb[0].mxu0
    %1480 = vmatprep.mubr.f32.mxu0 0.0
    %1481 = vmatmul.mubr.f32.gmra.mrb[0].mxu0 %v1357
    %v1482 = vpop.f32.mrb[0].mxu0
    %v1483 = vadd.f32 0.0, %v1482
    %v1484 = vpop.f32.mrb[0].mxu0
    %1485 = vmatprep.mubr.f32.mxu0 0.0
    %1486 = vmatmul.mubr.f32.gmra.mrb[0].mxu0 %v1360
    %v1487 = vpop.f32.mrb[0].mxu0
    %v1488 = vadd.f32 0.0, %v1487
    %v1489 = vpop.f32.mrb[0].mxu0
    %1490 = vmatprep.mubr.f32.mxu0 0.0
    %1491 = vmatmul.mubr.f32.gmra.mrb[0].mxu0 %v1363
    %v1492 = vpop.f32.mrb[0].mxu0
    %v1493 = vadd.f32 0.0, %v1492
    %v1494 = vpop.f32.mrb[0].mxu0
    %1495 = vmatprep.mubr.f32.mxu0 0.0
    %1496 = vmatmul.mubr.f32.gmra.mrb[0].mxu0 %v1366
    %v1497 = vpop.f32.mrb[0].mxu0
    %v1498 = vadd.f32 0.0, %v1497
    %v1499 = vpop.f32.mrb[0].mxu0
    %1500 = vmatprep.mubr.f32.mxu0 0.0
    %1501 = vmatmul.mubr.f32.gmra.mrb[0].mxu0 %v1369
    %v1502 = vpop.f32.mrb[0].mxu0
    %v1503 = vadd.f32 0.0, %v1502
    %v1504 = vpop.f32.mrb[0].mxu0
    %1505 = vmatprep.mubr.f32.mxu0 0.0
    %1506 = vmatmul.mubr.f32.gmra.mrb[0].mxu0 %v1372
    %v1507 = vpop.f32.mrb[0].mxu0
    %v1508 = vadd.f32 0.0, %v1507
    %v1509 = vpop.f32.mrb[0].mxu0
    %1510 = vmatprep.mubr.f32.mxu0 0.0
    %1511 = vmatmul.mubr.f32.gmra.mrb[0].mxu0 %v1375
    %v1512 = vpop.f32.mrb[0].mxu0
    %v1513 = vadd.f32 0.0, %v1512
    %v1514 = vpop.f32.mrb[0].mxu0
    %1515 = vmatprep.mubr.f32.mxu0 0.0
    %1516 = vmatmul.mubr.f32.gmra.mrb[0].mxu0 %v1378
    %v1517 = vpop.f32.mrb[0].mxu0
    %v1518 = vadd.f32 0.0, %v1517
    %v1519 = vpop.f32.mrb[0].mxu0
    %1520 = vmatprep.mubr.f32.mxu0 0.0
    %1521 = vmatmul.mubr.f32.gmra.mrb[0].mxu0 %v1381
    %v1522 = vpop.f32.mrb[0].mxu0
    %v1523 = vadd.f32 0.0, %v1522
    %v1524 = vpop.f32.mrb[0].mxu0
    %1525 = vmatprep.mubr.f32.mxu0 0.0
    %1526 = vmatmul.mubr.f32.gmra.mrb[0].mxu0 %v1384
    %v1527 = vpop.f32.mrb[0].mxu0
    %v1528 = vadd.f32 0.0, %v1527
    %v1529 = vpop.f32.mrb[0].mxu0
    %1530 = vdwg.mxu0
    %v1531 = vadd.f32 %v1453, %v194
    %v1532 = vadd.f32 %v1458, %v199
    %v1533 = vadd.f32 %v1463, %v204
    %v1534 = vadd.f32 %v1468, %v209
    %v1535 = vadd.f32 %v1473, %v214
    %v1536 = vadd.f32 %v1478, %v219
    %v1537 = vadd.f32 %v1483, %v224
    %v1538 = vadd.f32 %v1488, %v229
    %v1539 = vadd.f32 %v1493, %v234
    %v1540 = vadd.f32 %v1498, %v239
    %v1541 = vadd.f32 %v1503, %v244
    %v1542 = vadd.f32 %v1508, %v249
    %v1543 = vadd.f32 %v803, %v1513
    %v1544 = vadd.f32 %v804, %v1518
    %v1545 = vadd.f32 %v805, %v1523
    %v1546 = vadd.f32 %v806, %v1528
    %v1547 = vadd.f32 %v807, %v1513
    %v1548 = vadd.f32 %v808, %v1518
    %v1549 = vadd.f32 %v809, %v1523
    %v1550 = vadd.f32 %v810, %v1528
    %v1551 = vadd.f32 %v811, %v1513
    %v1552 = vadd.f32 %v812, %v1518
    %v1553 = vadd.f32 %v813, %v1523
    %v1554 = vadd.f32 %v814, %v1528
    %v1555 = vadd.f32 %v815, %v1513
    %v1556 = vadd.f32 %v816, %v1518
    %v1557 = vadd.f32 %v817, %v1523
    %v1558 = vadd.f32 %v818, %v1528
    %v1559 = vadd.f32 %v819, %v1513
    %v1560 = vadd.f32 %v820, %v1518
    %v1561 = vadd.f32 %v821, %v1523
    %v1562 = vadd.f32 %v822, %v1528
    %v1563 = vadd.f32 %v823, %v1513
    %v1564 = vadd.f32 %v824, %v1518
    %v1565 = vadd.f32 %v825, %v1523
    %v1566 = vadd.f32 %v826, %v1528
    %v1567 = vadd.f32 %v827, %v1513
    %v1568 = vadd.f32 %v828, %v1518
    %v1569 = vadd.f32 %v829, %v1523
    %v1570 = vadd.f32 %v830, %v1528
    %v1571 = vadd.f32 %v831, %v1513
    %v1572 = vadd.f32 %v832, %v1518
    %v1573 = vadd.f32 %v833, %v1523
    %v1574 = vadd.f32 %v834, %v1528
    %v1575 = vtanh.pop %v1543
    %v1576 = vtanh.pop %v1544
    %v1577 = vtanh.pop %v1545
    %v1578 = vtanh.pop %v1546
    %v1579 = vtanh.pop %v1547
    %v1580 = vtanh.pop %v1548
    %v1581 = vtanh.pop %v1549
    %v1582 = vtanh.pop %v1550
    %v1583 = vtanh.pop %v1551
    %v1584 = vtanh.pop %v1552
    %v1585 = vtanh.pop %v1553
    %v1586 = vtanh.pop %v1554
    %v1587 = vtanh.pop %v1555
    %v1588 = vtanh.pop %v1556
    %v1589 = vtanh.pop %v1557
    %v1590 = vtanh.pop %v1558
    %v1591 = vtanh.pop %v1559
    %v1592 = vtanh.pop %v1560
    %v1593 = vtanh.pop %v1561
    %v1594 = vtanh.pop %v1562
    %v1595 = vtanh.pop %v1563
    %v1596 = vtanh.pop %v1564
    %v1597 = vtanh.pop %v1565
    %v1598 = vtanh.pop %v1566
    %v1599 = vtanh.pop %v1567
    %v1600 = vtanh.pop %v1568
    %v1601 = vtanh.pop %v1569
    %v1602 = vtanh.pop %v1570
    %v1603 = vtanh.pop %v1571
    %v1604 = vtanh.pop %v1572
    %v1605 = vtanh.pop %v1573
    %v1606 = vtanh.pop %v1574
    %1608 = vset.pattern.permute.xlu0 0
    %1609 = vperm.xlu0 %1608, %v107
    %v1610 = vpop.permute.xlu0 %1609
    %1613 = vset.pattern.permute.xlu0 0
    %1614 = vperm.xlu0 %1613, %v108
    %v1615 = vpop.permute.xlu0 %1614
    %1618 = vset.pattern.permute.xlu0 0
    %1619 = vperm.xlu0 %1618, %v109
    %v1620 = vpop.permute.xlu0 %1619
    %1623 = vset.pattern.permute.xlu0 0
    %1624 = vperm.xlu0 %1623, %v110
    %v1625 = vpop.permute.xlu0 %1624
    %v1627 = vmul.f32 %v1610, %v1575
    %v1628 = vmul.f32 %v1615, %v1576
    %v1629 = vmul.f32 %v1620, %v1577
    %v1630 = vmul.f32 %v1625, %v1578
    %v1631 = vmul.f32 %v1610, %v1579
    %v1632 = vmul.f32 %v1615, %v1580
    %v1633 = vmul.f32 %v1620, %v1581
    %v1634 = vmul.f32 %v1625, %v1582
    %v1635 = vmul.f32 %v1610, %v1583
    %v1636 = vmul.f32 %v1615, %v1584
    %v1637 = vmul.f32 %v1620, %v1585
    %v1638 = vmul.f32 %v1625, %v1586
    %v1639 = vmul.f32 %v1610, %v1587
    %v1640 = vmul.f32 %v1615, %v1588
    %v1641 = vmul.f32 %v1620, %v1589
    %v1642 = vmul.f32 %v1625, %v1590
    %v1643 = vmul.f32 %v1610, %v1591
    %v1644 = vmul.f32 %v1615, %v1592
    %v1645 = vmul.f32 %v1620, %v1593
    %v1646 = vmul.f32 %v1625, %v1594
    %v1647 = vmul.f32 %v1610, %v1595
    %v1648 = vmul.f32 %v1615, %v1596
    %v1649 = vmul.f32 %v1620, %v1597
    %v1650 = vmul.f32 %v1625, %v1598
    %v1651 = vmul.f32 %v1610, %v1599
    %v1652 = vmul.f32 %v1615, %v1600
    %v1653 = vmul.f32 %v1620, %v1601
    %v1654 = vmul.f32 %v1625, %v1602
    %v1655 = vmul.f32 %v1610, %v1603
    %v1656 = vmul.f32 %v1615, %v1604
    %v1657 = vmul.f32 %v1620, %v1605
    %v1658 = vmul.f32 %v1625, %v1606
    %v1659 = vadd.f32 %v1627, %v1628
    %v1660 = vadd.f32 %v1659, %v1629
    %v1661 = vadd.f32 %v1660, %v1630
    %v1662 = vrot.slane %v1661, 4
    %v1663 = vadd.f32 %v1661, %v1662
    %v1664 = vrot.slane %v1663, 2
    %v1665 = vadd.f32 %v1663, %v1664
    %v1666 = vrot.slane %v1665, 1
    %v1667 = vadd.f32 %v1665, %v1666
    %v1668 = vadd.f32 %v1631, %v1632
    %v1669 = vadd.f32 %v1668, %v1633
    %v1670 = vadd.f32 %v1669, %v1634
    %v1671 = vrot.slane %v1670, 4
    %v1672 = vadd.f32 %v1670, %v1671
    %v1673 = vrot.slane %v1672, 2
    %v1674 = vadd.f32 %v1672, %v1673
    %v1675 = vrot.slane %v1674, 1
    %v1676 = vadd.f32 %v1674, %v1675
    %v1677 = vadd.f32 %v1635, %v1636
    %v1678 = vadd.f32 %v1677, %v1637
    %v1679 = vadd.f32 %v1678, %v1638
    %v1680 = vrot.slane %v1679, 4
    %v1681 = vadd.f32 %v1679, %v1680
    %v1682 = vrot.slane %v1681, 2
    %v1683 = vadd.f32 %v1681, %v1682
    %v1684 = vrot.slane %v1683, 1
    %v1685 = vadd.f32 %v1683, %v1684
    %v1686 = vadd.f32 %v1639, %v1640
    %v1687 = vadd.f32 %v1686, %v1641
    %v1688 = vadd.f32 %v1687, %v1642
    %v1689 = vrot.slane %v1688, 4
    %v1690 = vadd.f32 %v1688, %v1689
    %v1691 = vrot.slane %v1690, 2
    %v1692 = vadd.f32 %v1690, %v1691
    %v1693 = vrot.slane %v1692, 1
    %v1694 = vadd.f32 %v1692, %v1693
    %v1695 = vadd.f32 %v1643, %v1644
    %v1696 = vadd.f32 %v1695, %v1645
    %v1697 = vadd.f32 %v1696, %v1646
    %v1698 = vrot.slane %v1697, 4
    %v1699 = vadd.f32 %v1697, %v1698
    %v1700 = vrot.slane %v1699, 2
    %v1701 = vadd.f32 %v1699, %v1700
    %v1702 = vrot.slane %v1701, 1
    %v1703 = vadd.f32 %v1701, %v1702
    %v1704 = vadd.f32 %v1647, %v1648
    %v1705 = vadd.f32 %v1704, %v1649
    %v1706 = vadd.f32 %v1705, %v1650
    %v1707 = vrot.slane %v1706, 4
    %v1708 = vadd.f32 %v1706, %v1707
    %v1709 = vrot.slane %v1708, 2
    %v1710 = vadd.f32 %v1708, %v1709
    %v1711 = vrot.slane %v1710, 1
    %v1712 = vadd.f32 %v1710, %v1711
    %v1713 = vadd.f32 %v1651, %v1652
    %v1714 = vadd.f32 %v1713, %v1653
    %v1715 = vadd.f32 %v1714, %v1654
    %v1716 = vrot.slane %v1715, 4
    %v1717 = vadd.f32 %v1715, %v1716
    %v1718 = vrot.slane %v1717, 2
    %v1719 = vadd.f32 %v1717, %v1718
    %v1720 = vrot.slane %v1719, 1
    %v1721 = vadd.f32 %v1719, %v1720
    %v1722 = vadd.f32 %v1655, %v1656
    %v1723 = vadd.f32 %v1722, %v1657
    %v1724 = vadd.f32 %v1723, %v1658
    %v1725 = vrot.slane %v1724, 4
    %v1726 = vadd.f32 %v1724, %v1725
    %v1727 = vrot.slane %v1726, 2
    %v1728 = vadd.f32 %v1726, %v1727
    %v1729 = vrot.slane %v1728, 1
    %v1730 = vadd.f32 %v1728, %v1729
    %v1731 = vmax.f32 %v1667, %v1703
    %v1732 = vmax.f32 %v1676, %v1712
    %v1733 = vmax.f32 %v1685, %v1721
    %v1734 = vmax.f32 %v1694, %v1730
    %v1735 = vmax.f32 %v1731, %v1732
    %v1736 = vmax.f32 %v1733, %v1734
    %v1737 = vmax.f32 %v1735, %v1736
    %v1738 = vsub.f32 %v1667, %v1737
    %v1739 = vsub.f32 %v1676, %v1737
    %v1740 = vsub.f32 %v1685, %v1737
    %v1741 = vsub.f32 %v1694, %v1737
    %v1742 = vsub.f32 %v1703, %v1737
    %v1743 = vsub.f32 %v1712, %v1737
    %v1744 = vsub.f32 %v1721, %v1737
    %v1745 = vsub.f32 %v1730, %v1737
    %v1746 = vmul.f32 %v1738, 1.442695
    %v1747 = vpow.pop %v1746
    %v1748 = vmul.f32 %v1739, 1.442695
    %v1749 = vpow.pop %v1748
    %v1750 = vmul.f32 %v1740, 1.442695
    %v1751 = vpow.pop %v1750
    %v1752 = vmul.f32 %v1741, 1.442695
    %v1753 = vpow.pop %v1752
    %v1754 = vmul.f32 %v1742, 1.442695
    %v1755 = vpow.pop %v1754
    %v1756 = vmul.f32 %v1743, 1.442695
    %v1757 = vpow.pop %v1756
    %v1758 = vmul.f32 %v1744, 1.442695
    %v1759 = vpow.pop %v1758
    %v1760 = vmul.f32 %v1745, 1.442695
    %v1761 = vpow.pop %v1760
    %v1770 = vrot.slane %v1749, 7
    %vm1771 = vcmask 1041409
    %v1772 = vsel %vm1771, %v1770, %v1747
    %v1773 = vrot.slane %v1751, 6
    %vm1774 = vcmask 1042434
    %v1775 = vsel %vm1774, %v1773, %v1772
    %v1776 = vrot.slane %v1753, 5
    %vm1777 = vcmask 1043459
    %v1778 = vsel %vm1777, %v1776, %v1775
    %v1779 = vrot.slane %v1755, 4
    %vm1780 = vcmask 1044484
    %v1781 = vsel %vm1780, %v1779, %v1778
    %v1782 = vrot.slane %v1757, 3
    %vm1783 = vcmask 1045509
    %v1784 = vsel %vm1783, %v1782, %v1781
    %v1785 = vrot.slane %v1759, 2
    %vm1786 = vcmask 1046534
    %v1787 = vsel %vm1786, %v1785, %v1784
    %v1788 = vrot.slane %v1761, 1
    %vm1789 = vcmask 1047559
    %v1790 = vsel %vm1789, %v1788, %v1787
    %v1792 = vrot.slane %v1790, 4
    %v1793 = vadd.f32 %v1790, %v1792
    %v1794 = vrot.slane %v1793, 2
    %v1795 = vadd.f32 %v1793, %v1794
    %v1796 = vrot.slane %v1795, 1
    %v1797 = vadd.f32 %v1795, %v1796
    %v1798 = vlaneseq
    %v1799 = vshrl.u32 %v1798, 7
    %v1800 = vsub.s32 0, %v1799
    %v1801 = vrot.slane %v1797, %v1800
    %v1802 = vrcp.pop %v1801
    %v1803 = vmul.f32 %v1747, %v1802
    %v1804 = vmul.f32 %v1749, %v1802
    %v1805 = vmul.f32 %v1751, %v1802
    %v1806 = vmul.f32 %v1753, %v1802
    %v1807 = vmul.f32 %v1755, %v1802
    %v1808 = vmul.f32 %v1757, %v1802
    %v1809 = vmul.f32 %v1759, %v1802
    %v1810 = vmul.f32 %v1761, %v1802
    %v1811 = vlaneseq
    %v1812 = vshrl.u32 %v1811, 7
    %v1813 = vsub.s32 0, %v1812
    %v1814 = vrot.slane %v1803, %v1813
    %v1815 = vlaneseq
    %v1816 = vshrl.u32 %v1815, 7
    %v1817 = vsub.s32 0, %v1816
    %v1818 = vrot.slane %v1804, %v1817
    %v1819 = vlaneseq
    %v1820 = vshrl.u32 %v1819, 7
    %v1821 = vsub.s32 0, %v1820
    %v1822 = vrot.slane %v1805, %v1821
    %v1823 = vlaneseq
    %v1824 = vshrl.u32 %v1823, 7
    %v1825 = vsub.s32 0, %v1824
    %v1826 = vrot.slane %v1806, %v1825
    %v1827 = vlaneseq
    %v1828 = vshrl.u32 %v1827, 7
    %v1829 = vsub.s32 0, %v1828
    %v1830 = vrot.slane %v1807, %v1829
    %v1831 = vlaneseq
    %v1832 = vshrl.u32 %v1831, 7
    %v1833 = vsub.s32 0, %v1832
    %v1834 = vrot.slane %v1808, %v1833
    %v1835 = vlaneseq
    %v1836 = vshrl.u32 %v1835, 7
    %v1837 = vsub.s32 0, %v1836
    %v1838 = vrot.slane %v1809, %v1837
    %v1839 = vlaneseq
    %v1840 = vshrl.u32 %v1839, 7
    %v1841 = vsub.s32 0, %v1840
    %v1842 = vrot.slane %v1810, %v1841
    %v1843 = vmul.f32 %v1171, %v1814
    %v1844 = vmul.f32 %v1172, %v1814
    %v1845 = vmul.f32 %v1173, %v1814
    %v1846 = vmul.f32 %v1174, %v1814
    %v1847 = vmul.f32 %v1175, %v1818
    %v1848 = vmul.f32 %v1176, %v1818
    %v1849 = vmul.f32 %v1177, %v1818
    %v1850 = vmul.f32 %v1178, %v1818
    %v1851 = vmul.f32 %v1179, %v1822
    %v1852 = vmul.f32 %v1180, %v1822
    %v1853 = vmul.f32 %v1181, %v1822
    %v1854 = vmul.f32 %v1182, %v1822
    %v1855 = vmul.f32 %v1183, %v1826
    %v1856 = vmul.f32 %v1184, %v1826
    %v1857 = vmul.f32 %v1185, %v1826
    %v1858 = vmul.f32 %v1186, %v1826
    %v1859 = vmul.f32 %v1187, %v1830
    %v1860 = vmul.f32 %v1188, %v1830
    %v1861 = vmul.f32 %v1189, %v1830
    %v1862 = vmul.f32 %v1190, %v1830
    %v1863 = vmul.f32 %v1191, %v1834
    %v1864 = vmul.f32 %v1192, %v1834
    %v1865 = vmul.f32 %v1193, %v1834
    %v1866 = vmul.f32 %v1194, %v1834
    %v1867 = vmul.f32 %v1195, %v1838
    %v1868 = vmul.f32 %v1196, %v1838
    %v1869 = vmul.f32 %v1197, %v1838
    %v1870 = vmul.f32 %v1198, %v1838
    %v1871 = vmul.f32 %v1199, %v1842
    %v1872 = vmul.f32 %v1200, %v1842
    %v1873 = vmul.f32 %v1201, %v1842
    %v1874 = vmul.f32 %v1202, %v1842
    %v1875 = vadd.f32 %v1843, %v1847
    %v1876 = vadd.f32 %v1875, %v1851
    %v1877 = vadd.f32 %v1876, %v1855
    %v1878 = vadd.f32 %v1877, %v1859
    %v1879 = vadd.f32 %v1878, %v1863
    %v1880 = vadd.f32 %v1879, %v1867
    %v1881 = vadd.f32 %v1880, %v1871
    %v1882 = vadd.f32 %v1844, %v1848
    %v1883 = vadd.f32 %v1882, %v1852
    %v1884 = vadd.f32 %v1883, %v1856
    %v1885 = vadd.f32 %v1884, %v1860
    %v1886 = vadd.f32 %v1885, %v1864
    %v1887 = vadd.f32 %v1886, %v1868
    %v1888 = vadd.f32 %v1887, %v1872
    %v1889 = vadd.f32 %v1845, %v1849
    %v1890 = vadd.f32 %v1889, %v1853
    %v1891 = vadd.f32 %v1890, %v1857
    %v1892 = vadd.f32 %v1891, %v1861
    %v1893 = vadd.f32 %v1892, %v1865
    %v1894 = vadd.f32 %v1893, %v1869
    %v1895 = vadd.f32 %v1894, %v1873
    %v1896 = vadd.f32 %v1846, %v1850
    %v1897 = vadd.f32 %v1896, %v1854
    %v1898 = vadd.f32 %v1897, %v1858
    %v1899 = vadd.f32 %v1898, %v1862
    %v1900 = vadd.f32 %v1899, %v1866
    %v1901 = vadd.f32 %v1900, %v1870
    %v1902 = vadd.f32 %v1901, %v1874
    %v1903 = vadd.f32 %v1881, 0.0
    %v1904 = vadd.f32 %v1888, 0.0
    %v1905 = vadd.f32 %v1895, 0.0
    %v1906 = vadd.f32 %v1902, 0.0
    %v1907 = vadd.f32 %v987, %v1903
    %v1908 = vadd.f32 %v988, %v1904
    %v1909 = vadd.f32 %v989, %v1905
    %v1910 = vadd.f32 %v990, %v1906
    %v1911 = vadd.f32 %v991, %v1903
    %v1912 = vadd.f32 %v992, %v1904
    %v1913 = vadd.f32 %v993, %v1905
    %v1914 = vadd.f32 %v994, %v1906
    %v1915 = vadd.f32 %v995, %v1903
    %v1916 = vadd.f32 %v996, %v1904
    %v1917 = vadd.f32 %v997, %v1905
    %v1918 = vadd.f32 %v998, %v1906
    %v1919 = vadd.f32 %v999, %v1903
    %v1920 = vadd.f32 %v1000, %v1904
    %v1921 = vadd.f32 %v1001, %v1905
    %v1922 = vadd.f32 %v1002, %v1906
    %v1923 = vadd.f32 %v1003, %v1903
    %v1924 = vadd.f32 %v1004, %v1904
    %v1925 = vadd.f32 %v1005, %v1905
    %v1926 = vadd.f32 %v1006, %v1906
    %v1927 = vadd.f32 %v1007, %v1903
    %v1928 = vadd.f32 %v1008, %v1904
    %v1929 = vadd.f32 %v1009, %v1905
    %v1930 = vadd.f32 %v1010, %v1906
    %v1931 = vadd.f32 %v1011, %v1903
    %v1932 = vadd.f32 %v1012, %v1904
    %v1933 = vadd.f32 %v1013, %v1905
    %v1934 = vadd.f32 %v1014, %v1906
    %v1935 = vadd.f32 %v1015, %v1903
    %v1936 = vadd.f32 %v1016, %v1904
    %v1937 = vadd.f32 %v1017, %v1905
    %v1938 = vadd.f32 %v1018, %v1906
    %v1939 = vtanh.pop %v1907
    %v1940 = vtanh.pop %v1908
    %v1941 = vtanh.pop %v1909
    %v1942 = vtanh.pop %v1910
    %v1943 = vtanh.pop %v1911
    %v1944 = vtanh.pop %v1912
    %v1945 = vtanh.pop %v1913
    %v1946 = vtanh.pop %v1914
    %v1947 = vtanh.pop %v1915
    %v1948 = vtanh.pop %v1916
    %v1949 = vtanh.pop %v1917
    %v1950 = vtanh.pop %v1918
    %v1951 = vtanh.pop %v1919
    %v1952 = vtanh.pop %v1920
    %v1953 = vtanh.pop %v1921
    %v1954 = vtanh.pop %v1922
    %v1955 = vtanh.pop %v1923
    %v1956 = vtanh.pop %v1924
    %v1957 = vtanh.pop %v1925
    %v1958 = vtanh.pop %v1926
    %v1959 = vtanh.pop %v1927
    %v1960 = vtanh.pop %v1928
    %v1961 = vtanh.pop %v1929
    %v1962 = vtanh.pop %v1930
    %v1963 = vtanh.pop %v1931
    %v1964 = vtanh.pop %v1932
    %v1965 = vtanh.pop %v1933
    %v1966 = vtanh.pop %v1934
    %v1967 = vtanh.pop %v1935
    %v1968 = vtanh.pop %v1936
    %v1969 = vtanh.pop %v1937
    %v1970 = vtanh.pop %v1938
    %1972 = vset.pattern.permute.xlu0 0
    %1973 = vperm.xlu0 %1972, %v111
    %v1974 = vpop.permute.xlu0 %1973
    %1977 = vset.pattern.permute.xlu0 0
    %1978 = vperm.xlu0 %1977, %v112
    %v1979 = vpop.permute.xlu0 %1978
    %1982 = vset.pattern.permute.xlu0 0
    %1983 = vperm.xlu0 %1982, %v113
    %v1984 = vpop.permute.xlu0 %1983
    %1987 = vset.pattern.permute.xlu0 0
    %1988 = vperm.xlu0 %1987, %v114
    %v1989 = vpop.permute.xlu0 %1988
    %v1991 = vmul.f32 %v1974, %v1939
    %v1992 = vmul.f32 %v1979, %v1940
    %v1993 = vmul.f32 %v1984, %v1941
    %v1994 = vmul.f32 %v1989, %v1942
    %v1995 = vmul.f32 %v1974, %v1943
    %v1996 = vmul.f32 %v1979, %v1944
    %v1997 = vmul.f32 %v1984, %v1945
    %v1998 = vmul.f32 %v1989, %v1946
    %v1999 = vmul.f32 %v1974, %v1947
    %v2000 = vmul.f32 %v1979, %v1948
    %v2001 = vmul.f32 %v1984, %v1949
    %v2002 = vmul.f32 %v1989, %v1950
    %v2003 = vmul.f32 %v1974, %v1951
    %v2004 = vmul.f32 %v1979, %v1952
    %v2005 = vmul.f32 %v1984, %v1953
    %v2006 = vmul.f32 %v1989, %v1954
    %v2007 = vmul.f32 %v1974, %v1955
    %v2008 = vmul.f32 %v1979, %v1956
    %v2009 = vmul.f32 %v1984, %v1957
    %v2010 = vmul.f32 %v1989, %v1958
    %v2011 = vmul.f32 %v1974, %v1959
    %v2012 = vmul.f32 %v1979, %v1960
    %v2013 = vmul.f32 %v1984, %v1961
    %v2014 = vmul.f32 %v1989, %v1962
    %v2015 = vmul.f32 %v1974, %v1963
    %v2016 = vmul.f32 %v1979, %v1964
    %v2017 = vmul.f32 %v1984, %v1965
    %v2018 = vmul.f32 %v1989, %v1966
    %v2019 = vmul.f32 %v1974, %v1967
    %v2020 = vmul.f32 %v1979, %v1968
    %v2021 = vmul.f32 %v1984, %v1969
    %v2022 = vmul.f32 %v1989, %v1970
    %v2023 = vadd.f32 %v1991, %v1992
    %v2024 = vadd.f32 %v2023, %v1993
    %v2025 = vadd.f32 %v2024, %v1994
    %v2026 = vrot.slane %v2025, 4
    %v2027 = vadd.f32 %v2025, %v2026
    %v2028 = vrot.slane %v2027, 2
    %v2029 = vadd.f32 %v2027, %v2028
    %v2030 = vrot.slane %v2029, 1
    %v2031 = vadd.f32 %v2029, %v2030
    %v2032 = vadd.f32 %v1995, %v1996
    %v2033 = vadd.f32 %v2032, %v1997
    %v2034 = vadd.f32 %v2033, %v1998
    %v2035 = vrot.slane %v2034, 4
    %v2036 = vadd.f32 %v2034, %v2035
    %v2037 = vrot.slane %v2036, 2
    %v2038 = vadd.f32 %v2036, %v2037
    %v2039 = vrot.slane %v2038, 1
    %v2040 = vadd.f32 %v2038, %v2039
    %v2041 = vadd.f32 %v1999, %v2000
    %v2042 = vadd.f32 %v2041, %v2001
    %v2043 = vadd.f32 %v2042, %v2002
    %v2044 = vrot.slane %v2043, 4
    %v2045 = vadd.f32 %v2043, %v2044
    %v2046 = vrot.slane %v2045, 2
    %v2047 = vadd.f32 %v2045, %v2046
    %v2048 = vrot.slane %v2047, 1
    %v2049 = vadd.f32 %v2047, %v2048
    %v2050 = vadd.f32 %v2003, %v2004
    %v2051 = vadd.f32 %v2050, %v2005
    %v2052 = vadd.f32 %v2051, %v2006
    %v2053 = vrot.slane %v2052, 4
    %v2054 = vadd.f32 %v2052, %v2053
    %v2055 = vrot.slane %v2054, 2
    %v2056 = vadd.f32 %v2054, %v2055
    %v2057 = vrot.slane %v2056, 1
    %v2058 = vadd.f32 %v2056, %v2057
    %v2059 = vadd.f32 %v2007, %v2008
    %v2060 = vadd.f32 %v2059, %v2009
    %v2061 = vadd.f32 %v2060, %v2010
    %v2062 = vrot.slane %v2061, 4
    %v2063 = vadd.f32 %v2061, %v2062
    %v2064 = vrot.slane %v2063, 2
    %v2065 = vadd.f32 %v2063, %v2064
    %v2066 = vrot.slane %v2065, 1
    %v2067 = vadd.f32 %v2065, %v2066
    %v2068 = vadd.f32 %v2011, %v2012
    %v2069 = vadd.f32 %v2068, %v2013
    %v2070 = vadd.f32 %v2069, %v2014
    %v2071 = vrot.slane %v2070, 4
    %v2072 = vadd.f32 %v2070, %v2071
    %v2073 = vrot.slane %v2072, 2
    %v2074 = vadd.f32 %v2072, %v2073
    %v2075 = vrot.slane %v2074, 1
    %v2076 = vadd.f32 %v2074, %v2075
    %v2077 = vadd.f32 %v2015, %v2016
    %v2078 = vadd.f32 %v2077, %v2017
    %v2079 = vadd.f32 %v2078, %v2018
    %v2080 = vrot.slane %v2079, 4
    %v2081 = vadd.f32 %v2079, %v2080
    %v2082 = vrot.slane %v2081, 2
    %v2083 = vadd.f32 %v2081, %v2082
    %v2084 = vrot.slane %v2083, 1
    %v2085 = vadd.f32 %v2083, %v2084
    %v2086 = vadd.f32 %v2019, %v2020
    %v2087 = vadd.f32 %v2086, %v2021
    %v2088 = vadd.f32 %v2087, %v2022
    %v2089 = vrot.slane %v2088, 4
    %v2090 = vadd.f32 %v2088, %v2089
    %v2091 = vrot.slane %v2090, 2
    %v2092 = vadd.f32 %v2090, %v2091
    %v2093 = vrot.slane %v2092, 1
    %v2094 = vadd.f32 %v2092, %v2093
    %v2095 = vmax.f32 %v2031, %v2067
    %v2096 = vmax.f32 %v2040, %v2076
    %v2097 = vmax.f32 %v2049, %v2085
    %v2098 = vmax.f32 %v2058, %v2094
    %v2099 = vmax.f32 %v2095, %v2096
    %v2100 = vmax.f32 %v2097, %v2098
    %v2101 = vmax.f32 %v2099, %v2100
    %vm2102 = vcmp.ge.f32.partialorder %v2031, %v2101
    %vm2103 = vcmp.ge.f32.partialorder %v2040, %v2101
    %vm2104 = vcmp.ge.f32.partialorder %v2049, %v2101
    %vm2105 = vcmp.ge.f32.partialorder %v2058, %v2101
    %vm2106 = vcmp.ge.f32.partialorder %v2067, %v2101
    %vm2107 = vcmp.ge.f32.partialorder %v2076, %v2101
    %vm2108 = vcmp.ge.f32.partialorder %v2085, %v2101
    %vm2109 = vcmp.ge.f32.partialorder %v2094, %v2101
    %v2110 = vrot.slane %v1204, 1
    %v2111 = vrot.slane %v1204, 2
    %v2112 = vrot.slane %v1204, 3
    %v2113 = vrot.slane %v1204, 4
    %v2114 = vrot.slane %v1204, 5
    %v2115 = vrot.slane %v1204, 6
    %v2116 = vrot.slane %v1204, 7
    %v2117 = vsel %vm2102, %v1204, 8
    %v2118 = vsel %vm2103, %v2110, 8
    %v2119 = vsel %vm2104, %v2111, 8
    %v2120 = vsel %vm2105, %v2112, 8
    %v2121 = vsel %vm2106, %v2113, 8
    %v2122 = vsel %vm2107, %v2114, 8
    %v2123 = vsel %vm2108, %v2115, 8
    %v2124 = vsel %vm2109, %v2116, 8
    %vm2125 = vcmask 1040384
    %v2126 = vsel %vm2125, %v2117, 2147483647
    %v2127 = vsel %vm2125, %v2118, 2147483647
    %v2128 = vsel %vm2125, %v2119, 2147483647
    %v2129 = vsel %vm2125, %v2120, 2147483647
    %v2130 = vsel %vm2125, %v2121, 2147483647
    %vm2131 = vcmp.lt.s32.totalorder %v2126, %v2130
    %v2132 = vsel %vm2131, %v2126, %v2130
    %v2133 = vsel %vm2125, %v2122, 2147483647
    %vm2134 = vcmp.lt.s32.totalorder %v2127, %v2133
    %v2135 = vsel %vm2134, %v2127, %v2133
    %v2136 = vsel %vm2125, %v2123, 2147483647
    %vm2137 = vcmp.lt.s32.totalorder %v2128, %v2136
    %v2138 = vsel %vm2137, %v2128, %v2136
    %v2139 = vsel %vm2125, %v2124, 2147483647
    %vm2140 = vcmp.lt.s32.totalorder %v2129, %v2139
    %v2141 = vsel %vm2140, %v2129, %v2139
    %vm2142 = vcmp.lt.s32.totalorder %v2132, %v2135
    %v2143 = vsel %vm2142, %v2132, %v2135
    %vm2144 = vcmp.lt.s32.totalorder %v2138, %v2141
    %v2145 = vsel %vm2144, %v2138, %v2141
    %vm2146 = vcmp.lt.s32.totalorder %v2143, %v2145
    %v2147 = vsel %vm2146, %v2143, %v2145
    %vm2148 = vcmp.lt.s32.totalorder %v2147, 7
    %v2149 = vsel %vm2148, %v2147, 7
    %v2150 = vsub.f32 %v2031, %v2101
    %v2151 = vsub.f32 %v2040, %v2101
    %v2152 = vsub.f32 %v2049, %v2101
    %v2153 = vsub.f32 %v2058, %v2101
    %v2154 = vsub.f32 %v2067, %v2101
    %v2155 = vsub.f32 %v2076, %v2101
    %v2156 = vsub.f32 %v2085, %v2101
    %v2157 = vsub.f32 %v2094, %v2101
    %v2158 = vmul.f32 %v2150, 1.442695
    %v2159 = vpow.pop %v2158
    %v2160 = vmul.f32 %v2151, 1.442695
    %v2161 = vpow.pop %v2160
    %v2162 = vmul.f32 %v2152, 1.442695
    %v2163 = vpow.pop %v2162
    %v2164 = vmul.f32 %v2153, 1.442695
    %v2165 = vpow.pop %v2164
    %v2166 = vmul.f32 %v2154, 1.442695
    %v2167 = vpow.pop %v2166
    %v2168 = vmul.f32 %v2155, 1.442695
    %v2169 = vpow.pop %v2168
    %v2170 = vmul.f32 %v2156, 1.442695
    %v2171 = vpow.pop %v2170
    %v2172 = vmul.f32 %v2157, 1.442695
    %v2173 = vpow.pop %v2172
    %v2182 = vrot.slane %v2161, 7
    %v2183 = vsel %vm1771, %v2182, %v2159
    %v2184 = vrot.slane %v2163, 6
    %v2185 = vsel %vm1774, %v2184, %v2183
    %v2186 = vrot.slane %v2165, 5
    %v2187 = vsel %vm1777, %v2186, %v2185
    %v2188 = vrot.slane %v2167, 4
    %v2189 = vsel %vm1780, %v2188, %v2187
    %v2190 = vrot.slane %v2169, 3
    %v2191 = vsel %vm1783, %v2190, %v2189
    %v2192 = vrot.slane %v2171, 2
    %v2193 = vsel %vm1786, %v2192, %v2191
    %v2194 = vrot.slane %v2173, 1
    %v2195 = vsel %vm1789, %v2194, %v2193
    %v2197 = vrot.slane %v2195, 4
    %v2198 = vadd.f32 %v2195, %v2197
    %v2199 = vrot.slane %v2198, 2
    %v2200 = vadd.f32 %v2198, %v2199
    %v2201 = vrot.slane %v2200, 1
    %v2202 = vadd.f32 %v2200, %v2201
    %v2203 = vlog2.pop %v2202
    %v2204 = vmul.f32 %v2203, 0.6931472
    %v2205 = vsub.f32 0.0, %v2204
    %v2206 = vlaneseq
    %v2207 = vshrl.u32 %v2206, 7
    %v2208 = vsub.s32 0, %v2207
    %v2209 = vrot.slane %v2149, %v2208
    %vm2210 = vcmp.eq.s32.totalorder %v1204, %v2209
    %v2211 = vsel %vm2210, 1, 0
    %v2212 = vcvt.s32.f32 %v2211
    %v2214 = vcombine.high %v2212, %v2212
    %v2216 = vunpack.c.l.s4 1966171168
    %v2217 = vunpack.c.0.s8 %v2216
    %v2218 = vlaneseq
    %v2219 = vshrl.u32 %v2218, 7
    %v2220 = vsub.s32 %v2217, %v2219
    %v2221 = vrot.slane %v2212, %v2220
    %v2223 = vunpack.c.l.s4 1966171168
    %v2224 = vunpack.c.0.s8 %v2223
    %v2225 = vlaneseq
    %v2226 = vshrl.u32 %v2225, 7
    %v2227 = vsub.s32 %v2224, %v2226
    %v2228 = vrot.slane %v2214, %v2227
    %v2229 = vcombine.high %v2221, %v2221
    %v2230 = vcombine.high %v2228, %v2228
    %v2232 = vunpack.c.l.s4 1966171168
    %v2233 = vunpack.c.0.s8 %v2232
    %v2234 = vlaneseq
    %v2235 = vshrl.u32 %v2234, 7
    %v2236 = vsub.s32 %v2233, %v2235
    %v2237 = vrot.slane %v2221, %v2236
    %v2239 = vunpack.c.l.s4 1966171168
    %v2240 = vunpack.c.0.s8 %v2239
    %v2241 = vlaneseq
    %v2242 = vshrl.u32 %v2241, 7
    %v2243 = vsub.s32 %v2240, %v2242
    %v2244 = vrot.slane %v2228, %v2243
    %v2246 = vunpack.c.l.s4 1966171168
    %v2247 = vunpack.c.0.s8 %v2246
    %v2248 = vlaneseq
    %v2249 = vshrl.u32 %v2248, 7
    %v2250 = vsub.s32 %v2247, %v2249
    %v2251 = vrot.slane %v2229, %v2250
    %v2253 = vunpack.c.l.s4 1966171168
    %v2254 = vunpack.c.0.s8 %v2253
    %v2255 = vlaneseq
    %v2256 = vshrl.u32 %v2255, 7
    %v2257 = vsub.s32 %v2254, %v2256
    %v2258 = vrot.slane %v2230, %v2257
    %v2259 = vcombine.high %v2237, %v2237
    %v2260 = vcombine.high %v2244, %v2244
    %v2261 = vcombine.high %v2251, %v2251
    %v2262 = vcombine.high %v2258, %v2258
    %v2263 = vlaneseq
    %v2264 = vshrl.u32 %v2263, 7
    %v2265 = vsub.s32 0, %v2264
    %v2266 = vrot.slane %v2237, %v2265
    %v2267 = vlaneseq
    %v2268 = vshrl.u32 %v2267, 7
    %v2269 = vsub.s32 0, %v2268
    %v2270 = vrot.slane %v2251, %v2269
    %v2271 = vlaneseq
    %v2272 = vshrl.u32 %v2271, 7
    %v2273 = vsub.s32 0, %v2272
    %v2274 = vrot.slane %v2259, %v2273
    %v2275 = vlaneseq
    %v2276 = vshrl.u32 %v2275, 7
    %v2277 = vsub.s32 0, %v2276
    %v2278 = vrot.slane %v2261, %v2277
    %v2279 = vlaneseq
    %v2280 = vshrl.u32 %v2279, 7
    %v2281 = vsub.s32 0, %v2280
    %v2282 = vrot.slane %v2244, %v2281
    %v2283 = vlaneseq
    %v2284 = vshrl.u32 %v2283, 7
    %v2285 = vsub.s32 0, %v2284
    %v2286 = vrot.slane %v2258, %v2285
    %v2287 = vlaneseq
    %v2288 = vshrl.u32 %v2287, 7
    %v2289 = vsub.s32 0, %v2288
    %v2290 = vrot.slane %v2260, %v2289
    %v2291 = vlaneseq
    %v2292 = vshrl.u32 %v2291, 7
    %v2293 = vsub.s32 0, %v2292
    %v2294 = vrot.slane %v2262, %v2293
    %v2303 = vmul.f32 %v27, %v2266
    %v2304 = vmul.f32 %v28, %v2270
    %v2305 = vmul.f32 %v29, %v2274
    %v2306 = vmul.f32 %v30, %v2278
    %v2307 = vmul.f32 %v31, %v2282
    %v2308 = vmul.f32 %v32, %v2286
    %v2309 = vmul.f32 %v33, %v2290
    %v2310 = vmul.f32 %v34, %v2294
    %vm2311 = vcmask 1041408
    %v2312 = vsel %vm2311, %v2303, 0.0
    %v2313 = vsel %vm2311, %v2304, 0.0
    %v2314 = vadd.f32 %v2312, %v2313
    %v2315 = vsel %vm2311, %v2305, 0.0
    %v2316 = vadd.f32 %v2314, %v2315
    %v2317 = vsel %vm2311, %v2306, 0.0
    %v2318 = vadd.f32 %v2316, %v2317
    %v2319 = vsel %vm2311, %v2307, 0.0
    %v2320 = vadd.f32 %v2318, %v2319
    %v2321 = vsel %vm2311, %v2308, 0.0
    %v2322 = vadd.f32 %v2320, %v2321
    %v2323 = vsel %vm2311, %v2309, 0.0
    %v2324 = vadd.f32 %v2322, %v2323
    %v2325 = vsel %vm2311, %v2310, 0.0
    %v2326 = vadd.f32 %v2324, %v2325
    %2327 = vst [vmem:[#allocation2] sm:$0x1] %v2149
    %2328 = vst [vmem:[#allocation4] sm:$0x1] %v2205
    %v2329 = vlaneseq
    %v2330 = vshrl.u32 %v2329, 7
    %v2331 = vsub.s32 0, %v2330
    %v2332 = vrot.slane %v2326, %v2331
    %v2333 = vmul.f32 %v254, %v2332
    %v2334 = vmul.f32 %v259, %v2332
    %v2335 = vmul.f32 %v264, %v2332
    %v2336 = vmul.f32 %v269, %v2332
    %v2337 = vmul.f32 %v274, %v2332
    %v2338 = vmul.f32 %v279, %v2332
    %v2339 = vmul.f32 %v284, %v2332
    %v2340 = vmul.f32 %v289, %v2332
    %v2341 = vmul.f32 %v294, %v2332
    %v2342 = vmul.f32 %v299, %v2332
    %v2343 = vmul.f32 %v304, %v2332
    %v2344 = vmul.f32 %v309, %v2332
    %v2345 = vadd.f32 %v134, %v2333
    %v2346 = vadd.f32 %v139, %v2334
    %v2347 = vadd.f32 %v144, %v2335
    %v2348 = vadd.f32 %v149, %v2336
    %v2349 = vadd.f32 %v154, %v2337
    %v2350 = vadd.f32 %v159, %v2338
    %v2351 = vadd.f32 %v164, %v2339
    %v2352 = vadd.f32 %v169, %v2340
    %v2353 = vadd.f32 %v174, %v2341
    %v2354 = vadd.f32 %v179, %v2342
    %v2355 = vadd.f32 %v184, %v2343
    %v2356 = vadd.f32 %v189, %v2344
    %v2357 = vlaneseq
    %v2358 = vshrl.u32 %v2357, 7
    %v2359 = vsub.s32 1, %v2358
    %v2360 = vrot.slane %v2326, %v2359
    %v2361 = vmul.f32 %v313, %v2360
    %v2362 = vmul.f32 %v317, %v2360
    %v2363 = vmul.f32 %v321, %v2360
    %v2364 = vmul.f32 %v325, %v2360
    %v2365 = vmul.f32 %v329, %v2360
    %v2366 = vmul.f32 %v333, %v2360
    %v2367 = vmul.f32 %v337, %v2360
    %v2368 = vmul.f32 %v341, %v2360
    %v2369 = vmul.f32 %v345, %v2360
    %v2370 = vmul.f32 %v349, %v2360
    %v2371 = vmul.f32 %v353, %v2360
    %v2372 = vmul.f32 %v357, %v2360
    %v2373 = vadd.f32 %v2345, %v2361
    %v2374 = vadd.f32 %v2346, %v2362
    %v2375 = vadd.f32 %v2347, %v2363
    %v2376 = vadd.f32 %v2348, %v2364
    %v2377 = vadd.f32 %v2349, %v2365
    %v2378 = vadd.f32 %v2350, %v2366
    %v2379 = vadd.f32 %v2351, %v2367
    %v2380 = vadd.f32 %v2352, %v2368
    %v2381 = vadd.f32 %v2353, %v2369
    %v2382 = vadd.f32 %v2354, %v2370
    %v2383 = vadd.f32 %v2355, %v2371
    %v2384 = vadd.f32 %v2356, %v2372
    %v2385 = vadd.f32 %v2373, %v1531
    %v2386 = vadd.f32 %v2374, %v1532
    %v2387 = vadd.f32 %v2375, %v1533
    %v2388 = vadd.f32 %v2376, %v1534
    %v2389 = vxor.u32 %v2385, 2147483648
    %v2390 = vxor.u32 %v2386, 2147483648
    %v2391 = vxor.u32 %v2387, 2147483648
    %v2392 = vxor.u32 %v2388, 2147483648
    %v2393 = vmul.f32 %v2389, 1.442695
    %v2394 = vpow.pop %v2393
    %v2395 = vmul.f32 %v2390, 1.442695
    %v2396 = vpow.pop %v2395
    %v2397 = vmul.f32 %v2391, 1.442695
    %v2398 = vpow.pop %v2397
    %v2399 = vmul.f32 %v2392, 1.442695
    %v2400 = vpow.pop %v2399
    %v2401 = vadd.f32 %v2394, 1.0
    %v2402 = vadd.f32 %v2396, 1.0
    %v2403 = vadd.f32 %v2398, 1.0
    %v2404 = vadd.f32 %v2400, 1.0
    %v2405 = vrcp.pop %v2401
    %v2406 = vmul.f32 1.0, %v2405
    %v2407 = vrcp.pop %v2402
    %v2408 = vmul.f32 1.0, %v2407
    %v2409 = vrcp.pop %v2403
    %v2410 = vmul.f32 1.0, %v2409
    %v2411 = vrcp.pop %v2404
    %v2412 = vmul.f32 1.0, %v2411
    %v2413 = vadd.f32 %v2377, %v1535
    %v2414 = vadd.f32 %v2378, %v1536
    %v2415 = vadd.f32 %v2379, %v1537
    %v2416 = vadd.f32 %v2380, %v1538
    %v2417 = vxor.u32 %v2413, 2147483648
    %v2418 = vxor.u32 %v2414, 2147483648
    %v2419 = vxor.u32 %v2415, 2147483648
    %v2420 = vxor.u32 %v2416, 2147483648
    %v2421 = vmul.f32 %v2417, 1.442695
    %v2422 = vpow.pop %v2421
    %v2423 = vmul.f32 %v2418, 1.442695
    %v2424 = vpow.pop %v2423
    %v2425 = vmul.f32 %v2419, 1.442695
    %v2426 = vpow.pop %v2425
    %v2427 = vmul.f32 %v2420, 1.442695
    %v2428 = vpow.pop %v2427
    %v2429 = vadd.f32 %v2422, 1.0
    %v2430 = vadd.f32 %v2424, 1.0
    %v2431 = vadd.f32 %v2426, 1.0
    %v2432 = vadd.f32 %v2428, 1.0
    %v2433 = vrcp.pop %v2429
    %v2434 = vmul.f32 1.0, %v2433
    %v2435 = vrcp.pop %v2430
    %v2436 = vmul.f32 1.0, %v2435
    %v2437 = vrcp.pop %v2431
    %v2438 = vmul.f32 1.0, %v2437
    %v2439 = vrcp.pop %v2432
    %v2440 = vmul.f32 1.0, %v2439
    %v2441 = vmul.f32 %v2406, %v1539
    %v2442 = vmul.f32 %v2408, %v1540
    %v2443 = vmul.f32 %v2410, %v1541
    %v2444 = vmul.f32 %v2412, %v1542
    %v2445 = vadd.f32 %v2381, %v2441
    %v2446 = vadd.f32 %v2382, %v2442
    %v2447 = vadd.f32 %v2383, %v2443
    %v2448 = vadd.f32 %v2384, %v2444
    %v2449 = vtanh.pop %v2445
    %v2450 = vtanh.pop %v2446
    %v2451 = vtanh.pop %v2447
    %v2452 = vtanh.pop %v2448
    %v2453 = vsub.f32 1.0, %v2434
    %v2454 = vsub.f32 1.0, %v2436
    %v2455 = vsub.f32 1.0, %v2438
    %v2456 = vsub.f32 1.0, %v2440
    %v2457 = vmul.f32 %v2453, %v2449
    %v2458 = vmul.f32 %v2454, %v2450
    %v2459 = vmul.f32 %v2455, %v2451
    %v2460 = vmul.f32 %v2456, %v2452
    %v2461 = vmul.f32 %v2434, %v1333
    %v2462 = vmul.f32 %v2436, %v1334
    %v2463 = vmul.f32 %v2438, %v1335
    %v2464 = vmul.f32 %v2440, %v1336
    %v2465 = vadd.f32 %v2457, %v2461
    %v2466 = vadd.f32 %v2458, %v2462
    %v2467 = vadd.f32 %v2459, %v2463
    %v2468 = vadd.f32 %v2460, %v2464
    %2469 = vmatprep.subr.mxu0 0.0
    %2470 = vmatpush1.msra.mxu0 %v2465
    %2471 = vmatprep.subr.mxu0 0.0
    %2472 = vmatpush1.msra.mxu0 %v2466
    %2473 = vmatprep.subr.mxu0 0.0
    %2474 = vmatpush1.msra.mxu0 %v2467
    %2475 = vmatprep.subr.mxu0 0.0
    %2476 = vmatpush1.msra.mxu0 %v2468
    %2477 = vmatprep.subr.mxu0 0.0
    %2478 = vmatpush1.msra.mxu0 0.0
    %2479 = vmatprep.subr.mxu0 0.0
    %2480 = vmatpush1.msra.mxu0 0.0
    %2481 = vmatprep.subr.mxu0 0.0
    %2482 = vmatpush1.msra.mxu0 0.0
    %2483 = vmatprep.subr.mxu0 0.0
    %2484 = vmatpush1.msra.mxu0 0.0
    %2485 = vmatprep.subr.mxu0 0.0
    %2486 = vmatpush1.msra.mxu0 0.0
    %2487 = vmatprep.subr.mxu0 0.0
    %2488 = vmatpush1.msra.mxu0 0.0
    %2489 = vmatprep.subr.mxu0 0.0
    %2490 = vmatpush1.msra.mxu0 0.0
    %2491 = vmatprep.subr.mxu0 0.0
    %2492 = vmatpush1.msra.mxu0 0.0
    %2493 = vmatprep.subr.mxu0 0.0
    %2494 = vmatpush1.msra.mxu0 0.0
    %2495 = vmatprep.subr.mxu0 0.0
    %2496 = vmatpush1.msra.mxu0 0.0
    %2497 = vmatprep.subr.mxu0 0.0
    %2498 = vmatpush1.msra.mxu0 0.0
    %2499 = vmatprep.subr.mxu0 0.0
    %2500 = vmatpush1.msra.mxu0 0.0
    %2501 = vmatprep.subr.mxu0 0.0
    %2502 = vmatpush1.msra.mxu0 0.0
    %2503 = vmatprep.subr.mxu0 0.0
    %2504 = vmatpush1.msra.mxu0 0.0
    %2505 = vmatprep.subr.mxu0 0.0
    %2506 = vmatpush1.msra.mxu0 0.0
    %2507 = vmatprep.subr.mxu0 0.0
    %2508 = vmatpush1.msra.mxu0 0.0
    %2509 = vmatprep.subr.mxu0 0.0
    %2510 = vmatpush1.msra.mxu0 0.0
    %2511 = vmatprep.subr.mxu0 0.0
    %2512 = vmatpush1.msra.mxu0 0.0
    %2513 = vmatprep.subr.mxu0 0.0
    %2514 = vmatpush1.msra.mxu0 0.0
    %2515 = vmatprep.subr.mxu0 0.0
    %2516 = vmatpush1.msra.mxu0 0.0
    %2517 = vmatprep.subr.mxu0 0.0
    %2518 = vmatpush1.msra.mxu0 0.0
    %2519 = vmatprep.subr.mxu0 0.0
    %2520 = vmatpush1.msra.mxu0 0.0
    %2521 = vmatprep.subr.mxu0 0.0
    %2522 = vmatpush1.msra.mxu0 0.0
    %2523 = vmatprep.subr.mxu0 0.0
    %2524 = vmatpush1.msra.mxu0 0.0
    %2525 = vmatprep.subr.mxu0 0.0
    %2526 = vmatpush1.msra.mxu0 0.0
    %2527 = vmatprep.subr.mxu0 0.0
    %2528 = vmatpush1.msra.mxu0 0.0
    %2529 = vmatprep.subr.mxu0 0.0
    %2530 = vmatpush1.msra.mxu0 0.0
    %2531 = vmatprep.subr.mxu0 0.0
    %2532 = vmatpush1.msra.mxu0 0.0
    %2533 = vmatprep.mubr.f32.mxu0 0.0
    %2534 = vmatmul.mubr.f32.gmra.mrb[0].mxu0 %v1339
    %v2535 = vpop.f32.mrb[0].mxu0
    %v2536 = vadd.f32 0.0, %v2535
    %v2537 = vpop.f32.mrb[0].mxu0
    %2538 = vmatprep.mubr.f32.mxu0 0.0
    %2539 = vmatmul.mubr.f32.gmra.mrb[0].mxu0 %v1342
    %v2540 = vpop.f32.mrb[0].mxu0
    %v2541 = vadd.f32 0.0, %v2540
    %v2542 = vpop.f32.mrb[0].mxu0
    %2543 = vmatprep.mubr.f32.mxu0 0.0
    %2544 = vmatmul.mubr.f32.gmra.mrb[0].mxu0 %v1345
    %v2545 = vpop.f32.mrb[0].mxu0
    %v2546 = vadd.f32 0.0, %v2545
    %v2547 = vpop.f32.mrb[0].mxu0
    %2548 = vmatprep.mubr.f32.mxu0 0.0
    %2549 = vmatmul.mubr.f32.gmra.mrb[0].mxu0 %v1348
    %v2550 = vpop.f32.mrb[0].mxu0
    %v2551 = vadd.f32 0.0, %v2550
    %v2552 = vpop.f32.mrb[0].mxu0
    %2553 = vmatprep.mubr.f32.mxu0 0.0
    %2554 = vmatmul.mubr.f32.gmra.mrb[0].mxu0 %v1351
    %v2555 = vpop.f32.mrb[0].mxu0
    %v2556 = vadd.f32 0.0, %v2555
    %v2557 = vpop.f32.mrb[0].mxu0
    %2558 = vmatprep.mubr.f32.mxu0 0.0
    %2559 = vmatmul.mubr.f32.gmra.mrb[0].mxu0 %v1354
    %v2560 = vpop.f32.mrb[0].mxu0
    %v2561 = vadd.f32 0.0, %v2560
    %v2562 = vpop.f32.mrb[0].mxu0
    %2563 = vmatprep.mubr.f32.mxu0 0.0
    %2564 = vmatmul.mubr.f32.gmra.mrb[0].mxu0 %v1357
    %v2565 = vpop.f32.mrb[0].mxu0
    %v2566 = vadd.f32 0.0, %v2565
    %v2567 = vpop.f32.mrb[0].mxu0
    %2568 = vmatprep.mubr.f32.mxu0 0.0
    %2569 = vmatmul.mubr.f32.gmra.mrb[0].mxu0 %v1360
    %v2570 = vpop.f32.mrb[0].mxu0
    %v2571 = vadd.f32 0.0, %v2570
    %v2572 = vpop.f32.mrb[0].mxu0
    %2573 = vmatprep.mubr.f32.mxu0 0.0
    %2574 = vmatmul.mubr.f32.gmra.mrb[0].mxu0 %v1363
    %v2575 = vpop.f32.mrb[0].mxu0
    %v2576 = vadd.f32 0.0, %v2575
    %v2577 = vpop.f32.mrb[0].mxu0
    %2578 = vmatprep.mubr.f32.mxu0 0.0
    %2579 = vmatmul.mubr.f32.gmra.mrb[0].mxu0 %v1366
    %v2580 = vpop.f32.mrb[0].mxu0
    %v2581 = vadd.f32 0.0, %v2580
    %v2582 = vpop.f32.mrb[0].mxu0
    %2583 = vmatprep.mubr.f32.mxu0 0.0
    %2584 = vmatmul.mubr.f32.gmra.mrb[0].mxu0 %v1369
    %v2585 = vpop.f32.mrb[0].mxu0
    %v2586 = vadd.f32 0.0, %v2585
    %v2587 = vpop.f32.mrb[0].mxu0
    %2588 = vmatprep.mubr.f32.mxu0 0.0
    %2589 = vmatmul.mubr.f32.gmra.mrb[0].mxu0 %v1372
    %v2590 = vpop.f32.mrb[0].mxu0
    %v2591 = vadd.f32 0.0, %v2590
    %v2592 = vpop.f32.mrb[0].mxu0
    %2593 = vmatprep.mubr.f32.mxu0 0.0
    %2594 = vmatmul.mubr.f32.gmra.mrb[0].mxu0 %v1375
    %v2595 = vpop.f32.mrb[0].mxu0
    %v2596 = vadd.f32 0.0, %v2595
    %v2597 = vpop.f32.mrb[0].mxu0
    %2598 = vmatprep.mubr.f32.mxu0 0.0
    %2599 = vmatmul.mubr.f32.gmra.mrb[0].mxu0 %v1378
    %v2600 = vpop.f32.mrb[0].mxu0
    %v2601 = vadd.f32 0.0, %v2600
    %v2602 = vpop.f32.mrb[0].mxu0
    %2603 = vmatprep.mubr.f32.mxu0 0.0
    %2604 = vmatmul.mubr.f32.gmra.mrb[0].mxu0 %v1381
    %v2605 = vpop.f32.mrb[0].mxu0
    %v2606 = vadd.f32 0.0, %v2605
    %v2607 = vpop.f32.mrb[0].mxu0
    %2608 = vmatprep.mubr.f32.mxu0 0.0
    %2609 = vmatmul.mubr.f32.gmra.mrb[0].mxu0 %v1384
    %v2610 = vpop.f32.mrb[0].mxu0
    %v2611 = vadd.f32 0.0, %v2610
    %v2612 = vpop.f32.mrb[0].mxu0
    %2613 = vdwg.mxu0
    %v2614 = vadd.f32 %v2536, %v194
    %v2615 = vadd.f32 %v2541, %v199
    %v2616 = vadd.f32 %v2546, %v204
    %v2617 = vadd.f32 %v2551, %v209
    %v2618 = vadd.f32 %v2556, %v214
    %v2619 = vadd.f32 %v2561, %v219
    %v2620 = vadd.f32 %v2566, %v224
    %v2621 = vadd.f32 %v2571, %v229
    %v2622 = vadd.f32 %v2576, %v234
    %v2623 = vadd.f32 %v2581, %v239
    %v2624 = vadd.f32 %v2586, %v244
    %v2625 = vadd.f32 %v2591, %v249
    %v2626 = vadd.f32 %v803, %v2596
    %v2627 = vadd.f32 %v804, %v2601
    %v2628 = vadd.f32 %v805, %v2606
    %v2629 = vadd.f32 %v806, %v2611
    %v2630 = vadd.f32 %v807, %v2596
    %v2631 = vadd.f32 %v808, %v2601
    %v2632 = vadd.f32 %v809, %v2606
    %v2633 = vadd.f32 %v810, %v2611
    %v2634 = vadd.f32 %v811, %v2596
    %v2635 = vadd.f32 %v812, %v2601
    %v2636 = vadd.f32 %v813, %v2606
    %v2637 = vadd.f32 %v814, %v2611
    %v2638 = vadd.f32 %v815, %v2596
    %v2639 = vadd.f32 %v816, %v2601
    %v2640 = vadd.f32 %v817, %v2606
    %v2641 = vadd.f32 %v818, %v2611
    %v2642 = vadd.f32 %v819, %v2596
    %v2643 = vadd.f32 %v820, %v2601
    %v2644 = vadd.f32 %v821, %v2606
    %v2645 = vadd.f32 %v822, %v2611
    %v2646 = vadd.f32 %v823, %v2596
    %v2647 = vadd.f32 %v824, %v2601
    %v2648 = vadd.f32 %v825, %v2606
    %v2649 = vadd.f32 %v826, %v2611
    %v2650 = vadd.f32 %v827, %v2596
    %v2651 = vadd.f32 %v828, %v2601
    %v2652 = vadd.f32 %v829, %v2606
    %v2653 = vadd.f32 %v830, %v2611
    %v2654 = vadd.f32 %v831, %v2596
    %v2655 = vadd.f32 %v832, %v2601
    %v2656 = vadd.f32 %v833, %v2606
    %v2657 = vadd.f32 %v834, %v2611
    %v2658 = vtanh.pop %v2626
    %v2659 = vtanh.pop %v2627
    %v2660 = vtanh.pop %v2628
    %v2661 = vtanh.pop %v2629
    %v2662 = vtanh.pop %v2630
    %v2663 = vtanh.pop %v2631
    %v2664 = vtanh.pop %v2632
    %v2665 = vtanh.pop %v2633
    %v2666 = vtanh.pop %v2634
    %v2667 = vtanh.pop %v2635
    %v2668 = vtanh.pop %v2636
    %v2669 = vtanh.pop %v2637
    %v2670 = vtanh.pop %v2638
    %v2671 = vtanh.pop %v2639
    %v2672 = vtanh.pop %v2640
    %v2673 = vtanh.pop %v2641
    %v2674 = vtanh.pop %v2642
    %v2675 = vtanh.pop %v2643
    %v2676 = vtanh.pop %v2644
    %v2677 = vtanh.pop %v2645
    %v2678 = vtanh.pop %v2646
    %v2679 = vtanh.pop %v2647
    %v2680 = vtanh.pop %v2648
    %v2681 = vtanh.pop %v2649
    %v2682 = vtanh.pop %v2650
    %v2683 = vtanh.pop %v2651
    %v2684 = vtanh.pop %v2652
    %v2685 = vtanh.pop %v2653
    %v2686 = vtanh.pop %v2654
    %v2687 = vtanh.pop %v2655
    %v2688 = vtanh.pop %v2656
    %v2689 = vtanh.pop %v2657
    %v2690 = vmul.f32 %v1610, %v2658
    %v2691 = vmul.f32 %v1615, %v2659
    %v2692 = vmul.f32 %v1620, %v2660
    %v2693 = vmul.f32 %v1625, %v2661
    %v2694 = vmul.f32 %v1610, %v2662
    %v2695 = vmul.f32 %v1615, %v2663
    %v2696 = vmul.f32 %v1620, %v2664
    %v2697 = vmul.f32 %v1625, %v2665
    %v2698 = vmul.f32 %v1610, %v2666
    %v2699 = vmul.f32 %v1615, %v2667
    %v2700 = vmul.f32 %v1620, %v2668
    %v2701 = vmul.f32 %v1625, %v2669
    %v2702 = vmul.f32 %v1610, %v2670
    %v2703 = vmul.f32 %v1615, %v2671
    %v2704 = vmul.f32 %v1620, %v2672
    %v2705 = vmul.f32 %v1625, %v2673
    %v2706 = vmul.f32 %v1610, %v2674
    %v2707 = vmul.f32 %v1615, %v2675
    %v2708 = vmul.f32 %v1620, %v2676
    %v2709 = vmul.f32 %v1625, %v2677
    %v2710 = vmul.f32 %v1610, %v2678
    %v2711 = vmul.f32 %v1615, %v2679
    %v2712 = vmul.f32 %v1620, %v2680
    %v2713 = vmul.f32 %v1625, %v2681
    %v2714 = vmul.f32 %v1610, %v2682
    %v2715 = vmul.f32 %v1615, %v2683
    %v2716 = vmul.f32 %v1620, %v2684
    %v2717 = vmul.f32 %v1625, %v2685
    %v2718 = vmul.f32 %v1610, %v2686
    %v2719 = vmul.f32 %v1615, %v2687
    %v2720 = vmul.f32 %v1620, %v2688
    %v2721 = vmul.f32 %v1625, %v2689
    %v2722 = vadd.f32 %v2690, %v2691
    %v2723 = vadd.f32 %v2722, %v2692
    %v2724 = vadd.f32 %v2723, %v2693
    %v2725 = vrot.slane %v2724, 4
    %v2726 = vadd.f32 %v2724, %v2725
    %v2727 = vrot.slane %v2726, 2
    %v2728 = vadd.f32 %v2726, %v2727
    %v2729 = vrot.slane %v2728, 1
    %v2730 = vadd.f32 %v2728, %v2729
    %v2731 = vadd.f32 %v2694, %v2695
    %v2732 = vadd.f32 %v2731, %v2696
    %v2733 = vadd.f32 %v2732, %v2697
    %v2734 = vrot.slane %v2733, 4
    %v2735 = vadd.f32 %v2733, %v2734
    %v2736 = vrot.slane %v2735, 2
    %v2737 = vadd.f32 %v2735, %v2736
    %v2738 = vrot.slane %v2737, 1
    %v2739 = vadd.f32 %v2737, %v2738
    %v2740 = vadd.f32 %v2698, %v2699
    %v2741 = vadd.f32 %v2740, %v2700
    %v2742 = vadd.f32 %v2741, %v2701
    %v2743 = vrot.slane %v2742, 4
    %v2744 = vadd.f32 %v2742, %v2743
    %v2745 = vrot.slane %v2744, 2
    %v2746 = vadd.f32 %v2744, %v2745
    %v2747 = vrot.slane %v2746, 1
    %v2748 = vadd.f32 %v2746, %v2747
    %v2749 = vadd.f32 %v2702, %v2703
    %v2750 = vadd.f32 %v2749, %v2704
    %v2751 = vadd.f32 %v2750, %v2705
    %v2752 = vrot.slane %v2751, 4
    %v2753 = vadd.f32 %v2751, %v2752
    %v2754 = vrot.slane %v2753, 2
    %v2755 = vadd.f32 %v2753, %v2754
    %v2756 = vrot.slane %v2755, 1
    %v2757 = vadd.f32 %v2755, %v2756
    %v2758 = vadd.f32 %v2706, %v2707
    %v2759 = vadd.f32 %v2758, %v2708
    %v2760 = vadd.f32 %v2759, %v2709
    %v2761 = vrot.slane %v2760, 4
    %v2762 = vadd.f32 %v2760, %v2761
    %v2763 = vrot.slane %v2762, 2
    %v2764 = vadd.f32 %v2762, %v2763
    %v2765 = vrot.slane %v2764, 1
    %v2766 = vadd.f32 %v2764, %v2765
    %v2767 = vadd.f32 %v2710, %v2711
    %v2768 = vadd.f32 %v2767, %v2712
    %v2769 = vadd.f32 %v2768, %v2713
    %v2770 = vrot.slane %v2769, 4
    %v2771 = vadd.f32 %v2769, %v2770
    %v2772 = vrot.slane %v2771, 2
    %v2773 = vadd.f32 %v2771, %v2772
    %v2774 = vrot.slane %v2773, 1
    %v2775 = vadd.f32 %v2773, %v2774
    %v2776 = vadd.f32 %v2714, %v2715
    %v2777 = vadd.f32 %v2776, %v2716
    %v2778 = vadd.f32 %v2777, %v2717
    %v2779 = vrot.slane %v2778, 4
    %v2780 = vadd.f32 %v2778, %v2779
    %v2781 = vrot.slane %v2780, 2
    %v2782 = vadd.f32 %v2780, %v2781
    %v2783 = vrot.slane %v2782, 1
    %v2784 = vadd.f32 %v2782, %v2783
    %v2785 = vadd.f32 %v2718, %v2719
    %v2786 = vadd.f32 %v2785, %v2720
    %v2787 = vadd.f32 %v2786, %v2721
    %v2788 = vrot.slane %v2787, 4
    %v2789 = vadd.f32 %v2787, %v2788
    %v2790 = vrot.slane %v2789, 2
    %v2791 = vadd.f32 %v2789, %v2790
    %v2792 = vrot.slane %v2791, 1
    %v2793 = vadd.f32 %v2791, %v2792
    %v2794 = vmax.f32 %v2730, %v2766
    %v2795 = vmax.f32 %v2739, %v2775
    %v2796 = vmax.f32 %v2748, %v2784
    %v2797 = vmax.f32 %v2757, %v2793
    %v2798 = vmax.f32 %v2794, %v2795
    %v2799 = vmax.f32 %v2796, %v2797
    %v2800 = vmax.f32 %v2798, %v2799
    %v2801 = vsub.f32 %v2730, %v2800
    %v2802 = vsub.f32 %v2739, %v2800
    %v2803 = vsub.f32 %v2748, %v2800
    %v2804 = vsub.f32 %v2757, %v2800
    %v2805 = vsub.f32 %v2766, %v2800
    %v2806 = vsub.f32 %v2775, %v2800
    %v2807 = vsub.f32 %v2784, %v2800
    %v2808 = vsub.f32 %v2793, %v2800
    %v2809 = vmul.f32 %v2801, 1.442695
    %v2810 = vpow.pop %v2809
    %v2811 = vmul.f32 %v2802, 1.442695
    %v2812 = vpow.pop %v2811
    %v2813 = vmul.f32 %v2803, 1.442695
    %v2814 = vpow.pop %v2813
    %v2815 = vmul.f32 %v2804, 1.442695
    %v2816 = vpow.pop %v2815
    %v2817 = vmul.f32 %v2805, 1.442695
    %v2818 = vpow.pop %v2817
    %v2819 = vmul.f32 %v2806, 1.442695
    %v2820 = vpow.pop %v2819
    %v2821 = vmul.f32 %v2807, 1.442695
    %v2822 = vpow.pop %v2821
    %v2823 = vmul.f32 %v2808, 1.442695
    %v2824 = vpow.pop %v2823
    %v2833 = vrot.slane %v2812, 7
    %v2834 = vsel %vm1771, %v2833, %v2810
    %v2835 = vrot.slane %v2814, 6
    %v2836 = vsel %vm1774, %v2835, %v2834
    %v2837 = vrot.slane %v2816, 5
    %v2838 = vsel %vm1777, %v2837, %v2836
    %v2839 = vrot.slane %v2818, 4
    %v2840 = vsel %vm1780, %v2839, %v2838
    %v2841 = vrot.slane %v2820, 3
    %v2842 = vsel %vm1783, %v2841, %v2840
    %v2843 = vrot.slane %v2822, 2
    %v2844 = vsel %vm1786, %v2843, %v2842
    %v2845 = vrot.slane %v2824, 1
    %v2846 = vsel %vm1789, %v2845, %v2844
    %v2848 = vrot.slane %v2846, 4
    %v2849 = vadd.f32 %v2846, %v2848
    %v2850 = vrot.slane %v2849, 2
    %v2851 = vadd.f32 %v2849, %v2850
    %v2852 = vrot.slane %v2851, 1
    %v2853 = vadd.f32 %v2851, %v2852
    %v2854 = vlaneseq
    %v2855 = vshrl.u32 %v2854, 7
    %v2856 = vsub.s32 0, %v2855
    %v2857 = vrot.slane %v2853, %v2856
    %v2858 = vrcp.pop %v2857
    %v2859 = vmul.f32 %v2810, %v2858
    %v2860 = vmul.f32 %v2812, %v2858
    %v2861 = vmul.f32 %v2814, %v2858
    %v2862 = vmul.f32 %v2816, %v2858
    %v2863 = vmul.f32 %v2818, %v2858
    %v2864 = vmul.f32 %v2820, %v2858
    %v2865 = vmul.f32 %v2822, %v2858
    %v2866 = vmul.f32 %v2824, %v2858
    %v2867 = vlaneseq
    %v2868 = vshrl.u32 %v2867, 7
    %v2869 = vsub.s32 0, %v2868
    %v2870 = vrot.slane %v2859, %v2869
    %v2871 = vlaneseq
    %v2872 = vshrl.u32 %v2871, 7
    %v2873 = vsub.s32 0, %v2872
    %v2874 = vrot.slane %v2860, %v2873
    %v2875 = vlaneseq
    %v2876 = vshrl.u32 %v2875, 7
    %v2877 = vsub.s32 0, %v2876
    %v2878 = vrot.slane %v2861, %v2877
    %v2879 = vlaneseq
    %v2880 = vshrl.u32 %v2879, 7
    %v2881 = vsub.s32 0, %v2880
    %v2882 = vrot.slane %v2862, %v2881
    %v2883 = vlaneseq
    %v2884 = vshrl.u32 %v2883, 7
    %v2885 = vsub.s32 0, %v2884
    %v2886 = vrot.slane %v2863, %v2885
    %v2887 = vlaneseq
    %v2888 = vshrl.u32 %v2887, 7
    %v2889 = vsub.s32 0, %v2888
    %v2890 = vrot.slane %v2864, %v2889
    %v2891 = vlaneseq
    %v2892 = vshrl.u32 %v2891, 7
    %v2893 = vsub.s32 0, %v2892
    %v2894 = vrot.slane %v2865, %v2893
    %v2895 = vlaneseq
    %v2896 = vshrl.u32 %v2895, 7
    %v2897 = vsub.s32 0, %v2896
    %v2898 = vrot.slane %v2866, %v2897
    %v2899 = vmul.f32 %v1171, %v2870
    %v2900 = vmul.f32 %v1172, %v2870
    %v2901 = vmul.f32 %v1173, %v2870
    %v2902 = vmul.f32 %v1174, %v2870
    %v2903 = vmul.f32 %v1175, %v2874
    %v2904 = vmul.f32 %v1176, %v2874
    %v2905 = vmul.f32 %v1177, %v2874
    %v2906 = vmul.f32 %v1178, %v2874
    %v2907 = vmul.f32 %v1179, %v2878
    %v2908 = vmul.f32 %v1180, %v2878
    %v2909 = vmul.f32 %v1181, %v2878
    %v2910 = vmul.f32 %v1182, %v2878
    %v2911 = vmul.f32 %v1183, %v2882
    %v2912 = vmul.f32 %v1184, %v2882
    %v2913 = vmul.f32 %v1185, %v2882
    %v2914 = vmul.f32 %v1186, %v2882
    %v2915 = vmul.f32 %v1187, %v2886
    %v2916 = vmul.f32 %v1188, %v2886
    %v2917 = vmul.f32 %v1189, %v2886
    %v2918 = vmul.f32 %v1190, %v2886
    %v2919 = vmul.f32 %v1191, %v2890
    %v2920 = vmul.f32 %v1192, %v2890
    %v2921 = vmul.f32 %v1193, %v2890
    %v2922 = vmul.f32 %v1194, %v2890
    %v2923 = vmul.f32 %v1195, %v2894
    %v2924 = vmul.f32 %v1196, %v2894
    %v2925 = vmul.f32 %v1197, %v2894
    %v2926 = vmul.f32 %v1198, %v2894
    %v2927 = vmul.f32 %v1199, %v2898
    %v2928 = vmul.f32 %v1200, %v2898
    %v2929 = vmul.f32 %v1201, %v2898
    %v2930 = vmul.f32 %v1202, %v2898
    %v2931 = vadd.f32 %v2899, %v2903
    %v2932 = vadd.f32 %v2931, %v2907
    %v2933 = vadd.f32 %v2932, %v2911
    %v2934 = vadd.f32 %v2933, %v2915
    %v2935 = vadd.f32 %v2934, %v2919
    %v2936 = vadd.f32 %v2935, %v2923
    %v2937 = vadd.f32 %v2936, %v2927
    %v2938 = vadd.f32 %v2900, %v2904
    %v2939 = vadd.f32 %v2938, %v2908
    %v2940 = vadd.f32 %v2939, %v2912
    %v2941 = vadd.f32 %v2940, %v2916
    %v2942 = vadd.f32 %v2941, %v2920
    %v2943 = vadd.f32 %v2942, %v2924
    %v2944 = vadd.f32 %v2943, %v2928
    %v2945 = vadd.f32 %v2901, %v2905
    %v2946 = vadd.f32 %v2945, %v2909
    %v2947 = vadd.f32 %v2946, %v2913
    %v2948 = vadd.f32 %v2947, %v2917
    %v2949 = vadd.f32 %v2948, %v2921
    %v2950 = vadd.f32 %v2949, %v2925
    %v2951 = vadd.f32 %v2950, %v2929
    %v2952 = vadd.f32 %v2902, %v2906
    %v2953 = vadd.f32 %v2952, %v2910
    %v2954 = vadd.f32 %v2953, %v2914
    %v2955 = vadd.f32 %v2954, %v2918
    %v2956 = vadd.f32 %v2955, %v2922
    %v2957 = vadd.f32 %v2956, %v2926
    %v2958 = vadd.f32 %v2957, %v2930
    %v2959 = vadd.f32 %v2937, 0.0
    %v2960 = vadd.f32 %v2944, 0.0
    %v2961 = vadd.f32 %v2951, 0.0
    %v2962 = vadd.f32 %v2958, 0.0
    %v2963 = vadd.f32 %v987, %v2959
    %v2964 = vadd.f32 %v988, %v2960
    %v2965 = vadd.f32 %v989, %v2961
    %v2966 = vadd.f32 %v990, %v2962
    %v2967 = vadd.f32 %v991, %v2959
    %v2968 = vadd.f32 %v992, %v2960
    %v2969 = vadd.f32 %v993, %v2961
    %v2970 = vadd.f32 %v994, %v2962
    %v2971 = vadd.f32 %v995, %v2959
    %v2972 = vadd.f32 %v996, %v2960
    %v2973 = vadd.f32 %v997, %v2961
    %v2974 = vadd.f32 %v998, %v2962
    %v2975 = vadd.f32 %v999, %v2959
    %v2976 = vadd.f32 %v1000, %v2960
    %v2977 = vadd.f32 %v1001, %v2961
    %v2978 = vadd.f32 %v1002, %v2962
    %v2979 = vadd.f32 %v1003, %v2959
    %v2980 = vadd.f32 %v1004, %v2960
    %v2981 = vadd.f32 %v1005, %v2961
    %v2982 = vadd.f32 %v1006, %v2962
    %v2983 = vadd.f32 %v1007, %v2959
    %v2984 = vadd.f32 %v1008, %v2960
    %v2985 = vadd.f32 %v1009, %v2961
    %v2986 = vadd.f32 %v1010, %v2962
    %v2987 = vadd.f32 %v1011, %v2959
    %v2988 = vadd.f32 %v1012, %v2960
    %v2989 = vadd.f32 %v1013, %v2961
    %v2990 = vadd.f32 %v1014, %v2962
    %v2991 = vadd.f32 %v1015, %v2959
    %v2992 = vadd.f32 %v1016, %v2960
    %v2993 = vadd.f32 %v1017, %v2961
    %v2994 = vadd.f32 %v1018, %v2962
    %v2995 = vtanh.pop %v2963
    %v2996 = vtanh.pop %v2964
    %v2997 = vtanh.pop %v2965
    %v2998 = vtanh.pop %v2966
    %v2999 = vtanh.pop %v2967
    %v3000 = vtanh.pop %v2968
    %v3001 = vtanh.pop %v2969
    %v3002 = vtanh.pop %v2970
    %v3003 = vtanh.pop %v2971
    %v3004 = vtanh.pop %v2972
    %v3005 = vtanh.pop %v2973
    %v3006 = vtanh.pop %v2974
    %v3007 = vtanh.pop %v2975
    %v3008 = vtanh.pop %v2976
    %v3009 = vtanh.pop %v2977
    %v3010 = vtanh.pop %v2978
    %v3011 = vtanh.pop %v2979
    %v3012 = vtanh.pop %v2980
    %v3013 = vtanh.pop %v2981
    %v3014 = vtanh.pop %v2982
    %v3015 = vtanh.pop %v2983
    %v3016 = vtanh.pop %v2984
    %v3017 = vtanh.pop %v2985
    %v3018 = vtanh.pop %v2986
    %v3019 = vtanh.pop %v2987
    %v3020 = vtanh.pop %v2988
    %v3021 = vtanh.pop %v2989
    %v3022 = vtanh.pop %v2990
    %v3023 = vtanh.pop %v2991
    %v3024 = vtanh.pop %v2992
    %v3025 = vtanh.pop %v2993
    %v3026 = vtanh.pop %v2994
    %v3027 = vmul.f32 %v1974, %v2995
    %v3028 = vmul.f32 %v1979, %v2996
    %v3029 = vmul.f32 %v1984, %v2997
    %v3030 = vmul.f32 %v1989, %v2998
    %v3031 = vmul.f32 %v1974, %v2999
    %v3032 = vmul.f32 %v1979, %v3000
    %v3033 = vmul.f32 %v1984, %v3001
    %v3034 = vmul.f32 %v1989, %v3002
    %v3035 = vmul.f32 %v1974, %v3003
    %v3036 = vmul.f32 %v1979, %v3004
    %v3037 = vmul.f32 %v1984, %v3005
    %v3038 = vmul.f32 %v1989, %v3006
    %v3039 = vmul.f32 %v1974, %v3007
    %v3040 = vmul.f32 %v1979, %v3008
    %v3041 = vmul.f32 %v1984, %v3009
    %v3042 = vmul.f32 %v1989, %v3010
    %v3043 = vmul.f32 %v1974, %v3011
    %v3044 = vmul.f32 %v1979, %v3012
    %v3045 = vmul.f32 %v1984, %v3013
    %v3046 = vmul.f32 %v1989, %v3014
    %v3047 = vmul.f32 %v1974, %v3015
    %v3048 = vmul.f32 %v1979, %v3016
    %v3049 = vmul.f32 %v1984, %v3017
    %v3050 = vmul.f32 %v1989, %v3018
    %v3051 = vmul.f32 %v1974, %v3019
    %v3052 = vmul.f32 %v1979, %v3020
    %v3053 = vmul.f32 %v1984, %v3021
    %v3054 = vmul.f32 %v1989, %v3022
    %v3055 = vmul.f32 %v1974, %v3023
    %v3056 = vmul.f32 %v1979, %v3024
    %v3057 = vmul.f32 %v1984, %v3025
    %v3058 = vmul.f32 %v1989, %v3026
    %v3059 = vadd.f32 %v3027, %v3028
    %v3060 = vadd.f32 %v3059, %v3029
    %v3061 = vadd.f32 %v3060, %v3030
    %v3062 = vrot.slane %v3061, 4
    %v3063 = vadd.f32 %v3061, %v3062
    %v3064 = vrot.slane %v3063, 2
    %v3065 = vadd.f32 %v3063, %v3064
    %v3066 = vrot.slane %v3065, 1
    %v3067 = vadd.f32 %v3065, %v3066
    %v3068 = vadd.f32 %v3031, %v3032
    %v3069 = vadd.f32 %v3068, %v3033
    %v3070 = vadd.f32 %v3069, %v3034
    %v3071 = vrot.slane %v3070, 4
    %v3072 = vadd.f32 %v3070, %v3071
    %v3073 = vrot.slane %v3072, 2
    %v3074 = vadd.f32 %v3072, %v3073
    %v3075 = vrot.slane %v3074, 1
    %v3076 = vadd.f32 %v3074, %v3075
    %v3077 = vadd.f32 %v3035, %v3036
    %v3078 = vadd.f32 %v3077, %v3037
    %v3079 = vadd.f32 %v3078, %v3038
    %v3080 = vrot.slane %v3079, 4
    %v3081 = vadd.f32 %v3079, %v3080
    %v3082 = vrot.slane %v3081, 2
    %v3083 = vadd.f32 %v3081, %v3082
    %v3084 = vrot.slane %v3083, 1
    %v3085 = vadd.f32 %v3083, %v3084
    %v3086 = vadd.f32 %v3039, %v3040
    %v3087 = vadd.f32 %v3086, %v3041
    %v3088 = vadd.f32 %v3087, %v3042
    %v3089 = vrot.slane %v3088, 4
    %v3090 = vadd.f32 %v3088, %v3089
    %v3091 = vrot.slane %v3090, 2
    %v3092 = vadd.f32 %v3090, %v3091
    %v3093 = vrot.slane %v3092, 1
    %v3094 = vadd.f32 %v3092, %v3093
    %v3095 = vadd.f32 %v3043, %v3044
    %v3096 = vadd.f32 %v3095, %v3045
    %v3097 = vadd.f32 %v3096, %v3046
    %v3098 = vrot.slane %v3097, 4
    %v3099 = vadd.f32 %v3097, %v3098
    %v3100 = vrot.slane %v3099, 2
    %v3101 = vadd.f32 %v3099, %v3100
    %v3102 = vrot.slane %v3101, 1
    %v3103 = vadd.f32 %v3101, %v3102
    %v3104 = vadd.f32 %v3047, %v3048
    %v3105 = vadd.f32 %v3104, %v3049
    %v3106 = vadd.f32 %v3105, %v3050
    %v3107 = vrot.slane %v3106, 4
    %v3108 = vadd.f32 %v3106, %v3107
    %v3109 = vrot.slane %v3108, 2
    %v3110 = vadd.f32 %v3108, %v3109
    %v3111 = vrot.slane %v3110, 1
    %v3112 = vadd.f32 %v3110, %v3111
    %v3113 = vadd.f32 %v3051, %v3052
    %v3114 = vadd.f32 %v3113, %v3053
    %v3115 = vadd.f32 %v3114, %v3054
    %v3116 = vrot.slane %v3115, 4
    %v3117 = vadd.f32 %v3115, %v3116
    %v3118 = vrot.slane %v3117, 2
    %v3119 = vadd.f32 %v3117, %v3118
    %v3120 = vrot.slane %v3119, 1
    %v3121 = vadd.f32 %v3119, %v3120
    %v3122 = vadd.f32 %v3055, %v3056
    %v3123 = vadd.f32 %v3122, %v3057
    %v3124 = vadd.f32 %v3123, %v3058
    %v3125 = vrot.slane %v3124, 4
    %v3126 = vadd.f32 %v3124, %v3125
    %v3127 = vrot.slane %v3126, 2
    %v3128 = vadd.f32 %v3126, %v3127
    %v3129 = vrot.slane %v3128, 1
    %v3130 = vadd.f32 %v3128, %v3129
    %v3131 = vmax.f32 %v3067, %v3103
    %v3132 = vmax.f32 %v3076, %v3112
    %v3133 = vmax.f32 %v3085, %v3121
    %v3134 = vmax.f32 %v3094, %v3130
    %v3135 = vmax.f32 %v3131, %v3132
    %v3136 = vmax.f32 %v3133, %v3134
    %v3137 = vmax.f32 %v3135, %v3136
    %vm3138 = vcmp.ge.f32.partialorder %v3067, %v3137
    %vm3139 = vcmp.ge.f32.partialorder %v3076, %v3137
    %vm3140 = vcmp.ge.f32.partialorder %v3085, %v3137
    %vm3141 = vcmp.ge.f32.partialorder %v3094, %v3137
    %vm3142 = vcmp.ge.f32.partialorder %v3103, %v3137
    %vm3143 = vcmp.ge.f32.partialorder %v3112, %v3137
    %vm3144 = vcmp.ge.f32.partialorder %v3121, %v3137
    %vm3145 = vcmp.ge.f32.partialorder %v3130, %v3137
    %v3146 = vsel %vm3138, %v1204, 8
    %v3147 = vsel %vm3139, %v2110, 8
    %v3148 = vsel %vm3140, %v2111, 8
    %v3149 = vsel %vm3141, %v2112, 8
    %v3150 = vsel %vm3142, %v2113, 8
    %v3151 = vsel %vm3143, %v2114, 8
    %v3152 = vsel %vm3144, %v2115, 8
    %v3153 = vsel %vm3145, %v2116, 8
    %v3154 = vsel %vm2125, %v3146, 2147483647
    %v3155 = vsel %vm2125, %v3147, 2147483647
    %v3156 = vsel %vm2125, %v3148, 2147483647
    %v3157 = vsel %vm2125, %v3149, 2147483647
    %v3158 = vsel %vm2125, %v3150, 2147483647
    %vm3159 = vcmp.lt.s32.totalorder %v3154, %v3158
    %v3160 = vsel %vm3159, %v3154, %v3158
    %v3161 = vsel %vm2125, %v3151, 2147483647
    %vm3162 = vcmp.lt.s32.totalorder %v3155, %v3161
    %v3163 = vsel %vm3162, %v3155, %v3161
    %v3164 = vsel %vm2125, %v3152, 2147483647
    %vm3165 = vcmp.lt.s32.totalorder %v3156, %v3164
    %v3166 = vsel %vm3165, %v3156, %v3164
    %v3167 = vsel %vm2125, %v3153, 2147483647
    %vm3168 = vcmp.lt.s32.totalorder %v3157, %v3167
    %v3169 = vsel %vm3168, %v3157, %v3167
    %vm3170 = vcmp.lt.s32.totalorder %v3160, %v3163
    %v3171 = vsel %vm3170, %v3160, %v3163
    %vm3172 = vcmp.lt.s32.totalorder %v3166, %v3169
    %v3173 = vsel %vm3172, %v3166, %v3169
    %vm3174 = vcmp.lt.s32.totalorder %v3171, %v3173
    %v3175 = vsel %vm3174, %v3171, %v3173
    %vm3176 = vcmp.lt.s32.totalorder %v3175, 7
    %v3177 = vsel %vm3176, %v3175, 7
    %v3178 = vsub.f32 %v3067, %v3137
    %v3179 = vsub.f32 %v3076, %v3137
    %v3180 = vsub.f32 %v3085, %v3137
    %v3181 = vsub.f32 %v3094, %v3137
    %v3182 = vsub.f32 %v3103, %v3137
    %v3183 = vsub.f32 %v3112, %v3137
    %v3184 = vsub.f32 %v3121, %v3137
    %v3185 = vsub.f32 %v3130, %v3137
    %v3186 = vmul.f32 %v3178, 1.442695
    %v3187 = vpow.pop %v3186
    %v3188 = vmul.f32 %v3179, 1.442695
    %v3189 = vpow.pop %v3188
    %v3190 = vmul.f32 %v3180, 1.442695
    %v3191 = vpow.pop %v3190
    %v3192 = vmul.f32 %v3181, 1.442695
    %v3193 = vpow.pop %v3192
    %v3194 = vmul.f32 %v3182, 1.442695
    %v3195 = vpow.pop %v3194
    %v3196 = vmul.f32 %v3183, 1.442695
    %v3197 = vpow.pop %v3196
    %v3198 = vmul.f32 %v3184, 1.442695
    %v3199 = vpow.pop %v3198
    %v3200 = vmul.f32 %v3185, 1.442695
    %v3201 = vpow.pop %v3200
    %v3210 = vrot.slane %v3189, 7
    %v3211 = vsel %vm1771, %v3210, %v3187
    %v3212 = vrot.slane %v3191, 6
    %v3213 = vsel %vm1774, %v3212, %v3211
    %v3214 = vrot.slane %v3193, 5
    %v3215 = vsel %vm1777, %v3214, %v3213
    %v3216 = vrot.slane %v3195, 4
    %v3217 = vsel %vm1780, %v3216, %v3215
    %v3218 = vrot.slane %v3197, 3
    %v3219 = vsel %vm1783, %v3218, %v3217
    %v3220 = vrot.slane %v3199, 2
    %v3221 = vsel %vm1786, %v3220, %v3219
    %v3222 = vrot.slane %v3201, 1
    %v3223 = vsel %vm1789, %v3222, %v3221
    %v3225 = vrot.slane %v3223, 4
    %v3226 = vadd.f32 %v3223, %v3225
    %v3227 = vrot.slane %v3226, 2
    %v3228 = vadd.f32 %v3226, %v3227
    %v3229 = vrot.slane %v3228, 1
    %v3230 = vadd.f32 %v3228, %v3229
    %v3231 = vlog2.pop %v3230
    %v3232 = vmul.f32 %v3231, 0.6931472
    %v3233 = vsub.f32 0.0, %v3232
    %v3234 = vlaneseq
    %v3235 = vshrl.u32 %v3234, 7
    %v3236 = vsub.s32 0, %v3235
    %v3237 = vrot.slane %v3177, %v3236
    %vm3238 = vcmp.eq.s32.totalorder %v1204, %v3237
    %v3239 = vsel %vm3238, 1, 0
    %v3240 = vcvt.s32.f32 %v3239
    %v3242 = vcombine.high %v3240, %v3240
    %v3244 = vunpack.c.l.s4 1966171168
    %v3245 = vunpack.c.0.s8 %v3244
    %v3246 = vlaneseq
    %v3247 = vshrl.u32 %v3246, 7
    %v3248 = vsub.s32 %v3245, %v3247
    %v3249 = vrot.slane %v3240, %v3248
    %v3251 = vunpack.c.l.s4 1966171168
    %v3252 = vunpack.c.0.s8 %v3251
    %v3253 = vlaneseq
    %v3254 = vshrl.u32 %v3253, 7
    %v3255 = vsub.s32 %v3252, %v3254
    %v3256 = vrot.slane %v3242, %v3255
    %v3257 = vcombine.high %v3249, %v3249
    %v3258 = vcombine.high %v3256, %v3256
    %v3260 = vunpack.c.l.s4 1966171168
    %v3261 = vunpack.c.0.s8 %v3260
    %v3262 = vlaneseq
    %v3263 = vshrl.u32 %v3262, 7
    %v3264 = vsub.s32 %v3261, %v3263
    %v3265 = vrot.slane %v3249, %v3264
    %v3267 = vunpack.c.l.s4 1966171168
    %v3268 = vunpack.c.0.s8 %v3267
    %v3269 = vlaneseq
    %v3270 = vshrl.u32 %v3269, 7
    %v3271 = vsub.s32 %v3268, %v3270
    %v3272 = vrot.slane %v3256, %v3271
    %v3274 = vunpack.c.l.s4 1966171168
    %v3275 = vunpack.c.0.s8 %v3274
    %v3276 = vlaneseq
    %v3277 = vshrl.u32 %v3276, 7
    %v3278 = vsub.s32 %v3275, %v3277
    %v3279 = vrot.slane %v3257, %v3278
    %v3281 = vunpack.c.l.s4 1966171168
    %v3282 = vunpack.c.0.s8 %v3281
    %v3283 = vlaneseq
    %v3284 = vshrl.u32 %v3283, 7
    %v3285 = vsub.s32 %v3282, %v3284
    %v3286 = vrot.slane %v3258, %v3285
    %v3287 = vcombine.high %v3265, %v3265
    %v3288 = vcombine.high %v3272, %v3272
    %v3289 = vcombine.high %v3279, %v3279
    %v3290 = vcombine.high %v3286, %v3286
    %v3291 = vlaneseq
    %v3292 = vshrl.u32 %v3291, 7
    %v3293 = vsub.s32 0, %v3292
    %v3294 = vrot.slane %v3265, %v3293
    %v3295 = vlaneseq
    %v3296 = vshrl.u32 %v3295, 7
    %v3297 = vsub.s32 0, %v3296
    %v3298 = vrot.slane %v3279, %v3297
    %v3299 = vlaneseq
    %v3300 = vshrl.u32 %v3299, 7
    %v3301 = vsub.s32 0, %v3300
    %v3302 = vrot.slane %v3287, %v3301
    %v3303 = vlaneseq
    %v3304 = vshrl.u32 %v3303, 7
    %v3305 = vsub.s32 0, %v3304
    %v3306 = vrot.slane %v3289, %v3305
    %v3307 = vlaneseq
    %v3308 = vshrl.u32 %v3307, 7
    %v3309 = vsub.s32 0, %v3308
    %v3310 = vrot.slane %v3272, %v3309
    %v3311 = vlaneseq
    %v3312 = vshrl.u32 %v3311, 7
    %v3313 = vsub.s32 0, %v3312
    %v3314 = vrot.slane %v3286, %v3313
    %v3315 = vlaneseq
    %v3316 = vshrl.u32 %v3315, 7
    %v3317 = vsub.s32 0, %v3316
    %v3318 = vrot.slane %v3288, %v3317
    %v3319 = vlaneseq
    %v3320 = vshrl.u32 %v3319, 7
    %v3321 = vsub.s32 0, %v3320
    %v3322 = vrot.slane %v3290, %v3321
    %v3331 = vmul.f32 %v27, %v3294
    %v3332 = vmul.f32 %v28, %v3298
    %v3333 = vmul.f32 %v29, %v3302
    %v3334 = vmul.f32 %v30, %v3306
    %v3335 = vmul.f32 %v31, %v3310
    %v3336 = vmul.f32 %v32, %v3314
    %v3337 = vmul.f32 %v33, %v3318
    %v3338 = vmul.f32 %v34, %v3322
    %v3339 = vsel %vm2311, %v3331, 0.0
    %v3340 = vsel %vm2311, %v3332, 0.0
    %v3341 = vadd.f32 %v3339, %v3340
    %v3342 = vsel %vm2311, %v3333, 0.0
    %v3343 = vadd.f32 %v3341, %v3342
    %v3344 = vsel %vm2311, %v3334, 0.0
    %v3345 = vadd.f32 %v3343, %v3344
    %v3346 = vsel %vm2311, %v3335, 0.0
    %v3347 = vadd.f32 %v3345, %v3346
    %v3348 = vsel %vm2311, %v3336, 0.0
    %v3349 = vadd.f32 %v3347, %v3348
    %v3350 = vsel %vm2311, %v3337, 0.0
    %v3351 = vadd.f32 %v3349, %v3350
    %v3352 = vsel %vm2311, %v3338, 0.0
    %v3353 = vadd.f32 %v3351, %v3352
    %3354 = vst [vmem:[#allocation2 + $0x1] sm:$0x1] %v3177
    %3355 = vst [vmem:[#allocation4 + $0x1] sm:$0x1] %v3233
    %v3356 = vlaneseq
    %v3357 = vshrl.u32 %v3356, 7
    %v3358 = vsub.s32 0, %v3357
    %v3359 = vrot.slane %v3353, %v3358
    %v3360 = vmul.f32 %v254, %v3359
    %v3361 = vmul.f32 %v259, %v3359
    %v3362 = vmul.f32 %v264, %v3359
    %v3363 = vmul.f32 %v269, %v3359
    %v3364 = vmul.f32 %v274, %v3359
    %v3365 = vmul.f32 %v279, %v3359
    %v3366 = vmul.f32 %v284, %v3359
    %v3367 = vmul.f32 %v289, %v3359
    %v3368 = vmul.f32 %v294, %v3359
    %v3369 = vmul.f32 %v299, %v3359
    %v3370 = vmul.f32 %v304, %v3359
    %v3371 = vmul.f32 %v309, %v3359
    %v3372 = vadd.f32 %v134, %v3360
    %v3373 = vadd.f32 %v139, %v3361
    %v3374 = vadd.f32 %v144, %v3362
    %v3375 = vadd.f32 %v149, %v3363
    %v3376 = vadd.f32 %v154, %v3364
    %v3377 = vadd.f32 %v159, %v3365
    %v3378 = vadd.f32 %v164, %v3366
    %v3379 = vadd.f32 %v169, %v3367
    %v3380 = vadd.f32 %v174, %v3368
    %v3381 = vadd.f32 %v179, %v3369
    %v3382 = vadd.f32 %v184, %v3370
    %v3383 = vadd.f32 %v189, %v3371
    %v3384 = vlaneseq
    %v3385 = vshrl.u32 %v3384, 7
    %v3386 = vsub.s32 1, %v3385
    %v3387 = vrot.slane %v3353, %v3386
    %v3388 = vmul.f32 %v313, %v3387
    %v3389 = vmul.f32 %v317, %v3387
    %v3390 = vmul.f32 %v321, %v3387
    %v3391 = vmul.f32 %v325, %v3387
    %v3392 = vmul.f32 %v329, %v3387
    %v3393 = vmul.f32 %v333, %v3387
    %v3394 = vmul.f32 %v337, %v3387
    %v3395 = vmul.f32 %v341, %v3387
    %v3396 = vmul.f32 %v345, %v3387
    %v3397 = vmul.f32 %v349, %v3387
    %v3398 = vmul.f32 %v353, %v3387
    %v3399 = vmul.f32 %v357, %v3387
    %v3400 = vadd.f32 %v3372, %v3388
    %v3401 = vadd.f32 %v3373, %v3389
    %v3402 = vadd.f32 %v3374, %v3390
    %v3403 = vadd.f32 %v3375, %v3391
    %v3404 = vadd.f32 %v3376, %v3392
    %v3405 = vadd.f32 %v3377, %v3393
    %v3406 = vadd.f32 %v3378, %v3394
    %v3407 = vadd.f32 %v3379, %v3395
    %v3408 = vadd.f32 %v3380, %v3396
    %v3409 = vadd.f32 %v3381, %v3397
    %v3410 = vadd.f32 %v3382, %v3398
    %v3411 = vadd.f32 %v3383, %v3399
    %v3412 = vadd.f32 %v3400, %v2614
    %v3413 = vadd.f32 %v3401, %v2615
    %v3414 = vadd.f32 %v3402, %v2616
    %v3415 = vadd.f32 %v3403, %v2617
    %v3416 = vxor.u32 %v3412, 2147483648
    %v3417 = vxor.u32 %v3413, 2147483648
    %v3418 = vxor.u32 %v3414, 2147483648
    %v3419 = vxor.u32 %v3415, 2147483648
    %v3420 = vmul.f32 %v3416, 1.442695
    %v3421 = vpow.pop %v3420
    %v3422 = vmul.f32 %v3417, 1.442695
    %v3423 = vpow.pop %v3422
    %v3424 = vmul.f32 %v3418, 1.442695
    %v3425 = vpow.pop %v3424
    %v3426 = vmul.f32 %v3419, 1.442695
    %v3427 = vpow.pop %v3426
    %v3428 = vadd.f32 %v3421, 1.0
    %v3429 = vadd.f32 %v3423, 1.0
    %v3430 = vadd.f32 %v3425, 1.0
    %v3431 = vadd.f32 %v3427, 1.0
    %v3432 = vrcp.pop %v3428
    %v3433 = vmul.f32 1.0, %v3432
    %v3434 = vrcp.pop %v3429
    %v3435 = vmul.f32 1.0, %v3434
    %v3436 = vrcp.pop %v3430
    %v3437 = vmul.f32 1.0, %v3436
    %v3438 = vrcp.pop %v3431
    %v3439 = vmul.f32 1.0, %v3438
    %v3440 = vadd.f32 %v3404, %v2618
    %v3441 = vadd.f32 %v3405, %v2619
    %v3442 = vadd.f32 %v3406, %v2620
    %v3443 = vadd.f32 %v3407, %v2621
    %v3444 = vxor.u32 %v3440, 2147483648
    %v3445 = vxor.u32 %v3441, 2147483648
    %v3446 = vxor.u32 %v3442, 2147483648
    %v3447 = vxor.u32 %v3443, 2147483648
    %v3448 = vmul.f32 %v3444, 1.442695
    %v3449 = vpow.pop %v3448
    %v3450 = vmul.f32 %v3445, 1.442695
    %v3451 = vpow.pop %v3450
    %v3452 = vmul.f32 %v3446, 1.442695
    %v3453 = vpow.pop %v3452
    %v3454 = vmul.f32 %v3447, 1.442695
    %v3455 = vpow.pop %v3454
    %v3456 = vadd.f32 %v3449, 1.0
    %v3457 = vadd.f32 %v3451, 1.0
    %v3458 = vadd.f32 %v3453, 1.0
    %v3459 = vadd.f32 %v3455, 1.0
    %v3460 = vrcp.pop %v3456
    %v3461 = vmul.f32 1.0, %v3460
    %v3462 = vrcp.pop %v3457
    %v3463 = vmul.f32 1.0, %v3462
    %v3464 = vrcp.pop %v3458
    %v3465 = vmul.f32 1.0, %v3464
    %v3466 = vrcp.pop %v3459
    %v3467 = vmul.f32 1.0, %v3466
    %v3468 = vmul.f32 %v3433, %v2622
    %v3469 = vmul.f32 %v3435, %v2623
    %v3470 = vmul.f32 %v3437, %v2624
    %v3471 = vmul.f32 %v3439, %v2625
    %v3472 = vadd.f32 %v3408, %v3468
    %v3473 = vadd.f32 %v3409, %v3469
    %v3474 = vadd.f32 %v3410, %v3470
    %v3475 = vadd.f32 %v3411, %v3471
    %v3476 = vtanh.pop %v3472
    %v3477 = vtanh.pop %v3473
    %v3478 = vtanh.pop %v3474
    %v3479 = vtanh.pop %v3475
    %v3480 = vsub.f32 1.0, %v3461
    %v3481 = vsub.f32 1.0, %v3463
    %v3482 = vsub.f32 1.0, %v3465
    %v3483 = vsub.f32 1.0, %v3467
    %v3484 = vmul.f32 %v3480, %v3476
    %v3485 = vmul.f32 %v3481, %v3477
    %v3486 = vmul.f32 %v3482, %v3478
    %v3487 = vmul.f32 %v3483, %v3479
    %v3488 = vmul.f32 %v3461, %v2465
    %v3489 = vmul.f32 %v3463, %v2466
    %v3490 = vmul.f32 %v3465, %v2467
    %v3491 = vmul.f32 %v3467, %v2468
    %v3492 = vadd.f32 %v3484, %v3488
    %v3493 = vadd.f32 %v3485, %v3489
    %v3494 = vadd.f32 %v3486, %v3490
    %v3495 = vadd.f32 %v3487, %v3491
    %3496 = vmatprep.subr.mxu0 0.0
    %3497 = vmatpush1.msra.mxu0 %v3492
    %3498 = vmatprep.subr.mxu0 0.0
    %3499 = vmatpush1.msra.mxu0 %v3493
    %3500 = vmatprep.subr.mxu0 0.0
    %3501 = vmatpush1.msra.mxu0 %v3494
    %3502 = vmatprep.subr.mxu0 0.0
    %3503 = vmatpush1.msra.mxu0 %v3495
    %3504 = vmatprep.subr.mxu0 0.0
    %3505 = vmatpush1.msra.mxu0 0.0
    %3506 = vmatprep.subr.mxu0 0.0
    %3507 = vmatpush1.msra.mxu0 0.0
    %3508 = vmatprep.subr.mxu0 0.0
    %3509 = vmatpush1.msra.mxu0 0.0
    %3510 = vmatprep.subr.mxu0 0.0
    %3511 = vmatpush1.msra.mxu0 0.0
    %3512 = vmatprep.subr.mxu0 0.0
    %3513 = vmatpush1.msra.mxu0 0.0
    %3514 = vmatprep.subr.mxu0 0.0
    %3515 = vmatpush1.msra.mxu0 0.0
    %3516 = vmatprep.subr.mxu0 0.0
    %3517 = vmatpush1.msra.mxu0 0.0
    %3518 = vmatprep.subr.mxu0 0.0
    %3519 = vmatpush1.msra.mxu0 0.0
    %3520 = vmatprep.subr.mxu0 0.0
    %3521 = vmatpush1.msra.mxu0 0.0
    %3522 = vmatprep.subr.mxu0 0.0
    %3523 = vmatpush1.msra.mxu0 0.0
    %3524 = vmatprep.subr.mxu0 0.0
    %3525 = vmatpush1.msra.mxu0 0.0
    %3526 = vmatprep.subr.mxu0 0.0
    %3527 = vmatpush1.msra.mxu0 0.0
    %3528 = vmatprep.subr.mxu0 0.0
    %3529 = vmatpush1.msra.mxu0 0.0
    %3530 = vmatprep.subr.mxu0 0.0
    %3531 = vmatpush1.msra.mxu0 0.0
    %3532 = vmatprep.subr.mxu0 0.0
    %3533 = vmatpush1.msra.mxu0 0.0
    %3534 = vmatprep.subr.mxu0 0.0
    %3535 = vmatpush1.msra.mxu0 0.0
    %3536 = vmatprep.subr.mxu0 0.0
    %3537 = vmatpush1.msra.mxu0 0.0
    %3538 = vmatprep.subr.mxu0 0.0
    %3539 = vmatpush1.msra.mxu0 0.0
    %3540 = vmatprep.subr.mxu0 0.0
    %3541 = vmatpush1.msra.mxu0 0.0
    %3542 = vmatprep.subr.mxu0 0.0
    %3543 = vmatpush1.msra.mxu0 0.0
    %3544 = vmatprep.subr.mxu0 0.0
    %3545 = vmatpush1.msra.mxu0 0.0
    %3546 = vmatprep.subr.mxu0 0.0
    %3547 = vmatpush1.msra.mxu0 0.0
    %3548 = vmatprep.subr.mxu0 0.0
    %3549 = vmatpush1.msra.mxu0 0.0
    %3550 = vmatprep.subr.mxu0 0.0
    %3551 = vmatpush1.msra.mxu0 0.0
    %3552 = vmatprep.subr.mxu0 0.0
    %3553 = vmatpush1.msra.mxu0 0.0
    %3554 = vmatprep.subr.mxu0 0.0
    %3555 = vmatpush1.msra.mxu0 0.0
    %3556 = vmatprep.subr.mxu0 0.0
    %3557 = vmatpush1.msra.mxu0 0.0
    %3558 = vmatprep.subr.mxu0 0.0
    %3559 = vmatpush1.msra.mxu0 0.0
    %3560 = vmatprep.mubr.f32.mxu0 0.0
    %3561 = vmatmul.mubr.f32.gmra.mrb[0].mxu0 %v1339
    %v3562 = vpop.f32.mrb[0].mxu0
    %v3563 = vadd.f32 0.0, %v3562
    %v3564 = vpop.f32.mrb[0].mxu0
    %3565 = vmatprep.mubr.f32.mxu0 0.0
    %3566 = vmatmul.mubr.f32.gmra.mrb[0].mxu0 %v1342
    %v3567 = vpop.f32.mrb[0].mxu0
    %v3568 = vadd.f32 0.0, %v3567
    %v3569 = vpop.f32.mrb[0].mxu0
    %3570 = vmatprep.mubr.f32.mxu0 0.0
    %3571 = vmatmul.mubr.f32.gmra.mrb[0].mxu0 %v1345
    %v3572 = vpop.f32.mrb[0].mxu0
    %v3573 = vadd.f32 0.0, %v3572
    %v3574 = vpop.f32.mrb[0].mxu0
    %3575 = vmatprep.mubr.f32.mxu0 0.0
    %3576 = vmatmul.mubr.f32.gmra.mrb[0].mxu0 %v1348
    %v3577 = vpop.f32.mrb[0].mxu0
    %v3578 = vadd.f32 0.0, %v3577
    %v3579 = vpop.f32.mrb[0].mxu0
    %3580 = vmatprep.mubr.f32.mxu0 0.0
    %3581 = vmatmul.mubr.f32.gmra.mrb[0].mxu0 %v1351
    %v3582 = vpop.f32.mrb[0].mxu0
    %v3583 = vadd.f32 0.0, %v3582
    %v3584 = vpop.f32.mrb[0].mxu0
    %3585 = vmatprep.mubr.f32.mxu0 0.0
    %3586 = vmatmul.mubr.f32.gmra.mrb[0].mxu0 %v1354
    %v3587 = vpop.f32.mrb[0].mxu0
    %v3588 = vadd.f32 0.0, %v3587
    %v3589 = vpop.f32.mrb[0].mxu0
    %3590 = vmatprep.mubr.f32.mxu0 0.0
    %3591 = vmatmul.mubr.f32.gmra.mrb[0].mxu0 %v1357
    %v3592 = vpop.f32.mrb[0].mxu0
    %v3593 = vadd.f32 0.0, %v3592
    %v3594 = vpop.f32.mrb[0].mxu0
    %3595 = vmatprep.mubr.f32.mxu0 0.0
    %3596 = vmatmul.mubr.f32.gmra.mrb[0].mxu0 %v1360
    %v3597 = vpop.f32.mrb[0].mxu0
    %v3598 = vadd.f32 0.0, %v3597
    %v3599 = vpop.f32.mrb[0].mxu0
    %3600 = vmatprep.mubr.f32.mxu0 0.0
    %3601 = vmatmul.mubr.f32.gmra.mrb[0].mxu0 %v1363
    %v3602 = vpop.f32.mrb[0].mxu0
    %v3603 = vadd.f32 0.0, %v3602
    %v3604 = vpop.f32.mrb[0].mxu0
    %3605 = vmatprep.mubr.f32.mxu0 0.0
    %3606 = vmatmul.mubr.f32.gmra.mrb[0].mxu0 %v1366
    %v3607 = vpop.f32.mrb[0].mxu0
    %v3608 = vadd.f32 0.0, %v3607
    %v3609 = vpop.f32.mrb[0].mxu0
    %3610 = vmatprep.mubr.f32.mxu0 0.0
    %3611 = vmatmul.mubr.f32.gmra.mrb[0].mxu0 %v1369
    %v3612 = vpop.f32.mrb[0].mxu0
    %v3613 = vadd.f32 0.0, %v3612
    %v3614 = vpop.f32.mrb[0].mxu0
    %3615 = vmatprep.mubr.f32.mxu0 0.0
    %3616 = vmatmul.mubr.f32.gmra.mrb[0].mxu0 %v1372
    %v3617 = vpop.f32.mrb[0].mxu0
    %v3618 = vadd.f32 0.0, %v3617
    %v3619 = vpop.f32.mrb[0].mxu0
    %3620 = vmatprep.mubr.f32.mxu0 0.0
    %3621 = vmatmul.mubr.f32.gmra.mrb[0].mxu0 %v1375
    %v3622 = vpop.f32.mrb[0].mxu0
    %v3623 = vadd.f32 0.0, %v3622
    %v3624 = vpop.f32.mrb[0].mxu0
    %3625 = vmatprep.mubr.f32.mxu0 0.0
    %3626 = vmatmul.mubr.f32.gmra.mrb[0].mxu0 %v1378
    %v3627 = vpop.f32.mrb[0].mxu0
    %v3628 = vadd.f32 0.0, %v3627
    %v3629 = vpop.f32.mrb[0].mxu0
    %3630 = vmatprep.mubr.f32.mxu0 0.0
    %3631 = vmatmul.mubr.f32.gmra.mrb[0].mxu0 %v1381
    %v3632 = vpop.f32.mrb[0].mxu0
    %v3633 = vadd.f32 0.0, %v3632
    %v3634 = vpop.f32.mrb[0].mxu0
    %3635 = vmatprep.mubr.f32.mxu0 0.0
    %3636 = vmatmul.mubr.f32.gmra.mrb[0].mxu0 %v1384
    %v3637 = vpop.f32.mrb[0].mxu0
    %v3638 = vadd.f32 0.0, %v3637
    %v3639 = vpop.f32.mrb[0].mxu0
    %3640 = vdwg.mxu0
    %v3641 = vadd.f32 %v3563, %v194
    %v3642 = vadd.f32 %v3568, %v199
    %v3643 = vadd.f32 %v3573, %v204
    %v3644 = vadd.f32 %v3578, %v209
    %v3645 = vadd.f32 %v3583, %v214
    %v3646 = vadd.f32 %v3588, %v219
    %v3647 = vadd.f32 %v3593, %v224
    %v3648 = vadd.f32 %v3598, %v229
    %v3649 = vadd.f32 %v3603, %v234
    %v3650 = vadd.f32 %v3608, %v239
    %v3651 = vadd.f32 %v3613, %v244
    %v3652 = vadd.f32 %v3618, %v249
    %v3653 = vadd.f32 %v803, %v3623
    %v3654 = vadd.f32 %v804, %v3628
    %v3655 = vadd.f32 %v805, %v3633
    %v3656 = vadd.f32 %v806, %v3638
    %v3657 = vadd.f32 %v807, %v3623
    %v3658 = vadd.f32 %v808, %v3628
    %v3659 = vadd.f32 %v809, %v3633
    %v3660 = vadd.f32 %v810, %v3638
    %v3661 = vadd.f32 %v811, %v3623
    %v3662 = vadd.f32 %v812, %v3628
    %v3663 = vadd.f32 %v813, %v3633
    %v3664 = vadd.f32 %v814, %v3638
    %v3665 = vadd.f32 %v815, %v3623
    %v3666 = vadd.f32 %v816, %v3628
    %v3667 = vadd.f32 %v817, %v3633
    %v3668 = vadd.f32 %v818, %v3638
    %v3669 = vadd.f32 %v819, %v3623
    %v3670 = vadd.f32 %v820, %v3628
    %v3671 = vadd.f32 %v821, %v3633
    %v3672 = vadd.f32 %v822, %v3638
    %v3673 = vadd.f32 %v823, %v3623
    %v3674 = vadd.f32 %v824, %v3628
    %v3675 = vadd.f32 %v825, %v3633
    %v3676 = vadd.f32 %v826, %v3638
    %v3677 = vadd.f32 %v827, %v3623
    %v3678 = vadd.f32 %v828, %v3628
    %v3679 = vadd.f32 %v829, %v3633
    %v3680 = vadd.f32 %v830, %v3638
    %v3681 = vadd.f32 %v831, %v3623
    %v3682 = vadd.f32 %v832, %v3628
    %v3683 = vadd.f32 %v833, %v3633
    %v3684 = vadd.f32 %v834, %v3638
    %v3685 = vtanh.pop %v3653
    %v3686 = vtanh.pop %v3654
    %v3687 = vtanh.pop %v3655
    %v3688 = vtanh.pop %v3656
    %v3689 = vtanh.pop %v3657
    %v3690 = vtanh.pop %v3658
    %v3691 = vtanh.pop %v3659
    %v3692 = vtanh.pop %v3660
    %v3693 = vtanh.pop %v3661
    %v3694 = vtanh.pop %v3662
    %v3695 = vtanh.pop %v3663
    %v3696 = vtanh.pop %v3664
    %v3697 = vtanh.pop %v3665
    %v3698 = vtanh.pop %v3666
    %v3699 = vtanh.pop %v3667
    %v3700 = vtanh.pop %v3668
    %v3701 = vtanh.pop %v3669
    %v3702 = vtanh.pop %v3670
    %v3703 = vtanh.pop %v3671
    %v3704 = vtanh.pop %v3672
    %v3705 = vtanh.pop %v3673
    %v3706 = vtanh.pop %v3674
    %v3707 = vtanh.pop %v3675
    %v3708 = vtanh.pop %v3676
    %v3709 = vtanh.pop %v3677
    %v3710 = vtanh.pop %v3678
    %v3711 = vtanh.pop %v3679
    %v3712 = vtanh.pop %v3680
    %v3713 = vtanh.pop %v3681
    %v3714 = vtanh.pop %v3682
    %v3715 = vtanh.pop %v3683
    %v3716 = vtanh.pop %v3684
    %v3717 = vmul.f32 %v1610, %v3685
    %v3718 = vmul.f32 %v1615, %v3686
    %v3719 = vmul.f32 %v1620, %v3687
    %v3720 = vmul.f32 %v1625, %v3688
    %v3721 = vmul.f32 %v1610, %v3689
    %v3722 = vmul.f32 %v1615, %v3690
    %v3723 = vmul.f32 %v1620, %v3691
    %v3724 = vmul.f32 %v1625, %v3692
    %v3725 = vmul.f32 %v1610, %v3693
    %v3726 = vmul.f32 %v1615, %v3694
    %v3727 = vmul.f32 %v1620, %v3695
    %v3728 = vmul.f32 %v1625, %v3696
    %v3729 = vmul.f32 %v1610, %v3697
    %v3730 = vmul.f32 %v1615, %v3698
    %v3731 = vmul.f32 %v1620, %v3699
    %v3732 = vmul.f32 %v1625, %v3700
    %v3733 = vmul.f32 %v1610, %v3701
    %v3734 = vmul.f32 %v1615, %v3702
    %v3735 = vmul.f32 %v1620, %v3703
    %v3736 = vmul.f32 %v1625, %v3704
    %v3737 = vmul.f32 %v1610, %v3705
    %v3738 = vmul.f32 %v1615, %v3706
    %v3739 = vmul.f32 %v1620, %v3707
    %v3740 = vmul.f32 %v1625, %v3708
    %v3741 = vmul.f32 %v1610, %v3709
    %v3742 = vmul.f32 %v1615, %v3710
    %v3743 = vmul.f32 %v1620, %v3711
    %v3744 = vmul.f32 %v1625, %v3712
    %v3745 = vmul.f32 %v1610, %v3713
    %v3746 = vmul.f32 %v1615, %v3714
    %v3747 = vmul.f32 %v1620, %v3715
    %v3748 = vmul.f32 %v1625, %v3716
    %v3749 = vadd.f32 %v3717, %v3718
    %v3750 = vadd.f32 %v3749, %v3719
    %v3751 = vadd.f32 %v3750, %v3720
    %v3752 = vrot.slane %v3751, 4
    %v3753 = vadd.f32 %v3751, %v3752
    %v3754 = vrot.slane %v3753, 2
    %v3755 = vadd.f32 %v3753, %v3754
    %v3756 = vrot.slane %v3755, 1
    %v3757 = vadd.f32 %v3755, %v3756
    %v3758 = vadd.f32 %v3721, %v3722
    %v3759 = vadd.f32 %v3758, %v3723
    %v3760 = vadd.f32 %v3759, %v3724
    %v3761 = vrot.slane %v3760, 4
    %v3762 = vadd.f32 %v3760, %v3761
    %v3763 = vrot.slane %v3762, 2
    %v3764 = vadd.f32 %v3762, %v3763
    %v3765 = vrot.slane %v3764, 1
    %v3766 = vadd.f32 %v3764, %v3765
    %v3767 = vadd.f32 %v3725, %v3726
    %v3768 = vadd.f32 %v3767, %v3727
    %v3769 = vadd.f32 %v3768, %v3728
    %v3770 = vrot.slane %v3769, 4
    %v3771 = vadd.f32 %v3769, %v3770
    %v3772 = vrot.slane %v3771, 2
    %v3773 = vadd.f32 %v3771, %v3772
    %v3774 = vrot.slane %v3773, 1
    %v3775 = vadd.f32 %v3773, %v3774
    %v3776 = vadd.f32 %v3729, %v3730
    %v3777 = vadd.f32 %v3776, %v3731
    %v3778 = vadd.f32 %v3777, %v3732
    %v3779 = vrot.slane %v3778, 4
    %v3780 = vadd.f32 %v3778, %v3779
    %v3781 = vrot.slane %v3780, 2
    %v3782 = vadd.f32 %v3780, %v3781
    %v3783 = vrot.slane %v3782, 1
    %v3784 = vadd.f32 %v3782, %v3783
    %v3785 = vadd.f32 %v3733, %v3734
    %v3786 = vadd.f32 %v3785, %v3735
    %v3787 = vadd.f32 %v3786, %v3736
    %v3788 = vrot.slane %v3787, 4
    %v3789 = vadd.f32 %v3787, %v3788
    %v3790 = vrot.slane %v3789, 2
    %v3791 = vadd.f32 %v3789, %v3790
    %v3792 = vrot.slane %v3791, 1
    %v3793 = vadd.f32 %v3791, %v3792
    %v3794 = vadd.f32 %v3737, %v3738
    %v3795 = vadd.f32 %v3794, %v3739
    %v3796 = vadd.f32 %v3795, %v3740
    %v3797 = vrot.slane %v3796, 4
    %v3798 = vadd.f32 %v3796, %v3797
    %v3799 = vrot.slane %v3798, 2
    %v3800 = vadd.f32 %v3798, %v3799
    %v3801 = vrot.slane %v3800, 1
    %v3802 = vadd.f32 %v3800, %v3801
    %v3803 = vadd.f32 %v3741, %v3742
    %v3804 = vadd.f32 %v3803, %v3743
    %v3805 = vadd.f32 %v3804, %v3744
    %v3806 = vrot.slane %v3805, 4
    %v3807 = vadd.f32 %v3805, %v3806
    %v3808 = vrot.slane %v3807, 2
    %v3809 = vadd.f32 %v3807, %v3808
    %v3810 = vrot.slane %v3809, 1
    %v3811 = vadd.f32 %v3809, %v3810
    %v3812 = vadd.f32 %v3745, %v3746
    %v3813 = vadd.f32 %v3812, %v3747
    %v3814 = vadd.f32 %v3813, %v3748
    %v3815 = vrot.slane %v3814, 4
    %v3816 = vadd.f32 %v3814, %v3815
    %v3817 = vrot.slane %v3816, 2
    %v3818 = vadd.f32 %v3816, %v3817
    %v3819 = vrot.slane %v3818, 1
    %v3820 = vadd.f32 %v3818, %v3819
    %v3821 = vmax.f32 %v3757, %v3793
    %v3822 = vmax.f32 %v3766, %v3802
    %v3823 = vmax.f32 %v3775, %v3811
    %v3824 = vmax.f32 %v3784, %v3820
    %v3825 = vmax.f32 %v3821, %v3822
    %v3826 = vmax.f32 %v3823, %v3824
    %v3827 = vmax.f32 %v3825, %v3826
    %v3828 = vsub.f32 %v3757, %v3827
    %v3829 = vsub.f32 %v3766, %v3827
    %v3830 = vsub.f32 %v3775, %v3827
    %v3831 = vsub.f32 %v3784, %v3827
    %v3832 = vsub.f32 %v3793, %v3827
    %v3833 = vsub.f32 %v3802, %v3827
    %v3834 = vsub.f32 %v3811, %v3827
    %v3835 = vsub.f32 %v3820, %v3827
    %v3836 = vmul.f32 %v3828, 1.442695
    %v3837 = vpow.pop %v3836
    %v3838 = vmul.f32 %v3829, 1.442695
    %v3839 = vpow.pop %v3838
    %v3840 = vmul.f32 %v3830, 1.442695
    %v3841 = vpow.pop %v3840
    %v3842 = vmul.f32 %v3831, 1.442695
    %v3843 = vpow.pop %v3842
    %v3844 = vmul.f32 %v3832, 1.442695
    %v3845 = vpow.pop %v3844
    %v3846 = vmul.f32 %v3833, 1.442695
    %v3847 = vpow.pop %v3846
    %v3848 = vmul.f32 %v3834, 1.442695
    %v3849 = vpow.pop %v3848
    %v3850 = vmul.f32 %v3835, 1.442695
    %v3851 = vpow.pop %v3850
    %v3860 = vrot.slane %v3839, 7
    %v3861 = vsel %vm1771, %v3860, %v3837
    %v3862 = vrot.slane %v3841, 6
    %v3863 = vsel %vm1774, %v3862, %v3861
    %v3864 = vrot.slane %v3843, 5
    %v3865 = vsel %vm1777, %v3864, %v3863
    %v3866 = vrot.slane %v3845, 4
    %v3867 = vsel %vm1780, %v3866, %v3865
    %v3868 = vrot.slane %v3847, 3
    %v3869 = vsel %vm1783, %v3868, %v3867
    %v3870 = vrot.slane %v3849, 2
    %v3871 = vsel %vm1786, %v3870, %v3869
    %v3872 = vrot.slane %v3851, 1
    %v3873 = vsel %vm1789, %v3872, %v3871
    %v3875 = vrot.slane %v3873, 4
    %v3876 = vadd.f32 %v3873, %v3875
    %v3877 = vrot.slane %v3876, 2
    %v3878 = vadd.f32 %v3876, %v3877
    %v3879 = vrot.slane %v3878, 1
    %v3880 = vadd.f32 %v3878, %v3879
    %v3881 = vlaneseq
    %v3882 = vshrl.u32 %v3881, 7
    %v3883 = vsub.s32 0, %v3882
    %v3884 = vrot.slane %v3880, %v3883
    %v3885 = vrcp.pop %v3884
    %v3886 = vmul.f32 %v3837, %v3885
    %v3887 = vmul.f32 %v3839, %v3885
    %v3888 = vmul.f32 %v3841, %v3885
    %v3889 = vmul.f32 %v3843, %v3885
    %v3890 = vmul.f32 %v3845, %v3885
    %v3891 = vmul.f32 %v3847, %v3885
    %v3892 = vmul.f32 %v3849, %v3885
    %v3893 = vmul.f32 %v3851, %v3885
    %v3894 = vlaneseq
    %v3895 = vshrl.u32 %v3894, 7
    %v3896 = vsub.s32 0, %v3895
    %v3897 = vrot.slane %v3886, %v3896
    %v3898 = vlaneseq
    %v3899 = vshrl.u32 %v3898, 7
    %v3900 = vsub.s32 0, %v3899
    %v3901 = vrot.slane %v3887, %v3900
    %v3902 = vlaneseq
    %v3903 = vshrl.u32 %v3902, 7
    %v3904 = vsub.s32 0, %v3903
    %v3905 = vrot.slane %v3888, %v3904
    %v3906 = vlaneseq
    %v3907 = vshrl.u32 %v3906, 7
    %v3908 = vsub.s32 0, %v3907
    %v3909 = vrot.slane %v3889, %v3908
    %v3910 = vlaneseq
    %v3911 = vshrl.u32 %v3910, 7
    %v3912 = vsub.s32 0, %v3911
    %v3913 = vrot.slane %v3890, %v3912
    %v3914 = vlaneseq
    %v3915 = vshrl.u32 %v3914, 7
    %v3916 = vsub.s32 0, %v3915
    %v3917 = vrot.slane %v3891, %v3916
    %v3918 = vlaneseq
    %v3919 = vshrl.u32 %v3918, 7
    %v3920 = vsub.s32 0, %v3919
    %v3921 = vrot.slane %v3892, %v3920
    %v3922 = vlaneseq
    %v3923 = vshrl.u32 %v3922, 7
    %v3924 = vsub.s32 0, %v3923
    %v3925 = vrot.slane %v3893, %v3924
    %v3926 = vmul.f32 %v1171, %v3897
    %v3927 = vmul.f32 %v1172, %v3897
    %v3928 = vmul.f32 %v1173, %v3897
    %v3929 = vmul.f32 %v1174, %v3897
    %v3930 = vmul.f32 %v1175, %v3901
    %v3931 = vmul.f32 %v1176, %v3901
    %v3932 = vmul.f32 %v1177, %v3901
    %v3933 = vmul.f32 %v1178, %v3901
    %v3934 = vmul.f32 %v1179, %v3905
    %v3935 = vmul.f32 %v1180, %v3905
    %v3936 = vmul.f32 %v1181, %v3905
    %v3937 = vmul.f32 %v1182, %v3905
    %v3938 = vmul.f32 %v1183, %v3909
    %v3939 = vmul.f32 %v1184, %v3909
    %v3940 = vmul.f32 %v1185, %v3909
    %v3941 = vmul.f32 %v1186, %v3909
    %v3942 = vmul.f32 %v1187, %v3913
    %v3943 = vmul.f32 %v1188, %v3913
    %v3944 = vmul.f32 %v1189, %v3913
    %v3945 = vmul.f32 %v1190, %v3913
    %v3946 = vmul.f32 %v1191, %v3917
    %v3947 = vmul.f32 %v1192, %v3917
    %v3948 = vmul.f32 %v1193, %v3917
    %v3949 = vmul.f32 %v1194, %v3917
    %v3950 = vmul.f32 %v1195, %v3921
    %v3951 = vmul.f32 %v1196, %v3921
    %v3952 = vmul.f32 %v1197, %v3921
    %v3953 = vmul.f32 %v1198, %v3921
    %v3954 = vmul.f32 %v1199, %v3925
    %v3955 = vmul.f32 %v1200, %v3925
    %v3956 = vmul.f32 %v1201, %v3925
    %v3957 = vmul.f32 %v1202, %v3925
    %v3958 = vadd.f32 %v3926, %v3930
    %v3959 = vadd.f32 %v3958, %v3934
    %v3960 = vadd.f32 %v3959, %v3938
    %v3961 = vadd.f32 %v3960, %v3942
    %v3962 = vadd.f32 %v3961, %v3946
    %v3963 = vadd.f32 %v3962, %v3950
    %v3964 = vadd.f32 %v3963, %v3954
    %v3965 = vadd.f32 %v3927, %v3931
    %v3966 = vadd.f32 %v3965, %v3935
    %v3967 = vadd.f32 %v3966, %v3939
    %v3968 = vadd.f32 %v3967, %v3943
    %v3969 = vadd.f32 %v3968, %v3947
    %v3970 = vadd.f32 %v3969, %v3951
    %v3971 = vadd.f32 %v3970, %v3955
    %v3972 = vadd.f32 %v3928, %v3932
    %v3973 = vadd.f32 %v3972, %v3936
    %v3974 = vadd.f32 %v3973, %v3940
    %v3975 = vadd.f32 %v3974, %v3944
    %v3976 = vadd.f32 %v3975, %v3948
    %v3977 = vadd.f32 %v3976, %v3952
    %v3978 = vadd.f32 %v3977, %v3956
    %v3979 = vadd.f32 %v3929, %v3933
    %v3980 = vadd.f32 %v3979, %v3937
    %v3981 = vadd.f32 %v3980, %v3941
    %v3982 = vadd.f32 %v3981, %v3945
    %v3983 = vadd.f32 %v3982, %v3949
    %v3984 = vadd.f32 %v3983, %v3953
    %v3985 = vadd.f32 %v3984, %v3957
    %v3986 = vadd.f32 %v3964, 0.0
    %v3987 = vadd.f32 %v3971, 0.0
    %v3988 = vadd.f32 %v3978, 0.0
    %v3989 = vadd.f32 %v3985, 0.0
    %v3990 = vadd.f32 %v987, %v3986
    %v3991 = vadd.f32 %v988, %v3987
    %v3992 = vadd.f32 %v989, %v3988
    %v3993 = vadd.f32 %v990, %v3989
    %v3994 = vadd.f32 %v991, %v3986
    %v3995 = vadd.f32 %v992, %v3987
    %v3996 = vadd.f32 %v993, %v3988
    %v3997 = vadd.f32 %v994, %v3989
    %v3998 = vadd.f32 %v995, %v3986
    %v3999 = vadd.f32 %v996, %v3987
    %v4000 = vadd.f32 %v997, %v3988
    %v4001 = vadd.f32 %v998, %v3989
    %v4002 = vadd.f32 %v999, %v3986
    %v4003 = vadd.f32 %v1000, %v3987
    %v4004 = vadd.f32 %v1001, %v3988
    %v4005 = vadd.f32 %v1002, %v3989
    %v4006 = vadd.f32 %v1003, %v3986
    %v4007 = vadd.f32 %v1004, %v3987
    %v4008 = vadd.f32 %v1005, %v3988
    %v4009 = vadd.f32 %v1006, %v3989
    %v4010 = vadd.f32 %v1007, %v3986
    %v4011 = vadd.f32 %v1008, %v3987
    %v4012 = vadd.f32 %v1009, %v3988
    %v4013 = vadd.f32 %v1010, %v3989
    %v4014 = vadd.f32 %v1011, %v3986
    %v4015 = vadd.f32 %v1012, %v3987
    %v4016 = vadd.f32 %v1013, %v3988
    %v4017 = vadd.f32 %v1014, %v3989
    %v4018 = vadd.f32 %v1015, %v3986
    %v4019 = vadd.f32 %v1016, %v3987
    %v4020 = vadd.f32 %v1017, %v3988
    %v4021 = vadd.f32 %v1018, %v3989
    %v4022 = vtanh.pop %v3990
    %v4023 = vtanh.pop %v3991
    %v4024 = vtanh.pop %v3992
    %v4025 = vtanh.pop %v3993
    %v4026 = vtanh.pop %v3994
    %v4027 = vtanh.pop %v3995
    %v4028 = vtanh.pop %v3996
    %v4029 = vtanh.pop %v3997
    %v4030 = vtanh.pop %v3998
    %v4031 = vtanh.pop %v3999
    %v4032 = vtanh.pop %v4000
    %v4033 = vtanh.pop %v4001
    %v4034 = vtanh.pop %v4002
    %v4035 = vtanh.pop %v4003
    %v4036 = vtanh.pop %v4004
    %v4037 = vtanh.pop %v4005
    %v4038 = vtanh.pop %v4006
    %v4039 = vtanh.pop %v4007
    %v4040 = vtanh.pop %v4008
    %v4041 = vtanh.pop %v4009
    %v4042 = vtanh.pop %v4010
    %v4043 = vtanh.pop %v4011
    %v4044 = vtanh.pop %v4012
    %v4045 = vtanh.pop %v4013
    %v4046 = vtanh.pop %v4014
    %v4047 = vtanh.pop %v4015
    %v4048 = vtanh.pop %v4016
    %v4049 = vtanh.pop %v4017
    %v4050 = vtanh.pop %v4018
    %v4051 = vtanh.pop %v4019
    %v4052 = vtanh.pop %v4020
    %v4053 = vtanh.pop %v4021
    %v4054 = vmul.f32 %v1974, %v4022
    %v4055 = vmul.f32 %v1979, %v4023
    %v4056 = vmul.f32 %v1984, %v4024
    %v4057 = vmul.f32 %v1989, %v4025
    %v4058 = vmul.f32 %v1974, %v4026
    %v4059 = vmul.f32 %v1979, %v4027
    %v4060 = vmul.f32 %v1984, %v4028
    %v4061 = vmul.f32 %v1989, %v4029
    %v4062 = vmul.f32 %v1974, %v4030
    %v4063 = vmul.f32 %v1979, %v4031
    %v4064 = vmul.f32 %v1984, %v4032
    %v4065 = vmul.f32 %v1989, %v4033
    %v4066 = vmul.f32 %v1974, %v4034
    %v4067 = vmul.f32 %v1979, %v4035
    %v4068 = vmul.f32 %v1984, %v4036
    %v4069 = vmul.f32 %v1989, %v4037
    %v4070 = vmul.f32 %v1974, %v4038
    %v4071 = vmul.f32 %v1979, %v4039
    %v4072 = vmul.f32 %v1984, %v4040
    %v4073 = vmul.f32 %v1989, %v4041
    %v4074 = vmul.f32 %v1974, %v4042
    %v4075 = vmul.f32 %v1979, %v4043
    %v4076 = vmul.f32 %v1984, %v4044
    %v4077 = vmul.f32 %v1989, %v4045
    %v4078 = vmul.f32 %v1974, %v4046
    %v4079 = vmul.f32 %v1979, %v4047
    %v4080 = vmul.f32 %v1984, %v4048
    %v4081 = vmul.f32 %v1989, %v4049
    %v4082 = vmul.f32 %v1974, %v4050
    %v4083 = vmul.f32 %v1979, %v4051
    %v4084 = vmul.f32 %v1984, %v4052
    %v4085 = vmul.f32 %v1989, %v4053
    %v4086 = vadd.f32 %v4054, %v4055
    %v4087 = vadd.f32 %v4086, %v4056
    %v4088 = vadd.f32 %v4087, %v4057
    %v4089 = vrot.slane %v4088, 4
    %v4090 = vadd.f32 %v4088, %v4089
    %v4091 = vrot.slane %v4090, 2
    %v4092 = vadd.f32 %v4090, %v4091
    %v4093 = vrot.slane %v4092, 1
    %v4094 = vadd.f32 %v4092, %v4093
    %v4095 = vadd.f32 %v4058, %v4059
    %v4096 = vadd.f32 %v4095, %v4060
    %v4097 = vadd.f32 %v4096, %v4061
    %v4098 = vrot.slane %v4097, 4
    %v4099 = vadd.f32 %v4097, %v4098
    %v4100 = vrot.slane %v4099, 2
    %v4101 = vadd.f32 %v4099, %v4100
    %v4102 = vrot.slane %v4101, 1
    %v4103 = vadd.f32 %v4101, %v4102
    %v4104 = vadd.f32 %v4062, %v4063
    %v4105 = vadd.f32 %v4104, %v4064
    %v4106 = vadd.f32 %v4105, %v4065
    %v4107 = vrot.slane %v4106, 4
    %v4108 = vadd.f32 %v4106, %v4107
    %v4109 = vrot.slane %v4108, 2
    %v4110 = vadd.f32 %v4108, %v4109
    %v4111 = vrot.slane %v4110, 1
    %v4112 = vadd.f32 %v4110, %v4111
    %v4113 = vadd.f32 %v4066, %v4067
    %v4114 = vadd.f32 %v4113, %v4068
    %v4115 = vadd.f32 %v4114, %v4069
    %v4116 = vrot.slane %v4115, 4
    %v4117 = vadd.f32 %v4115, %v4116
    %v4118 = vrot.slane %v4117, 2
    %v4119 = vadd.f32 %v4117, %v4118
    %v4120 = vrot.slane %v4119, 1
    %v4121 = vadd.f32 %v4119, %v4120
    %v4122 = vadd.f32 %v4070, %v4071
    %v4123 = vadd.f32 %v4122, %v4072
    %v4124 = vadd.f32 %v4123, %v4073
    %v4125 = vrot.slane %v4124, 4
    %v4126 = vadd.f32 %v4124, %v4125
    %v4127 = vrot.slane %v4126, 2
    %v4128 = vadd.f32 %v4126, %v4127
    %v4129 = vrot.slane %v4128, 1
    %v4130 = vadd.f32 %v4128, %v4129
    %v4131 = vadd.f32 %v4074, %v4075
    %v4132 = vadd.f32 %v4131, %v4076
    %v4133 = vadd.f32 %v4132, %v4077
    %v4134 = vrot.slane %v4133, 4
    %v4135 = vadd.f32 %v4133, %v4134
    %v4136 = vrot.slane %v4135, 2
    %v4137 = vadd.f32 %v4135, %v4136
    %v4138 = vrot.slane %v4137, 1
    %v4139 = vadd.f32 %v4137, %v4138
    %v4140 = vadd.f32 %v4078, %v4079
    %v4141 = vadd.f32 %v4140, %v4080
    %v4142 = vadd.f32 %v4141, %v4081
    %v4143 = vrot.slane %v4142, 4
    %v4144 = vadd.f32 %v4142, %v4143
    %v4145 = vrot.slane %v4144, 2
    %v4146 = vadd.f32 %v4144, %v4145
    %v4147 = vrot.slane %v4146, 1
    %v4148 = vadd.f32 %v4146, %v4147
    %v4149 = vadd.f32 %v4082, %v4083
    %v4150 = vadd.f32 %v4149, %v4084
    %v4151 = vadd.f32 %v4150, %v4085
    %v4152 = vrot.slane %v4151, 4
    %v4153 = vadd.f32 %v4151, %v4152
    %v4154 = vrot.slane %v4153, 2
    %v4155 = vadd.f32 %v4153, %v4154
    %v4156 = vrot.slane %v4155, 1
    %v4157 = vadd.f32 %v4155, %v4156
    %v4158 = vmax.f32 %v4094, %v4130
    %v4159 = vmax.f32 %v4103, %v4139
    %v4160 = vmax.f32 %v4112, %v4148
    %v4161 = vmax.f32 %v4121, %v4157
    %v4162 = vmax.f32 %v4158, %v4159
    %v4163 = vmax.f32 %v4160, %v4161
    %v4164 = vmax.f32 %v4162, %v4163
    %vm4165 = vcmp.ge.f32.partialorder %v4094, %v4164
    %vm4166 = vcmp.ge.f32.partialorder %v4103, %v4164
    %vm4167 = vcmp.ge.f32.partialorder %v4112, %v4164
    %vm4168 = vcmp.ge.f32.partialorder %v4121, %v4164
    %vm4169 = vcmp.ge.f32.partialorder %v4130, %v4164
    %vm4170 = vcmp.ge.f32.partialorder %v4139, %v4164
    %vm4171 = vcmp.ge.f32.partialorder %v4148, %v4164
    %vm4172 = vcmp.ge.f32.partialorder %v4157, %v4164
    %v4173 = vsel %vm4165, %v1204, 8
    %v4174 = vsel %vm4166, %v2110, 8
    %v4175 = vsel %vm4167, %v2111, 8
    %v4176 = vsel %vm4168, %v2112, 8
    %v4177 = vsel %vm4169, %v2113, 8
    %v4178 = vsel %vm4170, %v2114, 8
    %v4179 = vsel %vm4171, %v2115, 8
    %v4180 = vsel %vm4172, %v2116, 8
    %v4181 = vsel %vm2125, %v4173, 2147483647
    %v4182 = vsel %vm2125, %v4174, 2147483647
    %v4183 = vsel %vm2125, %v4175, 2147483647
    %v4184 = vsel %vm2125, %v4176, 2147483647
    %v4185 = vsel %vm2125, %v4177, 2147483647
    %vm4186 = vcmp.lt.s32.totalorder %v4181, %v4185
    %v4187 = vsel %vm4186, %v4181, %v4185
    %v4188 = vsel %vm2125, %v4178, 2147483647
    %vm4189 = vcmp.lt.s32.totalorder %v4182, %v4188
    %v4190 = vsel %vm4189, %v4182, %v4188
    %v4191 = vsel %vm2125, %v4179, 2147483647
    %vm4192 = vcmp.lt.s32.totalorder %v4183, %v4191
    %v4193 = vsel %vm4192, %v4183, %v4191
    %v4194 = vsel %vm2125, %v4180, 2147483647
    %vm4195 = vcmp.lt.s32.totalorder %v4184, %v4194
    %v4196 = vsel %vm4195, %v4184, %v4194
    %vm4197 = vcmp.lt.s32.totalorder %v4187, %v4190
    %v4198 = vsel %vm4197, %v4187, %v4190
    %vm4199 = vcmp.lt.s32.totalorder %v4193, %v4196
    %v4200 = vsel %vm4199, %v4193, %v4196
    %vm4201 = vcmp.lt.s32.totalorder %v4198, %v4200
    %v4202 = vsel %vm4201, %v4198, %v4200
    %vm4203 = vcmp.lt.s32.totalorder %v4202, 7
    %v4204 = vsel %vm4203, %v4202, 7
    %v4205 = vsub.f32 %v4094, %v4164
    %v4206 = vsub.f32 %v4103, %v4164
    %v4207 = vsub.f32 %v4112, %v4164
    %v4208 = vsub.f32 %v4121, %v4164
    %v4209 = vsub.f32 %v4130, %v4164
    %v4210 = vsub.f32 %v4139, %v4164
    %v4211 = vsub.f32 %v4148, %v4164
    %v4212 = vsub.f32 %v4157, %v4164
    %v4213 = vmul.f32 %v4205, 1.442695
    %v4214 = vpow.pop %v4213
    %v4215 = vmul.f32 %v4206, 1.442695
    %v4216 = vpow.pop %v4215
    %v4217 = vmul.f32 %v4207, 1.442695
    %v4218 = vpow.pop %v4217
    %v4219 = vmul.f32 %v4208, 1.442695
    %v4220 = vpow.pop %v4219
    %v4221 = vmul.f32 %v4209, 1.442695
    %v4222 = vpow.pop %v4221
    %v4223 = vmul.f32 %v4210, 1.442695
    %v4224 = vpow.pop %v4223
    %v4225 = vmul.f32 %v4211, 1.442695
    %v4226 = vpow.pop %v4225
    %v4227 = vmul.f32 %v4212, 1.442695
    %v4228 = vpow.pop %v4227
    %v4237 = vrot.slane %v4216, 7
    %v4238 = vsel %vm1771, %v4237, %v4214
    %v4239 = vrot.slane %v4218, 6
    %v4240 = vsel %vm1774, %v4239, %v4238
    %v4241 = vrot.slane %v4220, 5
    %v4242 = vsel %vm1777, %v4241, %v4240
    %v4243 = vrot.slane %v4222, 4
    %v4244 = vsel %vm1780, %v4243, %v4242
    %v4245 = vrot.slane %v4224, 3
    %v4246 = vsel %vm1783, %v4245, %v4244
    %v4247 = vrot.slane %v4226, 2
    %v4248 = vsel %vm1786, %v4247, %v4246
    %v4249 = vrot.slane %v4228, 1
    %v4250 = vsel %vm1789, %v4249, %v4248
    %v4252 = vrot.slane %v4250, 4
    %v4253 = vadd.f32 %v4250, %v4252
    %v4254 = vrot.slane %v4253, 2
    %v4255 = vadd.f32 %v4253, %v4254
    %v4256 = vrot.slane %v4255, 1
    %v4257 = vadd.f32 %v4255, %v4256
    %v4258 = vlog2.pop %v4257
    %v4259 = vmul.f32 %v4258, 0.6931472
    %v4260 = vsub.f32 0.0, %v4259
    %v4261 = vlaneseq
    %v4262 = vshrl.u32 %v4261, 7
    %v4263 = vsub.s32 0, %v4262
    %v4264 = vrot.slane %v4204, %v4263
    %vm4265 = vcmp.eq.s32.totalorder %v1204, %v4264
    %v4266 = vsel %vm4265, 1, 0
    %v4267 = vcvt.s32.f32 %v4266
    %v4269 = vcombine.high %v4267, %v4267
    %v4271 = vunpack.c.l.s4 1966171168
    %v4272 = vunpack.c.0.s8 %v4271
    %v4273 = vlaneseq
    %v4274 = vshrl.u32 %v4273, 7
    %v4275 = vsub.s32 %v4272, %v4274
    %v4276 = vrot.slane %v4267, %v4275
    %v4278 = vunpack.c.l.s4 1966171168
    %v4279 = vunpack.c.0.s8 %v4278
    %v4280 = vlaneseq
    %v4281 = vshrl.u32 %v4280, 7
    %v4282 = vsub.s32 %v4279, %v4281
    %v4283 = vrot.slane %v4269, %v4282
    %v4284 = vcombine.high %v4276, %v4276
    %v4285 = vcombine.high %v4283, %v4283
    %v4287 = vunpack.c.l.s4 1966171168
    %v4288 = vunpack.c.0.s8 %v4287
    %v4289 = vlaneseq
    %v4290 = vshrl.u32 %v4289, 7
    %v4291 = vsub.s32 %v4288, %v4290
    %v4292 = vrot.slane %v4276, %v4291
    %v4294 = vunpack.c.l.s4 1966171168
    %v4295 = vunpack.c.0.s8 %v4294
    %v4296 = vlaneseq
    %v4297 = vshrl.u32 %v4296, 7
    %v4298 = vsub.s32 %v4295, %v4297
    %v4299 = vrot.slane %v4283, %v4298
    %v4301 = vunpack.c.l.s4 1966171168
    %v4302 = vunpack.c.0.s8 %v4301
    %v4303 = vlaneseq
    %v4304 = vshrl.u32 %v4303, 7
    %v4305 = vsub.s32 %v4302, %v4304
    %v4306 = vrot.slane %v4284, %v4305
    %v4308 = vunpack.c.l.s4 1966171168
    %v4309 = vunpack.c.0.s8 %v4308
    %v4310 = vlaneseq
    %v4311 = vshrl.u32 %v4310, 7
    %v4312 = vsub.s32 %v4309, %v4311
    %v4313 = vrot.slane %v4285, %v4312
    %v4314 = vcombine.high %v4292, %v4292
    %v4315 = vcombine.high %v4299, %v4299
    %v4316 = vcombine.high %v4306, %v4306
    %v4317 = vcombine.high %v4313, %v4313
    %v4318 = vlaneseq
    %v4319 = vshrl.u32 %v4318, 7
    %v4320 = vsub.s32 0, %v4319
    %v4321 = vrot.slane %v4292, %v4320
    %v4322 = vlaneseq
    %v4323 = vshrl.u32 %v4322, 7
    %v4324 = vsub.s32 0, %v4323
    %v4325 = vrot.slane %v4306, %v4324
    %v4326 = vlaneseq
    %v4327 = vshrl.u32 %v4326, 7
    %v4328 = vsub.s32 0, %v4327
    %v4329 = vrot.slane %v4314, %v4328
    %v4330 = vlaneseq
    %v4331 = vshrl.u32 %v4330, 7
    %v4332 = vsub.s32 0, %v4331
    %v4333 = vrot.slane %v4316, %v4332
    %v4334 = vlaneseq
    %v4335 = vshrl.u32 %v4334, 7
    %v4336 = vsub.s32 0, %v4335
    %v4337 = vrot.slane %v4299, %v4336
    %v4338 = vlaneseq
    %v4339 = vshrl.u32 %v4338, 7
    %v4340 = vsub.s32 0, %v4339
    %v4341 = vrot.slane %v4313, %v4340
    %v4342 = vlaneseq
    %v4343 = vshrl.u32 %v4342, 7
    %v4344 = vsub.s32 0, %v4343
    %v4345 = vrot.slane %v4315, %v4344
    %v4346 = vlaneseq
    %v4347 = vshrl.u32 %v4346, 7
    %v4348 = vsub.s32 0, %v4347
    %v4349 = vrot.slane %v4317, %v4348
    %v4358 = vmul.f32 %v27, %v4321
    %v4359 = vmul.f32 %v28, %v4325
    %v4360 = vmul.f32 %v29, %v4329
    %v4361 = vmul.f32 %v30, %v4333
    %v4362 = vmul.f32 %v31, %v4337
    %v4363 = vmul.f32 %v32, %v4341
    %v4364 = vmul.f32 %v33, %v4345
    %v4365 = vmul.f32 %v34, %v4349
    %v4366 = vsel %vm2311, %v4358, 0.0
    %v4367 = vsel %vm2311, %v4359, 0.0
    %v4368 = vadd.f32 %v4366, %v4367
    %v4369 = vsel %vm2311, %v4360, 0.0
    %v4370 = vadd.f32 %v4368, %v4369
    %v4371 = vsel %vm2311, %v4361, 0.0
    %v4372 = vadd.f32 %v4370, %v4371
    %v4373 = vsel %vm2311, %v4362, 0.0
    %v4374 = vadd.f32 %v4372, %v4373
    %v4375 = vsel %vm2311, %v4363, 0.0
    %v4376 = vadd.f32 %v4374, %v4375
    %v4377 = vsel %vm2311, %v4364, 0.0
    %v4378 = vadd.f32 %v4376, %v4377
    %v4379 = vsel %vm2311, %v4365, 0.0
    %v4380 = vadd.f32 %v4378, %v4379
    %4381 = vst [vmem:[#allocation2 + $0x2] sm:$0x1] %v4204
    %4382 = vst [vmem:[#allocation4 + $0x2] sm:$0x1] %v4260
    %v4383 = vlaneseq
    %v4384 = vshrl.u32 %v4383, 7
    %v4385 = vsub.s32 0, %v4384
    %v4386 = vrot.slane %v4380, %v4385
    %v4387 = vmul.f32 %v254, %v4386
    %v4388 = vmul.f32 %v259, %v4386
    %v4389 = vmul.f32 %v264, %v4386
    %v4390 = vmul.f32 %v269, %v4386
    %v4391 = vmul.f32 %v274, %v4386
    %v4392 = vmul.f32 %v279, %v4386
    %v4393 = vmul.f32 %v284, %v4386
    %v4394 = vmul.f32 %v289, %v4386
    %v4395 = vmul.f32 %v294, %v4386
    %v4396 = vmul.f32 %v299, %v4386
    %v4397 = vmul.f32 %v304, %v4386
    %v4398 = vmul.f32 %v309, %v4386
    %v4399 = vadd.f32 %v134, %v4387
    %v4400 = vadd.f32 %v139, %v4388
    %v4401 = vadd.f32 %v144, %v4389
    %v4402 = vadd.f32 %v149, %v4390
    %v4403 = vadd.f32 %v154, %v4391
    %v4404 = vadd.f32 %v159, %v4392
    %v4405 = vadd.f32 %v164, %v4393
    %v4406 = vadd.f32 %v169, %v4394
    %v4407 = vadd.f32 %v174, %v4395
    %v4408 = vadd.f32 %v179, %v4396
    %v4409 = vadd.f32 %v184, %v4397
    %v4410 = vadd.f32 %v189, %v4398
    %v4411 = vlaneseq
    %v4412 = vshrl.u32 %v4411, 7
    %v4413 = vsub.s32 1, %v4412
    %v4414 = vrot.slane %v4380, %v4413
    %v4415 = vmul.f32 %v313, %v4414
    %v4416 = vmul.f32 %v317, %v4414
    %v4417 = vmul.f32 %v321, %v4414
    %v4418 = vmul.f32 %v325, %v4414
    %v4419 = vmul.f32 %v329, %v4414
    %v4420 = vmul.f32 %v333, %v4414
    %v4421 = vmul.f32 %v337, %v4414
    %v4422 = vmul.f32 %v341, %v4414
    %v4423 = vmul.f32 %v345, %v4414
    %v4424 = vmul.f32 %v349, %v4414
    %v4425 = vmul.f32 %v353, %v4414
    %v4426 = vmul.f32 %v357, %v4414
    %v4427 = vadd.f32 %v4399, %v4415
    %v4428 = vadd.f32 %v4400, %v4416
    %v4429 = vadd.f32 %v4401, %v4417
    %v4430 = vadd.f32 %v4402, %v4418
    %v4431 = vadd.f32 %v4403, %v4419
    %v4432 = vadd.f32 %v4404, %v4420
    %v4433 = vadd.f32 %v4405, %v4421
    %v4434 = vadd.f32 %v4406, %v4422
    %v4435 = vadd.f32 %v4407, %v4423
    %v4436 = vadd.f32 %v4408, %v4424
    %v4437 = vadd.f32 %v4409, %v4425
    %v4438 = vadd.f32 %v4410, %v4426
    %v4439 = vadd.f32 %v4427, %v3641
    %v4440 = vadd.f32 %v4428, %v3642
    %v4441 = vadd.f32 %v4429, %v3643
    %v4442 = vadd.f32 %v4430, %v3644
    %v4443 = vxor.u32 %v4439, 2147483648
    %v4444 = vxor.u32 %v4440, 2147483648
    %v4445 = vxor.u32 %v4441, 2147483648
    %v4446 = vxor.u32 %v4442, 2147483648
    %v4447 = vmul.f32 %v4443, 1.442695
    %v4448 = vpow.pop %v4447
    %v4449 = vmul.f32 %v4444, 1.442695
    %v4450 = vpow.pop %v4449
    %v4451 = vmul.f32 %v4445, 1.442695
    %v4452 = vpow.pop %v4451
    %v4453 = vmul.f32 %v4446, 1.442695
    %v4454 = vpow.pop %v4453
    %v4455 = vadd.f32 %v4448, 1.0
    %v4456 = vadd.f32 %v4450, 1.0
    %v4457 = vadd.f32 %v4452, 1.0
    %v4458 = vadd.f32 %v4454, 1.0
    %v4459 = vrcp.pop %v4455
    %v4460 = vmul.f32 1.0, %v4459
    %v4461 = vrcp.pop %v4456
    %v4462 = vmul.f32 1.0, %v4461
    %v4463 = vrcp.pop %v4457
    %v4464 = vmul.f32 1.0, %v4463
    %v4465 = vrcp.pop %v4458
    %v4466 = vmul.f32 1.0, %v4465
    %v4467 = vadd.f32 %v4431, %v3645
    %v4468 = vadd.f32 %v4432, %v3646
    %v4469 = vadd.f32 %v4433, %v3647
    %v4470 = vadd.f32 %v4434, %v3648
    %v4471 = vxor.u32 %v4467, 2147483648
    %v4472 = vxor.u32 %v4468, 2147483648
    %v4473 = vxor.u32 %v4469, 2147483648
    %v4474 = vxor.u32 %v4470, 2147483648
    %v4475 = vmul.f32 %v4471, 1.442695
    %v4476 = vpow.pop %v4475
    %v4477 = vmul.f32 %v4472, 1.442695
    %v4478 = vpow.pop %v4477
    %v4479 = vmul.f32 %v4473, 1.442695
    %v4480 = vpow.pop %v4479
    %v4481 = vmul.f32 %v4474, 1.442695
    %v4482 = vpow.pop %v4481
    %v4483 = vadd.f32 %v4476, 1.0
    %v4484 = vadd.f32 %v4478, 1.0
    %v4485 = vadd.f32 %v4480, 1.0
    %v4486 = vadd.f32 %v4482, 1.0
    %v4487 = vrcp.pop %v4483
    %v4488 = vmul.f32 1.0, %v4487
    %v4489 = vrcp.pop %v4484
    %v4490 = vmul.f32 1.0, %v4489
    %v4491 = vrcp.pop %v4485
    %v4492 = vmul.f32 1.0, %v4491
    %v4493 = vrcp.pop %v4486
    %v4494 = vmul.f32 1.0, %v4493
    %v4495 = vmul.f32 %v4460, %v3649
    %v4496 = vmul.f32 %v4462, %v3650
    %v4497 = vmul.f32 %v4464, %v3651
    %v4498 = vmul.f32 %v4466, %v3652
    %v4499 = vadd.f32 %v4435, %v4495
    %v4500 = vadd.f32 %v4436, %v4496
    %v4501 = vadd.f32 %v4437, %v4497
    %v4502 = vadd.f32 %v4438, %v4498
    %v4503 = vtanh.pop %v4499
    %v4504 = vtanh.pop %v4500
    %v4505 = vtanh.pop %v4501
    %v4506 = vtanh.pop %v4502
    %v4507 = vsub.f32 1.0, %v4488
    %v4508 = vsub.f32 1.0, %v4490
    %v4509 = vsub.f32 1.0, %v4492
    %v4510 = vsub.f32 1.0, %v4494
    %v4511 = vmul.f32 %v4507, %v4503
    %v4512 = vmul.f32 %v4508, %v4504
    %v4513 = vmul.f32 %v4509, %v4505
    %v4514 = vmul.f32 %v4510, %v4506
    %v4515 = vmul.f32 %v4488, %v3492
    %v4516 = vmul.f32 %v4490, %v3493
    %v4517 = vmul.f32 %v4492, %v3494
    %v4518 = vmul.f32 %v4494, %v3495
    %v4519 = vadd.f32 %v4511, %v4515
    %v4520 = vadd.f32 %v4512, %v4516
    %v4521 = vadd.f32 %v4513, %v4517
    %v4522 = vadd.f32 %v4514, %v4518
    %4523 = vmatprep.subr.mxu0 0.0
    %4524 = vmatpush1.msra.mxu0 %v4519
    %4525 = vmatprep.subr.mxu0 0.0
    %4526 = vmatpush1.msra.mxu0 %v4520
    %4527 = vmatprep.subr.mxu0 0.0
    %4528 = vmatpush1.msra.mxu0 %v4521
    %4529 = vmatprep.subr.mxu0 0.0
    %4530 = vmatpush1.msra.mxu0 %v4522
    %4531 = vmatprep.subr.mxu0 0.0
    %4532 = vmatpush1.msra.mxu0 0.0
    %4533 = vmatprep.subr.mxu0 0.0
    %4534 = vmatpush1.msra.mxu0 0.0
    %4535 = vmatprep.subr.mxu0 0.0
    %4536 = vmatpush1.msra.mxu0 0.0
    %4537 = vmatprep.subr.mxu0 0.0
    %4538 = vmatpush1.msra.mxu0 0.0
    %4539 = vmatprep.subr.mxu0 0.0
    %4540 = vmatpush1.msra.mxu0 0.0
    %4541 = vmatprep.subr.mxu0 0.0
    %4542 = vmatpush1.msra.mxu0 0.0
    %4543 = vmatprep.subr.mxu0 0.0
    %4544 = vmatpush1.msra.mxu0 0.0
    %4545 = vmatprep.subr.mxu0 0.0
    %4546 = vmatpush1.msra.mxu0 0.0
    %4547 = vmatprep.subr.mxu0 0.0
    %4548 = vmatpush1.msra.mxu0 0.0
    %4549 = vmatprep.subr.mxu0 0.0
    %4550 = vmatpush1.msra.mxu0 0.0
    %4551 = vmatprep.subr.mxu0 0.0
    %4552 = vmatpush1.msra.mxu0 0.0
    %4553 = vmatprep.subr.mxu0 0.0
    %4554 = vmatpush1.msra.mxu0 0.0
    %4555 = vmatprep.subr.mxu0 0.0
    %4556 = vmatpush1.msra.mxu0 0.0
    %4557 = vmatprep.subr.mxu0 0.0
    %4558 = vmatpush1.msra.mxu0 0.0
    %4559 = vmatprep.subr.mxu0 0.0
    %4560 = vmatpush1.msra.mxu0 0.0
    %4561 = vmatprep.subr.mxu0 0.0
    %4562 = vmatpush1.msra.mxu0 0.0
    %4563 = vmatprep.subr.mxu0 0.0
    %4564 = vmatpush1.msra.mxu0 0.0
    %4565 = vmatprep.subr.mxu0 0.0
    %4566 = vmatpush1.msra.mxu0 0.0
    %4567 = vmatprep.subr.mxu0 0.0
    %4568 = vmatpush1.msra.mxu0 0.0
    %4569 = vmatprep.subr.mxu0 0.0
    %4570 = vmatpush1.msra.mxu0 0.0
    %4571 = vmatprep.subr.mxu0 0.0
    %4572 = vmatpush1.msra.mxu0 0.0
    %4573 = vmatprep.subr.mxu0 0.0
    %4574 = vmatpush1.msra.mxu0 0.0
    %4575 = vmatprep.subr.mxu0 0.0
    %4576 = vmatpush1.msra.mxu0 0.0
    %4577 = vmatprep.subr.mxu0 0.0
    %4578 = vmatpush1.msra.mxu0 0.0
    %4579 = vmatprep.subr.mxu0 0.0
    %4580 = vmatpush1.msra.mxu0 0.0
    %4581 = vmatprep.subr.mxu0 0.0
    %4582 = vmatpush1.msra.mxu0 0.0
    %4583 = vmatprep.subr.mxu0 0.0
    %4584 = vmatpush1.msra.mxu0 0.0
    %4585 = vmatprep.subr.mxu0 0.0
    %4586 = vmatpush1.msra.mxu0 0.0
    %4587 = vmatprep.mubr.f32.mxu0 0.0
    %4588 = vmatmul.mubr.f32.gmra.mrb[0].mxu0 %v1339
    %v4589 = vpop.f32.mrb[0].mxu0
    %v4590 = vadd.f32 0.0, %v4589
    %v4591 = vpop.f32.mrb[0].mxu0
    %4592 = vmatprep.mubr.f32.mxu0 0.0
    %4593 = vmatmul.mubr.f32.gmra.mrb[0].mxu0 %v1342
    %v4594 = vpop.f32.mrb[0].mxu0
    %v4595 = vadd.f32 0.0, %v4594
    %v4596 = vpop.f32.mrb[0].mxu0
    %4597 = vmatprep.mubr.f32.mxu0 0.0
    %4598 = vmatmul.mubr.f32.gmra.mrb[0].mxu0 %v1345
    %v4599 = vpop.f32.mrb[0].mxu0
    %v4600 = vadd.f32 0.0, %v4599
    %v4601 = vpop.f32.mrb[0].mxu0
    %4602 = vmatprep.mubr.f32.mxu0 0.0
    %4603 = vmatmul.mubr.f32.gmra.mrb[0].mxu0 %v1348
    %v4604 = vpop.f32.mrb[0].mxu0
    %v4605 = vadd.f32 0.0, %v4604
    %v4606 = vpop.f32.mrb[0].mxu0
    %4607 = vmatprep.mubr.f32.mxu0 0.0
    %4608 = vmatmul.mubr.f32.gmra.mrb[0].mxu0 %v1351
    %v4609 = vpop.f32.mrb[0].mxu0
    %v4610 = vadd.f32 0.0, %v4609
    %v4611 = vpop.f32.mrb[0].mxu0
    %4612 = vmatprep.mubr.f32.mxu0 0.0
    %4613 = vmatmul.mubr.f32.gmra.mrb[0].mxu0 %v1354
    %v4614 = vpop.f32.mrb[0].mxu0
    %v4615 = vadd.f32 0.0, %v4614
    %v4616 = vpop.f32.mrb[0].mxu0
    %4617 = vmatprep.mubr.f32.mxu0 0.0
    %4618 = vmatmul.mubr.f32.gmra.mrb[0].mxu0 %v1357
    %v4619 = vpop.f32.mrb[0].mxu0
    %v4620 = vadd.f32 0.0, %v4619
    %v4621 = vpop.f32.mrb[0].mxu0
    %4622 = vmatprep.mubr.f32.mxu0 0.0
    %4623 = vmatmul.mubr.f32.gmra.mrb[0].mxu0 %v1360
    %v4624 = vpop.f32.mrb[0].mxu0
    %v4625 = vadd.f32 0.0, %v4624
    %v4626 = vpop.f32.mrb[0].mxu0
    %4627 = vmatprep.mubr.f32.mxu0 0.0
    %4628 = vmatmul.mubr.f32.gmra.mrb[0].mxu0 %v1363
    %v4629 = vpop.f32.mrb[0].mxu0
    %v4630 = vadd.f32 0.0, %v4629
    %v4631 = vpop.f32.mrb[0].mxu0
    %4632 = vmatprep.mubr.f32.mxu0 0.0
    %4633 = vmatmul.mubr.f32.gmra.mrb[0].mxu0 %v1366
    %v4634 = vpop.f32.mrb[0].mxu0
    %v4635 = vadd.f32 0.0, %v4634
    %v4636 = vpop.f32.mrb[0].mxu0
    %4637 = vmatprep.mubr.f32.mxu0 0.0
    %4638 = vmatmul.mubr.f32.gmra.mrb[0].mxu0 %v1369
    %v4639 = vpop.f32.mrb[0].mxu0
    %v4640 = vadd.f32 0.0, %v4639
    %v4641 = vpop.f32.mrb[0].mxu0
    %4642 = vmatprep.mubr.f32.mxu0 0.0
    %4643 = vmatmul.mubr.f32.gmra.mrb[0].mxu0 %v1372
    %v4644 = vpop.f32.mrb[0].mxu0
    %v4645 = vadd.f32 0.0, %v4644
    %v4646 = vpop.f32.mrb[0].mxu0
    %4647 = vmatprep.mubr.f32.mxu0 0.0
    %4648 = vmatmul.mubr.f32.gmra.mrb[0].mxu0 %v1375
    %v4649 = vpop.f32.mrb[0].mxu0
    %v4650 = vadd.f32 0.0, %v4649
    %v4651 = vpop.f32.mrb[0].mxu0
    %4652 = vmatprep.mubr.f32.mxu0 0.0
    %4653 = vmatmul.mubr.f32.gmra.mrb[0].mxu0 %v1378
    %v4654 = vpop.f32.mrb[0].mxu0
    %v4655 = vadd.f32 0.0, %v4654
    %v4656 = vpop.f32.mrb[0].mxu0
    %4657 = vmatprep.mubr.f32.mxu0 0.0
    %4658 = vmatmul.mubr.f32.gmra.mrb[0].mxu0 %v1381
    %v4659 = vpop.f32.mrb[0].mxu0
    %v4660 = vadd.f32 0.0, %v4659
    %v4661 = vpop.f32.mrb[0].mxu0
    %4662 = vmatprep.mubr.f32.mxu0 0.0
    %4663 = vmatmul.mubr.f32.gmra.mrb[0].mxu0 %v1384
    %v4664 = vpop.f32.mrb[0].mxu0
    %v4665 = vadd.f32 0.0, %v4664
    %v4666 = vpop.f32.mrb[0].mxu0
    %4667 = vdwg.mxu0
    %v4668 = vadd.f32 %v4590, %v194
    %v4669 = vadd.f32 %v4595, %v199
    %v4670 = vadd.f32 %v4600, %v204
    %v4671 = vadd.f32 %v4605, %v209
    %v4672 = vadd.f32 %v4610, %v214
    %v4673 = vadd.f32 %v4615, %v219
    %v4674 = vadd.f32 %v4620, %v224
    %v4675 = vadd.f32 %v4625, %v229
    %v4676 = vadd.f32 %v4630, %v234
    %v4677 = vadd.f32 %v4635, %v239
    %v4678 = vadd.f32 %v4640, %v244
    %v4679 = vadd.f32 %v4645, %v249
    %v4680 = vadd.f32 %v803, %v4650
    %v4681 = vadd.f32 %v804, %v4655
    %v4682 = vadd.f32 %v805, %v4660
    %v4683 = vadd.f32 %v806, %v4665
    %v4684 = vadd.f32 %v807, %v4650
    %v4685 = vadd.f32 %v808, %v4655
    %v4686 = vadd.f32 %v809, %v4660
    %v4687 = vadd.f32 %v810, %v4665
    %v4688 = vadd.f32 %v811, %v4650
    %v4689 = vadd.f32 %v812, %v4655
    %v4690 = vadd.f32 %v813, %v4660
    %v4691 = vadd.f32 %v814, %v4665
    %v4692 = vadd.f32 %v815, %v4650
    %v4693 = vadd.f32 %v816, %v4655
    %v4694 = vadd.f32 %v817, %v4660
    %v4695 = vadd.f32 %v818, %v4665
    %v4696 = vadd.f32 %v819, %v4650
    %v4697 = vadd.f32 %v820, %v4655
    %v4698 = vadd.f32 %v821, %v4660
    %v4699 = vadd.f32 %v822, %v4665
    %v4700 = vadd.f32 %v823, %v4650
    %v4701 = vadd.f32 %v824, %v4655
    %v4702 = vadd.f32 %v825, %v4660
    %v4703 = vadd.f32 %v826, %v4665
    %v4704 = vadd.f32 %v827, %v4650
    %v4705 = vadd.f32 %v828, %v4655
    %v4706 = vadd.f32 %v829, %v4660
    %v4707 = vadd.f32 %v830, %v4665
    %v4708 = vadd.f32 %v831, %v4650
    %v4709 = vadd.f32 %v832, %v4655
    %v4710 = vadd.f32 %v833, %v4660
    %v4711 = vadd.f32 %v834, %v4665
    %v4712 = vtanh.pop %v4680
    %v4713 = vtanh.pop %v4681
    %v4714 = vtanh.pop %v4682
    %v4715 = vtanh.pop %v4683
    %v4716 = vtanh.pop %v4684
    %v4717 = vtanh.pop %v4685
    %v4718 = vtanh.pop %v4686
    %v4719 = vtanh.pop %v4687
    %v4720 = vtanh.pop %v4688
    %v4721 = vtanh.pop %v4689
    %v4722 = vtanh.pop %v4690
    %v4723 = vtanh.pop %v4691
    %v4724 = vtanh.pop %v4692
    %v4725 = vtanh.pop %v4693
    %v4726 = vtanh.pop %v4694
    %v4727 = vtanh.pop %v4695
    %v4728 = vtanh.pop %v4696
    %v4729 = vtanh.pop %v4697
    %v4730 = vtanh.pop %v4698
    %v4731 = vtanh.pop %v4699
    %v4732 = vtanh.pop %v4700
    %v4733 = vtanh.pop %v4701
    %v4734 = vtanh.pop %v4702
    %v4735 = vtanh.pop %v4703
    %v4736 = vtanh.pop %v4704
    %v4737 = vtanh.pop %v4705
    %v4738 = vtanh.pop %v4706
    %v4739 = vtanh.pop %v4707
    %v4740 = vtanh.pop %v4708
    %v4741 = vtanh.pop %v4709
    %v4742 = vtanh.pop %v4710
    %v4743 = vtanh.pop %v4711
    %v4744 = vmul.f32 %v1610, %v4712
    %v4745 = vmul.f32 %v1615, %v4713
    %v4746 = vmul.f32 %v1620, %v4714
    %v4747 = vmul.f32 %v1625, %v4715
    %v4748 = vmul.f32 %v1610, %v4716
    %v4749 = vmul.f32 %v1615, %v4717
    %v4750 = vmul.f32 %v1620, %v4718
    %v4751 = vmul.f32 %v1625, %v4719
    %v4752 = vmul.f32 %v1610, %v4720
    %v4753 = vmul.f32 %v1615, %v4721
    %v4754 = vmul.f32 %v1620, %v4722
    %v4755 = vmul.f32 %v1625, %v4723
    %v4756 = vmul.f32 %v1610, %v4724
    %v4757 = vmul.f32 %v1615, %v4725
    %v4758 = vmul.f32 %v1620, %v4726
    %v4759 = vmul.f32 %v1625, %v4727
    %v4760 = vmul.f32 %v1610, %v4728
    %v4761 = vmul.f32 %v1615, %v4729
    %v4762 = vmul.f32 %v1620, %v4730
    %v4763 = vmul.f32 %v1625, %v4731
    %v4764 = vmul.f32 %v1610, %v4732
    %v4765 = vmul.f32 %v1615, %v4733
    %v4766 = vmul.f32 %v1620, %v4734
    %v4767 = vmul.f32 %v1625, %v4735
    %v4768 = vmul.f32 %v1610, %v4736
    %v4769 = vmul.f32 %v1615, %v4737
    %v4770 = vmul.f32 %v1620, %v4738
    %v4771 = vmul.f32 %v1625, %v4739
    %v4772 = vmul.f32 %v1610, %v4740
    %v4773 = vmul.f32 %v1615, %v4741
    %v4774 = vmul.f32 %v1620, %v4742
    %v4775 = vmul.f32 %v1625, %v4743
    %v4776 = vadd.f32 %v4744, %v4745
    %v4777 = vadd.f32 %v4776, %v4746
    %v4778 = vadd.f32 %v4777, %v4747
    %v4779 = vrot.slane %v4778, 4
    %v4780 = vadd.f32 %v4778, %v4779
    %v4781 = vrot.slane %v4780, 2
    %v4782 = vadd.f32 %v4780, %v4781
    %v4783 = vrot.slane %v4782, 1
    %v4784 = vadd.f32 %v4782, %v4783
    %v4785 = vadd.f32 %v4748, %v4749
    %v4786 = vadd.f32 %v4785, %v4750
    %v4787 = vadd.f32 %v4786, %v4751
    %v4788 = vrot.slane %v4787, 4
    %v4789 = vadd.f32 %v4787, %v4788
    %v4790 = vrot.slane %v4789, 2
    %v4791 = vadd.f32 %v4789, %v4790
    %v4792 = vrot.slane %v4791, 1
    %v4793 = vadd.f32 %v4791, %v4792
    %v4794 = vadd.f32 %v4752, %v4753
    %v4795 = vadd.f32 %v4794, %v4754
    %v4796 = vadd.f32 %v4795, %v4755
    %v4797 = vrot.slane %v4796, 4
    %v4798 = vadd.f32 %v4796, %v4797
    %v4799 = vrot.slane %v4798, 2
    %v4800 = vadd.f32 %v4798, %v4799
    %v4801 = vrot.slane %v4800, 1
    %v4802 = vadd.f32 %v4800, %v4801
    %v4803 = vadd.f32 %v4756, %v4757
    %v4804 = vadd.f32 %v4803, %v4758
    %v4805 = vadd.f32 %v4804, %v4759
    %v4806 = vrot.slane %v4805, 4
    %v4807 = vadd.f32 %v4805, %v4806
    %v4808 = vrot.slane %v4807, 2
    %v4809 = vadd.f32 %v4807, %v4808
    %v4810 = vrot.slane %v4809, 1
    %v4811 = vadd.f32 %v4809, %v4810
    %v4812 = vadd.f32 %v4760, %v4761
    %v4813 = vadd.f32 %v4812, %v4762
    %v4814 = vadd.f32 %v4813, %v4763
    %v4815 = vrot.slane %v4814, 4
    %v4816 = vadd.f32 %v4814, %v4815
    %v4817 = vrot.slane %v4816, 2
    %v4818 = vadd.f32 %v4816, %v4817
    %v4819 = vrot.slane %v4818, 1
    %v4820 = vadd.f32 %v4818, %v4819
    %v4821 = vadd.f32 %v4764, %v4765
    %v4822 = vadd.f32 %v4821, %v4766
    %v4823 = vadd.f32 %v4822, %v4767
    %v4824 = vrot.slane %v4823, 4
    %v4825 = vadd.f32 %v4823, %v4824
    %v4826 = vrot.slane %v4825, 2
    %v4827 = vadd.f32 %v4825, %v4826
    %v4828 = vrot.slane %v4827, 1
    %v4829 = vadd.f32 %v4827, %v4828
    %v4830 = vadd.f32 %v4768, %v4769
    %v4831 = vadd.f32 %v4830, %v4770
    %v4832 = vadd.f32 %v4831, %v4771
    %v4833 = vrot.slane %v4832, 4
    %v4834 = vadd.f32 %v4832, %v4833
    %v4835 = vrot.slane %v4834, 2
    %v4836 = vadd.f32 %v4834, %v4835
    %v4837 = vrot.slane %v4836, 1
    %v4838 = vadd.f32 %v4836, %v4837
    %v4839 = vadd.f32 %v4772, %v4773
    %v4840 = vadd.f32 %v4839, %v4774
    %v4841 = vadd.f32 %v4840, %v4775
    %v4842 = vrot.slane %v4841, 4
    %v4843 = vadd.f32 %v4841, %v4842
    %v4844 = vrot.slane %v4843, 2
    %v4845 = vadd.f32 %v4843, %v4844
    %v4846 = vrot.slane %v4845, 1
    %v4847 = vadd.f32 %v4845, %v4846
    %v4848 = vmax.f32 %v4784, %v4820
    %v4849 = vmax.f32 %v4793, %v4829
    %v4850 = vmax.f32 %v4802, %v4838
    %v4851 = vmax.f32 %v4811, %v4847
    %v4852 = vmax.f32 %v4848, %v4849
    %v4853 = vmax.f32 %v4850, %v4851
    %v4854 = vmax.f32 %v4852, %v4853
    %v4855 = vsub.f32 %v4784, %v4854
    %v4856 = vsub.f32 %v4793, %v4854
    %v4857 = vsub.f32 %v4802, %v4854
    %v4858 = vsub.f32 %v4811, %v4854
    %v4859 = vsub.f32 %v4820, %v4854
    %v4860 = vsub.f32 %v4829, %v4854
    %v4861 = vsub.f32 %v4838, %v4854
    %v4862 = vsub.f32 %v4847, %v4854
    %v4863 = vmul.f32 %v4855, 1.442695
    %v4864 = vpow.pop %v4863
    %v4865 = vmul.f32 %v4856, 1.442695
    %v4866 = vpow.pop %v4865
    %v4867 = vmul.f32 %v4857, 1.442695
    %v4868 = vpow.pop %v4867
    %v4869 = vmul.f32 %v4858, 1.442695
    %v4870 = vpow.pop %v4869
    %v4871 = vmul.f32 %v4859, 1.442695
    %v4872 = vpow.pop %v4871
    %v4873 = vmul.f32 %v4860, 1.442695
    %v4874 = vpow.pop %v4873
    %v4875 = vmul.f32 %v4861, 1.442695
    %v4876 = vpow.pop %v4875
    %v4877 = vmul.f32 %v4862, 1.442695
    %v4878 = vpow.pop %v4877
    %v4887 = vrot.slane %v4866, 7
    %v4888 = vsel %vm1771, %v4887, %v4864
    %v4889 = vrot.slane %v4868, 6
    %v4890 = vsel %vm1774, %v4889, %v4888
    %v4891 = vrot.slane %v4870, 5
    %v4892 = vsel %vm1777, %v4891, %v4890
    %v4893 = vrot.slane %v4872, 4
    %v4894 = vsel %vm1780, %v4893, %v4892
    %v4895 = vrot.slane %v4874, 3
    %v4896 = vsel %vm1783, %v4895, %v4894
    %v4897 = vrot.slane %v4876, 2
    %v4898 = vsel %vm1786, %v4897, %v4896
    %v4899 = vrot.slane %v4878, 1
    %v4900 = vsel %vm1789, %v4899, %v4898
    %v4902 = vrot.slane %v4900, 4
    %v4903 = vadd.f32 %v4900, %v4902
    %v4904 = vrot.slane %v4903, 2
    %v4905 = vadd.f32 %v4903, %v4904
    %v4906 = vrot.slane %v4905, 1
    %v4907 = vadd.f32 %v4905, %v4906
    %v4908 = vlaneseq
    %v4909 = vshrl.u32 %v4908, 7
    %v4910 = vsub.s32 0, %v4909
    %v4911 = vrot.slane %v4907, %v4910
    %v4912 = vrcp.pop %v4911
    %v4913 = vmul.f32 %v4864, %v4912
    %v4914 = vmul.f32 %v4866, %v4912
    %v4915 = vmul.f32 %v4868, %v4912
    %v4916 = vmul.f32 %v4870, %v4912
    %v4917 = vmul.f32 %v4872, %v4912
    %v4918 = vmul.f32 %v4874, %v4912
    %v4919 = vmul.f32 %v4876, %v4912
    %v4920 = vmul.f32 %v4878, %v4912
    %v4921 = vlaneseq
    %v4922 = vshrl.u32 %v4921, 7
    %v4923 = vsub.s32 0, %v4922
    %v4924 = vrot.slane %v4913, %v4923
    %v4925 = vlaneseq
    %v4926 = vshrl.u32 %v4925, 7
    %v4927 = vsub.s32 0, %v4926
    %v4928 = vrot.slane %v4914, %v4927
    %v4929 = vlaneseq
    %v4930 = vshrl.u32 %v4929, 7
    %v4931 = vsub.s32 0, %v4930
    %v4932 = vrot.slane %v4915, %v4931
    %v4933 = vlaneseq
    %v4934 = vshrl.u32 %v4933, 7
    %v4935 = vsub.s32 0, %v4934
    %v4936 = vrot.slane %v4916, %v4935
    %v4937 = vlaneseq
    %v4938 = vshrl.u32 %v4937, 7
    %v4939 = vsub.s32 0, %v4938
    %v4940 = vrot.slane %v4917, %v4939
    %v4941 = vlaneseq
    %v4942 = vshrl.u32 %v4941, 7
    %v4943 = vsub.s32 0, %v4942
    %v4944 = vrot.slane %v4918, %v4943
    %v4945 = vlaneseq
    %v4946 = vshrl.u32 %v4945, 7
    %v4947 = vsub.s32 0, %v4946
    %v4948 = vrot.slane %v4919, %v4947
    %v4949 = vlaneseq
    %v4950 = vshrl.u32 %v4949, 7
    %v4951 = vsub.s32 0, %v4950
    %v4952 = vrot.slane %v4920, %v4951
    %v4953 = vmul.f32 %v1171, %v4924
    %v4954 = vmul.f32 %v1172, %v4924
    %v4955 = vmul.f32 %v1173, %v4924
    %v4956 = vmul.f32 %v1174, %v4924
    %v4957 = vmul.f32 %v1175, %v4928
    %v4958 = vmul.f32 %v1176, %v4928
    %v4959 = vmul.f32 %v1177, %v4928
    %v4960 = vmul.f32 %v1178, %v4928
    %v4961 = vmul.f32 %v1179, %v4932
    %v4962 = vmul.f32 %v1180, %v4932
    %v4963 = vmul.f32 %v1181, %v4932
    %v4964 = vmul.f32 %v1182, %v4932
    %v4965 = vmul.f32 %v1183, %v4936
    %v4966 = vmul.f32 %v1184, %v4936
    %v4967 = vmul.f32 %v1185, %v4936
    %v4968 = vmul.f32 %v1186, %v4936
    %v4969 = vmul.f32 %v1187, %v4940
    %v4970 = vmul.f32 %v1188, %v4940
    %v4971 = vmul.f32 %v1189, %v4940
    %v4972 = vmul.f32 %v1190, %v4940
    %v4973 = vmul.f32 %v1191, %v4944
    %v4974 = vmul.f32 %v1192, %v4944
    %v4975 = vmul.f32 %v1193, %v4944
    %v4976 = vmul.f32 %v1194, %v4944
    %v4977 = vmul.f32 %v1195, %v4948
    %v4978 = vmul.f32 %v1196, %v4948
    %v4979 = vmul.f32 %v1197, %v4948
    %v4980 = vmul.f32 %v1198, %v4948
    %v4981 = vmul.f32 %v1199, %v4952
    %v4982 = vmul.f32 %v1200, %v4952
    %v4983 = vmul.f32 %v1201, %v4952
    %v4984 = vmul.f32 %v1202, %v4952
    %v4985 = vadd.f32 %v4953, %v4957
    %v4986 = vadd.f32 %v4985, %v4961
    %v4987 = vadd.f32 %v4986, %v4965
    %v4988 = vadd.f32 %v4987, %v4969
    %v4989 = vadd.f32 %v4988, %v4973
    %v4990 = vadd.f32 %v4989, %v4977
    %v4991 = vadd.f32 %v4990, %v4981
    %v4992 = vadd.f32 %v4954, %v4958
    %v4993 = vadd.f32 %v4992, %v4962
    %v4994 = vadd.f32 %v4993, %v4966
    %v4995 = vadd.f32 %v4994, %v4970
    %v4996 = vadd.f32 %v4995, %v4974
    %v4997 = vadd.f32 %v4996, %v4978
    %v4998 = vadd.f32 %v4997, %v4982
    %v4999 = vadd.f32 %v4955, %v4959
    %v5000 = vadd.f32 %v4999, %v4963
    %v5001 = vadd.f32 %v5000, %v4967
    %v5002 = vadd.f32 %v5001, %v4971
    %v5003 = vadd.f32 %v5002, %v4975
    %v5004 = vadd.f32 %v5003, %v4979
    %v5005 = vadd.f32 %v5004, %v4983
    %v5006 = vadd.f32 %v4956, %v4960
    %v5007 = vadd.f32 %v5006, %v4964
    %v5008 = vadd.f32 %v5007, %v4968
    %v5009 = vadd.f32 %v5008, %v4972
    %v5010 = vadd.f32 %v5009, %v4976
    %v5011 = vadd.f32 %v5010, %v4980
    %v5012 = vadd.f32 %v5011, %v4984
    %v5013 = vadd.f32 %v4991, 0.0
    %v5014 = vadd.f32 %v4998, 0.0
    %v5015 = vadd.f32 %v5005, 0.0
    %v5016 = vadd.f32 %v5012, 0.0
    %v5017 = vadd.f32 %v987, %v5013
    %v5018 = vadd.f32 %v988, %v5014
    %v5019 = vadd.f32 %v989, %v5015
    %v5020 = vadd.f32 %v990, %v5016
    %v5021 = vadd.f32 %v991, %v5013
    %v5022 = vadd.f32 %v992, %v5014
    %v5023 = vadd.f32 %v993, %v5015
    %v5024 = vadd.f32 %v994, %v5016
    %v5025 = vadd.f32 %v995, %v5013
    %v5026 = vadd.f32 %v996, %v5014
    %v5027 = vadd.f32 %v997, %v5015
    %v5028 = vadd.f32 %v998, %v5016
    %v5029 = vadd.f32 %v999, %v5013
    %v5030 = vadd.f32 %v1000, %v5014
    %v5031 = vadd.f32 %v1001, %v5015
    %v5032 = vadd.f32 %v1002, %v5016
    %v5033 = vadd.f32 %v1003, %v5013
    %v5034 = vadd.f32 %v1004, %v5014
    %v5035 = vadd.f32 %v1005, %v5015
    %v5036 = vadd.f32 %v1006, %v5016
    %v5037 = vadd.f32 %v1007, %v5013
    %v5038 = vadd.f32 %v1008, %v5014
    %v5039 = vadd.f32 %v1009, %v5015
    %v5040 = vadd.f32 %v1010, %v5016
    %v5041 = vadd.f32 %v1011, %v5013
    %v5042 = vadd.f32 %v1012, %v5014
    %v5043 = vadd.f32 %v1013, %v5015
    %v5044 = vadd.f32 %v1014, %v5016
    %v5045 = vadd.f32 %v1015, %v5013
    %v5046 = vadd.f32 %v1016, %v5014
    %v5047 = vadd.f32 %v1017, %v5015
    %v5048 = vadd.f32 %v1018, %v5016
    %v5049 = vtanh.pop %v5017
    %v5050 = vtanh.pop %v5018
    %v5051 = vtanh.pop %v5019
    %v5052 = vtanh.pop %v5020
    %v5053 = vtanh.pop %v5021
    %v5054 = vtanh.pop %v5022
    %v5055 = vtanh.pop %v5023
    %v5056 = vtanh.pop %v5024
    %v5057 = vtanh.pop %v5025
    %v5058 = vtanh.pop %v5026
    %v5059 = vtanh.pop %v5027
    %v5060 = vtanh.pop %v5028
    %v5061 = vtanh.pop %v5029
    %v5062 = vtanh.pop %v5030
    %v5063 = vtanh.pop %v5031
    %v5064 = vtanh.pop %v5032
    %v5065 = vtanh.pop %v5033
    %v5066 = vtanh.pop %v5034
    %v5067 = vtanh.pop %v5035
    %v5068 = vtanh.pop %v5036
    %v5069 = vtanh.pop %v5037
    %v5070 = vtanh.pop %v5038
    %v5071 = vtanh.pop %v5039
    %v5072 = vtanh.pop %v5040
    %v5073 = vtanh.pop %v5041
    %v5074 = vtanh.pop %v5042
    %v5075 = vtanh.pop %v5043
    %v5076 = vtanh.pop %v5044
    %v5077 = vtanh.pop %v5045
    %v5078 = vtanh.pop %v5046
    %v5079 = vtanh.pop %v5047
    %v5080 = vtanh.pop %v5048
    %v5081 = vmul.f32 %v1974, %v5049
    %v5082 = vmul.f32 %v1979, %v5050
    %v5083 = vmul.f32 %v1984, %v5051
    %v5084 = vmul.f32 %v1989, %v5052
    %v5085 = vmul.f32 %v1974, %v5053
    %v5086 = vmul.f32 %v1979, %v5054
    %v5087 = vmul.f32 %v1984, %v5055
    %v5088 = vmul.f32 %v1989, %v5056
    %v5089 = vmul.f32 %v1974, %v5057
    %v5090 = vmul.f32 %v1979, %v5058
    %v5091 = vmul.f32 %v1984, %v5059
    %v5092 = vmul.f32 %v1989, %v5060
    %v5093 = vmul.f32 %v1974, %v5061
    %v5094 = vmul.f32 %v1979, %v5062
    %v5095 = vmul.f32 %v1984, %v5063
    %v5096 = vmul.f32 %v1989, %v5064
    %v5097 = vmul.f32 %v1974, %v5065
    %v5098 = vmul.f32 %v1979, %v5066
    %v5099 = vmul.f32 %v1984, %v5067
    %v5100 = vmul.f32 %v1989, %v5068
    %v5101 = vmul.f32 %v1974, %v5069
    %v5102 = vmul.f32 %v1979, %v5070
    %v5103 = vmul.f32 %v1984, %v5071
    %v5104 = vmul.f32 %v1989, %v5072
    %v5105 = vmul.f32 %v1974, %v5073
    %v5106 = vmul.f32 %v1979, %v5074
    %v5107 = vmul.f32 %v1984, %v5075
    %v5108 = vmul.f32 %v1989, %v5076
    %v5109 = vmul.f32 %v1974, %v5077
    %v5110 = vmul.f32 %v1979, %v5078
    %v5111 = vmul.f32 %v1984, %v5079
    %v5112 = vmul.f32 %v1989, %v5080
    %v5113 = vadd.f32 %v5081, %v5082
    %v5114 = vadd.f32 %v5113, %v5083
    %v5115 = vadd.f32 %v5114, %v5084
    %v5116 = vrot.slane %v5115, 4
    %v5117 = vadd.f32 %v5115, %v5116
    %v5118 = vrot.slane %v5117, 2
    %v5119 = vadd.f32 %v5117, %v5118
    %v5120 = vrot.slane %v5119, 1
    %v5121 = vadd.f32 %v5119, %v5120
    %v5122 = vadd.f32 %v5085, %v5086
    %v5123 = vadd.f32 %v5122, %v5087
    %v5124 = vadd.f32 %v5123, %v5088
    %v5125 = vrot.slane %v5124, 4
    %v5126 = vadd.f32 %v5124, %v5125
    %v5127 = vrot.slane %v5126, 2
    %v5128 = vadd.f32 %v5126, %v5127
    %v5129 = vrot.slane %v5128, 1
    %v5130 = vadd.f32 %v5128, %v5129
    %v5131 = vadd.f32 %v5089, %v5090
    %v5132 = vadd.f32 %v5131, %v5091
    %v5133 = vadd.f32 %v5132, %v5092
    %v5134 = vrot.slane %v5133, 4
    %v5135 = vadd.f32 %v5133, %v5134
    %v5136 = vrot.slane %v5135, 2
    %v5137 = vadd.f32 %v5135, %v5136
    %v5138 = vrot.slane %v5137, 1
    %v5139 = vadd.f32 %v5137, %v5138
    %v5140 = vadd.f32 %v5093, %v5094
    %v5141 = vadd.f32 %v5140, %v5095
    %v5142 = vadd.f32 %v5141, %v5096
    %v5143 = vrot.slane %v5142, 4
    %v5144 = vadd.f32 %v5142, %v5143
    %v5145 = vrot.slane %v5144, 2
    %v5146 = vadd.f32 %v5144, %v5145
    %v5147 = vrot.slane %v5146, 1
    %v5148 = vadd.f32 %v5146, %v5147
    %v5149 = vadd.f32 %v5097, %v5098
    %v5150 = vadd.f32 %v5149, %v5099
    %v5151 = vadd.f32 %v5150, %v5100
    %v5152 = vrot.slane %v5151, 4
    %v5153 = vadd.f32 %v5151, %v5152
    %v5154 = vrot.slane %v5153, 2
    %v5155 = vadd.f32 %v5153, %v5154
    %v5156 = vrot.slane %v5155, 1
    %v5157 = vadd.f32 %v5155, %v5156
    %v5158 = vadd.f32 %v5101, %v5102
    %v5159 = vadd.f32 %v5158, %v5103
    %v5160 = vadd.f32 %v5159, %v5104
    %v5161 = vrot.slane %v5160, 4
    %v5162 = vadd.f32 %v5160, %v5161
    %v5163 = vrot.slane %v5162, 2
    %v5164 = vadd.f32 %v5162, %v5163
    %v5165 = vrot.slane %v5164, 1
    %v5166 = vadd.f32 %v5164, %v5165
    %v5167 = vadd.f32 %v5105, %v5106
    %v5168 = vadd.f32 %v5167, %v5107
    %v5169 = vadd.f32 %v5168, %v5108
    %v5170 = vrot.slane %v5169, 4
    %v5171 = vadd.f32 %v5169, %v5170
    %v5172 = vrot.slane %v5171, 2
    %v5173 = vadd.f32 %v5171, %v5172
    %v5174 = vrot.slane %v5173, 1
    %v5175 = vadd.f32 %v5173, %v5174
    %v5176 = vadd.f32 %v5109, %v5110
    %v5177 = vadd.f32 %v5176, %v5111
    %v5178 = vadd.f32 %v5177, %v5112
    %v5179 = vrot.slane %v5178, 4
    %v5180 = vadd.f32 %v5178, %v5179
    %v5181 = vrot.slane %v5180, 2
    %v5182 = vadd.f32 %v5180, %v5181
    %v5183 = vrot.slane %v5182, 1
    %v5184 = vadd.f32 %v5182, %v5183
    %v5185 = vmax.f32 %v5121, %v5157
    %v5186 = vmax.f32 %v5130, %v5166
    %v5187 = vmax.f32 %v5139, %v5175
    %v5188 = vmax.f32 %v5148, %v5184
    %v5189 = vmax.f32 %v5185, %v5186
    %v5190 = vmax.f32 %v5187, %v5188
    %v5191 = vmax.f32 %v5189, %v5190
    %vm5192 = vcmp.ge.f32.partialorder %v5121, %v5191
    %vm5193 = vcmp.ge.f32.partialorder %v5130, %v5191
    %vm5194 = vcmp.ge.f32.partialorder %v5139, %v5191
    %vm5195 = vcmp.ge.f32.partialorder %v5148, %v5191
    %vm5196 = vcmp.ge.f32.partialorder %v5157, %v5191
    %vm5197 = vcmp.ge.f32.partialorder %v5166, %v5191
    %vm5198 = vcmp.ge.f32.partialorder %v5175, %v5191
    %vm5199 = vcmp.ge.f32.partialorder %v5184, %v5191
    %v5200 = vsel %vm5192, %v1204, 8
    %v5201 = vsel %vm5193, %v2110, 8
    %v5202 = vsel %vm5194, %v2111, 8
    %v5203 = vsel %vm5195, %v2112, 8
    %v5204 = vsel %vm5196, %v2113, 8
    %v5205 = vsel %vm5197, %v2114, 8
    %v5206 = vsel %vm5198, %v2115, 8
    %v5207 = vsel %vm5199, %v2116, 8
    %v5208 = vsel %vm2125, %v5200, 2147483647
    %v5209 = vsel %vm2125, %v5201, 2147483647
    %v5210 = vsel %vm2125, %v5202, 2147483647
    %v5211 = vsel %vm2125, %v5203, 2147483647
    %v5212 = vsel %vm2125, %v5204, 2147483647
    %vm5213 = vcmp.lt.s32.totalorder %v5208, %v5212
    %v5214 = vsel %vm5213, %v5208, %v5212
    %v5215 = vsel %vm2125, %v5205, 2147483647
    %vm5216 = vcmp.lt.s32.totalorder %v5209, %v5215
    %v5217 = vsel %vm5216, %v5209, %v5215
    %v5218 = vsel %vm2125, %v5206, 2147483647
    %vm5219 = vcmp.lt.s32.totalorder %v5210, %v5218
    %v5220 = vsel %vm5219, %v5210, %v5218
    %v5221 = vsel %vm2125, %v5207, 2147483647
    %vm5222 = vcmp.lt.s32.totalorder %v5211, %v5221
    %v5223 = vsel %vm5222, %v5211, %v5221
    %vm5224 = vcmp.lt.s32.totalorder %v5214, %v5217
    %v5225 = vsel %vm5224, %v5214, %v5217
    %vm5226 = vcmp.lt.s32.totalorder %v5220, %v5223
    %v5227 = vsel %vm5226, %v5220, %v5223
    %vm5228 = vcmp.lt.s32.totalorder %v5225, %v5227
    %v5229 = vsel %vm5228, %v5225, %v5227
    %vm5230 = vcmp.lt.s32.totalorder %v5229, 7
    %v5231 = vsel %vm5230, %v5229, 7
    %v5232 = vsub.f32 %v5121, %v5191
    %v5233 = vsub.f32 %v5130, %v5191
    %v5234 = vsub.f32 %v5139, %v5191
    %v5235 = vsub.f32 %v5148, %v5191
    %v5236 = vsub.f32 %v5157, %v5191
    %v5237 = vsub.f32 %v5166, %v5191
    %v5238 = vsub.f32 %v5175, %v5191
    %v5239 = vsub.f32 %v5184, %v5191
    %v5240 = vmul.f32 %v5232, 1.442695
    %v5241 = vpow.pop %v5240
    %v5242 = vmul.f32 %v5233, 1.442695
    %v5243 = vpow.pop %v5242
    %v5244 = vmul.f32 %v5234, 1.442695
    %v5245 = vpow.pop %v5244
    %v5246 = vmul.f32 %v5235, 1.442695
    %v5247 = vpow.pop %v5246
    %v5248 = vmul.f32 %v5236, 1.442695
    %v5249 = vpow.pop %v5248
    %v5250 = vmul.f32 %v5237, 1.442695
    %v5251 = vpow.pop %v5250
    %v5252 = vmul.f32 %v5238, 1.442695
    %v5253 = vpow.pop %v5252
    %v5254 = vmul.f32 %v5239, 1.442695
    %v5255 = vpow.pop %v5254
    %v5264 = vrot.slane %v5243, 7
    %v5265 = vsel %vm1771, %v5264, %v5241
    %v5266 = vrot.slane %v5245, 6
    %v5267 = vsel %vm1774, %v5266, %v5265
    %v5268 = vrot.slane %v5247, 5
    %v5269 = vsel %vm1777, %v5268, %v5267
    %v5270 = vrot.slane %v5249, 4
    %v5271 = vsel %vm1780, %v5270, %v5269
    %v5272 = vrot.slane %v5251, 3
    %v5273 = vsel %vm1783, %v5272, %v5271
    %v5274 = vrot.slane %v5253, 2
    %v5275 = vsel %vm1786, %v5274, %v5273
    %v5276 = vrot.slane %v5255, 1
    %v5277 = vsel %vm1789, %v5276, %v5275
    %v5279 = vrot.slane %v5277, 4
    %v5280 = vadd.f32 %v5277, %v5279
    %v5281 = vrot.slane %v5280, 2
    %v5282 = vadd.f32 %v5280, %v5281
    %v5283 = vrot.slane %v5282, 1
    %v5284 = vadd.f32 %v5282, %v5283
    %v5285 = vlog2.pop %v5284
    %v5286 = vmul.f32 %v5285, 0.6931472
    %v5287 = vsub.f32 0.0, %v5286
    %v5288 = vlaneseq
    %v5289 = vshrl.u32 %v5288, 7
    %v5290 = vsub.s32 0, %v5289
    %v5291 = vrot.slane %v5231, %v5290
    %vm5292 = vcmp.eq.s32.totalorder %v1204, %v5291
    %v5293 = vsel %vm5292, 1, 0
    %v5294 = vcvt.s32.f32 %v5293
    %v5296 = vcombine.high %v5294, %v5294
    %v5298 = vunpack.c.l.s4 1966171168
    %v5299 = vunpack.c.0.s8 %v5298
    %v5300 = vlaneseq
    %v5301 = vshrl.u32 %v5300, 7
    %v5302 = vsub.s32 %v5299, %v5301
    %v5303 = vrot.slane %v5294, %v5302
    %v5305 = vunpack.c.l.s4 1966171168
    %v5306 = vunpack.c.0.s8 %v5305
    %v5307 = vlaneseq
    %v5308 = vshrl.u32 %v5307, 7
    %v5309 = vsub.s32 %v5306, %v5308
    %v5310 = vrot.slane %v5296, %v5309
    %v5311 = vcombine.high %v5303, %v5303
    %v5312 = vcombine.high %v5310, %v5310
    %v5314 = vunpack.c.l.s4 1966171168
    %v5315 = vunpack.c.0.s8 %v5314
    %v5316 = vlaneseq
    %v5317 = vshrl.u32 %v5316, 7
    %v5318 = vsub.s32 %v5315, %v5317
    %v5319 = vrot.slane %v5303, %v5318
    %v5321 = vunpack.c.l.s4 1966171168
    %v5322 = vunpack.c.0.s8 %v5321
    %v5323 = vlaneseq
    %v5324 = vshrl.u32 %v5323, 7
    %v5325 = vsub.s32 %v5322, %v5324
    %v5326 = vrot.slane %v5310, %v5325
    %v5328 = vunpack.c.l.s4 1966171168
    %v5329 = vunpack.c.0.s8 %v5328
    %v5330 = vlaneseq
    %v5331 = vshrl.u32 %v5330, 7
    %v5332 = vsub.s32 %v5329, %v5331
    %v5333 = vrot.slane %v5311, %v5332
    %v5335 = vunpack.c.l.s4 1966171168
    %v5336 = vunpack.c.0.s8 %v5335
    %v5337 = vlaneseq
    %v5338 = vshrl.u32 %v5337, 7
    %v5339 = vsub.s32 %v5336, %v5338
    %v5340 = vrot.slane %v5312, %v5339
    %v5341 = vcombine.high %v5319, %v5319
    %v5342 = vcombine.high %v5326, %v5326
    %v5343 = vcombine.high %v5333, %v5333
    %v5344 = vcombine.high %v5340, %v5340
    %v5345 = vlaneseq
    %v5346 = vshrl.u32 %v5345, 7
    %v5347 = vsub.s32 0, %v5346
    %v5348 = vrot.slane %v5319, %v5347
    %v5349 = vlaneseq
    %v5350 = vshrl.u32 %v5349, 7
    %v5351 = vsub.s32 0, %v5350
    %v5352 = vrot.slane %v5333, %v5351
    %v5353 = vlaneseq
    %v5354 = vshrl.u32 %v5353, 7
    %v5355 = vsub.s32 0, %v5354
    %v5356 = vrot.slane %v5341, %v5355
    %v5357 = vlaneseq
    %v5358 = vshrl.u32 %v5357, 7
    %v5359 = vsub.s32 0, %v5358
    %v5360 = vrot.slane %v5343, %v5359
    %v5361 = vlaneseq
    %v5362 = vshrl.u32 %v5361, 7
    %v5363 = vsub.s32 0, %v5362
    %v5364 = vrot.slane %v5326, %v5363
    %v5365 = vlaneseq
    %v5366 = vshrl.u32 %v5365, 7
    %v5367 = vsub.s32 0, %v5366
    %v5368 = vrot.slane %v5340, %v5367
    %v5369 = vlaneseq
    %v5370 = vshrl.u32 %v5369, 7
    %v5371 = vsub.s32 0, %v5370
    %v5372 = vrot.slane %v5342, %v5371
    %v5373 = vlaneseq
    %v5374 = vshrl.u32 %v5373, 7
    %v5375 = vsub.s32 0, %v5374
    %v5376 = vrot.slane %v5344, %v5375
    %v5385 = vmul.f32 %v27, %v5348
    %v5386 = vmul.f32 %v28, %v5352
    %v5387 = vmul.f32 %v29, %v5356
    %v5388 = vmul.f32 %v30, %v5360
    %v5389 = vmul.f32 %v31, %v5364
    %v5390 = vmul.f32 %v32, %v5368
    %v5391 = vmul.f32 %v33, %v5372
    %v5392 = vmul.f32 %v34, %v5376
    %v5393 = vsel %vm2311, %v5385, 0.0
    %v5394 = vsel %vm2311, %v5386, 0.0
    %v5395 = vadd.f32 %v5393, %v5394
    %v5396 = vsel %vm2311, %v5387, 0.0
    %v5397 = vadd.f32 %v5395, %v5396
    %v5398 = vsel %vm2311, %v5388, 0.0
    %v5399 = vadd.f32 %v5397, %v5398
    %v5400 = vsel %vm2311, %v5389, 0.0
    %v5401 = vadd.f32 %v5399, %v5400
    %v5402 = vsel %vm2311, %v5390, 0.0
    %v5403 = vadd.f32 %v5401, %v5402
    %v5404 = vsel %vm2311, %v5391, 0.0
    %v5405 = vadd.f32 %v5403, %v5404
    %v5406 = vsel %vm2311, %v5392, 0.0
    %v5407 = vadd.f32 %v5405, %v5406
    %5408 = vst [vmem:[#allocation2 + $0x3] sm:$0x1] %v5231
    %5409 = vst [vmem:[#allocation4 + $0x3] sm:$0x1] %v5287
    %v5410 = vlaneseq
    %v5411 = vshrl.u32 %v5410, 7
    %v5412 = vsub.s32 0, %v5411
    %v5413 = vrot.slane %v5407, %v5412
    %v5414 = vmul.f32 %v254, %v5413
    %v5415 = vmul.f32 %v259, %v5413
    %v5416 = vmul.f32 %v264, %v5413
    %v5417 = vmul.f32 %v269, %v5413
    %v5418 = vmul.f32 %v274, %v5413
    %v5419 = vmul.f32 %v279, %v5413
    %v5420 = vmul.f32 %v284, %v5413
    %v5421 = vmul.f32 %v289, %v5413
    %v5422 = vmul.f32 %v294, %v5413
    %v5423 = vmul.f32 %v299, %v5413
    %v5424 = vmul.f32 %v304, %v5413
    %v5425 = vmul.f32 %v309, %v5413
    %v5426 = vadd.f32 %v134, %v5414
    %v5427 = vadd.f32 %v139, %v5415
    %v5428 = vadd.f32 %v144, %v5416
    %v5429 = vadd.f32 %v149, %v5417
    %v5430 = vadd.f32 %v154, %v5418
    %v5431 = vadd.f32 %v159, %v5419
    %v5432 = vadd.f32 %v164, %v5420
    %v5433 = vadd.f32 %v169, %v5421
    %v5434 = vadd.f32 %v174, %v5422
    %v5435 = vadd.f32 %v179, %v5423
    %v5436 = vadd.f32 %v184, %v5424
    %v5437 = vadd.f32 %v189, %v5425
    %v5438 = vlaneseq
    %v5439 = vshrl.u32 %v5438, 7
    %v5440 = vsub.s32 1, %v5439
    %v5441 = vrot.slane %v5407, %v5440
    %v5442 = vmul.f32 %v313, %v5441
    %v5443 = vmul.f32 %v317, %v5441
    %v5444 = vmul.f32 %v321, %v5441
    %v5445 = vmul.f32 %v325, %v5441
    %v5446 = vmul.f32 %v329, %v5441
    %v5447 = vmul.f32 %v333, %v5441
    %v5448 = vmul.f32 %v337, %v5441
    %v5449 = vmul.f32 %v341, %v5441
    %v5450 = vmul.f32 %v345, %v5441
    %v5451 = vmul.f32 %v349, %v5441
    %v5452 = vmul.f32 %v353, %v5441
    %v5453 = vmul.f32 %v357, %v5441
    %v5454 = vadd.f32 %v5426, %v5442
    %v5455 = vadd.f32 %v5427, %v5443
    %v5456 = vadd.f32 %v5428, %v5444
    %v5457 = vadd.f32 %v5429, %v5445
    %v5458 = vadd.f32 %v5430, %v5446
    %v5459 = vadd.f32 %v5431, %v5447
    %v5460 = vadd.f32 %v5432, %v5448
    %v5461 = vadd.f32 %v5433, %v5449
    %v5462 = vadd.f32 %v5434, %v5450
    %v5463 = vadd.f32 %v5435, %v5451
    %v5464 = vadd.f32 %v5436, %v5452
    %v5465 = vadd.f32 %v5437, %v5453
    %v5466 = vadd.f32 %v5454, %v4668
    %v5467 = vadd.f32 %v5455, %v4669
    %v5468 = vadd.f32 %v5456, %v4670
    %v5469 = vadd.f32 %v5457, %v4671
    %v5470 = vxor.u32 %v5466, 2147483648
    %v5471 = vxor.u32 %v5467, 2147483648
    %v5472 = vxor.u32 %v5468, 2147483648
    %v5473 = vxor.u32 %v5469, 2147483648
    %v5474 = vmul.f32 %v5470, 1.442695
    %v5475 = vpow.pop %v5474
    %v5476 = vmul.f32 %v5471, 1.442695
    %v5477 = vpow.pop %v5476
    %v5478 = vmul.f32 %v5472, 1.442695
    %v5479 = vpow.pop %v5478
    %v5480 = vmul.f32 %v5473, 1.442695
    %v5481 = vpow.pop %v5480
    %v5482 = vadd.f32 %v5475, 1.0
    %v5483 = vadd.f32 %v5477, 1.0
    %v5484 = vadd.f32 %v5479, 1.0
    %v5485 = vadd.f32 %v5481, 1.0
    %v5486 = vrcp.pop %v5482
    %v5487 = vmul.f32 1.0, %v5486
    %v5488 = vrcp.pop %v5483
    %v5489 = vmul.f32 1.0, %v5488
    %v5490 = vrcp.pop %v5484
    %v5491 = vmul.f32 1.0, %v5490
    %v5492 = vrcp.pop %v5485
    %v5493 = vmul.f32 1.0, %v5492
    %v5494 = vadd.f32 %v5458, %v4672
    %v5495 = vadd.f32 %v5459, %v4673
    %v5496 = vadd.f32 %v5460, %v4674
    %v5497 = vadd.f32 %v5461, %v4675
    %v5498 = vxor.u32 %v5494, 2147483648
    %v5499 = vxor.u32 %v5495, 2147483648
    %v5500 = vxor.u32 %v5496, 2147483648
    %v5501 = vxor.u32 %v5497, 2147483648
    %v5502 = vmul.f32 %v5498, 1.442695
    %v5503 = vpow.pop %v5502
    %v5504 = vmul.f32 %v5499, 1.442695
    %v5505 = vpow.pop %v5504
    %v5506 = vmul.f32 %v5500, 1.442695
    %v5507 = vpow.pop %v5506
    %v5508 = vmul.f32 %v5501, 1.442695
    %v5509 = vpow.pop %v5508
    %v5510 = vadd.f32 %v5503, 1.0
    %v5511 = vadd.f32 %v5505, 1.0
    %v5512 = vadd.f32 %v5507, 1.0
    %v5513 = vadd.f32 %v5509, 1.0
    %v5514 = vrcp.pop %v5510
    %v5515 = vmul.f32 1.0, %v5514
    %v5516 = vrcp.pop %v5511
    %v5517 = vmul.f32 1.0, %v5516
    %v5518 = vrcp.pop %v5512
    %v5519 = vmul.f32 1.0, %v5518
    %v5520 = vrcp.pop %v5513
    %v5521 = vmul.f32 1.0, %v5520
    %v5522 = vmul.f32 %v5487, %v4676
    %v5523 = vmul.f32 %v5489, %v4677
    %v5524 = vmul.f32 %v5491, %v4678
    %v5525 = vmul.f32 %v5493, %v4679
    %v5526 = vadd.f32 %v5462, %v5522
    %v5527 = vadd.f32 %v5463, %v5523
    %v5528 = vadd.f32 %v5464, %v5524
    %v5529 = vadd.f32 %v5465, %v5525
    %v5530 = vtanh.pop %v5526
    %v5531 = vtanh.pop %v5527
    %v5532 = vtanh.pop %v5528
    %v5533 = vtanh.pop %v5529
    %v5534 = vsub.f32 1.0, %v5515
    %v5535 = vsub.f32 1.0, %v5517
    %v5536 = vsub.f32 1.0, %v5519
    %v5537 = vsub.f32 1.0, %v5521
    %v5538 = vmul.f32 %v5534, %v5530
    %v5539 = vmul.f32 %v5535, %v5531
    %v5540 = vmul.f32 %v5536, %v5532
    %v5541 = vmul.f32 %v5537, %v5533
    %v5542 = vmul.f32 %v5515, %v4519
    %v5543 = vmul.f32 %v5517, %v4520
    %v5544 = vmul.f32 %v5519, %v4521
    %v5545 = vmul.f32 %v5521, %v4522
    %v5546 = vadd.f32 %v5538, %v5542
    %v5547 = vadd.f32 %v5539, %v5543
    %v5548 = vadd.f32 %v5540, %v5544
    %v5549 = vadd.f32 %v5541, %v5545
    %5550 = vmatprep.subr.mxu0 0.0
    %5551 = vmatpush1.msra.mxu0 %v5546
    %5552 = vmatprep.subr.mxu0 0.0
    %5553 = vmatpush1.msra.mxu0 %v5547
    %5554 = vmatprep.subr.mxu0 0.0
    %5555 = vmatpush1.msra.mxu0 %v5548
    %5556 = vmatprep.subr.mxu0 0.0
    %5557 = vmatpush1.msra.mxu0 %v5549
    %5558 = vmatprep.subr.mxu0 0.0
    %5559 = vmatpush1.msra.mxu0 0.0
    %5560 = vmatprep.subr.mxu0 0.0
    %5561 = vmatpush1.msra.mxu0 0.0
    %5562 = vmatprep.subr.mxu0 0.0
    %5563 = vmatpush1.msra.mxu0 0.0
    %5564 = vmatprep.subr.mxu0 0.0
    %5565 = vmatpush1.msra.mxu0 0.0
    %5566 = vmatprep.subr.mxu0 0.0
    %5567 = vmatpush1.msra.mxu0 0.0
    %5568 = vmatprep.subr.mxu0 0.0
    %5569 = vmatpush1.msra.mxu0 0.0
    %5570 = vmatprep.subr.mxu0 0.0
    %5571 = vmatpush1.msra.mxu0 0.0
    %5572 = vmatprep.subr.mxu0 0.0
    %5573 = vmatpush1.msra.mxu0 0.0
    %5574 = vmatprep.subr.mxu0 0.0
    %5575 = vmatpush1.msra.mxu0 0.0
    %5576 = vmatprep.subr.mxu0 0.0
    %5577 = vmatpush1.msra.mxu0 0.0
    %5578 = vmatprep.subr.mxu0 0.0
    %5579 = vmatpush1.msra.mxu0 0.0
    %5580 = vmatprep.subr.mxu0 0.0
    %5581 = vmatpush1.msra.mxu0 0.0
    %5582 = vmatprep.subr.mxu0 0.0
    %5583 = vmatpush1.msra.mxu0 0.0
    %5584 = vmatprep.subr.mxu0 0.0
    %5585 = vmatpush1.msra.mxu0 0.0
    %5586 = vmatprep.subr.mxu0 0.0
    %5587 = vmatpush1.msra.mxu0 0.0
    %5588 = vmatprep.subr.mxu0 0.0
    %5589 = vmatpush1.msra.mxu0 0.0
    %5590 = vmatprep.subr.mxu0 0.0
    %5591 = vmatpush1.msra.mxu0 0.0
    %5592 = vmatprep.subr.mxu0 0.0
    %5593 = vmatpush1.msra.mxu0 0.0
    %5594 = vmatprep.subr.mxu0 0.0
    %5595 = vmatpush1.msra.mxu0 0.0
    %5596 = vmatprep.subr.mxu0 0.0
    %5597 = vmatpush1.msra.mxu0 0.0
    %5598 = vmatprep.subr.mxu0 0.0
    %5599 = vmatpush1.msra.mxu0 0.0
    %5600 = vmatprep.subr.mxu0 0.0
    %5601 = vmatpush1.msra.mxu0 0.0
    %5602 = vmatprep.subr.mxu0 0.0
    %5603 = vmatpush1.msra.mxu0 0.0
    %5604 = vmatprep.subr.mxu0 0.0
    %5605 = vmatpush1.msra.mxu0 0.0
    %5606 = vmatprep.subr.mxu0 0.0
    %5607 = vmatpush1.msra.mxu0 0.0
    %5608 = vmatprep.subr.mxu0 0.0
    %5609 = vmatpush1.msra.mxu0 0.0
    %5610 = vmatprep.subr.mxu0 0.0
    %5611 = vmatpush1.msra.mxu0 0.0
    %5612 = vmatprep.subr.mxu0 0.0
    %5613 = vmatpush1.msra.mxu0 0.0
    %5614 = vmatprep.mubr.f32.mxu0 0.0
    %5615 = vmatmul.mubr.f32.gmra.mrb[0].mxu0 %v1339
    %v5616 = vpop.f32.mrb[0].mxu0
    %v5617 = vadd.f32 0.0, %v5616
    %v5618 = vpop.f32.mrb[0].mxu0
    %5619 = vmatprep.mubr.f32.mxu0 0.0
    %5620 = vmatmul.mubr.f32.gmra.mrb[0].mxu0 %v1342
    %v5621 = vpop.f32.mrb[0].mxu0
    %v5622 = vadd.f32 0.0, %v5621
    %v5623 = vpop.f32.mrb[0].mxu0
    %5624 = vmatprep.mubr.f32.mxu0 0.0
    %5625 = vmatmul.mubr.f32.gmra.mrb[0].mxu0 %v1345
    %v5626 = vpop.f32.mrb[0].mxu0
    %v5627 = vadd.f32 0.0, %v5626
    %v5628 = vpop.f32.mrb[0].mxu0
    %5629 = vmatprep.mubr.f32.mxu0 0.0
    %5630 = vmatmul.mubr.f32.gmra.mrb[0].mxu0 %v1348
    %v5631 = vpop.f32.mrb[0].mxu0
    %v5632 = vadd.f32 0.0, %v5631
    %v5633 = vpop.f32.mrb[0].mxu0
    %5634 = vmatprep.mubr.f32.mxu0 0.0
    %5635 = vmatmul.mubr.f32.gmra.mrb[0].mxu0 %v1351
    %v5636 = vpop.f32.mrb[0].mxu0
    %v5637 = vadd.f32 0.0, %v5636
    %v5638 = vpop.f32.mrb[0].mxu0
    %5639 = vmatprep.mubr.f32.mxu0 0.0
    %5640 = vmatmul.mubr.f32.gmra.mrb[0].mxu0 %v1354
    %v5641 = vpop.f32.mrb[0].mxu0
    %v5642 = vadd.f32 0.0, %v5641
    %v5643 = vpop.f32.mrb[0].mxu0
    %5644 = vmatprep.mubr.f32.mxu0 0.0
    %5645 = vmatmul.mubr.f32.gmra.mrb[0].mxu0 %v1357
    %v5646 = vpop.f32.mrb[0].mxu0
    %v5647 = vadd.f32 0.0, %v5646
    %v5648 = vpop.f32.mrb[0].mxu0
    %5649 = vmatprep.mubr.f32.mxu0 0.0
    %5650 = vmatmul.mubr.f32.gmra.mrb[0].mxu0 %v1360
    %v5651 = vpop.f32.mrb[0].mxu0
    %v5652 = vadd.f32 0.0, %v5651
    %v5653 = vpop.f32.mrb[0].mxu0
    %5654 = vmatprep.mubr.f32.mxu0 0.0
    %5655 = vmatmul.mubr.f32.gmra.mrb[0].mxu0 %v1363
    %v5656 = vpop.f32.mrb[0].mxu0
    %v5657 = vadd.f32 0.0, %v5656
    %v5658 = vpop.f32.mrb[0].mxu0
    %5659 = vmatprep.mubr.f32.mxu0 0.0
    %5660 = vmatmul.mubr.f32.gmra.mrb[0].mxu0 %v1366
    %v5661 = vpop.f32.mrb[0].mxu0
    %v5662 = vadd.f32 0.0, %v5661
    %v5663 = vpop.f32.mrb[0].mxu0
    %5664 = vmatprep.mubr.f32.mxu0 0.0
    %5665 = vmatmul.mubr.f32.gmra.mrb[0].mxu0 %v1369
    %v5666 = vpop.f32.mrb[0].mxu0
    %v5667 = vadd.f32 0.0, %v5666
    %v5668 = vpop.f32.mrb[0].mxu0
    %5669 = vmatprep.mubr.f32.mxu0 0.0
    %5670 = vmatmul.mubr.f32.gmra.mrb[0].mxu0 %v1372
    %v5671 = vpop.f32.mrb[0].mxu0
    %v5672 = vadd.f32 0.0, %v5671
    %v5673 = vpop.f32.mrb[0].mxu0
    %5674 = vmatprep.mubr.f32.mxu0 0.0
    %5675 = vmatmul.mubr.f32.gmra.mrb[0].mxu0 %v1375
    %v5676 = vpop.f32.mrb[0].mxu0
    %v5677 = vadd.f32 0.0, %v5676
    %v5678 = vpop.f32.mrb[0].mxu0
    %5679 = vmatprep.mubr.f32.mxu0 0.0
    %5680 = vmatmul.mubr.f32.gmra.mrb[0].mxu0 %v1378
    %v5681 = vpop.f32.mrb[0].mxu0
    %v5682 = vadd.f32 0.0, %v5681
    %v5683 = vpop.f32.mrb[0].mxu0
    %5684 = vmatprep.mubr.f32.mxu0 0.0
    %5685 = vmatmul.mubr.f32.gmra.mrb[0].mxu0 %v1381
    %v5686 = vpop.f32.mrb[0].mxu0
    %v5687 = vadd.f32 0.0, %v5686
    %v5688 = vpop.f32.mrb[0].mxu0
    %5689 = vmatprep.mubr.f32.mxu0 0.0
    %5690 = vmatmul.mubr.f32.gmra.mrb[0].mxu0 %v1384
    %v5691 = vpop.f32.mrb[0].mxu0
    %v5692 = vadd.f32 0.0, %v5691
    %v5693 = vpop.f32.mrb[0].mxu0
    %5694 = vdwg.mxu0
    %v5695 = vadd.f32 %v5617, %v194
    %v5696 = vadd.f32 %v5622, %v199
    %v5697 = vadd.f32 %v5627, %v204
    %v5698 = vadd.f32 %v5632, %v209
    %v5699 = vadd.f32 %v5637, %v214
    %v5700 = vadd.f32 %v5642, %v219
    %v5701 = vadd.f32 %v5647, %v224
    %v5702 = vadd.f32 %v5652, %v229
    %v5703 = vadd.f32 %v5657, %v234
    %v5704 = vadd.f32 %v5662, %v239
    %v5705 = vadd.f32 %v5667, %v244
    %v5706 = vadd.f32 %v5672, %v249
    %v5707 = vadd.f32 %v803, %v5677
    %v5708 = vadd.f32 %v804, %v5682
    %v5709 = vadd.f32 %v805, %v5687
    %v5710 = vadd.f32 %v806, %v5692
    %v5711 = vadd.f32 %v807, %v5677
    %v5712 = vadd.f32 %v808, %v5682
    %v5713 = vadd.f32 %v809, %v5687
    %v5714 = vadd.f32 %v810, %v5692
    %v5715 = vadd.f32 %v811, %v5677
    %v5716 = vadd.f32 %v812, %v5682
    %v5717 = vadd.f32 %v813, %v5687
    %v5718 = vadd.f32 %v814, %v5692
    %v5719 = vadd.f32 %v815, %v5677
    %v5720 = vadd.f32 %v816, %v5682
    %v5721 = vadd.f32 %v817, %v5687
    %v5722 = vadd.f32 %v818, %v5692
    %v5723 = vadd.f32 %v819, %v5677
    %v5724 = vadd.f32 %v820, %v5682
    %v5725 = vadd.f32 %v821, %v5687
    %v5726 = vadd.f32 %v822, %v5692
    %v5727 = vadd.f32 %v823, %v5677
    %v5728 = vadd.f32 %v824, %v5682
    %v5729 = vadd.f32 %v825, %v5687
    %v5730 = vadd.f32 %v826, %v5692
    %v5731 = vadd.f32 %v827, %v5677
    %v5732 = vadd.f32 %v828, %v5682
    %v5733 = vadd.f32 %v829, %v5687
    %v5734 = vadd.f32 %v830, %v5692
    %v5735 = vadd.f32 %v831, %v5677
    %v5736 = vadd.f32 %v832, %v5682
    %v5737 = vadd.f32 %v833, %v5687
    %v5738 = vadd.f32 %v834, %v5692
    %v5739 = vtanh.pop %v5707
    %v5740 = vtanh.pop %v5708
    %v5741 = vtanh.pop %v5709
    %v5742 = vtanh.pop %v5710
    %v5743 = vtanh.pop %v5711
    %v5744 = vtanh.pop %v5712
    %v5745 = vtanh.pop %v5713
    %v5746 = vtanh.pop %v5714
    %v5747 = vtanh.pop %v5715
    %v5748 = vtanh.pop %v5716
    %v5749 = vtanh.pop %v5717
    %v5750 = vtanh.pop %v5718
    %v5751 = vtanh.pop %v5719
    %v5752 = vtanh.pop %v5720
    %v5753 = vtanh.pop %v5721
    %v5754 = vtanh.pop %v5722
    %v5755 = vtanh.pop %v5723
    %v5756 = vtanh.pop %v5724
    %v5757 = vtanh.pop %v5725
    %v5758 = vtanh.pop %v5726
    %v5759 = vtanh.pop %v5727
    %v5760 = vtanh.pop %v5728
    %v5761 = vtanh.pop %v5729
    %v5762 = vtanh.pop %v5730
    %v5763 = vtanh.pop %v5731
    %v5764 = vtanh.pop %v5732
    %v5765 = vtanh.pop %v5733
    %v5766 = vtanh.pop %v5734
    %v5767 = vtanh.pop %v5735
    %v5768 = vtanh.pop %v5736
    %v5769 = vtanh.pop %v5737
    %v5770 = vtanh.pop %v5738
    %v5771 = vmul.f32 %v1610, %v5739
    %v5772 = vmul.f32 %v1615, %v5740
    %v5773 = vmul.f32 %v1620, %v5741
    %v5774 = vmul.f32 %v1625, %v5742
    %v5775 = vmul.f32 %v1610, %v5743
    %v5776 = vmul.f32 %v1615, %v5744
    %v5777 = vmul.f32 %v1620, %v5745
    %v5778 = vmul.f32 %v1625, %v5746
    %v5779 = vmul.f32 %v1610, %v5747
    %v5780 = vmul.f32 %v1615, %v5748
    %v5781 = vmul.f32 %v1620, %v5749
    %v5782 = vmul.f32 %v1625, %v5750
    %v5783 = vmul.f32 %v1610, %v5751
    %v5784 = vmul.f32 %v1615, %v5752
    %v5785 = vmul.f32 %v1620, %v5753
    %v5786 = vmul.f32 %v1625, %v5754
    %v5787 = vmul.f32 %v1610, %v5755
    %v5788 = vmul.f32 %v1615, %v5756
    %v5789 = vmul.f32 %v1620, %v5757
    %v5790 = vmul.f32 %v1625, %v5758
    %v5791 = vmul.f32 %v1610, %v5759
    %v5792 = vmul.f32 %v1615, %v5760
    %v5793 = vmul.f32 %v1620, %v5761
    %v5794 = vmul.f32 %v1625, %v5762
    %v5795 = vmul.f32 %v1610, %v5763
    %v5796 = vmul.f32 %v1615, %v5764
    %v5797 = vmul.f32 %v1620, %v5765
    %v5798 = vmul.f32 %v1625, %v5766
    %v5799 = vmul.f32 %v1610, %v5767
    %v5800 = vmul.f32 %v1615, %v5768
    %v5801 = vmul.f32 %v1620, %v5769
    %v5802 = vmul.f32 %v1625, %v5770
    %v5803 = vadd.f32 %v5771, %v5772
    %v5804 = vadd.f32 %v5803, %v5773
    %v5805 = vadd.f32 %v5804, %v5774
    %v5806 = vrot.slane %v5805, 4
    %v5807 = vadd.f32 %v5805, %v5806
    %v5808 = vrot.slane %v5807, 2
    %v5809 = vadd.f32 %v5807, %v5808
    %v5810 = vrot.slane %v5809, 1
    %v5811 = vadd.f32 %v5809, %v5810
    %v5812 = vadd.f32 %v5775, %v5776
    %v5813 = vadd.f32 %v5812, %v5777
    %v5814 = vadd.f32 %v5813, %v5778
    %v5815 = vrot.slane %v5814, 4
    %v5816 = vadd.f32 %v5814, %v5815
    %v5817 = vrot.slane %v5816, 2
    %v5818 = vadd.f32 %v5816, %v5817
    %v5819 = vrot.slane %v5818, 1
    %v5820 = vadd.f32 %v5818, %v5819
    %v5821 = vadd.f32 %v5779, %v5780
    %v5822 = vadd.f32 %v5821, %v5781
    %v5823 = vadd.f32 %v5822, %v5782
    %v5824 = vrot.slane %v5823, 4
    %v5825 = vadd.f32 %v5823, %v5824
    %v5826 = vrot.slane %v5825, 2
    %v5827 = vadd.f32 %v5825, %v5826
    %v5828 = vrot.slane %v5827, 1
    %v5829 = vadd.f32 %v5827, %v5828
    %v5830 = vadd.f32 %v5783, %v5784
    %v5831 = vadd.f32 %v5830, %v5785
    %v5832 = vadd.f32 %v5831, %v5786
    %v5833 = vrot.slane %v5832, 4
    %v5834 = vadd.f32 %v5832, %v5833
    %v5835 = vrot.slane %v5834, 2
    %v5836 = vadd.f32 %v5834, %v5835
    %v5837 = vrot.slane %v5836, 1
    %v5838 = vadd.f32 %v5836, %v5837
    %v5839 = vadd.f32 %v5787, %v5788
    %v5840 = vadd.f32 %v5839, %v5789
    %v5841 = vadd.f32 %v5840, %v5790
    %v5842 = vrot.slane %v5841, 4
    %v5843 = vadd.f32 %v5841, %v5842
    %v5844 = vrot.slane %v5843, 2
    %v5845 = vadd.f32 %v5843, %v5844
    %v5846 = vrot.slane %v5845, 1
    %v5847 = vadd.f32 %v5845, %v5846
    %v5848 = vadd.f32 %v5791, %v5792
    %v5849 = vadd.f32 %v5848, %v5793
    %v5850 = vadd.f32 %v5849, %v5794
    %v5851 = vrot.slane %v5850, 4
    %v5852 = vadd.f32 %v5850, %v5851
    %v5853 = vrot.slane %v5852, 2
    %v5854 = vadd.f32 %v5852, %v5853
    %v5855 = vrot.slane %v5854, 1
    %v5856 = vadd.f32 %v5854, %v5855
    %v5857 = vadd.f32 %v5795, %v5796
    %v5858 = vadd.f32 %v5857, %v5797
    %v5859 = vadd.f32 %v5858, %v5798
    %v5860 = vrot.slane %v5859, 4
    %v5861 = vadd.f32 %v5859, %v5860
    %v5862 = vrot.slane %v5861, 2
    %v5863 = vadd.f32 %v5861, %v5862
    %v5864 = vrot.slane %v5863, 1
    %v5865 = vadd.f32 %v5863, %v5864
    %v5866 = vadd.f32 %v5799, %v5800
    %v5867 = vadd.f32 %v5866, %v5801
    %v5868 = vadd.f32 %v5867, %v5802
    %v5869 = vrot.slane %v5868, 4
    %v5870 = vadd.f32 %v5868, %v5869
    %v5871 = vrot.slane %v5870, 2
    %v5872 = vadd.f32 %v5870, %v5871
    %v5873 = vrot.slane %v5872, 1
    %v5874 = vadd.f32 %v5872, %v5873
    %v5875 = vmax.f32 %v5811, %v5847
    %v5876 = vmax.f32 %v5820, %v5856
    %v5877 = vmax.f32 %v5829, %v5865
    %v5878 = vmax.f32 %v5838, %v5874
    %v5879 = vmax.f32 %v5875, %v5876
    %v5880 = vmax.f32 %v5877, %v5878
    %v5881 = vmax.f32 %v5879, %v5880
    %v5882 = vsub.f32 %v5811, %v5881
    %v5883 = vsub.f32 %v5820, %v5881
    %v5884 = vsub.f32 %v5829, %v5881
    %v5885 = vsub.f32 %v5838, %v5881
    %v5886 = vsub.f32 %v5847, %v5881
    %v5887 = vsub.f32 %v5856, %v5881
    %v5888 = vsub.f32 %v5865, %v5881
    %v5889 = vsub.f32 %v5874, %v5881
    %v5890 = vmul.f32 %v5882, 1.442695
    %v5891 = vpow.pop %v5890
    %v5892 = vmul.f32 %v5883, 1.442695
    %v5893 = vpow.pop %v5892
    %v5894 = vmul.f32 %v5884, 1.442695
    %v5895 = vpow.pop %v5894
    %v5896 = vmul.f32 %v5885, 1.442695
    %v5897 = vpow.pop %v5896
    %v5898 = vmul.f32 %v5886, 1.442695
    %v5899 = vpow.pop %v5898
    %v5900 = vmul.f32 %v5887, 1.442695
    %v5901 = vpow.pop %v5900
    %v5902 = vmul.f32 %v5888, 1.442695
    %v5903 = vpow.pop %v5902
    %v5904 = vmul.f32 %v5889, 1.442695
    %v5905 = vpow.pop %v5904
    %v5914 = vrot.slane %v5893, 7
    %v5915 = vsel %vm1771, %v5914, %v5891
    %v5916 = vrot.slane %v5895, 6
    %v5917 = vsel %vm1774, %v5916, %v5915
    %v5918 = vrot.slane %v5897, 5
    %v5919 = vsel %vm1777, %v5918, %v5917
    %v5920 = vrot.slane %v5899, 4
    %v5921 = vsel %vm1780, %v5920, %v5919
    %v5922 = vrot.slane %v5901, 3
    %v5923 = vsel %vm1783, %v5922, %v5921
    %v5924 = vrot.slane %v5903, 2
    %v5925 = vsel %vm1786, %v5924, %v5923
    %v5926 = vrot.slane %v5905, 1
    %v5927 = vsel %vm1789, %v5926, %v5925
    %v5929 = vrot.slane %v5927, 4
    %v5930 = vadd.f32 %v5927, %v5929
    %v5931 = vrot.slane %v5930, 2
    %v5932 = vadd.f32 %v5930, %v5931
    %v5933 = vrot.slane %v5932, 1
    %v5934 = vadd.f32 %v5932, %v5933
    %v5935 = vlaneseq
    %v5936 = vshrl.u32 %v5935, 7
    %v5937 = vsub.s32 0, %v5936
    %v5938 = vrot.slane %v5934, %v5937
    %v5939 = vrcp.pop %v5938
    %v5940 = vmul.f32 %v5891, %v5939
    %v5941 = vmul.f32 %v5893, %v5939
    %v5942 = vmul.f32 %v5895, %v5939
    %v5943 = vmul.f32 %v5897, %v5939
    %v5944 = vmul.f32 %v5899, %v5939
    %v5945 = vmul.f32 %v5901, %v5939
    %v5946 = vmul.f32 %v5903, %v5939
    %v5947 = vmul.f32 %v5905, %v5939
    %v5948 = vlaneseq
    %v5949 = vshrl.u32 %v5948, 7
    %v5950 = vsub.s32 0, %v5949
    %v5951 = vrot.slane %v5940, %v5950
    %v5952 = vlaneseq
    %v5953 = vshrl.u32 %v5952, 7
    %v5954 = vsub.s32 0, %v5953
    %v5955 = vrot.slane %v5941, %v5954
    %v5956 = vlaneseq
    %v5957 = vshrl.u32 %v5956, 7
    %v5958 = vsub.s32 0, %v5957
    %v5959 = vrot.slane %v5942, %v5958
    %v5960 = vlaneseq
    %v5961 = vshrl.u32 %v5960, 7
    %v5962 = vsub.s32 0, %v5961
    %v5963 = vrot.slane %v5943, %v5962
    %v5964 = vlaneseq
    %v5965 = vshrl.u32 %v5964, 7
    %v5966 = vsub.s32 0, %v5965
    %v5967 = vrot.slane %v5944, %v5966
    %v5968 = vlaneseq
    %v5969 = vshrl.u32 %v5968, 7
    %v5970 = vsub.s32 0, %v5969
    %v5971 = vrot.slane %v5945, %v5970
    %v5972 = vlaneseq
    %v5973 = vshrl.u32 %v5972, 7
    %v5974 = vsub.s32 0, %v5973
    %v5975 = vrot.slane %v5946, %v5974
    %v5976 = vlaneseq
    %v5977 = vshrl.u32 %v5976, 7
    %v5978 = vsub.s32 0, %v5977
    %v5979 = vrot.slane %v5947, %v5978
    %v5980 = vmul.f32 %v1171, %v5951
    %v5981 = vmul.f32 %v1172, %v5951
    %v5982 = vmul.f32 %v1173, %v5951
    %v5983 = vmul.f32 %v1174, %v5951
    %v5984 = vmul.f32 %v1175, %v5955
    %v5985 = vmul.f32 %v1176, %v5955
    %v5986 = vmul.f32 %v1177, %v5955
    %v5987 = vmul.f32 %v1178, %v5955
    %v5988 = vmul.f32 %v1179, %v5959
    %v5989 = vmul.f32 %v1180, %v5959
    %v5990 = vmul.f32 %v1181, %v5959
    %v5991 = vmul.f32 %v1182, %v5959
    %v5992 = vmul.f32 %v1183, %v5963
    %v5993 = vmul.f32 %v1184, %v5963
    %v5994 = vmul.f32 %v1185, %v5963
    %v5995 = vmul.f32 %v1186, %v5963
    %v5996 = vmul.f32 %v1187, %v5967
    %v5997 = vmul.f32 %v1188, %v5967
    %v5998 = vmul.f32 %v1189, %v5967
    %v5999 = vmul.f32 %v1190, %v5967
    %v6000 = vmul.f32 %v1191, %v5971
    %v6001 = vmul.f32 %v1192, %v5971
    %v6002 = vmul.f32 %v1193, %v5971
    %v6003 = vmul.f32 %v1194, %v5971
    %v6004 = vmul.f32 %v1195, %v5975
    %v6005 = vmul.f32 %v1196, %v5975
    %v6006 = vmul.f32 %v1197, %v5975
    %v6007 = vmul.f32 %v1198, %v5975
    %v6008 = vmul.f32 %v1199, %v5979
    %v6009 = vmul.f32 %v1200, %v5979
    %v6010 = vmul.f32 %v1201, %v5979
    %v6011 = vmul.f32 %v1202, %v5979
    %v6012 = vadd.f32 %v5980, %v5984
    %v6013 = vadd.f32 %v6012, %v5988
    %v6014 = vadd.f32 %v6013, %v5992
    %v6015 = vadd.f32 %v6014, %v5996
    %v6016 = vadd.f32 %v6015, %v6000
    %v6017 = vadd.f32 %v6016, %v6004
    %v6018 = vadd.f32 %v6017, %v6008
    %v6019 = vadd.f32 %v5981, %v5985
    %v6020 = vadd.f32 %v6019, %v5989
    %v6021 = vadd.f32 %v6020, %v5993
    %v6022 = vadd.f32 %v6021, %v5997
    %v6023 = vadd.f32 %v6022, %v6001
    %v6024 = vadd.f32 %v6023, %v6005
    %v6025 = vadd.f32 %v6024, %v6009
    %v6026 = vadd.f32 %v5982, %v5986
    %v6027 = vadd.f32 %v6026, %v5990
    %v6028 = vadd.f32 %v6027, %v5994
    %v6029 = vadd.f32 %v6028, %v5998
    %v6030 = vadd.f32 %v6029, %v6002
    %v6031 = vadd.f32 %v6030, %v6006
    %v6032 = vadd.f32 %v6031, %v6010
    %v6033 = vadd.f32 %v5983, %v5987
    %v6034 = vadd.f32 %v6033, %v5991
    %v6035 = vadd.f32 %v6034, %v5995
    %v6036 = vadd.f32 %v6035, %v5999
    %v6037 = vadd.f32 %v6036, %v6003
    %v6038 = vadd.f32 %v6037, %v6007
    %v6039 = vadd.f32 %v6038, %v6011
    %v6040 = vadd.f32 %v6018, 0.0
    %v6041 = vadd.f32 %v6025, 0.0
    %v6042 = vadd.f32 %v6032, 0.0
    %v6043 = vadd.f32 %v6039, 0.0
    %v6044 = vadd.f32 %v987, %v6040
    %v6045 = vadd.f32 %v988, %v6041
    %v6046 = vadd.f32 %v989, %v6042
    %v6047 = vadd.f32 %v990, %v6043
    %v6048 = vadd.f32 %v991, %v6040
    %v6049 = vadd.f32 %v992, %v6041
    %v6050 = vadd.f32 %v993, %v6042
    %v6051 = vadd.f32 %v994, %v6043
    %v6052 = vadd.f32 %v995, %v6040
    %v6053 = vadd.f32 %v996, %v6041
    %v6054 = vadd.f32 %v997, %v6042
    %v6055 = vadd.f32 %v998, %v6043
    %v6056 = vadd.f32 %v999, %v6040
    %v6057 = vadd.f32 %v1000, %v6041
    %v6058 = vadd.f32 %v1001, %v6042
    %v6059 = vadd.f32 %v1002, %v6043
    %v6060 = vadd.f32 %v1003, %v6040
    %v6061 = vadd.f32 %v1004, %v6041
    %v6062 = vadd.f32 %v1005, %v6042
    %v6063 = vadd.f32 %v1006, %v6043
    %v6064 = vadd.f32 %v1007, %v6040
    %v6065 = vadd.f32 %v1008, %v6041
    %v6066 = vadd.f32 %v1009, %v6042
    %v6067 = vadd.f32 %v1010, %v6043
    %v6068 = vadd.f32 %v1011, %v6040
    %v6069 = vadd.f32 %v1012, %v6041
    %v6070 = vadd.f32 %v1013, %v6042
    %v6071 = vadd.f32 %v1014, %v6043
    %v6072 = vadd.f32 %v1015, %v6040
    %v6073 = vadd.f32 %v1016, %v6041
    %v6074 = vadd.f32 %v1017, %v6042
    %v6075 = vadd.f32 %v1018, %v6043
    %v6076 = vtanh.pop %v6044
    %v6077 = vtanh.pop %v6045
    %v6078 = vtanh.pop %v6046
    %v6079 = vtanh.pop %v6047
    %v6080 = vtanh.pop %v6048
    %v6081 = vtanh.pop %v6049
    %v6082 = vtanh.pop %v6050
    %v6083 = vtanh.pop %v6051
    %v6084 = vtanh.pop %v6052
    %v6085 = vtanh.pop %v6053
    %v6086 = vtanh.pop %v6054
    %v6087 = vtanh.pop %v6055
    %v6088 = vtanh.pop %v6056
    %v6089 = vtanh.pop %v6057
    %v6090 = vtanh.pop %v6058
    %v6091 = vtanh.pop %v6059
    %v6092 = vtanh.pop %v6060
    %v6093 = vtanh.pop %v6061
    %v6094 = vtanh.pop %v6062
    %v6095 = vtanh.pop %v6063
    %v6096 = vtanh.pop %v6064
    %v6097 = vtanh.pop %v6065
    %v6098 = vtanh.pop %v6066
    %v6099 = vtanh.pop %v6067
    %v6100 = vtanh.pop %v6068
    %v6101 = vtanh.pop %v6069
    %v6102 = vtanh.pop %v6070
    %v6103 = vtanh.pop %v6071
    %v6104 = vtanh.pop %v6072
    %v6105 = vtanh.pop %v6073
    %v6106 = vtanh.pop %v6074
    %v6107 = vtanh.pop %v6075
    %v6108 = vmul.f32 %v1974, %v6076
    %v6109 = vmul.f32 %v1979, %v6077
    %v6110 = vmul.f32 %v1984, %v6078
    %v6111 = vmul.f32 %v1989, %v6079
    %v6112 = vmul.f32 %v1974, %v6080
    %v6113 = vmul.f32 %v1979, %v6081
    %v6114 = vmul.f32 %v1984, %v6082
    %v6115 = vmul.f32 %v1989, %v6083
    %v6116 = vmul.f32 %v1974, %v6084
    %v6117 = vmul.f32 %v1979, %v6085
    %v6118 = vmul.f32 %v1984, %v6086
    %v6119 = vmul.f32 %v1989, %v6087
    %v6120 = vmul.f32 %v1974, %v6088
    %v6121 = vmul.f32 %v1979, %v6089
    %v6122 = vmul.f32 %v1984, %v6090
    %v6123 = vmul.f32 %v1989, %v6091
    %v6124 = vmul.f32 %v1974, %v6092
    %v6125 = vmul.f32 %v1979, %v6093
    %v6126 = vmul.f32 %v1984, %v6094
    %v6127 = vmul.f32 %v1989, %v6095
    %v6128 = vmul.f32 %v1974, %v6096
    %v6129 = vmul.f32 %v1979, %v6097
    %v6130 = vmul.f32 %v1984, %v6098
    %v6131 = vmul.f32 %v1989, %v6099
    %v6132 = vmul.f32 %v1974, %v6100
    %v6133 = vmul.f32 %v1979, %v6101
    %v6134 = vmul.f32 %v1984, %v6102
    %v6135 = vmul.f32 %v1989, %v6103
    %v6136 = vmul.f32 %v1974, %v6104
    %v6137 = vmul.f32 %v1979, %v6105
    %v6138 = vmul.f32 %v1984, %v6106
    %v6139 = vmul.f32 %v1989, %v6107
    %v6140 = vadd.f32 %v6108, %v6109
    %v6141 = vadd.f32 %v6140, %v6110
    %v6142 = vadd.f32 %v6141, %v6111
    %v6143 = vrot.slane %v6142, 4
    %v6144 = vadd.f32 %v6142, %v6143
    %v6145 = vrot.slane %v6144, 2
    %v6146 = vadd.f32 %v6144, %v6145
    %v6147 = vrot.slane %v6146, 1
    %v6148 = vadd.f32 %v6146, %v6147
    %v6149 = vadd.f32 %v6112, %v6113
    %v6150 = vadd.f32 %v6149, %v6114
    %v6151 = vadd.f32 %v6150, %v6115
    %v6152 = vrot.slane %v6151, 4
    %v6153 = vadd.f32 %v6151, %v6152
    %v6154 = vrot.slane %v6153, 2
    %v6155 = vadd.f32 %v6153, %v6154
    %v6156 = vrot.slane %v6155, 1
    %v6157 = vadd.f32 %v6155, %v6156
    %v6158 = vadd.f32 %v6116, %v6117
    %v6159 = vadd.f32 %v6158, %v6118
    %v6160 = vadd.f32 %v6159, %v6119
    %v6161 = vrot.slane %v6160, 4
    %v6162 = vadd.f32 %v6160, %v6161
    %v6163 = vrot.slane %v6162, 2
    %v6164 = vadd.f32 %v6162, %v6163
    %v6165 = vrot.slane %v6164, 1
    %v6166 = vadd.f32 %v6164, %v6165
    %v6167 = vadd.f32 %v6120, %v6121
    %v6168 = vadd.f32 %v6167, %v6122
    %v6169 = vadd.f32 %v6168, %v6123
    %v6170 = vrot.slane %v6169, 4
    %v6171 = vadd.f32 %v6169, %v6170
    %v6172 = vrot.slane %v6171, 2
    %v6173 = vadd.f32 %v6171, %v6172
    %v6174 = vrot.slane %v6173, 1
    %v6175 = vadd.f32 %v6173, %v6174
    %v6176 = vadd.f32 %v6124, %v6125
    %v6177 = vadd.f32 %v6176, %v6126
    %v6178 = vadd.f32 %v6177, %v6127
    %v6179 = vrot.slane %v6178, 4
    %v6180 = vadd.f32 %v6178, %v6179
    %v6181 = vrot.slane %v6180, 2
    %v6182 = vadd.f32 %v6180, %v6181
    %v6183 = vrot.slane %v6182, 1
    %v6184 = vadd.f32 %v6182, %v6183
    %v6185 = vadd.f32 %v6128, %v6129
    %v6186 = vadd.f32 %v6185, %v6130
    %v6187 = vadd.f32 %v6186, %v6131
    %v6188 = vrot.slane %v6187, 4
    %v6189 = vadd.f32 %v6187, %v6188
    %v6190 = vrot.slane %v6189, 2
    %v6191 = vadd.f32 %v6189, %v6190
    %v6192 = vrot.slane %v6191, 1
    %v6193 = vadd.f32 %v6191, %v6192
    %v6194 = vadd.f32 %v6132, %v6133
    %v6195 = vadd.f32 %v6194, %v6134
    %v6196 = vadd.f32 %v6195, %v6135
    %v6197 = vrot.slane %v6196, 4
    %v6198 = vadd.f32 %v6196, %v6197
    %v6199 = vrot.slane %v6198, 2
    %v6200 = vadd.f32 %v6198, %v6199
    %v6201 = vrot.slane %v6200, 1
    %v6202 = vadd.f32 %v6200, %v6201
    %v6203 = vadd.f32 %v6136, %v6137
    %v6204 = vadd.f32 %v6203, %v6138
    %v6205 = vadd.f32 %v6204, %v6139
    %v6206 = vrot.slane %v6205, 4
    %v6207 = vadd.f32 %v6205, %v6206
    %v6208 = vrot.slane %v6207, 2
    %v6209 = vadd.f32 %v6207, %v6208
    %v6210 = vrot.slane %v6209, 1
    %v6211 = vadd.f32 %v6209, %v6210
    %v6212 = vmax.f32 %v6148, %v6184
    %v6213 = vmax.f32 %v6157, %v6193
    %v6214 = vmax.f32 %v6166, %v6202
    %v6215 = vmax.f32 %v6175, %v6211
    %v6216 = vmax.f32 %v6212, %v6213
    %v6217 = vmax.f32 %v6214, %v6215
    %v6218 = vmax.f32 %v6216, %v6217
    %vm6219 = vcmp.ge.f32.partialorder %v6148, %v6218
    %vm6220 = vcmp.ge.f32.partialorder %v6157, %v6218
    %vm6221 = vcmp.ge.f32.partialorder %v6166, %v6218
    %vm6222 = vcmp.ge.f32.partialorder %v6175, %v6218
    %vm6223 = vcmp.ge.f32.partialorder %v6184, %v6218
    %vm6224 = vcmp.ge.f32.partialorder %v6193, %v6218
    %vm6225 = vcmp.ge.f32.partialorder %v6202, %v6218
    %vm6226 = vcmp.ge.f32.partialorder %v6211, %v6218
    %v6227 = vsel %vm6219, %v1204, 8
    %v6228 = vsel %vm6220, %v2110, 8
    %v6229 = vsel %vm6221, %v2111, 8
    %v6230 = vsel %vm6222, %v2112, 8
    %v6231 = vsel %vm6223, %v2113, 8
    %v6232 = vsel %vm6224, %v2114, 8
    %v6233 = vsel %vm6225, %v2115, 8
    %v6234 = vsel %vm6226, %v2116, 8
    %v6235 = vsel %vm2125, %v6227, 2147483647
    %v6236 = vsel %vm2125, %v6228, 2147483647
    %v6237 = vsel %vm2125, %v6229, 2147483647
    %v6238 = vsel %vm2125, %v6230, 2147483647
    %v6239 = vsel %vm2125, %v6231, 2147483647
    %vm6240 = vcmp.lt.s32.totalorder %v6235, %v6239
    %v6241 = vsel %vm6240, %v6235, %v6239
    %v6242 = vsel %vm2125, %v6232, 2147483647
    %vm6243 = vcmp.lt.s32.totalorder %v6236, %v6242
    %v6244 = vsel %vm6243, %v6236, %v6242
    %v6245 = vsel %vm2125, %v6233, 2147483647
    %vm6246 = vcmp.lt.s32.totalorder %v6237, %v6245
    %v6247 = vsel %vm6246, %v6237, %v6245
    %v6248 = vsel %vm2125, %v6234, 2147483647
    %vm6249 = vcmp.lt.s32.totalorder %v6238, %v6248
    %v6250 = vsel %vm6249, %v6238, %v6248
    %vm6251 = vcmp.lt.s32.totalorder %v6241, %v6244
    %v6252 = vsel %vm6251, %v6241, %v6244
    %vm6253 = vcmp.lt.s32.totalorder %v6247, %v6250
    %v6254 = vsel %vm6253, %v6247, %v6250
    %vm6255 = vcmp.lt.s32.totalorder %v6252, %v6254
    %v6256 = vsel %vm6255, %v6252, %v6254
    %vm6257 = vcmp.lt.s32.totalorder %v6256, 7
    %v6258 = vsel %vm6257, %v6256, 7
    %v6259 = vsub.f32 %v6148, %v6218
    %v6260 = vsub.f32 %v6157, %v6218
    %v6261 = vsub.f32 %v6166, %v6218
    %v6262 = vsub.f32 %v6175, %v6218
    %v6263 = vsub.f32 %v6184, %v6218
    %v6264 = vsub.f32 %v6193, %v6218
    %v6265 = vsub.f32 %v6202, %v6218
    %v6266 = vsub.f32 %v6211, %v6218
    %v6267 = vmul.f32 %v6259, 1.442695
    %v6268 = vpow.pop %v6267
    %v6269 = vmul.f32 %v6260, 1.442695
    %v6270 = vpow.pop %v6269
    %v6271 = vmul.f32 %v6261, 1.442695
    %v6272 = vpow.pop %v6271
    %v6273 = vmul.f32 %v6262, 1.442695
    %v6274 = vpow.pop %v6273
    %v6275 = vmul.f32 %v6263, 1.442695
    %v6276 = vpow.pop %v6275
    %v6277 = vmul.f32 %v6264, 1.442695
    %v6278 = vpow.pop %v6277
    %v6279 = vmul.f32 %v6265, 1.442695
    %v6280 = vpow.pop %v6279
    %v6281 = vmul.f32 %v6266, 1.442695
    %v6282 = vpow.pop %v6281
    %v6291 = vrot.slane %v6270, 7
    %v6292 = vsel %vm1771, %v6291, %v6268
    %v6293 = vrot.slane %v6272, 6
    %v6294 = vsel %vm1774, %v6293, %v6292
    %v6295 = vrot.slane %v6274, 5
    %v6296 = vsel %vm1777, %v6295, %v6294
    %v6297 = vrot.slane %v6276, 4
    %v6298 = vsel %vm1780, %v6297, %v6296
    %v6299 = vrot.slane %v6278, 3
    %v6300 = vsel %vm1783, %v6299, %v6298
    %v6301 = vrot.slane %v6280, 2
    %v6302 = vsel %vm1786, %v6301, %v6300
    %v6303 = vrot.slane %v6282, 1
    %v6304 = vsel %vm1789, %v6303, %v6302
    %v6306 = vrot.slane %v6304, 4
    %v6307 = vadd.f32 %v6304, %v6306
    %v6308 = vrot.slane %v6307, 2
    %v6309 = vadd.f32 %v6307, %v6308
    %v6310 = vrot.slane %v6309, 1
    %v6311 = vadd.f32 %v6309, %v6310
    %v6312 = vlog2.pop %v6311
    %v6313 = vmul.f32 %v6312, 0.6931472
    %v6314 = vsub.f32 0.0, %v6313
    %v6315 = vlaneseq
    %v6316 = vshrl.u32 %v6315, 7
    %v6317 = vsub.s32 0, %v6316
    %v6318 = vrot.slane %v6258, %v6317
    %vm6319 = vcmp.eq.s32.totalorder %v1204, %v6318
    %v6320 = vsel %vm6319, 1, 0
    %v6321 = vcvt.s32.f32 %v6320
    %v6323 = vcombine.high %v6321, %v6321
    %v6325 = vunpack.c.l.s4 1966171168
    %v6326 = vunpack.c.0.s8 %v6325
    %v6327 = vlaneseq
    %v6328 = vshrl.u32 %v6327, 7
    %v6329 = vsub.s32 %v6326, %v6328
    %v6330 = vrot.slane %v6321, %v6329
    %v6332 = vunpack.c.l.s4 1966171168
    %v6333 = vunpack.c.0.s8 %v6332
    %v6334 = vlaneseq
    %v6335 = vshrl.u32 %v6334, 7
    %v6336 = vsub.s32 %v6333, %v6335
    %v6337 = vrot.slane %v6323, %v6336
    %v6338 = vcombine.high %v6330, %v6330
    %v6339 = vcombine.high %v6337, %v6337
    %v6341 = vunpack.c.l.s4 1966171168
    %v6342 = vunpack.c.0.s8 %v6341
    %v6343 = vlaneseq
    %v6344 = vshrl.u32 %v6343, 7
    %v6345 = vsub.s32 %v6342, %v6344
    %v6346 = vrot.slane %v6330, %v6345
    %v6348 = vunpack.c.l.s4 1966171168
    %v6349 = vunpack.c.0.s8 %v6348
    %v6350 = vlaneseq
    %v6351 = vshrl.u32 %v6350, 7
    %v6352 = vsub.s32 %v6349, %v6351
    %v6353 = vrot.slane %v6337, %v6352
    %v6355 = vunpack.c.l.s4 1966171168
    %v6356 = vunpack.c.0.s8 %v6355
    %v6357 = vlaneseq
    %v6358 = vshrl.u32 %v6357, 7
    %v6359 = vsub.s32 %v6356, %v6358
    %v6360 = vrot.slane %v6338, %v6359
    %v6362 = vunpack.c.l.s4 1966171168
    %v6363 = vunpack.c.0.s8 %v6362
    %v6364 = vlaneseq
    %v6365 = vshrl.u32 %v6364, 7
    %v6366 = vsub.s32 %v6363, %v6365
    %v6367 = vrot.slane %v6339, %v6366
    %v6368 = vcombine.high %v6346, %v6346
    %v6369 = vcombine.high %v6353, %v6353
    %v6370 = vcombine.high %v6360, %v6360
    %v6371 = vcombine.high %v6367, %v6367
    %v6372 = vlaneseq
    %v6373 = vshrl.u32 %v6372, 7
    %v6374 = vsub.s32 0, %v6373
    %v6375 = vrot.slane %v6346, %v6374
    %v6376 = vlaneseq
    %v6377 = vshrl.u32 %v6376, 7
    %v6378 = vsub.s32 0, %v6377
    %v6379 = vrot.slane %v6360, %v6378
    %v6380 = vlaneseq
    %v6381 = vshrl.u32 %v6380, 7
    %v6382 = vsub.s32 0, %v6381
    %v6383 = vrot.slane %v6368, %v6382
    %v6384 = vlaneseq
    %v6385 = vshrl.u32 %v6384, 7
    %v6386 = vsub.s32 0, %v6385
    %v6387 = vrot.slane %v6370, %v6386
    %v6388 = vlaneseq
    %v6389 = vshrl.u32 %v6388, 7
    %v6390 = vsub.s32 0, %v6389
    %v6391 = vrot.slane %v6353, %v6390
    %v6392 = vlaneseq
    %v6393 = vshrl.u32 %v6392, 7
    %v6394 = vsub.s32 0, %v6393
    %v6395 = vrot.slane %v6367, %v6394
    %v6396 = vlaneseq
    %v6397 = vshrl.u32 %v6396, 7
    %v6398 = vsub.s32 0, %v6397
    %v6399 = vrot.slane %v6369, %v6398
    %v6400 = vlaneseq
    %v6401 = vshrl.u32 %v6400, 7
    %v6402 = vsub.s32 0, %v6401
    %v6403 = vrot.slane %v6371, %v6402
    %v6412 = vmul.f32 %v27, %v6375
    %v6413 = vmul.f32 %v28, %v6379
    %v6414 = vmul.f32 %v29, %v6383
    %v6415 = vmul.f32 %v30, %v6387
    %v6416 = vmul.f32 %v31, %v6391
    %v6417 = vmul.f32 %v32, %v6395
    %v6418 = vmul.f32 %v33, %v6399
    %v6419 = vmul.f32 %v34, %v6403
    %v6420 = vsel %vm2311, %v6412, 0.0
    %v6421 = vsel %vm2311, %v6413, 0.0
    %v6422 = vadd.f32 %v6420, %v6421
    %v6423 = vsel %vm2311, %v6414, 0.0
    %v6424 = vadd.f32 %v6422, %v6423
    %v6425 = vsel %vm2311, %v6415, 0.0
    %v6426 = vadd.f32 %v6424, %v6425
    %v6427 = vsel %vm2311, %v6416, 0.0
    %v6428 = vadd.f32 %v6426, %v6427
    %v6429 = vsel %vm2311, %v6417, 0.0
    %v6430 = vadd.f32 %v6428, %v6429
    %v6431 = vsel %vm2311, %v6418, 0.0
    %v6432 = vadd.f32 %v6430, %v6431
    %v6433 = vsel %vm2311, %v6419, 0.0
    %v6434 = vadd.f32 %v6432, %v6433
    %6435 = vst [vmem:[#allocation2 + $0x4] sm:$0x1] %v6258
    %6436 = vst [vmem:[#allocation4 + $0x4] sm:$0x1] %v6314
    %v6437 = vlaneseq
    %v6438 = vshrl.u32 %v6437, 7
    %v6439 = vsub.s32 0, %v6438
    %v6440 = vrot.slane %v6434, %v6439
    %v6441 = vmul.f32 %v254, %v6440
    %v6442 = vmul.f32 %v259, %v6440
    %v6443 = vmul.f32 %v264, %v6440
    %v6444 = vmul.f32 %v269, %v6440
    %v6445 = vmul.f32 %v274, %v6440
    %v6446 = vmul.f32 %v279, %v6440
    %v6447 = vmul.f32 %v284, %v6440
    %v6448 = vmul.f32 %v289, %v6440
    %v6449 = vmul.f32 %v294, %v6440
    %v6450 = vmul.f32 %v299, %v6440
    %v6451 = vmul.f32 %v304, %v6440
    %v6452 = vmul.f32 %v309, %v6440
    %v6453 = vadd.f32 %v134, %v6441
    %v6454 = vadd.f32 %v139, %v6442
    %v6455 = vadd.f32 %v144, %v6443
    %v6456 = vadd.f32 %v149, %v6444
    %v6457 = vadd.f32 %v154, %v6445
    %v6458 = vadd.f32 %v159, %v6446
    %v6459 = vadd.f32 %v164, %v6447
    %v6460 = vadd.f32 %v169, %v6448
    %v6461 = vadd.f32 %v174, %v6449
    %v6462 = vadd.f32 %v179, %v6450
    %v6463 = vadd.f32 %v184, %v6451
    %v6464 = vadd.f32 %v189, %v6452
    %v6465 = vlaneseq
    %v6466 = vshrl.u32 %v6465, 7
    %v6467 = vsub.s32 1, %v6466
    %v6468 = vrot.slane %v6434, %v6467
    %v6469 = vmul.f32 %v313, %v6468
    %v6470 = vmul.f32 %v317, %v6468
    %v6471 = vmul.f32 %v321, %v6468
    %v6472 = vmul.f32 %v325, %v6468
    %v6473 = vmul.f32 %v329, %v6468
    %v6474 = vmul.f32 %v333, %v6468
    %v6475 = vmul.f32 %v337, %v6468
    %v6476 = vmul.f32 %v341, %v6468
    %v6477 = vmul.f32 %v345, %v6468
    %v6478 = vmul.f32 %v349, %v6468
    %v6479 = vmul.f32 %v353, %v6468
    %v6480 = vmul.f32 %v357, %v6468
    %v6481 = vadd.f32 %v6453, %v6469
    %v6482 = vadd.f32 %v6454, %v6470
    %v6483 = vadd.f32 %v6455, %v6471
    %v6484 = vadd.f32 %v6456, %v6472
    %v6485 = vadd.f32 %v6457, %v6473
    %v6486 = vadd.f32 %v6458, %v6474
    %v6487 = vadd.f32 %v6459, %v6475
    %v6488 = vadd.f32 %v6460, %v6476
    %v6489 = vadd.f32 %v6461, %v6477
    %v6490 = vadd.f32 %v6462, %v6478
    %v6491 = vadd.f32 %v6463, %v6479
    %v6492 = vadd.f32 %v6464, %v6480
    %v6493 = vadd.f32 %v6481, %v5695
    %v6494 = vadd.f32 %v6482, %v5696
    %v6495 = vadd.f32 %v6483, %v5697
    %v6496 = vadd.f32 %v6484, %v5698
    %v6497 = vxor.u32 %v6493, 2147483648
    %v6498 = vxor.u32 %v6494, 2147483648
    %v6499 = vxor.u32 %v6495, 2147483648
    %v6500 = vxor.u32 %v6496, 2147483648
    %v6501 = vmul.f32 %v6497, 1.442695
    %v6502 = vpow.pop %v6501
    %v6503 = vmul.f32 %v6498, 1.442695
    %v6504 = vpow.pop %v6503
    %v6505 = vmul.f32 %v6499, 1.442695
    %v6506 = vpow.pop %v6505
    %v6507 = vmul.f32 %v6500, 1.442695
    %v6508 = vpow.pop %v6507
    %v6509 = vadd.f32 %v6502, 1.0
    %v6510 = vadd.f32 %v6504, 1.0
    %v6511 = vadd.f32 %v6506, 1.0
    %v6512 = vadd.f32 %v6508, 1.0
    %v6513 = vrcp.pop %v6509
    %v6514 = vmul.f32 1.0, %v6513
    %v6515 = vrcp.pop %v6510
    %v6516 = vmul.f32 1.0, %v6515
    %v6517 = vrcp.pop %v6511
    %v6518 = vmul.f32 1.0, %v6517
    %v6519 = vrcp.pop %v6512
    %v6520 = vmul.f32 1.0, %v6519
    %v6521 = vadd.f32 %v6485, %v5699
    %v6522 = vadd.f32 %v6486, %v5700
    %v6523 = vadd.f32 %v6487, %v5701
    %v6524 = vadd.f32 %v6488, %v5702
    %v6525 = vxor.u32 %v6521, 2147483648
    %v6526 = vxor.u32 %v6522, 2147483648
    %v6527 = vxor.u32 %v6523, 2147483648
    %v6528 = vxor.u32 %v6524, 2147483648
    %v6529 = vmul.f32 %v6525, 1.442695
    %v6530 = vpow.pop %v6529
    %v6531 = vmul.f32 %v6526, 1.442695
    %v6532 = vpow.pop %v6531
    %v6533 = vmul.f32 %v6527, 1.442695
    %v6534 = vpow.pop %v6533
    %v6535 = vmul.f32 %v6528, 1.442695
    %v6536 = vpow.pop %v6535
    %v6537 = vadd.f32 %v6530, 1.0
    %v6538 = vadd.f32 %v6532, 1.0
    %v6539 = vadd.f32 %v6534, 1.0
    %v6540 = vadd.f32 %v6536, 1.0
    %v6541 = vrcp.pop %v6537
    %v6542 = vmul.f32 1.0, %v6541
    %v6543 = vrcp.pop %v6538
    %v6544 = vmul.f32 1.0, %v6543
    %v6545 = vrcp.pop %v6539
    %v6546 = vmul.f32 1.0, %v6545
    %v6547 = vrcp.pop %v6540
    %v6548 = vmul.f32 1.0, %v6547
    %v6549 = vmul.f32 %v6514, %v5703
    %v6550 = vmul.f32 %v6516, %v5704
    %v6551 = vmul.f32 %v6518, %v5705
    %v6552 = vmul.f32 %v6520, %v5706
    %v6553 = vadd.f32 %v6489, %v6549
    %v6554 = vadd.f32 %v6490, %v6550
    %v6555 = vadd.f32 %v6491, %v6551
    %v6556 = vadd.f32 %v6492, %v6552
    %v6557 = vtanh.pop %v6553
    %v6558 = vtanh.pop %v6554
    %v6559 = vtanh.pop %v6555
    %v6560 = vtanh.pop %v6556
    %v6561 = vsub.f32 1.0, %v6542
    %v6562 = vsub.f32 1.0, %v6544
    %v6563 = vsub.f32 1.0, %v6546
    %v6564 = vsub.f32 1.0, %v6548
    %v6565 = vmul.f32 %v6561, %v6557
    %v6566 = vmul.f32 %v6562, %v6558
    %v6567 = vmul.f32 %v6563, %v6559
    %v6568 = vmul.f32 %v6564, %v6560
    %v6569 = vmul.f32 %v6542, %v5546
    %v6570 = vmul.f32 %v6544, %v5547
    %v6571 = vmul.f32 %v6546, %v5548
    %v6572 = vmul.f32 %v6548, %v5549
    %v6573 = vadd.f32 %v6565, %v6569
    %v6574 = vadd.f32 %v6566, %v6570
    %v6575 = vadd.f32 %v6567, %v6571
    %v6576 = vadd.f32 %v6568, %v6572
    %6577 = vmatprep.subr.mxu0 0.0
    %6578 = vmatpush1.msra.mxu0 %v6573
    %6579 = vmatprep.subr.mxu0 0.0
    %6580 = vmatpush1.msra.mxu0 %v6574
    %6581 = vmatprep.subr.mxu0 0.0
    %6582 = vmatpush1.msra.mxu0 %v6575
    %6583 = vmatprep.subr.mxu0 0.0
    %6584 = vmatpush1.msra.mxu0 %v6576
    %6585 = vmatprep.subr.mxu0 0.0
    %6586 = vmatpush1.msra.mxu0 0.0
    %6587 = vmatprep.subr.mxu0 0.0
    %6588 = vmatpush1.msra.mxu0 0.0
    %6589 = vmatprep.subr.mxu0 0.0
    %6590 = vmatpush1.msra.mxu0 0.0
    %6591 = vmatprep.subr.mxu0 0.0
    %6592 = vmatpush1.msra.mxu0 0.0
    %6593 = vmatprep.subr.mxu0 0.0
    %6594 = vmatpush1.msra.mxu0 0.0
    %6595 = vmatprep.subr.mxu0 0.0
    %6596 = vmatpush1.msra.mxu0 0.0
    %6597 = vmatprep.subr.mxu0 0.0
    %6598 = vmatpush1.msra.mxu0 0.0
    %6599 = vmatprep.subr.mxu0 0.0
    %6600 = vmatpush1.msra.mxu0 0.0
    %6601 = vmatprep.subr.mxu0 0.0
    %6602 = vmatpush1.msra.mxu0 0.0
    %6603 = vmatprep.subr.mxu0 0.0
    %6604 = vmatpush1.msra.mxu0 0.0
    %6605 = vmatprep.subr.mxu0 0.0
    %6606 = vmatpush1.msra.mxu0 0.0
    %6607 = vmatprep.subr.mxu0 0.0
    %6608 = vmatpush1.msra.mxu0 0.0
    %6609 = vmatprep.subr.mxu0 0.0
    %6610 = vmatpush1.msra.mxu0 0.0
    %6611 = vmatprep.subr.mxu0 0.0
    %6612 = vmatpush1.msra.mxu0 0.0
    %6613 = vmatprep.subr.mxu0 0.0
    %6614 = vmatpush1.msra.mxu0 0.0
    %6615 = vmatprep.subr.mxu0 0.0
    %6616 = vmatpush1.msra.mxu0 0.0
    %6617 = vmatprep.subr.mxu0 0.0
    %6618 = vmatpush1.msra.mxu0 0.0
    %6619 = vmatprep.subr.mxu0 0.0
    %6620 = vmatpush1.msra.mxu0 0.0
    %6621 = vmatprep.subr.mxu0 0.0
    %6622 = vmatpush1.msra.mxu0 0.0
    %6623 = vmatprep.subr.mxu0 0.0
    %6624 = vmatpush1.msra.mxu0 0.0
    %6625 = vmatprep.subr.mxu0 0.0
    %6626 = vmatpush1.msra.mxu0 0.0
    %6627 = vmatprep.subr.mxu0 0.0
    %6628 = vmatpush1.msra.mxu0 0.0
    %6629 = vmatprep.subr.mxu0 0.0
    %6630 = vmatpush1.msra.mxu0 0.0
    %6631 = vmatprep.subr.mxu0 0.0
    %6632 = vmatpush1.msra.mxu0 0.0
    %6633 = vmatprep.subr.mxu0 0.0
    %6634 = vmatpush1.msra.mxu0 0.0
    %6635 = vmatprep.subr.mxu0 0.0
    %6636 = vmatpush1.msra.mxu0 0.0
    %6637 = vmatprep.subr.mxu0 0.0
    %6638 = vmatpush1.msra.mxu0 0.0
    %6639 = vmatprep.subr.mxu0 0.0
    %6640 = vmatpush1.msra.mxu0 0.0
    %6641 = vmatprep.mubr.f32.mxu0 0.0
    %6642 = vmatmul.mubr.f32.gmra.mrb[0].mxu0 %v1339
    %v6643 = vpop.f32.mrb[0].mxu0
    %v6644 = vadd.f32 0.0, %v6643
    %v6645 = vpop.f32.mrb[0].mxu0
    %6646 = vmatprep.mubr.f32.mxu0 0.0
    %6647 = vmatmul.mubr.f32.gmra.mrb[0].mxu0 %v1342
    %v6648 = vpop.f32.mrb[0].mxu0
    %v6649 = vadd.f32 0.0, %v6648
    %v6650 = vpop.f32.mrb[0].mxu0
    %6651 = vmatprep.mubr.f32.mxu0 0.0
    %6652 = vmatmul.mubr.f32.gmra.mrb[0].mxu0 %v1345
    %v6653 = vpop.f32.mrb[0].mxu0
    %v6654 = vadd.f32 0.0, %v6653
    %v6655 = vpop.f32.mrb[0].mxu0
    %6656 = vmatprep.mubr.f32.mxu0 0.0
    %6657 = vmatmul.mubr.f32.gmra.mrb[0].mxu0 %v1348
    %v6658 = vpop.f32.mrb[0].mxu0
    %v6659 = vadd.f32 0.0, %v6658
    %v6660 = vpop.f32.mrb[0].mxu0
    %6661 = vmatprep.mubr.f32.mxu0 0.0
    %6662 = vmatmul.mubr.f32.gmra.mrb[0].mxu0 %v1351
    %v6663 = vpop.f32.mrb[0].mxu0
    %v6664 = vadd.f32 0.0, %v6663
    %v6665 = vpop.f32.mrb[0].mxu0
    %6666 = vmatprep.mubr.f32.mxu0 0.0
    %6667 = vmatmul.mubr.f32.gmra.mrb[0].mxu0 %v1354
    %v6668 = vpop.f32.mrb[0].mxu0
    %v6669 = vadd.f32 0.0, %v6668
    %v6670 = vpop.f32.mrb[0].mxu0
    %6671 = vmatprep.mubr.f32.mxu0 0.0
    %6672 = vmatmul.mubr.f32.gmra.mrb[0].mxu0 %v1357
    %v6673 = vpop.f32.mrb[0].mxu0
    %v6674 = vadd.f32 0.0, %v6673
    %v6675 = vpop.f32.mrb[0].mxu0
    %6676 = vmatprep.mubr.f32.mxu0 0.0
    %6677 = vmatmul.mubr.f32.gmra.mrb[0].mxu0 %v1360
    %v6678 = vpop.f32.mrb[0].mxu0
    %v6679 = vadd.f32 0.0, %v6678
    %v6680 = vpop.f32.mrb[0].mxu0
    %6681 = vmatprep.mubr.f32.mxu0 0.0
    %6682 = vmatmul.mubr.f32.gmra.mrb[0].mxu0 %v1363
    %v6683 = vpop.f32.mrb[0].mxu0
    %v6684 = vadd.f32 0.0, %v6683
    %v6685 = vpop.f32.mrb[0].mxu0
    %6686 = vmatprep.mubr.f32.mxu0 0.0
    %6687 = vmatmul.mubr.f32.gmra.mrb[0].mxu0 %v1366
    %v6688 = vpop.f32.mrb[0].mxu0
    %v6689 = vadd.f32 0.0, %v6688
    %v6690 = vpop.f32.mrb[0].mxu0
    %6691 = vmatprep.mubr.f32.mxu0 0.0
    %6692 = vmatmul.mubr.f32.gmra.mrb[0].mxu0 %v1369
    %v6693 = vpop.f32.mrb[0].mxu0
    %v6694 = vadd.f32 0.0, %v6693
    %v6695 = vpop.f32.mrb[0].mxu0
    %6696 = vmatprep.mubr.f32.mxu0 0.0
    %6697 = vmatmul.mubr.f32.gmra.mrb[0].mxu0 %v1372
    %v6698 = vpop.f32.mrb[0].mxu0
    %v6699 = vadd.f32 0.0, %v6698
    %v6700 = vpop.f32.mrb[0].mxu0
    %6701 = vmatprep.mubr.f32.mxu0 0.0
    %6702 = vmatmul.mubr.f32.gmra.mrb[0].mxu0 %v1375
    %v6703 = vpop.f32.mrb[0].mxu0
    %v6704 = vadd.f32 0.0, %v6703
    %v6705 = vpop.f32.mrb[0].mxu0
    %6706 = vmatprep.mubr.f32.mxu0 0.0
    %6707 = vmatmul.mubr.f32.gmra.mrb[0].mxu0 %v1378
    %v6708 = vpop.f32.mrb[0].mxu0
    %v6709 = vadd.f32 0.0, %v6708
    %v6710 = vpop.f32.mrb[0].mxu0
    %6711 = vmatprep.mubr.f32.mxu0 0.0
    %6712 = vmatmul.mubr.f32.gmra.mrb[0].mxu0 %v1381
    %v6713 = vpop.f32.mrb[0].mxu0
    %v6714 = vadd.f32 0.0, %v6713
    %v6715 = vpop.f32.mrb[0].mxu0
    %6716 = vmatprep.mubr.f32.mxu0 0.0
    %6717 = vmatmul.mubr.f32.gmra.mrb[0].mxu0 %v1384
    %v6718 = vpop.f32.mrb[0].mxu0
    %v6719 = vadd.f32 0.0, %v6718
    %v6720 = vpop.f32.mrb[0].mxu0
    %6721 = vdwg.mxu0
    %v6722 = vadd.f32 %v6644, %v194
    %v6723 = vadd.f32 %v6649, %v199
    %v6724 = vadd.f32 %v6654, %v204
    %v6725 = vadd.f32 %v6659, %v209
    %v6726 = vadd.f32 %v6664, %v214
    %v6727 = vadd.f32 %v6669, %v219
    %v6728 = vadd.f32 %v6674, %v224
    %v6729 = vadd.f32 %v6679, %v229
    %v6730 = vadd.f32 %v6684, %v234
    %v6731 = vadd.f32 %v6689, %v239
    %v6732 = vadd.f32 %v6694, %v244
    %v6733 = vadd.f32 %v6699, %v249
    %v6734 = vadd.f32 %v803, %v6704
    %v6735 = vadd.f32 %v804, %v6709
    %v6736 = vadd.f32 %v805, %v6714
    %v6737 = vadd.f32 %v806, %v6719
    %v6738 = vadd.f32 %v807, %v6704
    %v6739 = vadd.f32 %v808, %v6709
    %v6740 = vadd.f32 %v809, %v6714
    %v6741 = vadd.f32 %v810, %v6719
    %v6742 = vadd.f32 %v811, %v6704
    %v6743 = vadd.f32 %v812, %v6709
    %v6744 = vadd.f32 %v813, %v6714
    %v6745 = vadd.f32 %v814, %v6719
    %v6746 = vadd.f32 %v815, %v6704
    %v6747 = vadd.f32 %v816, %v6709
    %v6748 = vadd.f32 %v817, %v6714
    %v6749 = vadd.f32 %v818, %v6719
    %v6750 = vadd.f32 %v819, %v6704
    %v6751 = vadd.f32 %v820, %v6709
    %v6752 = vadd.f32 %v821, %v6714
    %v6753 = vadd.f32 %v822, %v6719
    %v6754 = vadd.f32 %v823, %v6704
    %v6755 = vadd.f32 %v824, %v6709
    %v6756 = vadd.f32 %v825, %v6714
    %v6757 = vadd.f32 %v826, %v6719
    %v6758 = vadd.f32 %v827, %v6704
    %v6759 = vadd.f32 %v828, %v6709
    %v6760 = vadd.f32 %v829, %v6714
    %v6761 = vadd.f32 %v830, %v6719
    %v6762 = vadd.f32 %v831, %v6704
    %v6763 = vadd.f32 %v832, %v6709
    %v6764 = vadd.f32 %v833, %v6714
    %v6765 = vadd.f32 %v834, %v6719
    %v6766 = vtanh.pop %v6734
    %v6767 = vtanh.pop %v6735
    %v6768 = vtanh.pop %v6736
    %v6769 = vtanh.pop %v6737
    %v6770 = vtanh.pop %v6738
    %v6771 = vtanh.pop %v6739
    %v6772 = vtanh.pop %v6740
    %v6773 = vtanh.pop %v6741
    %v6774 = vtanh.pop %v6742
    %v6775 = vtanh.pop %v6743
    %v6776 = vtanh.pop %v6744
    %v6777 = vtanh.pop %v6745
    %v6778 = vtanh.pop %v6746
    %v6779 = vtanh.pop %v6747
    %v6780 = vtanh.pop %v6748
    %v6781 = vtanh.pop %v6749
    %v6782 = vtanh.pop %v6750
    %v6783 = vtanh.pop %v6751
    %v6784 = vtanh.pop %v6752
    %v6785 = vtanh.pop %v6753
    %v6786 = vtanh.pop %v6754
    %v6787 = vtanh.pop %v6755
    %v6788 = vtanh.pop %v6756
    %v6789 = vtanh.pop %v6757
    %v6790 = vtanh.pop %v6758
    %v6791 = vtanh.pop %v6759
    %v6792 = vtanh.pop %v6760
    %v6793 = vtanh.pop %v6761
    %v6794 = vtanh.pop %v6762
    %v6795 = vtanh.pop %v6763
    %v6796 = vtanh.pop %v6764
    %v6797 = vtanh.pop %v6765
    %v6798 = vmul.f32 %v1610, %v6766
    %v6799 = vmul.f32 %v1615, %v6767
    %v6800 = vmul.f32 %v1620, %v6768
    %v6801 = vmul.f32 %v1625, %v6769
    %v6802 = vmul.f32 %v1610, %v6770
    %v6803 = vmul.f32 %v1615, %v6771
    %v6804 = vmul.f32 %v1620, %v6772
    %v6805 = vmul.f32 %v1625, %v6773
    %v6806 = vmul.f32 %v1610, %v6774
    %v6807 = vmul.f32 %v1615, %v6775
    %v6808 = vmul.f32 %v1620, %v6776
    %v6809 = vmul.f32 %v1625, %v6777
    %v6810 = vmul.f32 %v1610, %v6778
    %v6811 = vmul.f32 %v1615, %v6779
    %v6812 = vmul.f32 %v1620, %v6780
    %v6813 = vmul.f32 %v1625, %v6781
    %v6814 = vmul.f32 %v1610, %v6782
    %v6815 = vmul.f32 %v1615, %v6783
    %v6816 = vmul.f32 %v1620, %v6784
    %v6817 = vmul.f32 %v1625, %v6785
    %v6818 = vmul.f32 %v1610, %v6786
    %v6819 = vmul.f32 %v1615, %v6787
    %v6820 = vmul.f32 %v1620, %v6788
    %v6821 = vmul.f32 %v1625, %v6789
    %v6822 = vmul.f32 %v1610, %v6790
    %v6823 = vmul.f32 %v1615, %v6791
    %v6824 = vmul.f32 %v1620, %v6792
    %v6825 = vmul.f32 %v1625, %v6793
    %v6826 = vmul.f32 %v1610, %v6794
    %v6827 = vmul.f32 %v1615, %v6795
    %v6828 = vmul.f32 %v1620, %v6796
    %v6829 = vmul.f32 %v1625, %v6797
    %v6830 = vadd.f32 %v6798, %v6799
    %v6831 = vadd.f32 %v6830, %v6800
    %v6832 = vadd.f32 %v6831, %v6801
    %v6833 = vrot.slane %v6832, 4
    %v6834 = vadd.f32 %v6832, %v6833
    %v6835 = vrot.slane %v6834, 2
    %v6836 = vadd.f32 %v6834, %v6835
    %v6837 = vrot.slane %v6836, 1
    %v6838 = vadd.f32 %v6836, %v6837
    %v6839 = vadd.f32 %v6802, %v6803
    %v6840 = vadd.f32 %v6839, %v6804
    %v6841 = vadd.f32 %v6840, %v6805
    %v6842 = vrot.slane %v6841, 4
    %v6843 = vadd.f32 %v6841, %v6842
    %v6844 = vrot.slane %v6843, 2
    %v6845 = vadd.f32 %v6843, %v6844
    %v6846 = vrot.slane %v6845, 1
    %v6847 = vadd.f32 %v6845, %v6846
    %v6848 = vadd.f32 %v6806, %v6807
    %v6849 = vadd.f32 %v6848, %v6808
    %v6850 = vadd.f32 %v6849, %v6809
    %v6851 = vrot.slane %v6850, 4
    %v6852 = vadd.f32 %v6850, %v6851
    %v6853 = vrot.slane %v6852, 2
    %v6854 = vadd.f32 %v6852, %v6853
    %v6855 = vrot.slane %v6854, 1
    %v6856 = vadd.f32 %v6854, %v6855
    %v6857 = vadd.f32 %v6810, %v6811
    %v6858 = vadd.f32 %v6857, %v6812
    %v6859 = vadd.f32 %v6858, %v6813
    %v6860 = vrot.slane %v6859, 4
    %v6861 = vadd.f32 %v6859, %v6860
    %v6862 = vrot.slane %v6861, 2
    %v6863 = vadd.f32 %v6861, %v6862
    %v6864 = vrot.slane %v6863, 1
    %v6865 = vadd.f32 %v6863, %v6864
    %v6866 = vadd.f32 %v6814, %v6815
    %v6867 = vadd.f32 %v6866, %v6816
    %v6868 = vadd.f32 %v6867, %v6817
    %v6869 = vrot.slane %v6868, 4
    %v6870 = vadd.f32 %v6868, %v6869
    %v6871 = vrot.slane %v6870, 2
    %v6872 = vadd.f32 %v6870, %v6871
    %v6873 = vrot.slane %v6872, 1
    %v6874 = vadd.f32 %v6872, %v6873
    %v6875 = vadd.f32 %v6818, %v6819
    %v6876 = vadd.f32 %v6875, %v6820
    %v6877 = vadd.f32 %v6876, %v6821
    %v6878 = vrot.slane %v6877, 4
    %v6879 = vadd.f32 %v6877, %v6878
    %v6880 = vrot.slane %v6879, 2
    %v6881 = vadd.f32 %v6879, %v6880
    %v6882 = vrot.slane %v6881, 1
    %v6883 = vadd.f32 %v6881, %v6882
    %v6884 = vadd.f32 %v6822, %v6823
    %v6885 = vadd.f32 %v6884, %v6824
    %v6886 = vadd.f32 %v6885, %v6825
    %v6887 = vrot.slane %v6886, 4
    %v6888 = vadd.f32 %v6886, %v6887
    %v6889 = vrot.slane %v6888, 2
    %v6890 = vadd.f32 %v6888, %v6889
    %v6891 = vrot.slane %v6890, 1
    %v6892 = vadd.f32 %v6890, %v6891
    %v6893 = vadd.f32 %v6826, %v6827
    %v6894 = vadd.f32 %v6893, %v6828
    %v6895 = vadd.f32 %v6894, %v6829
    %v6896 = vrot.slane %v6895, 4
    %v6897 = vadd.f32 %v6895, %v6896
    %v6898 = vrot.slane %v6897, 2
    %v6899 = vadd.f32 %v6897, %v6898
    %v6900 = vrot.slane %v6899, 1
    %v6901 = vadd.f32 %v6899, %v6900
    %v6902 = vmax.f32 %v6838, %v6874
    %v6903 = vmax.f32 %v6847, %v6883
    %v6904 = vmax.f32 %v6856, %v6892
    %v6905 = vmax.f32 %v6865, %v6901
    %v6906 = vmax.f32 %v6902, %v6903
    %v6907 = vmax.f32 %v6904, %v6905
    %v6908 = vmax.f32 %v6906, %v6907
    %v6909 = vsub.f32 %v6838, %v6908
    %v6910 = vsub.f32 %v6847, %v6908
    %v6911 = vsub.f32 %v6856, %v6908
    %v6912 = vsub.f32 %v6865, %v6908
    %v6913 = vsub.f32 %v6874, %v6908
    %v6914 = vsub.f32 %v6883, %v6908
    %v6915 = vsub.f32 %v6892, %v6908
    %v6916 = vsub.f32 %v6901, %v6908
    %v6917 = vmul.f32 %v6909, 1.442695
    %v6918 = vpow.pop %v6917
    %v6919 = vmul.f32 %v6910, 1.442695
    %v6920 = vpow.pop %v6919
    %v6921 = vmul.f32 %v6911, 1.442695
    %v6922 = vpow.pop %v6921
    %v6923 = vmul.f32 %v6912, 1.442695
    %v6924 = vpow.pop %v6923
    %v6925 = vmul.f32 %v6913, 1.442695
    %v6926 = vpow.pop %v6925
    %v6927 = vmul.f32 %v6914, 1.442695
    %v6928 = vpow.pop %v6927
    %v6929 = vmul.f32 %v6915, 1.442695
    %v6930 = vpow.pop %v6929
    %v6931 = vmul.f32 %v6916, 1.442695
    %v6932 = vpow.pop %v6931
    %v6941 = vrot.slane %v6920, 7
    %v6942 = vsel %vm1771, %v6941, %v6918
    %v6943 = vrot.slane %v6922, 6
    %v6944 = vsel %vm1774, %v6943, %v6942
    %v6945 = vrot.slane %v6924, 5
    %v6946 = vsel %vm1777, %v6945, %v6944
    %v6947 = vrot.slane %v6926, 4
    %v6948 = vsel %vm1780, %v6947, %v6946
    %v6949 = vrot.slane %v6928, 3
    %v6950 = vsel %vm1783, %v6949, %v6948
    %v6951 = vrot.slane %v6930, 2
    %v6952 = vsel %vm1786, %v6951, %v6950
    %v6953 = vrot.slane %v6932, 1
    %v6954 = vsel %vm1789, %v6953, %v6952
    %v6956 = vrot.slane %v6954, 4
    %v6957 = vadd.f32 %v6954, %v6956
    %v6958 = vrot.slane %v6957, 2
    %v6959 = vadd.f32 %v6957, %v6958
    %v6960 = vrot.slane %v6959, 1
    %v6961 = vadd.f32 %v6959, %v6960
    %v6962 = vlaneseq
    %v6963 = vshrl.u32 %v6962, 7
    %v6964 = vsub.s32 0, %v6963
    %v6965 = vrot.slane %v6961, %v6964
    %v6966 = vrcp.pop %v6965
    %v6967 = vmul.f32 %v6918, %v6966
    %v6968 = vmul.f32 %v6920, %v6966
    %v6969 = vmul.f32 %v6922, %v6966
    %v6970 = vmul.f32 %v6924, %v6966
    %v6971 = vmul.f32 %v6926, %v6966
    %v6972 = vmul.f32 %v6928, %v6966
    %v6973 = vmul.f32 %v6930, %v6966
    %v6974 = vmul.f32 %v6932, %v6966
    %v6975 = vlaneseq
    %v6976 = vshrl.u32 %v6975, 7
    %v6977 = vsub.s32 0, %v6976
    %v6978 = vrot.slane %v6967, %v6977
    %v6979 = vlaneseq
    %v6980 = vshrl.u32 %v6979, 7
    %v6981 = vsub.s32 0, %v6980
    %v6982 = vrot.slane %v6968, %v6981
    %v6983 = vlaneseq
    %v6984 = vshrl.u32 %v6983, 7
    %v6985 = vsub.s32 0, %v6984
    %v6986 = vrot.slane %v6969, %v6985
    %v6987 = vlaneseq
    %v6988 = vshrl.u32 %v6987, 7
    %v6989 = vsub.s32 0, %v6988
    %v6990 = vrot.slane %v6970, %v6989
    %v6991 = vlaneseq
    %v6992 = vshrl.u32 %v6991, 7
    %v6993 = vsub.s32 0, %v6992
    %v6994 = vrot.slane %v6971, %v6993
    %v6995 = vlaneseq
    %v6996 = vshrl.u32 %v6995, 7
    %v6997 = vsub.s32 0, %v6996
    %v6998 = vrot.slane %v6972, %v6997
    %v6999 = vlaneseq
    %v7000 = vshrl.u32 %v6999, 7
    %v7001 = vsub.s32 0, %v7000
    %v7002 = vrot.slane %v6973, %v7001
    %v7003 = vlaneseq
    %v7004 = vshrl.u32 %v7003, 7
    %v7005 = vsub.s32 0, %v7004
    %v7006 = vrot.slane %v6974, %v7005
    %v7007 = vmul.f32 %v1171, %v6978
    %v7008 = vmul.f32 %v1172, %v6978
    %v7009 = vmul.f32 %v1173, %v6978
    %v7010 = vmul.f32 %v1174, %v6978
    %v7011 = vmul.f32 %v1175, %v6982
    %v7012 = vmul.f32 %v1176, %v6982
    %v7013 = vmul.f32 %v1177, %v6982
    %v7014 = vmul.f32 %v1178, %v6982
    %v7015 = vmul.f32 %v1179, %v6986
    %v7016 = vmul.f32 %v1180, %v6986
    %v7017 = vmul.f32 %v1181, %v6986
    %v7018 = vmul.f32 %v1182, %v6986
    %v7019 = vmul.f32 %v1183, %v6990
    %v7020 = vmul.f32 %v1184, %v6990
    %v7021 = vmul.f32 %v1185, %v6990
    %v7022 = vmul.f32 %v1186, %v6990
    %v7023 = vmul.f32 %v1187, %v6994
    %v7024 = vmul.f32 %v1188, %v6994
    %v7025 = vmul.f32 %v1189, %v6994
    %v7026 = vmul.f32 %v1190, %v6994
    %v7027 = vmul.f32 %v1191, %v6998
    %v7028 = vmul.f32 %v1192, %v6998
    %v7029 = vmul.f32 %v1193, %v6998
    %v7030 = vmul.f32 %v1194, %v6998
    %v7031 = vmul.f32 %v1195, %v7002
    %v7032 = vmul.f32 %v1196, %v7002
    %v7033 = vmul.f32 %v1197, %v7002
    %v7034 = vmul.f32 %v1198, %v7002
    %v7035 = vmul.f32 %v1199, %v7006
    %v7036 = vmul.f32 %v1200, %v7006
    %v7037 = vmul.f32 %v1201, %v7006
    %v7038 = vmul.f32 %v1202, %v7006
    %v7039 = vadd.f32 %v7007, %v7011
    %v7040 = vadd.f32 %v7039, %v7015
    %v7041 = vadd.f32 %v7040, %v7019
    %v7042 = vadd.f32 %v7041, %v7023
    %v7043 = vadd.f32 %v7042, %v7027
    %v7044 = vadd.f32 %v7043, %v7031
    %v7045 = vadd.f32 %v7044, %v7035
    %v7046 = vadd.f32 %v7008, %v7012
    %v7047 = vadd.f32 %v7046, %v7016
    %v7048 = vadd.f32 %v7047, %v7020
    %v7049 = vadd.f32 %v7048, %v7024
    %v7050 = vadd.f32 %v7049, %v7028
    %v7051 = vadd.f32 %v7050, %v7032
    %v7052 = vadd.f32 %v7051, %v7036
    %v7053 = vadd.f32 %v7009, %v7013
    %v7054 = vadd.f32 %v7053, %v7017
    %v7055 = vadd.f32 %v7054, %v7021
    %v7056 = vadd.f32 %v7055, %v7025
    %v7057 = vadd.f32 %v7056, %v7029
    %v7058 = vadd.f32 %v7057, %v7033
    %v7059 = vadd.f32 %v7058, %v7037
    %v7060 = vadd.f32 %v7010, %v7014
    %v7061 = vadd.f32 %v7060, %v7018
    %v7062 = vadd.f32 %v7061, %v7022
    %v7063 = vadd.f32 %v7062, %v7026
    %v7064 = vadd.f32 %v7063, %v7030
    %v7065 = vadd.f32 %v7064, %v7034
    %v7066 = vadd.f32 %v7065, %v7038
    %v7067 = vadd.f32 %v7045, 0.0
    %v7068 = vadd.f32 %v7052, 0.0
    %v7069 = vadd.f32 %v7059, 0.0
    %v7070 = vadd.f32 %v7066, 0.0
    %v7071 = vadd.f32 %v987, %v7067
    %v7072 = vadd.f32 %v988, %v7068
    %v7073 = vadd.f32 %v989, %v7069
    %v7074 = vadd.f32 %v990, %v7070
    %v7075 = vadd.f32 %v991, %v7067
    %v7076 = vadd.f32 %v992, %v7068
    %v7077 = vadd.f32 %v993, %v7069
    %v7078 = vadd.f32 %v994, %v7070
    %v7079 = vadd.f32 %v995, %v7067
    %v7080 = vadd.f32 %v996, %v7068
    %v7081 = vadd.f32 %v997, %v7069
    %v7082 = vadd.f32 %v998, %v7070
    %v7083 = vadd.f32 %v999, %v7067
    %v7084 = vadd.f32 %v1000, %v7068
    %v7085 = vadd.f32 %v1001, %v7069
    %v7086 = vadd.f32 %v1002, %v7070
    %v7087 = vadd.f32 %v1003, %v7067
    %v7088 = vadd.f32 %v1004, %v7068
    %v7089 = vadd.f32 %v1005, %v7069
    %v7090 = vadd.f32 %v1006, %v7070
    %v7091 = vadd.f32 %v1007, %v7067
    %v7092 = vadd.f32 %v1008, %v7068
    %v7093 = vadd.f32 %v1009, %v7069
    %v7094 = vadd.f32 %v1010, %v7070
    %v7095 = vadd.f32 %v1011, %v7067
    %v7096 = vadd.f32 %v1012, %v7068
    %v7097 = vadd.f32 %v1013, %v7069
    %v7098 = vadd.f32 %v1014, %v7070
    %v7099 = vadd.f32 %v1015, %v7067
    %v7100 = vadd.f32 %v1016, %v7068
    %v7101 = vadd.f32 %v1017, %v7069
    %v7102 = vadd.f32 %v1018, %v7070
    %v7103 = vtanh.pop %v7071
    %v7104 = vtanh.pop %v7072
    %v7105 = vtanh.pop %v7073
    %v7106 = vtanh.pop %v7074
    %v7107 = vtanh.pop %v7075
    %v7108 = vtanh.pop %v7076
    %v7109 = vtanh.pop %v7077
    %v7110 = vtanh.pop %v7078
    %v7111 = vtanh.pop %v7079
    %v7112 = vtanh.pop %v7080
    %v7113 = vtanh.pop %v7081
    %v7114 = vtanh.pop %v7082
    %v7115 = vtanh.pop %v7083
    %v7116 = vtanh.pop %v7084
    %v7117 = vtanh.pop %v7085
    %v7118 = vtanh.pop %v7086
    %v7119 = vtanh.pop %v7087
    %v7120 = vtanh.pop %v7088
    %v7121 = vtanh.pop %v7089
    %v7122 = vtanh.pop %v7090
    %v7123 = vtanh.pop %v7091
    %v7124 = vtanh.pop %v7092
    %v7125 = vtanh.pop %v7093
    %v7126 = vtanh.pop %v7094
    %v7127 = vtanh.pop %v7095
    %v7128 = vtanh.pop %v7096
    %v7129 = vtanh.pop %v7097
    %v7130 = vtanh.pop %v7098
    %v7131 = vtanh.pop %v7099
    %v7132 = vtanh.pop %v7100
    %v7133 = vtanh.pop %v7101
    %v7134 = vtanh.pop %v7102
    %v7135 = vmul.f32 %v1974, %v7103
    %v7136 = vmul.f32 %v1979, %v7104
    %v7137 = vmul.f32 %v1984, %v7105
    %v7138 = vmul.f32 %v1989, %v7106
    %v7139 = vmul.f32 %v1974, %v7107
    %v7140 = vmul.f32 %v1979, %v7108
    %v7141 = vmul.f32 %v1984, %v7109
    %v7142 = vmul.f32 %v1989, %v7110
    %v7143 = vmul.f32 %v1974, %v7111
    %v7144 = vmul.f32 %v1979, %v7112
    %v7145 = vmul.f32 %v1984, %v7113
    %v7146 = vmul.f32 %v1989, %v7114
    %v7147 = vmul.f32 %v1974, %v7115
    %v7148 = vmul.f32 %v1979, %v7116
    %v7149 = vmul.f32 %v1984, %v7117
    %v7150 = vmul.f32 %v1989, %v7118
    %v7151 = vmul.f32 %v1974, %v7119
    %v7152 = vmul.f32 %v1979, %v7120
    %v7153 = vmul.f32 %v1984, %v7121
    %v7154 = vmul.f32 %v1989, %v7122
    %v7155 = vmul.f32 %v1974, %v7123
    %v7156 = vmul.f32 %v1979, %v7124
    %v7157 = vmul.f32 %v1984, %v7125
    %v7158 = vmul.f32 %v1989, %v7126
    %v7159 = vmul.f32 %v1974, %v7127
    %v7160 = vmul.f32 %v1979, %v7128
    %v7161 = vmul.f32 %v1984, %v7129
    %v7162 = vmul.f32 %v1989, %v7130
    %v7163 = vmul.f32 %v1974, %v7131
    %v7164 = vmul.f32 %v1979, %v7132
    %v7165 = vmul.f32 %v1984, %v7133
    %v7166 = vmul.f32 %v1989, %v7134
    %v7167 = vadd.f32 %v7135, %v7136
    %v7168 = vadd.f32 %v7167, %v7137
    %v7169 = vadd.f32 %v7168, %v7138
    %v7170 = vrot.slane %v7169, 4
    %v7171 = vadd.f32 %v7169, %v7170
    %v7172 = vrot.slane %v7171, 2
    %v7173 = vadd.f32 %v7171, %v7172
    %v7174 = vrot.slane %v7173, 1
    %v7175 = vadd.f32 %v7173, %v7174
    %v7176 = vadd.f32 %v7139, %v7140
    %v7177 = vadd.f32 %v7176, %v7141
    %v7178 = vadd.f32 %v7177, %v7142
    %v7179 = vrot.slane %v7178, 4
    %v7180 = vadd.f32 %v7178, %v7179
    %v7181 = vrot.slane %v7180, 2
    %v7182 = vadd.f32 %v7180, %v7181
    %v7183 = vrot.slane %v7182, 1
    %v7184 = vadd.f32 %v7182, %v7183
    %v7185 = vadd.f32 %v7143, %v7144
    %v7186 = vadd.f32 %v7185, %v7145
    %v7187 = vadd.f32 %v7186, %v7146
    %v7188 = vrot.slane %v7187, 4
    %v7189 = vadd.f32 %v7187, %v7188
    %v7190 = vrot.slane %v7189, 2
    %v7191 = vadd.f32 %v7189, %v7190
    %v7192 = vrot.slane %v7191, 1
    %v7193 = vadd.f32 %v7191, %v7192
    %v7194 = vadd.f32 %v7147, %v7148
    %v7195 = vadd.f32 %v7194, %v7149
    %v7196 = vadd.f32 %v7195, %v7150
    %v7197 = vrot.slane %v7196, 4
    %v7198 = vadd.f32 %v7196, %v7197
    %v7199 = vrot.slane %v7198, 2
    %v7200 = vadd.f32 %v7198, %v7199
    %v7201 = vrot.slane %v7200, 1
    %v7202 = vadd.f32 %v7200, %v7201
    %v7203 = vadd.f32 %v7151, %v7152
    %v7204 = vadd.f32 %v7203, %v7153
    %v7205 = vadd.f32 %v7204, %v7154
    %v7206 = vrot.slane %v7205, 4
    %v7207 = vadd.f32 %v7205, %v7206
    %v7208 = vrot.slane %v7207, 2
    %v7209 = vadd.f32 %v7207, %v7208
    %v7210 = vrot.slane %v7209, 1
    %v7211 = vadd.f32 %v7209, %v7210
    %v7212 = vadd.f32 %v7155, %v7156
    %v7213 = vadd.f32 %v7212, %v7157
    %v7214 = vadd.f32 %v7213, %v7158
    %v7215 = vrot.slane %v7214, 4
    %v7216 = vadd.f32 %v7214, %v7215
    %v7217 = vrot.slane %v7216, 2
    %v7218 = vadd.f32 %v7216, %v7217
    %v7219 = vrot.slane %v7218, 1
    %v7220 = vadd.f32 %v7218, %v7219
    %v7221 = vadd.f32 %v7159, %v7160
    %v7222 = vadd.f32 %v7221, %v7161
    %v7223 = vadd.f32 %v7222, %v7162
    %v7224 = vrot.slane %v7223, 4
    %v7225 = vadd.f32 %v7223, %v7224
    %v7226 = vrot.slane %v7225, 2
    %v7227 = vadd.f32 %v7225, %v7226
    %v7228 = vrot.slane %v7227, 1
    %v7229 = vadd.f32 %v7227, %v7228
    %v7230 = vadd.f32 %v7163, %v7164
    %v7231 = vadd.f32 %v7230, %v7165
    %v7232 = vadd.f32 %v7231, %v7166
    %v7233 = vrot.slane %v7232, 4
    %v7234 = vadd.f32 %v7232, %v7233
    %v7235 = vrot.slane %v7234, 2
    %v7236 = vadd.f32 %v7234, %v7235
    %v7237 = vrot.slane %v7236, 1
    %v7238 = vadd.f32 %v7236, %v7237
    %v7239 = vmax.f32 %v7175, %v7211
    %v7240 = vmax.f32 %v7184, %v7220
    %v7241 = vmax.f32 %v7193, %v7229
    %v7242 = vmax.f32 %v7202, %v7238
    %v7243 = vmax.f32 %v7239, %v7240
    %v7244 = vmax.f32 %v7241, %v7242
    %v7245 = vmax.f32 %v7243, %v7244
    %vm7246 = vcmp.ge.f32.partialorder %v7175, %v7245
    %vm7247 = vcmp.ge.f32.partialorder %v7184, %v7245
    %vm7248 = vcmp.ge.f32.partialorder %v7193, %v7245
    %vm7249 = vcmp.ge.f32.partialorder %v7202, %v7245
    %vm7250 = vcmp.ge.f32.partialorder %v7211, %v7245
    %vm7251 = vcmp.ge.f32.partialorder %v7220, %v7245
    %vm7252 = vcmp.ge.f32.partialorder %v7229, %v7245
    %vm7253 = vcmp.ge.f32.partialorder %v7238, %v7245
    %v7254 = vsel %vm7246, %v1204, 8
    %v7255 = vsel %vm7247, %v2110, 8
    %v7256 = vsel %vm7248, %v2111, 8
    %v7257 = vsel %vm7249, %v2112, 8
    %v7258 = vsel %vm7250, %v2113, 8
    %v7259 = vsel %vm7251, %v2114, 8
    %v7260 = vsel %vm7252, %v2115, 8
    %v7261 = vsel %vm7253, %v2116, 8
    %v7262 = vsel %vm2125, %v7254, 2147483647
    %v7263 = vsel %vm2125, %v7255, 2147483647
    %v7264 = vsel %vm2125, %v7256, 2147483647
    %v7265 = vsel %vm2125, %v7257, 2147483647
    %v7266 = vsel %vm2125, %v7258, 2147483647
    %vm7267 = vcmp.lt.s32.totalorder %v7262, %v7266
    %v7268 = vsel %vm7267, %v7262, %v7266
    %v7269 = vsel %vm2125, %v7259, 2147483647
    %vm7270 = vcmp.lt.s32.totalorder %v7263, %v7269
    %v7271 = vsel %vm7270, %v7263, %v7269
    %v7272 = vsel %vm2125, %v7260, 2147483647
    %vm7273 = vcmp.lt.s32.totalorder %v7264, %v7272
    %v7274 = vsel %vm7273, %v7264, %v7272
    %v7275 = vsel %vm2125, %v7261, 2147483647
    %vm7276 = vcmp.lt.s32.totalorder %v7265, %v7275
    %v7277 = vsel %vm7276, %v7265, %v7275
    %vm7278 = vcmp.lt.s32.totalorder %v7268, %v7271
    %v7279 = vsel %vm7278, %v7268, %v7271
    %vm7280 = vcmp.lt.s32.totalorder %v7274, %v7277
    %v7281 = vsel %vm7280, %v7274, %v7277
    %vm7282 = vcmp.lt.s32.totalorder %v7279, %v7281
    %v7283 = vsel %vm7282, %v7279, %v7281
    %vm7284 = vcmp.lt.s32.totalorder %v7283, 7
    %v7285 = vsel %vm7284, %v7283, 7
    %v7286 = vsub.f32 %v7175, %v7245
    %v7287 = vsub.f32 %v7184, %v7245
    %v7288 = vsub.f32 %v7193, %v7245
    %v7289 = vsub.f32 %v7202, %v7245
    %v7290 = vsub.f32 %v7211, %v7245
    %v7291 = vsub.f32 %v7220, %v7245
    %v7292 = vsub.f32 %v7229, %v7245
    %v7293 = vsub.f32 %v7238, %v7245
    %v7294 = vmul.f32 %v7286, 1.442695
    %v7295 = vpow.pop %v7294
    %v7296 = vmul.f32 %v7287, 1.442695
    %v7297 = vpow.pop %v7296
    %v7298 = vmul.f32 %v7288, 1.442695
    %v7299 = vpow.pop %v7298
    %v7300 = vmul.f32 %v7289, 1.442695
    %v7301 = vpow.pop %v7300
    %v7302 = vmul.f32 %v7290, 1.442695
    %v7303 = vpow.pop %v7302
    %v7304 = vmul.f32 %v7291, 1.442695
    %v7305 = vpow.pop %v7304
    %v7306 = vmul.f32 %v7292, 1.442695
    %v7307 = vpow.pop %v7306
    %v7308 = vmul.f32 %v7293, 1.442695
    %v7309 = vpow.pop %v7308
    %v7318 = vrot.slane %v7297, 7
    %v7319 = vsel %vm1771, %v7318, %v7295
    %v7320 = vrot.slane %v7299, 6
    %v7321 = vsel %vm1774, %v7320, %v7319
    %v7322 = vrot.slane %v7301, 5
    %v7323 = vsel %vm1777, %v7322, %v7321
    %v7324 = vrot.slane %v7303, 4
    %v7325 = vsel %vm1780, %v7324, %v7323
    %v7326 = vrot.slane %v7305, 3
    %v7327 = vsel %vm1783, %v7326, %v7325
    %v7328 = vrot.slane %v7307, 2
    %v7329 = vsel %vm1786, %v7328, %v7327
    %v7330 = vrot.slane %v7309, 1
    %v7331 = vsel %vm1789, %v7330, %v7329
    %v7333 = vrot.slane %v7331, 4
    %v7334 = vadd.f32 %v7331, %v7333
    %v7335 = vrot.slane %v7334, 2
    %v7336 = vadd.f32 %v7334, %v7335
    %v7337 = vrot.slane %v7336, 1
    %v7338 = vadd.f32 %v7336, %v7337
    %v7339 = vlog2.pop %v7338
    %v7340 = vmul.f32 %v7339, 0.6931472
    %v7341 = vsub.f32 0.0, %v7340
    %v7342 = vlaneseq
    %v7343 = vshrl.u32 %v7342, 7
    %v7344 = vsub.s32 0, %v7343
    %v7345 = vrot.slane %v7285, %v7344
    %vm7346 = vcmp.eq.s32.totalorder %v1204, %v7345
    %v7347 = vsel %vm7346, 1, 0
    %v7348 = vcvt.s32.f32 %v7347
    %v7350 = vcombine.high %v7348, %v7348
    %v7352 = vunpack.c.l.s4 1966171168
    %v7353 = vunpack.c.0.s8 %v7352
    %v7354 = vlaneseq
    %v7355 = vshrl.u32 %v7354, 7
    %v7356 = vsub.s32 %v7353, %v7355
    %v7357 = vrot.slane %v7348, %v7356
    %v7359 = vunpack.c.l.s4 1966171168
    %v7360 = vunpack.c.0.s8 %v7359
    %v7361 = vlaneseq
    %v7362 = vshrl.u32 %v7361, 7
    %v7363 = vsub.s32 %v7360, %v7362
    %v7364 = vrot.slane %v7350, %v7363
    %v7365 = vcombine.high %v7357, %v7357
    %v7366 = vcombine.high %v7364, %v7364
    %v7368 = vunpack.c.l.s4 1966171168
    %v7369 = vunpack.c.0.s8 %v7368
    %v7370 = vlaneseq
    %v7371 = vshrl.u32 %v7370, 7
    %v7372 = vsub.s32 %v7369, %v7371
    %v7373 = vrot.slane %v7357, %v7372
    %v7375 = vunpack.c.l.s4 1966171168
    %v7376 = vunpack.c.0.s8 %v7375
    %v7377 = vlaneseq
    %v7378 = vshrl.u32 %v7377, 7
    %v7379 = vsub.s32 %v7376, %v7378
    %v7380 = vrot.slane %v7364, %v7379
    %v7382 = vunpack.c.l.s4 1966171168
    %v7383 = vunpack.c.0.s8 %v7382
    %v7384 = vlaneseq
    %v7385 = vshrl.u32 %v7384, 7
    %v7386 = vsub.s32 %v7383, %v7385
    %v7387 = vrot.slane %v7365, %v7386
    %v7389 = vunpack.c.l.s4 1966171168
    %v7390 = vunpack.c.0.s8 %v7389
    %v7391 = vlaneseq
    %v7392 = vshrl.u32 %v7391, 7
    %v7393 = vsub.s32 %v7390, %v7392
    %v7394 = vrot.slane %v7366, %v7393
    %v7395 = vcombine.high %v7373, %v7373
    %v7396 = vcombine.high %v7380, %v7380
    %v7397 = vcombine.high %v7387, %v7387
    %v7398 = vcombine.high %v7394, %v7394
    %v7399 = vlaneseq
    %v7400 = vshrl.u32 %v7399, 7
    %v7401 = vsub.s32 0, %v7400
    %v7402 = vrot.slane %v7373, %v7401
    %v7403 = vlaneseq
    %v7404 = vshrl.u32 %v7403, 7
    %v7405 = vsub.s32 0, %v7404
    %v7406 = vrot.slane %v7387, %v7405
    %v7407 = vlaneseq
    %v7408 = vshrl.u32 %v7407, 7
    %v7409 = vsub.s32 0, %v7408
    %v7410 = vrot.slane %v7395, %v7409
    %v7411 = vlaneseq
    %v7412 = vshrl.u32 %v7411, 7
    %v7413 = vsub.s32 0, %v7412
    %v7414 = vrot.slane %v7397, %v7413
    %v7415 = vlaneseq
    %v7416 = vshrl.u32 %v7415, 7
    %v7417 = vsub.s32 0, %v7416
    %v7418 = vrot.slane %v7380, %v7417
    %v7419 = vlaneseq
    %v7420 = vshrl.u32 %v7419, 7
    %v7421 = vsub.s32 0, %v7420
    %v7422 = vrot.slane %v7394, %v7421
    %v7423 = vlaneseq
    %v7424 = vshrl.u32 %v7423, 7
    %v7425 = vsub.s32 0, %v7424
    %v7426 = vrot.slane %v7396, %v7425
    %v7427 = vlaneseq
    %v7428 = vshrl.u32 %v7427, 7
    %v7429 = vsub.s32 0, %v7428
    %v7430 = vrot.slane %v7398, %v7429
    %v7439 = vmul.f32 %v27, %v7402
    %v7440 = vmul.f32 %v28, %v7406
    %v7441 = vmul.f32 %v29, %v7410
    %v7442 = vmul.f32 %v30, %v7414
    %v7443 = vmul.f32 %v31, %v7418
    %v7444 = vmul.f32 %v32, %v7422
    %v7445 = vmul.f32 %v33, %v7426
    %v7446 = vmul.f32 %v34, %v7430
    %v7447 = vsel %vm2311, %v7439, 0.0
    %v7448 = vsel %vm2311, %v7440, 0.0
    %v7449 = vadd.f32 %v7447, %v7448
    %v7450 = vsel %vm2311, %v7441, 0.0
    %v7451 = vadd.f32 %v7449, %v7450
    %v7452 = vsel %vm2311, %v7442, 0.0
    %v7453 = vadd.f32 %v7451, %v7452
    %v7454 = vsel %vm2311, %v7443, 0.0
    %v7455 = vadd.f32 %v7453, %v7454
    %v7456 = vsel %vm2311, %v7444, 0.0
    %v7457 = vadd.f32 %v7455, %v7456
    %v7458 = vsel %vm2311, %v7445, 0.0
    %v7459 = vadd.f32 %v7457, %v7458
    %v7460 = vsel %vm2311, %v7446, 0.0
    %v7461 = vadd.f32 %v7459, %v7460
    %7462 = vst [vmem:[#allocation2 + $0x5] sm:$0x1] %v7285
    %7463 = vst [vmem:[#allocation4 + $0x5] sm:$0x1] %v7341
    %v7464 = vlaneseq
    %v7465 = vshrl.u32 %v7464, 7
    %v7466 = vsub.s32 0, %v7465
    %v7467 = vrot.slane %v7461, %v7466
    %v7468 = vmul.f32 %v254, %v7467
    %v7469 = vmul.f32 %v259, %v7467
    %v7470 = vmul.f32 %v264, %v7467
    %v7471 = vmul.f32 %v269, %v7467
    %v7472 = vmul.f32 %v274, %v7467
    %v7473 = vmul.f32 %v279, %v7467
    %v7474 = vmul.f32 %v284, %v7467
    %v7475 = vmul.f32 %v289, %v7467
    %v7476 = vmul.f32 %v294, %v7467
    %v7477 = vmul.f32 %v299, %v7467
    %v7478 = vmul.f32 %v304, %v7467
    %v7479 = vmul.f32 %v309, %v7467
    %v7480 = vadd.f32 %v134, %v7468
    %v7481 = vadd.f32 %v139, %v7469
    %v7482 = vadd.f32 %v144, %v7470
    %v7483 = vadd.f32 %v149, %v7471
    %v7484 = vadd.f32 %v154, %v7472
    %v7485 = vadd.f32 %v159, %v7473
    %v7486 = vadd.f32 %v164, %v7474
    %v7487 = vadd.f32 %v169, %v7475
    %v7488 = vadd.f32 %v174, %v7476
    %v7489 = vadd.f32 %v179, %v7477
    %v7490 = vadd.f32 %v184, %v7478
    %v7491 = vadd.f32 %v189, %v7479
    %v7492 = vlaneseq
    %v7493 = vshrl.u32 %v7492, 7
    %v7494 = vsub.s32 1, %v7493
    %v7495 = vrot.slane %v7461, %v7494
    %v7496 = vmul.f32 %v313, %v7495
    %v7497 = vmul.f32 %v317, %v7495
    %v7498 = vmul.f32 %v321, %v7495
    %v7499 = vmul.f32 %v325, %v7495
    %v7500 = vmul.f32 %v329, %v7495
    %v7501 = vmul.f32 %v333, %v7495
    %v7502 = vmul.f32 %v337, %v7495
    %v7503 = vmul.f32 %v341, %v7495
    %v7504 = vmul.f32 %v345, %v7495
    %v7505 = vmul.f32 %v349, %v7495
    %v7506 = vmul.f32 %v353, %v7495
    %v7507 = vmul.f32 %v357, %v7495
    %v7508 = vadd.f32 %v7480, %v7496
    %v7509 = vadd.f32 %v7481, %v7497
    %v7510 = vadd.f32 %v7482, %v7498
    %v7511 = vadd.f32 %v7483, %v7499
    %v7512 = vadd.f32 %v7484, %v7500
    %v7513 = vadd.f32 %v7485, %v7501
    %v7514 = vadd.f32 %v7486, %v7502
    %v7515 = vadd.f32 %v7487, %v7503
    %v7516 = vadd.f32 %v7488, %v7504
    %v7517 = vadd.f32 %v7489, %v7505
    %v7518 = vadd.f32 %v7490, %v7506
    %v7519 = vadd.f32 %v7491, %v7507
    %v7520 = vadd.f32 %v7508, %v6722
    %v7521 = vadd.f32 %v7509, %v6723
    %v7522 = vadd.f32 %v7510, %v6724
    %v7523 = vadd.f32 %v7511, %v6725
    %v7524 = vxor.u32 %v7520, 2147483648
    %v7525 = vxor.u32 %v7521, 2147483648
    %v7526 = vxor.u32 %v7522, 2147483648
    %v7527 = vxor.u32 %v7523, 2147483648
    %v7528 = vmul.f32 %v7524, 1.442695
    %v7529 = vpow.pop %v7528
    %v7530 = vmul.f32 %v7525, 1.442695
    %v7531 = vpow.pop %v7530
    %v7532 = vmul.f32 %v7526, 1.442695
    %v7533 = vpow.pop %v7532
    %v7534 = vmul.f32 %v7527, 1.442695
    %v7535 = vpow.pop %v7534
    %v7536 = vadd.f32 %v7529, 1.0
    %v7537 = vadd.f32 %v7531, 1.0
    %v7538 = vadd.f32 %v7533, 1.0
    %v7539 = vadd.f32 %v7535, 1.0
    %v7540 = vrcp.pop %v7536
    %v7541 = vmul.f32 1.0, %v7540
    %v7542 = vrcp.pop %v7537
    %v7543 = vmul.f32 1.0, %v7542
    %v7544 = vrcp.pop %v7538
    %v7545 = vmul.f32 1.0, %v7544
    %v7546 = vrcp.pop %v7539
    %v7547 = vmul.f32 1.0, %v7546
    %v7548 = vadd.f32 %v7512, %v6726
    %v7549 = vadd.f32 %v7513, %v6727
    %v7550 = vadd.f32 %v7514, %v6728
    %v7551 = vadd.f32 %v7515, %v6729
    %v7552 = vxor.u32 %v7548, 2147483648
    %v7553 = vxor.u32 %v7549, 2147483648
    %v7554 = vxor.u32 %v7550, 2147483648
    %v7555 = vxor.u32 %v7551, 2147483648
    %v7556 = vmul.f32 %v7552, 1.442695
    %v7557 = vpow.pop %v7556
    %v7558 = vmul.f32 %v7553, 1.442695
    %v7559 = vpow.pop %v7558
    %v7560 = vmul.f32 %v7554, 1.442695
    %v7561 = vpow.pop %v7560
    %v7562 = vmul.f32 %v7555, 1.442695
    %v7563 = vpow.pop %v7562
    %v7564 = vadd.f32 %v7557, 1.0
    %v7565 = vadd.f32 %v7559, 1.0
    %v7566 = vadd.f32 %v7561, 1.0
    %v7567 = vadd.f32 %v7563, 1.0
    %v7568 = vrcp.pop %v7564
    %v7569 = vmul.f32 1.0, %v7568
    %v7570 = vrcp.pop %v7565
    %v7571 = vmul.f32 1.0, %v7570
    %v7572 = vrcp.pop %v7566
    %v7573 = vmul.f32 1.0, %v7572
    %v7574 = vrcp.pop %v7567
    %v7575 = vmul.f32 1.0, %v7574
    %v7576 = vmul.f32 %v7541, %v6730
    %v7577 = vmul.f32 %v7543, %v6731
    %v7578 = vmul.f32 %v7545, %v6732
    %v7579 = vmul.f32 %v7547, %v6733
    %v7580 = vadd.f32 %v7516, %v7576
    %v7581 = vadd.f32 %v7517, %v7577
    %v7582 = vadd.f32 %v7518, %v7578
    %v7583 = vadd.f32 %v7519, %v7579
    %v7584 = vtanh.pop %v7580
    %v7585 = vtanh.pop %v7581
    %v7586 = vtanh.pop %v7582
    %v7587 = vtanh.pop %v7583
    %v7588 = vsub.f32 1.0, %v7569
    %v7589 = vsub.f32 1.0, %v7571
    %v7590 = vsub.f32 1.0, %v7573
    %v7591 = vsub.f32 1.0, %v7575
    %v7592 = vmul.f32 %v7588, %v7584
    %v7593 = vmul.f32 %v7589, %v7585
    %v7594 = vmul.f32 %v7590, %v7586
    %v7595 = vmul.f32 %v7591, %v7587
    %v7596 = vmul.f32 %v7569, %v6573
    %v7597 = vmul.f32 %v7571, %v6574
    %v7598 = vmul.f32 %v7573, %v6575
    %v7599 = vmul.f32 %v7575, %v6576
    %v7600 = vadd.f32 %v7592, %v7596
    %v7601 = vadd.f32 %v7593, %v7597
    %v7602 = vadd.f32 %v7594, %v7598
    %v7603 = vadd.f32 %v7595, %v7599
    %7604 = vmatprep.subr.mxu0 0.0
    %7605 = vmatpush1.msra.mxu0 %v7600
    %7606 = vmatprep.subr.mxu0 0.0
    %7607 = vmatpush1.msra.mxu0 %v7601
    %7608 = vmatprep.subr.mxu0 0.0
    %7609 = vmatpush1.msra.mxu0 %v7602
    %7610 = vmatprep.subr.mxu0 0.0
    %7611 = vmatpush1.msra.mxu0 %v7603
    %7612 = vmatprep.subr.mxu0 0.0
    %7613 = vmatpush1.msra.mxu0 0.0
    %7614 = vmatprep.subr.mxu0 0.0
    %7615 = vmatpush1.msra.mxu0 0.0
    %7616 = vmatprep.subr.mxu0 0.0
    %7617 = vmatpush1.msra.mxu0 0.0
    %7618 = vmatprep.subr.mxu0 0.0
    %7619 = vmatpush1.msra.mxu0 0.0
    %7620 = vmatprep.subr.mxu0 0.0
    %7621 = vmatpush1.msra.mxu0 0.0
    %7622 = vmatprep.subr.mxu0 0.0
    %7623 = vmatpush1.msra.mxu0 0.0
    %7624 = vmatprep.subr.mxu0 0.0
    %7625 = vmatpush1.msra.mxu0 0.0
    %7626 = vmatprep.subr.mxu0 0.0
    %7627 = vmatpush1.msra.mxu0 0.0
    %7628 = vmatprep.subr.mxu0 0.0
    %7629 = vmatpush1.msra.mxu0 0.0
    %7630 = vmatprep.subr.mxu0 0.0
    %7631 = vmatpush1.msra.mxu0 0.0
    %7632 = vmatprep.subr.mxu0 0.0
    %7633 = vmatpush1.msra.mxu0 0.0
    %7634 = vmatprep.subr.mxu0 0.0
    %7635 = vmatpush1.msra.mxu0 0.0
    %7636 = vmatprep.subr.mxu0 0.0
    %7637 = vmatpush1.msra.mxu0 0.0
    %7638 = vmatprep.subr.mxu0 0.0
    %7639 = vmatpush1.msra.mxu0 0.0
    %7640 = vmatprep.subr.mxu0 0.0
    %7641 = vmatpush1.msra.mxu0 0.0
    %7642 = vmatprep.subr.mxu0 0.0
    %7643 = vmatpush1.msra.mxu0 0.0
    %7644 = vmatprep.subr.mxu0 0.0
    %7645 = vmatpush1.msra.mxu0 0.0
    %7646 = vmatprep.subr.mxu0 0.0
    %7647 = vmatpush1.msra.mxu0 0.0
    %7648 = vmatprep.subr.mxu0 0.0
    %7649 = vmatpush1.msra.mxu0 0.0
    %7650 = vmatprep.subr.mxu0 0.0
    %7651 = vmatpush1.msra.mxu0 0.0
    %7652 = vmatprep.subr.mxu0 0.0
    %7653 = vmatpush1.msra.mxu0 0.0
    %7654 = vmatprep.subr.mxu0 0.0
    %7655 = vmatpush1.msra.mxu0 0.0
    %7656 = vmatprep.subr.mxu0 0.0
    %7657 = vmatpush1.msra.mxu0 0.0
    %7658 = vmatprep.subr.mxu0 0.0
    %7659 = vmatpush1.msra.mxu0 0.0
    %7660 = vmatprep.subr.mxu0 0.0
    %7661 = vmatpush1.msra.mxu0 0.0
    %7662 = vmatprep.subr.mxu0 0.0
    %7663 = vmatpush1.msra.mxu0 0.0
    %7664 = vmatprep.subr.mxu0 0.0
    %7665 = vmatpush1.msra.mxu0 0.0
    %7666 = vmatprep.subr.mxu0 0.0
    %7667 = vmatpush1.msra.mxu0 0.0
    %7668 = vmatprep.mubr.f32.mxu0 0.0
    %7669 = vmatmul.mubr.f32.gmra.mrb[0].mxu0 %v1339
    %v7670 = vpop.f32.mrb[0].mxu0
    %v7671 = vadd.f32 0.0, %v7670
    %v7672 = vpop.f32.mrb[0].mxu0
    %7673 = vmatprep.mubr.f32.mxu0 0.0
    %7674 = vmatmul.mubr.f32.gmra.mrb[0].mxu0 %v1342
    %v7675 = vpop.f32.mrb[0].mxu0
    %v7676 = vadd.f32 0.0, %v7675
    %v7677 = vpop.f32.mrb[0].mxu0
    %7678 = vmatprep.mubr.f32.mxu0 0.0
    %7679 = vmatmul.mubr.f32.gmra.mrb[0].mxu0 %v1345
    %v7680 = vpop.f32.mrb[0].mxu0
    %v7681 = vadd.f32 0.0, %v7680
    %v7682 = vpop.f32.mrb[0].mxu0
    %7683 = vmatprep.mubr.f32.mxu0 0.0
    %7684 = vmatmul.mubr.f32.gmra.mrb[0].mxu0 %v1348
    %v7685 = vpop.f32.mrb[0].mxu0
    %v7686 = vadd.f32 0.0, %v7685
    %v7687 = vpop.f32.mrb[0].mxu0
    %7688 = vmatprep.mubr.f32.mxu0 0.0
    %7689 = vmatmul.mubr.f32.gmra.mrb[0].mxu0 %v1351
    %v7690 = vpop.f32.mrb[0].mxu0
    %v7691 = vadd.f32 0.0, %v7690
    %v7692 = vpop.f32.mrb[0].mxu0
    %7693 = vmatprep.mubr.f32.mxu0 0.0
    %7694 = vmatmul.mubr.f32.gmra.mrb[0].mxu0 %v1354
    %v7695 = vpop.f32.mrb[0].mxu0
    %v7696 = vadd.f32 0.0, %v7695
    %v7697 = vpop.f32.mrb[0].mxu0
    %7698 = vmatprep.mubr.f32.mxu0 0.0
    %7699 = vmatmul.mubr.f32.gmra.mrb[0].mxu0 %v1357
    %v7700 = vpop.f32.mrb[0].mxu0
    %v7701 = vadd.f32 0.0, %v7700
    %v7702 = vpop.f32.mrb[0].mxu0
    %7703 = vmatprep.mubr.f32.mxu0 0.0
    %7704 = vmatmul.mubr.f32.gmra.mrb[0].mxu0 %v1360
    %v7705 = vpop.f32.mrb[0].mxu0
    %v7706 = vadd.f32 0.0, %v7705
    %v7707 = vpop.f32.mrb[0].mxu0
    %7708 = vmatprep.mubr.f32.mxu0 0.0
    %7709 = vmatmul.mubr.f32.gmra.mrb[0].mxu0 %v1363
    %v7710 = vpop.f32.mrb[0].mxu0
    %v7711 = vadd.f32 0.0, %v7710
    %v7712 = vpop.f32.mrb[0].mxu0
    %7713 = vmatprep.mubr.f32.mxu0 0.0
    %7714 = vmatmul.mubr.f32.gmra.mrb[0].mxu0 %v1366
    %v7715 = vpop.f32.mrb[0].mxu0
    %v7716 = vadd.f32 0.0, %v7715
    %v7717 = vpop.f32.mrb[0].mxu0
    %7718 = vmatprep.mubr.f32.mxu0 0.0
    %7719 = vmatmul.mubr.f32.gmra.mrb[0].mxu0 %v1369
    %v7720 = vpop.f32.mrb[0].mxu0
    %v7721 = vadd.f32 0.0, %v7720
    %v7722 = vpop.f32.mrb[0].mxu0
    %7723 = vmatprep.mubr.f32.mxu0 0.0
    %7724 = vmatmul.mubr.f32.gmra.mrb[0].mxu0 %v1372
    %v7725 = vpop.f32.mrb[0].mxu0
    %v7726 = vadd.f32 0.0, %v7725
    %v7727 = vpop.f32.mrb[0].mxu0
    %7728 = vmatprep.mubr.f32.mxu0 0.0
    %7729 = vmatmul.mubr.f32.gmra.mrb[0].mxu0 %v1375
    %v7730 = vpop.f32.mrb[0].mxu0
    %v7731 = vadd.f32 0.0, %v7730
    %v7732 = vpop.f32.mrb[0].mxu0
    %7733 = vmatprep.mubr.f32.mxu0 0.0
    %7734 = vmatmul.mubr.f32.gmra.mrb[0].mxu0 %v1378
    %v7735 = vpop.f32.mrb[0].mxu0
    %v7736 = vadd.f32 0.0, %v7735
    %v7737 = vpop.f32.mrb[0].mxu0
    %7738 = vmatprep.mubr.f32.mxu0 0.0
    %7739 = vmatmul.mubr.f32.gmra.mrb[0].mxu0 %v1381
    %v7740 = vpop.f32.mrb[0].mxu0
    %v7741 = vadd.f32 0.0, %v7740
    %v7742 = vpop.f32.mrb[0].mxu0
    %7743 = vmatprep.mubr.f32.mxu0 0.0
    %7744 = vmatmul.mubr.f32.gmra.mrb[0].mxu0 %v1384
    %v7745 = vpop.f32.mrb[0].mxu0
    %v7746 = vadd.f32 0.0, %v7745
    %v7747 = vpop.f32.mrb[0].mxu0
    %7748 = vdwg.mxu0
    %v7749 = vadd.f32 %v7671, %v194
    %v7750 = vadd.f32 %v7676, %v199
    %v7751 = vadd.f32 %v7681, %v204
    %v7752 = vadd.f32 %v7686, %v209
    %v7753 = vadd.f32 %v7691, %v214
    %v7754 = vadd.f32 %v7696, %v219
    %v7755 = vadd.f32 %v7701, %v224
    %v7756 = vadd.f32 %v7706, %v229
    %v7757 = vadd.f32 %v7711, %v234
    %v7758 = vadd.f32 %v7716, %v239
    %v7759 = vadd.f32 %v7721, %v244
    %v7760 = vadd.f32 %v7726, %v249
    %v7761 = vadd.f32 %v803, %v7731
    %v7762 = vadd.f32 %v804, %v7736
    %v7763 = vadd.f32 %v805, %v7741
    %v7764 = vadd.f32 %v806, %v7746
    %v7765 = vadd.f32 %v807, %v7731
    %v7766 = vadd.f32 %v808, %v7736
    %v7767 = vadd.f32 %v809, %v7741
    %v7768 = vadd.f32 %v810, %v7746
    %v7769 = vadd.f32 %v811, %v7731
    %v7770 = vadd.f32 %v812, %v7736
    %v7771 = vadd.f32 %v813, %v7741
    %v7772 = vadd.f32 %v814, %v7746
    %v7773 = vadd.f32 %v815, %v7731
    %v7774 = vadd.f32 %v816, %v7736
    %v7775 = vadd.f32 %v817, %v7741
    %v7776 = vadd.f32 %v818, %v7746
    %v7777 = vadd.f32 %v819, %v7731
    %v7778 = vadd.f32 %v820, %v7736
    %v7779 = vadd.f32 %v821, %v7741
    %v7780 = vadd.f32 %v822, %v7746
    %v7781 = vadd.f32 %v823, %v7731
    %v7782 = vadd.f32 %v824, %v7736
    %v7783 = vadd.f32 %v825, %v7741
    %v7784 = vadd.f32 %v826, %v7746
    %v7785 = vadd.f32 %v827, %v7731
    %v7786 = vadd.f32 %v828, %v7736
    %v7787 = vadd.f32 %v829, %v7741
    %v7788 = vadd.f32 %v830, %v7746
    %v7789 = vadd.f32 %v831, %v7731
    %v7790 = vadd.f32 %v832, %v7736
    %v7791 = vadd.f32 %v833, %v7741
    %v7792 = vadd.f32 %v834, %v7746
    %v7793 = vtanh.pop %v7761
    %v7794 = vtanh.pop %v7762
    %v7795 = vtanh.pop %v7763
    %v7796 = vtanh.pop %v7764
    %v7797 = vtanh.pop %v7765
    %v7798 = vtanh.pop %v7766
    %v7799 = vtanh.pop %v7767
    %v7800 = vtanh.pop %v7768
    %v7801 = vtanh.pop %v7769
    %v7802 = vtanh.pop %v7770
    %v7803 = vtanh.pop %v7771
    %v7804 = vtanh.pop %v7772
    %v7805 = vtanh.pop %v7773
    %v7806 = vtanh.pop %v7774
    %v7807 = vtanh.pop %v7775
    %v7808 = vtanh.pop %v7776
    %v7809 = vtanh.pop %v7777
    %v7810 = vtanh.pop %v7778
    %v7811 = vtanh.pop %v7779
    %v7812 = vtanh.pop %v7780
    %v7813 = vtanh.pop %v7781
    %v7814 = vtanh.pop %v7782
    %v7815 = vtanh.pop %v7783
    %v7816 = vtanh.pop %v7784
    %v7817 = vtanh.pop %v7785
    %v7818 = vtanh.pop %v7786
    %v7819 = vtanh.pop %v7787
    %v7820 = vtanh.pop %v7788
    %v7821 = vtanh.pop %v7789
    %v7822 = vtanh.pop %v7790
    %v7823 = vtanh.pop %v7791
    %v7824 = vtanh.pop %v7792
    %v7825 = vmul.f32 %v1610, %v7793
    %v7826 = vmul.f32 %v1615, %v7794
    %v7827 = vmul.f32 %v1620, %v7795
    %v7828 = vmul.f32 %v1625, %v7796
    %v7829 = vmul.f32 %v1610, %v7797
    %v7830 = vmul.f32 %v1615, %v7798
    %v7831 = vmul.f32 %v1620, %v7799
    %v7832 = vmul.f32 %v1625, %v7800
    %v7833 = vmul.f32 %v1610, %v7801
    %v7834 = vmul.f32 %v1615, %v7802
    %v7835 = vmul.f32 %v1620, %v7803
    %v7836 = vmul.f32 %v1625, %v7804
    %v7837 = vmul.f32 %v1610, %v7805
    %v7838 = vmul.f32 %v1615, %v7806
    %v7839 = vmul.f32 %v1620, %v7807
    %v7840 = vmul.f32 %v1625, %v7808
    %v7841 = vmul.f32 %v1610, %v7809
    %v7842 = vmul.f32 %v1615, %v7810
    %v7843 = vmul.f32 %v1620, %v7811
    %v7844 = vmul.f32 %v1625, %v7812
    %v7845 = vmul.f32 %v1610, %v7813
    %v7846 = vmul.f32 %v1615, %v7814
    %v7847 = vmul.f32 %v1620, %v7815
    %v7848 = vmul.f32 %v1625, %v7816
    %v7849 = vmul.f32 %v1610, %v7817
    %v7850 = vmul.f32 %v1615, %v7818
    %v7851 = vmul.f32 %v1620, %v7819
    %v7852 = vmul.f32 %v1625, %v7820
    %v7853 = vmul.f32 %v1610, %v7821
    %v7854 = vmul.f32 %v1615, %v7822
    %v7855 = vmul.f32 %v1620, %v7823
    %v7856 = vmul.f32 %v1625, %v7824
    %v7857 = vadd.f32 %v7825, %v7826
    %v7858 = vadd.f32 %v7857, %v7827
    %v7859 = vadd.f32 %v7858, %v7828
    %v7860 = vrot.slane %v7859, 4
    %v7861 = vadd.f32 %v7859, %v7860
    %v7862 = vrot.slane %v7861, 2
    %v7863 = vadd.f32 %v7861, %v7862
    %v7864 = vrot.slane %v7863, 1
    %v7865 = vadd.f32 %v7863, %v7864
    %v7866 = vadd.f32 %v7829, %v7830
    %v7867 = vadd.f32 %v7866, %v7831
    %v7868 = vadd.f32 %v7867, %v7832
    %v7869 = vrot.slane %v7868, 4
    %v7870 = vadd.f32 %v7868, %v7869
    %v7871 = vrot.slane %v7870, 2
    %v7872 = vadd.f32 %v7870, %v7871
    %v7873 = vrot.slane %v7872, 1
    %v7874 = vadd.f32 %v7872, %v7873
    %v7875 = vadd.f32 %v7833, %v7834
    %v7876 = vadd.f32 %v7875, %v7835
    %v7877 = vadd.f32 %v7876, %v7836
    %v7878 = vrot.slane %v7877, 4
    %v7879 = vadd.f32 %v7877, %v7878
    %v7880 = vrot.slane %v7879, 2
    %v7881 = vadd.f32 %v7879, %v7880
    %v7882 = vrot.slane %v7881, 1
    %v7883 = vadd.f32 %v7881, %v7882
    %v7884 = vadd.f32 %v7837, %v7838
    %v7885 = vadd.f32 %v7884, %v7839
    %v7886 = vadd.f32 %v7885, %v7840
    %v7887 = vrot.slane %v7886, 4
    %v7888 = vadd.f32 %v7886, %v7887
    %v7889 = vrot.slane %v7888, 2
    %v7890 = vadd.f32 %v7888, %v7889
    %v7891 = vrot.slane %v7890, 1
    %v7892 = vadd.f32 %v7890, %v7891
    %v7893 = vadd.f32 %v7841, %v7842
    %v7894 = vadd.f32 %v7893, %v7843
    %v7895 = vadd.f32 %v7894, %v7844
    %v7896 = vrot.slane %v7895, 4
    %v7897 = vadd.f32 %v7895, %v7896
    %v7898 = vrot.slane %v7897, 2
    %v7899 = vadd.f32 %v7897, %v7898
    %v7900 = vrot.slane %v7899, 1
    %v7901 = vadd.f32 %v7899, %v7900
    %v7902 = vadd.f32 %v7845, %v7846
    %v7903 = vadd.f32 %v7902, %v7847
    %v7904 = vadd.f32 %v7903, %v7848
    %v7905 = vrot.slane %v7904, 4
    %v7906 = vadd.f32 %v7904, %v7905
    %v7907 = vrot.slane %v7906, 2
    %v7908 = vadd.f32 %v7906, %v7907
    %v7909 = vrot.slane %v7908, 1
    %v7910 = vadd.f32 %v7908, %v7909
    %v7911 = vadd.f32 %v7849, %v7850
    %v7912 = vadd.f32 %v7911, %v7851
    %v7913 = vadd.f32 %v7912, %v7852
    %v7914 = vrot.slane %v7913, 4
    %v7915 = vadd.f32 %v7913, %v7914
    %v7916 = vrot.slane %v7915, 2
    %v7917 = vadd.f32 %v7915, %v7916
    %v7918 = vrot.slane %v7917, 1
    %v7919 = vadd.f32 %v7917, %v7918
    %v7920 = vadd.f32 %v7853, %v7854
    %v7921 = vadd.f32 %v7920, %v7855
    %v7922 = vadd.f32 %v7921, %v7856
    %v7923 = vrot.slane %v7922, 4
    %v7924 = vadd.f32 %v7922, %v7923
    %v7925 = vrot.slane %v7924, 2
    %v7926 = vadd.f32 %v7924, %v7925
    %v7927 = vrot.slane %v7926, 1
    %v7928 = vadd.f32 %v7926, %v7927
    %v7929 = vmax.f32 %v7865, %v7901
    %v7930 = vmax.f32 %v7874, %v7910
    %v7931 = vmax.f32 %v7883, %v7919
    %v7932 = vmax.f32 %v7892, %v7928
    %v7933 = vmax.f32 %v7929, %v7930
    %v7934 = vmax.f32 %v7931, %v7932
    %v7935 = vmax.f32 %v7933, %v7934
    %v7936 = vsub.f32 %v7865, %v7935
    %v7937 = vsub.f32 %v7874, %v7935
    %v7938 = vsub.f32 %v7883, %v7935
    %v7939 = vsub.f32 %v7892, %v7935
    %v7940 = vsub.f32 %v7901, %v7935
    %v7941 = vsub.f32 %v7910, %v7935
    %v7942 = vsub.f32 %v7919, %v7935
    %v7943 = vsub.f32 %v7928, %v7935
    %v7944 = vmul.f32 %v7936, 1.442695
    %v7945 = vpow.pop %v7944
    %v7946 = vmul.f32 %v7937, 1.442695
    %v7947 = vpow.pop %v7946
    %v7948 = vmul.f32 %v7938, 1.442695
    %v7949 = vpow.pop %v7948
    %v7950 = vmul.f32 %v7939, 1.442695
    %v7951 = vpow.pop %v7950
    %v7952 = vmul.f32 %v7940, 1.442695
    %v7953 = vpow.pop %v7952
    %v7954 = vmul.f32 %v7941, 1.442695
    %v7955 = vpow.pop %v7954
    %v7956 = vmul.f32 %v7942, 1.442695
    %v7957 = vpow.pop %v7956
    %v7958 = vmul.f32 %v7943, 1.442695
    %v7959 = vpow.pop %v7958
    %v7968 = vrot.slane %v7947, 7
    %v7969 = vsel %vm1771, %v7968, %v7945
    %v7970 = vrot.slane %v7949, 6
    %v7971 = vsel %vm1774, %v7970, %v7969
    %v7972 = vrot.slane %v7951, 5
    %v7973 = vsel %vm1777, %v7972, %v7971
    %v7974 = vrot.slane %v7953, 4
    %v7975 = vsel %vm1780, %v7974, %v7973
    %v7976 = vrot.slane %v7955, 3
    %v7977 = vsel %vm1783, %v7976, %v7975
    %v7978 = vrot.slane %v7957, 2
    %v7979 = vsel %vm1786, %v7978, %v7977
    %v7980 = vrot.slane %v7959, 1
    %v7981 = vsel %vm1789, %v7980, %v7979
    %v7983 = vrot.slane %v7981, 4
    %v7984 = vadd.f32 %v7981, %v7983
    %v7985 = vrot.slane %v7984, 2
    %v7986 = vadd.f32 %v7984, %v7985
    %v7987 = vrot.slane %v7986, 1
    %v7988 = vadd.f32 %v7986, %v7987
    %v7989 = vlaneseq
    %v7990 = vshrl.u32 %v7989, 7
    %v7991 = vsub.s32 0, %v7990
    %v7992 = vrot.slane %v7988, %v7991
    %v7993 = vrcp.pop %v7992
    %v7994 = vmul.f32 %v7945, %v7993
    %v7995 = vmul.f32 %v7947, %v7993
    %v7996 = vmul.f32 %v7949, %v7993
    %v7997 = vmul.f32 %v7951, %v7993
    %v7998 = vmul.f32 %v7953, %v7993
    %v7999 = vmul.f32 %v7955, %v7993
    %v8000 = vmul.f32 %v7957, %v7993
    %v8001 = vmul.f32 %v7959, %v7993
    %v8002 = vlaneseq
    %v8003 = vshrl.u32 %v8002, 7
    %v8004 = vsub.s32 0, %v8003
    %v8005 = vrot.slane %v7994, %v8004
    %v8006 = vlaneseq
    %v8007 = vshrl.u32 %v8006, 7
    %v8008 = vsub.s32 0, %v8007
    %v8009 = vrot.slane %v7995, %v8008
    %v8010 = vlaneseq
    %v8011 = vshrl.u32 %v8010, 7
    %v8012 = vsub.s32 0, %v8011
    %v8013 = vrot.slane %v7996, %v8012
    %v8014 = vlaneseq
    %v8015 = vshrl.u32 %v8014, 7
    %v8016 = vsub.s32 0, %v8015
    %v8017 = vrot.slane %v7997, %v8016
    %v8018 = vlaneseq
    %v8019 = vshrl.u32 %v8018, 7
    %v8020 = vsub.s32 0, %v8019
    %v8021 = vrot.slane %v7998, %v8020
    %v8022 = vlaneseq
    %v8023 = vshrl.u32 %v8022, 7
    %v8024 = vsub.s32 0, %v8023
    %v8025 = vrot.slane %v7999, %v8024
    %v8026 = vlaneseq
    %v8027 = vshrl.u32 %v8026, 7
    %v8028 = vsub.s32 0, %v8027
    %v8029 = vrot.slane %v8000, %v8028
    %v8030 = vlaneseq
    %v8031 = vshrl.u32 %v8030, 7
    %v8032 = vsub.s32 0, %v8031
    %v8033 = vrot.slane %v8001, %v8032
    %v8034 = vmul.f32 %v1171, %v8005
    %v8035 = vmul.f32 %v1172, %v8005
    %v8036 = vmul.f32 %v1173, %v8005
    %v8037 = vmul.f32 %v1174, %v8005
    %v8038 = vmul.f32 %v1175, %v8009
    %v8039 = vmul.f32 %v1176, %v8009
    %v8040 = vmul.f32 %v1177, %v8009
    %v8041 = vmul.f32 %v1178, %v8009
    %v8042 = vmul.f32 %v1179, %v8013
    %v8043 = vmul.f32 %v1180, %v8013
    %v8044 = vmul.f32 %v1181, %v8013
    %v8045 = vmul.f32 %v1182, %v8013
    %v8046 = vmul.f32 %v1183, %v8017
    %v8047 = vmul.f32 %v1184, %v8017
    %v8048 = vmul.f32 %v1185, %v8017
    %v8049 = vmul.f32 %v1186, %v8017
    %v8050 = vmul.f32 %v1187, %v8021
    %v8051 = vmul.f32 %v1188, %v8021
    %v8052 = vmul.f32 %v1189, %v8021
    %v8053 = vmul.f32 %v1190, %v8021
    %v8054 = vmul.f32 %v1191, %v8025
    %v8055 = vmul.f32 %v1192, %v8025
    %v8056 = vmul.f32 %v1193, %v8025
    %v8057 = vmul.f32 %v1194, %v8025
    %v8058 = vmul.f32 %v1195, %v8029
    %v8059 = vmul.f32 %v1196, %v8029
    %v8060 = vmul.f32 %v1197, %v8029
    %v8061 = vmul.f32 %v1198, %v8029
    %v8062 = vmul.f32 %v1199, %v8033
    %v8063 = vmul.f32 %v1200, %v8033
    %v8064 = vmul.f32 %v1201, %v8033
    %v8065 = vmul.f32 %v1202, %v8033
    %v8066 = vadd.f32 %v8034, %v8038
    %v8067 = vadd.f32 %v8066, %v8042
    %v8068 = vadd.f32 %v8067, %v8046
    %v8069 = vadd.f32 %v8068, %v8050
    %v8070 = vadd.f32 %v8069, %v8054
    %v8071 = vadd.f32 %v8070, %v8058
    %v8072 = vadd.f32 %v8071, %v8062
    %v8073 = vadd.f32 %v8035, %v8039
    %v8074 = vadd.f32 %v8073, %v8043
    %v8075 = vadd.f32 %v8074, %v8047
    %v8076 = vadd.f32 %v8075, %v8051
    %v8077 = vadd.f32 %v8076, %v8055
    %v8078 = vadd.f32 %v8077, %v8059
    %v8079 = vadd.f32 %v8078, %v8063
    %v8080 = vadd.f32 %v8036, %v8040
    %v8081 = vadd.f32 %v8080, %v8044
    %v8082 = vadd.f32 %v8081, %v8048
    %v8083 = vadd.f32 %v8082, %v8052
    %v8084 = vadd.f32 %v8083, %v8056
    %v8085 = vadd.f32 %v8084, %v8060
    %v8086 = vadd.f32 %v8085, %v8064
    %v8087 = vadd.f32 %v8037, %v8041
    %v8088 = vadd.f32 %v8087, %v8045
    %v8089 = vadd.f32 %v8088, %v8049
    %v8090 = vadd.f32 %v8089, %v8053
    %v8091 = vadd.f32 %v8090, %v8057
    %v8092 = vadd.f32 %v8091, %v8061
    %v8093 = vadd.f32 %v8092, %v8065
    %v8094 = vadd.f32 %v8072, 0.0
    %v8095 = vadd.f32 %v8079, 0.0
    %v8096 = vadd.f32 %v8086, 0.0
    %v8097 = vadd.f32 %v8093, 0.0
    %v8098 = vadd.f32 %v987, %v8094
    %v8099 = vadd.f32 %v988, %v8095
    %v8100 = vadd.f32 %v989, %v8096
    %v8101 = vadd.f32 %v990, %v8097
    %v8102 = vadd.f32 %v991, %v8094
    %v8103 = vadd.f32 %v992, %v8095
    %v8104 = vadd.f32 %v993, %v8096
    %v8105 = vadd.f32 %v994, %v8097
    %v8106 = vadd.f32 %v995, %v8094
    %v8107 = vadd.f32 %v996, %v8095
    %v8108 = vadd.f32 %v997, %v8096
    %v8109 = vadd.f32 %v998, %v8097
    %v8110 = vadd.f32 %v999, %v8094
    %v8111 = vadd.f32 %v1000, %v8095
    %v8112 = vadd.f32 %v1001, %v8096
    %v8113 = vadd.f32 %v1002, %v8097
    %v8114 = vadd.f32 %v1003, %v8094
    %v8115 = vadd.f32 %v1004, %v8095
    %v8116 = vadd.f32 %v1005, %v8096
    %v8117 = vadd.f32 %v1006, %v8097
    %v8118 = vadd.f32 %v1007, %v8094
    %v8119 = vadd.f32 %v1008, %v8095
    %v8120 = vadd.f32 %v1009, %v8096
    %v8121 = vadd.f32 %v1010, %v8097
    %v8122 = vadd.f32 %v1011, %v8094
    %v8123 = vadd.f32 %v1012, %v8095
    %v8124 = vadd.f32 %v1013, %v8096
    %v8125 = vadd.f32 %v1014, %v8097
    %v8126 = vadd.f32 %v1015, %v8094
    %v8127 = vadd.f32 %v1016, %v8095
    %v8128 = vadd.f32 %v1017, %v8096
    %v8129 = vadd.f32 %v1018, %v8097
    %v8130 = vtanh.pop %v8098
    %v8131 = vtanh.pop %v8099
    %v8132 = vtanh.pop %v8100
    %v8133 = vtanh.pop %v8101
    %v8134 = vtanh.pop %v8102
    %v8135 = vtanh.pop %v8103
    %v8136 = vtanh.pop %v8104
    %v8137 = vtanh.pop %v8105
    %v8138 = vtanh.pop %v8106
    %v8139 = vtanh.pop %v8107
    %v8140 = vtanh.pop %v8108
    %v8141 = vtanh.pop %v8109
    %v8142 = vtanh.pop %v8110
    %v8143 = vtanh.pop %v8111
    %v8144 = vtanh.pop %v8112
    %v8145 = vtanh.pop %v8113
    %v8146 = vtanh.pop %v8114
    %v8147 = vtanh.pop %v8115
    %v8148 = vtanh.pop %v8116
    %v8149 = vtanh.pop %v8117
    %v8150 = vtanh.pop %v8118
    %v8151 = vtanh.pop %v8119
    %v8152 = vtanh.pop %v8120
    %v8153 = vtanh.pop %v8121
    %v8154 = vtanh.pop %v8122
    %v8155 = vtanh.pop %v8123
    %v8156 = vtanh.pop %v8124
    %v8157 = vtanh.pop %v8125
    %v8158 = vtanh.pop %v8126
    %v8159 = vtanh.pop %v8127
    %v8160 = vtanh.pop %v8128
    %v8161 = vtanh.pop %v8129
    %v8162 = vmul.f32 %v1974, %v8130
    %v8163 = vmul.f32 %v1979, %v8131
    %v8164 = vmul.f32 %v1984, %v8132
    %v8165 = vmul.f32 %v1989, %v8133
    %v8166 = vmul.f32 %v1974, %v8134
    %v8167 = vmul.f32 %v1979, %v8135
    %v8168 = vmul.f32 %v1984, %v8136
    %v8169 = vmul.f32 %v1989, %v8137
    %v8170 = vmul.f32 %v1974, %v8138
    %v8171 = vmul.f32 %v1979, %v8139
    %v8172 = vmul.f32 %v1984, %v8140
    %v8173 = vmul.f32 %v1989, %v8141
    %v8174 = vmul.f32 %v1974, %v8142
    %v8175 = vmul.f32 %v1979, %v8143
    %v8176 = vmul.f32 %v1984, %v8144
    %v8177 = vmul.f32 %v1989, %v8145
    %v8178 = vmul.f32 %v1974, %v8146
    %v8179 = vmul.f32 %v1979, %v8147
    %v8180 = vmul.f32 %v1984, %v8148
    %v8181 = vmul.f32 %v1989, %v8149
    %v8182 = vmul.f32 %v1974, %v8150
    %v8183 = vmul.f32 %v1979, %v8151
    %v8184 = vmul.f32 %v1984, %v8152
    %v8185 = vmul.f32 %v1989, %v8153
    %v8186 = vmul.f32 %v1974, %v8154
    %v8187 = vmul.f32 %v1979, %v8155
    %v8188 = vmul.f32 %v1984, %v8156
    %v8189 = vmul.f32 %v1989, %v8157
    %v8190 = vmul.f32 %v1974, %v8158
    %v8191 = vmul.f32 %v1979, %v8159
    %v8192 = vmul.f32 %v1984, %v8160
    %v8193 = vmul.f32 %v1989, %v8161
    %v8194 = vadd.f32 %v8162, %v8163
    %v8195 = vadd.f32 %v8194, %v8164
    %v8196 = vadd.f32 %v8195, %v8165
    %v8197 = vrot.slane %v8196, 4
    %v8198 = vadd.f32 %v8196, %v8197
    %v8199 = vrot.slane %v8198, 2
    %v8200 = vadd.f32 %v8198, %v8199
    %v8201 = vrot.slane %v8200, 1
    %v8202 = vadd.f32 %v8200, %v8201
    %v8203 = vadd.f32 %v8166, %v8167
    %v8204 = vadd.f32 %v8203, %v8168
    %v8205 = vadd.f32 %v8204, %v8169
    %v8206 = vrot.slane %v8205, 4
    %v8207 = vadd.f32 %v8205, %v8206
    %v8208 = vrot.slane %v8207, 2
    %v8209 = vadd.f32 %v8207, %v8208
    %v8210 = vrot.slane %v8209, 1
    %v8211 = vadd.f32 %v8209, %v8210
    %v8212 = vadd.f32 %v8170, %v8171
    %v8213 = vadd.f32 %v8212, %v8172
    %v8214 = vadd.f32 %v8213, %v8173
    %v8215 = vrot.slane %v8214, 4
    %v8216 = vadd.f32 %v8214, %v8215
    %v8217 = vrot.slane %v8216, 2
    %v8218 = vadd.f32 %v8216, %v8217
    %v8219 = vrot.slane %v8218, 1
    %v8220 = vadd.f32 %v8218, %v8219
    %v8221 = vadd.f32 %v8174, %v8175
    %v8222 = vadd.f32 %v8221, %v8176
    %v8223 = vadd.f32 %v8222, %v8177
    %v8224 = vrot.slane %v8223, 4
    %v8225 = vadd.f32 %v8223, %v8224
    %v8226 = vrot.slane %v8225, 2
    %v8227 = vadd.f32 %v8225, %v8226
    %v8228 = vrot.slane %v8227, 1
    %v8229 = vadd.f32 %v8227, %v8228
    %v8230 = vadd.f32 %v8178, %v8179
    %v8231 = vadd.f32 %v8230, %v8180
    %v8232 = vadd.f32 %v8231, %v8181
    %v8233 = vrot.slane %v8232, 4
    %v8234 = vadd.f32 %v8232, %v8233
    %v8235 = vrot.slane %v8234, 2
    %v8236 = vadd.f32 %v8234, %v8235
    %v8237 = vrot.slane %v8236, 1
    %v8238 = vadd.f32 %v8236, %v8237
    %v8239 = vadd.f32 %v8182, %v8183
    %v8240 = vadd.f32 %v8239, %v8184
    %v8241 = vadd.f32 %v8240, %v8185
    %v8242 = vrot.slane %v8241, 4
    %v8243 = vadd.f32 %v8241, %v8242
    %v8244 = vrot.slane %v8243, 2
    %v8245 = vadd.f32 %v8243, %v8244
    %v8246 = vrot.slane %v8245, 1
    %v8247 = vadd.f32 %v8245, %v8246
    %v8248 = vadd.f32 %v8186, %v8187
    %v8249 = vadd.f32 %v8248, %v8188
    %v8250 = vadd.f32 %v8249, %v8189
    %v8251 = vrot.slane %v8250, 4
    %v8252 = vadd.f32 %v8250, %v8251
    %v8253 = vrot.slane %v8252, 2
    %v8254 = vadd.f32 %v8252, %v8253
    %v8255 = vrot.slane %v8254, 1
    %v8256 = vadd.f32 %v8254, %v8255
    %v8257 = vadd.f32 %v8190, %v8191
    %v8258 = vadd.f32 %v8257, %v8192
    %v8259 = vadd.f32 %v8258, %v8193
    %v8260 = vrot.slane %v8259, 4
    %v8261 = vadd.f32 %v8259, %v8260
    %v8262 = vrot.slane %v8261, 2
    %v8263 = vadd.f32 %v8261, %v8262
    %v8264 = vrot.slane %v8263, 1
    %v8265 = vadd.f32 %v8263, %v8264
    %v8266 = vmax.f32 %v8202, %v8238
    %v8267 = vmax.f32 %v8211, %v8247
    %v8268 = vmax.f32 %v8220, %v8256
    %v8269 = vmax.f32 %v8229, %v8265
    %v8270 = vmax.f32 %v8266, %v8267
    %v8271 = vmax.f32 %v8268, %v8269
    %v8272 = vmax.f32 %v8270, %v8271
    %vm8273 = vcmp.ge.f32.partialorder %v8202, %v8272
    %vm8274 = vcmp.ge.f32.partialorder %v8211, %v8272
    %vm8275 = vcmp.ge.f32.partialorder %v8220, %v8272
    %vm8276 = vcmp.ge.f32.partialorder %v8229, %v8272
    %vm8277 = vcmp.ge.f32.partialorder %v8238, %v8272
    %vm8278 = vcmp.ge.f32.partialorder %v8247, %v8272
    %vm8279 = vcmp.ge.f32.partialorder %v8256, %v8272
    %vm8280 = vcmp.ge.f32.partialorder %v8265, %v8272
    %v8281 = vsel %vm8273, %v1204, 8
    %v8282 = vsel %vm8274, %v2110, 8
    %v8283 = vsel %vm8275, %v2111, 8
    %v8284 = vsel %vm8276, %v2112, 8
    %v8285 = vsel %vm8277, %v2113, 8
    %v8286 = vsel %vm8278, %v2114, 8
    %v8287 = vsel %vm8279, %v2115, 8
    %v8288 = vsel %vm8280, %v2116, 8
    %v8289 = vsel %vm2125, %v8281, 2147483647
    %v8290 = vsel %vm2125, %v8282, 2147483647
    %v8291 = vsel %vm2125, %v8283, 2147483647
    %v8292 = vsel %vm2125, %v8284, 2147483647
    %v8293 = vsel %vm2125, %v8285, 2147483647
    %vm8294 = vcmp.lt.s32.totalorder %v8289, %v8293
    %v8295 = vsel %vm8294, %v8289, %v8293
    %v8296 = vsel %vm2125, %v8286, 2147483647
    %vm8297 = vcmp.lt.s32.totalorder %v8290, %v8296
    %v8298 = vsel %vm8297, %v8290, %v8296
    %v8299 = vsel %vm2125, %v8287, 2147483647
    %vm8300 = vcmp.lt.s32.totalorder %v8291, %v8299
    %v8301 = vsel %vm8300, %v8291, %v8299
    %v8302 = vsel %vm2125, %v8288, 2147483647
    %vm8303 = vcmp.lt.s32.totalorder %v8292, %v8302
    %v8304 = vsel %vm8303, %v8292, %v8302
    %vm8305 = vcmp.lt.s32.totalorder %v8295, %v8298
    %v8306 = vsel %vm8305, %v8295, %v8298
    %vm8307 = vcmp.lt.s32.totalorder %v8301, %v8304
    %v8308 = vsel %vm8307, %v8301, %v8304
    %vm8309 = vcmp.lt.s32.totalorder %v8306, %v8308
    %v8310 = vsel %vm8309, %v8306, %v8308
    %vm8311 = vcmp.lt.s32.totalorder %v8310, 7
    %v8312 = vsel %vm8311, %v8310, 7
    %v8313 = vsub.f32 %v8202, %v8272
    %v8314 = vsub.f32 %v8211, %v8272
    %v8315 = vsub.f32 %v8220, %v8272
    %v8316 = vsub.f32 %v8229, %v8272
    %v8317 = vsub.f32 %v8238, %v8272
    %v8318 = vsub.f32 %v8247, %v8272
    %v8319 = vsub.f32 %v8256, %v8272
    %v8320 = vsub.f32 %v8265, %v8272
    %v8321 = vmul.f32 %v8313, 1.442695
    %v8322 = vpow.pop %v8321
    %v8323 = vmul.f32 %v8314, 1.442695
    %v8324 = vpow.pop %v8323
    %v8325 = vmul.f32 %v8315, 1.442695
    %v8326 = vpow.pop %v8325
    %v8327 = vmul.f32 %v8316, 1.442695
    %v8328 = vpow.pop %v8327
    %v8329 = vmul.f32 %v8317, 1.442695
    %v8330 = vpow.pop %v8329
    %v8331 = vmul.f32 %v8318, 1.442695
    %v8332 = vpow.pop %v8331
    %v8333 = vmul.f32 %v8319, 1.442695
    %v8334 = vpow.pop %v8333
    %v8335 = vmul.f32 %v8320, 1.442695
    %v8336 = vpow.pop %v8335
    %v8345 = vrot.slane %v8324, 7
    %v8346 = vsel %vm1771, %v8345, %v8322
    %v8347 = vrot.slane %v8326, 6
    %v8348 = vsel %vm1774, %v8347, %v8346
    %v8349 = vrot.slane %v8328, 5
    %v8350 = vsel %vm1777, %v8349, %v8348
    %v8351 = vrot.slane %v8330, 4
    %v8352 = vsel %vm1780, %v8351, %v8350
    %v8353 = vrot.slane %v8332, 3
    %v8354 = vsel %vm1783, %v8353, %v8352
    %v8355 = vrot.slane %v8334, 2
    %v8356 = vsel %vm1786, %v8355, %v8354
    %v8357 = vrot.slane %v8336, 1
    %v8358 = vsel %vm1789, %v8357, %v8356
    %v8360 = vrot.slane %v8358, 4
    %v8361 = vadd.f32 %v8358, %v8360
    %v8362 = vrot.slane %v8361, 2
    %v8363 = vadd.f32 %v8361, %v8362
    %v8364 = vrot.slane %v8363, 1
    %v8365 = vadd.f32 %v8363, %v8364
    %v8366 = vlog2.pop %v8365
    %v8367 = vmul.f32 %v8366, 0.6931472
    %v8368 = vsub.f32 0.0, %v8367
    %v8369 = vlaneseq
    %v8370 = vshrl.u32 %v8369, 7
    %v8371 = vsub.s32 0, %v8370
    %v8372 = vrot.slane %v8312, %v8371
    %vm8373 = vcmp.eq.s32.totalorder %v1204, %v8372
    %v8374 = vsel %vm8373, 1, 0
    %v8375 = vcvt.s32.f32 %v8374
    %v8377 = vcombine.high %v8375, %v8375
    %v8379 = vunpack.c.l.s4 1966171168
    %v8380 = vunpack.c.0.s8 %v8379
    %v8381 = vlaneseq
    %v8382 = vshrl.u32 %v8381, 7
    %v8383 = vsub.s32 %v8380, %v8382
    %v8384 = vrot.slane %v8375, %v8383
    %v8386 = vunpack.c.l.s4 1966171168
    %v8387 = vunpack.c.0.s8 %v8386
    %v8388 = vlaneseq
    %v8389 = vshrl.u32 %v8388, 7
    %v8390 = vsub.s32 %v8387, %v8389
    %v8391 = vrot.slane %v8377, %v8390
    %v8392 = vcombine.high %v8384, %v8384
    %v8393 = vcombine.high %v8391, %v8391
    %v8395 = vunpack.c.l.s4 1966171168
    %v8396 = vunpack.c.0.s8 %v8395
    %v8397 = vlaneseq
    %v8398 = vshrl.u32 %v8397, 7
    %v8399 = vsub.s32 %v8396, %v8398
    %v8400 = vrot.slane %v8384, %v8399
    %v8402 = vunpack.c.l.s4 1966171168
    %v8403 = vunpack.c.0.s8 %v8402
    %v8404 = vlaneseq
    %v8405 = vshrl.u32 %v8404, 7
    %v8406 = vsub.s32 %v8403, %v8405
    %v8407 = vrot.slane %v8391, %v8406
    %v8409 = vunpack.c.l.s4 1966171168
    %v8410 = vunpack.c.0.s8 %v8409
    %v8411 = vlaneseq
    %v8412 = vshrl.u32 %v8411, 7
    %v8413 = vsub.s32 %v8410, %v8412
    %v8414 = vrot.slane %v8392, %v8413
    %v8416 = vunpack.c.l.s4 1966171168
    %v8417 = vunpack.c.0.s8 %v8416
    %v8418 = vlaneseq
    %v8419 = vshrl.u32 %v8418, 7
    %v8420 = vsub.s32 %v8417, %v8419
    %v8421 = vrot.slane %v8393, %v8420
    %v8422 = vcombine.high %v8400, %v8400
    %v8423 = vcombine.high %v8407, %v8407
    %v8424 = vcombine.high %v8414, %v8414
    %v8425 = vcombine.high %v8421, %v8421
    %v8426 = vlaneseq
    %v8427 = vshrl.u32 %v8426, 7
    %v8428 = vsub.s32 0, %v8427
    %v8429 = vrot.slane %v8400, %v8428
    %v8430 = vlaneseq
    %v8431 = vshrl.u32 %v8430, 7
    %v8432 = vsub.s32 0, %v8431
    %v8433 = vrot.slane %v8414, %v8432
    %v8434 = vlaneseq
    %v8435 = vshrl.u32 %v8434, 7
    %v8436 = vsub.s32 0, %v8435
    %v8437 = vrot.slane %v8422, %v8436
    %v8438 = vlaneseq
    %v8439 = vshrl.u32 %v8438, 7
    %v8440 = vsub.s32 0, %v8439
    %v8441 = vrot.slane %v8424, %v8440
    %v8442 = vlaneseq
    %v8443 = vshrl.u32 %v8442, 7
    %v8444 = vsub.s32 0, %v8443
    %v8445 = vrot.slane %v8407, %v8444
    %v8446 = vlaneseq
    %v8447 = vshrl.u32 %v8446, 7
    %v8448 = vsub.s32 0, %v8447
    %v8449 = vrot.slane %v8421, %v8448
    %v8450 = vlaneseq
    %v8451 = vshrl.u32 %v8450, 7
    %v8452 = vsub.s32 0, %v8451
    %v8453 = vrot.slane %v8423, %v8452
    %v8454 = vlaneseq
    %v8455 = vshrl.u32 %v8454, 7
    %v8456 = vsub.s32 0, %v8455
    %v8457 = vrot.slane %v8425, %v8456
    %v8466 = vmul.f32 %v27, %v8429
    %v8467 = vmul.f32 %v28, %v8433
    %v8468 = vmul.f32 %v29, %v8437
    %v8469 = vmul.f32 %v30, %v8441
    %v8470 = vmul.f32 %v31, %v8445
    %v8471 = vmul.f32 %v32, %v8449
    %v8472 = vmul.f32 %v33, %v8453
    %v8473 = vmul.f32 %v34, %v8457
    %v8474 = vsel %vm2311, %v8466, 0.0
    %v8475 = vsel %vm2311, %v8467, 0.0
    %v8476 = vadd.f32 %v8474, %v8475
    %v8477 = vsel %vm2311, %v8468, 0.0
    %v8478 = vadd.f32 %v8476, %v8477
    %v8479 = vsel %vm2311, %v8469, 0.0
    %v8480 = vadd.f32 %v8478, %v8479
    %v8481 = vsel %vm2311, %v8470, 0.0
    %v8482 = vadd.f32 %v8480, %v8481
    %v8483 = vsel %vm2311, %v8471, 0.0
    %v8484 = vadd.f32 %v8482, %v8483
    %v8485 = vsel %vm2311, %v8472, 0.0
    %v8486 = vadd.f32 %v8484, %v8485
    %v8487 = vsel %vm2311, %v8473, 0.0
    %v8488 = vadd.f32 %v8486, %v8487
    %8489 = vst [vmem:[#allocation2 + $0x6] sm:$0x1] %v8312
    %8490 = vst [vmem:[#allocation4 + $0x6] sm:$0x1] %v8368
    %v8491 = vlaneseq
    %v8492 = vshrl.u32 %v8491, 7
    %v8493 = vsub.s32 0, %v8492
    %v8494 = vrot.slane %v8488, %v8493
    %v8495 = vmul.f32 %v254, %v8494
    %v8496 = vmul.f32 %v259, %v8494
    %v8497 = vmul.f32 %v264, %v8494
    %v8498 = vmul.f32 %v269, %v8494
    %v8499 = vmul.f32 %v274, %v8494
    %v8500 = vmul.f32 %v279, %v8494
    %v8501 = vmul.f32 %v284, %v8494
    %v8502 = vmul.f32 %v289, %v8494
    %v8503 = vmul.f32 %v294, %v8494
    %v8504 = vmul.f32 %v299, %v8494
    %v8505 = vmul.f32 %v304, %v8494
    %v8506 = vmul.f32 %v309, %v8494
    %v8507 = vadd.f32 %v134, %v8495
    %v8508 = vadd.f32 %v139, %v8496
    %v8509 = vadd.f32 %v144, %v8497
    %v8510 = vadd.f32 %v149, %v8498
    %v8511 = vadd.f32 %v154, %v8499
    %v8512 = vadd.f32 %v159, %v8500
    %v8513 = vadd.f32 %v164, %v8501
    %v8514 = vadd.f32 %v169, %v8502
    %v8515 = vadd.f32 %v174, %v8503
    %v8516 = vadd.f32 %v179, %v8504
    %v8517 = vadd.f32 %v184, %v8505
    %v8518 = vadd.f32 %v189, %v8506
    %v8519 = vlaneseq
    %v8520 = vshrl.u32 %v8519, 7
    %v8521 = vsub.s32 1, %v8520
    %v8522 = vrot.slane %v8488, %v8521
    %v8523 = vmul.f32 %v313, %v8522
    %v8524 = vmul.f32 %v317, %v8522
    %v8525 = vmul.f32 %v321, %v8522
    %v8526 = vmul.f32 %v325, %v8522
    %v8527 = vmul.f32 %v329, %v8522
    %v8528 = vmul.f32 %v333, %v8522
    %v8529 = vmul.f32 %v337, %v8522
    %v8530 = vmul.f32 %v341, %v8522
    %v8531 = vmul.f32 %v345, %v8522
    %v8532 = vmul.f32 %v349, %v8522
    %v8533 = vmul.f32 %v353, %v8522
    %v8534 = vmul.f32 %v357, %v8522
    %v8535 = vadd.f32 %v8507, %v8523
    %v8536 = vadd.f32 %v8508, %v8524
    %v8537 = vadd.f32 %v8509, %v8525
    %v8538 = vadd.f32 %v8510, %v8526
    %v8539 = vadd.f32 %v8511, %v8527
    %v8540 = vadd.f32 %v8512, %v8528
    %v8541 = vadd.f32 %v8513, %v8529
    %v8542 = vadd.f32 %v8514, %v8530
    %v8543 = vadd.f32 %v8515, %v8531
    %v8544 = vadd.f32 %v8516, %v8532
    %v8545 = vadd.f32 %v8517, %v8533
    %v8546 = vadd.f32 %v8518, %v8534
    %v8547 = vadd.f32 %v8535, %v7749
    %v8548 = vadd.f32 %v8536, %v7750
    %v8549 = vadd.f32 %v8537, %v7751
    %v8550 = vadd.f32 %v8538, %v7752
    %v8551 = vxor.u32 %v8547, 2147483648
    %v8552 = vxor.u32 %v8548, 2147483648
    %v8553 = vxor.u32 %v8549, 2147483648
    %v8554 = vxor.u32 %v8550, 2147483648
    %v8555 = vmul.f32 %v8551, 1.442695
    %v8556 = vpow.pop %v8555
    %v8557 = vmul.f32 %v8552, 1.442695
    %v8558 = vpow.pop %v8557
    %v8559 = vmul.f32 %v8553, 1.442695
    %v8560 = vpow.pop %v8559
    %v8561 = vmul.f32 %v8554, 1.442695
    %v8562 = vpow.pop %v8561
    %v8563 = vadd.f32 %v8556, 1.0
    %v8564 = vadd.f32 %v8558, 1.0
    %v8565 = vadd.f32 %v8560, 1.0
    %v8566 = vadd.f32 %v8562, 1.0
    %v8567 = vrcp.pop %v8563
    %v8568 = vmul.f32 1.0, %v8567
    %v8569 = vrcp.pop %v8564
    %v8570 = vmul.f32 1.0, %v8569
    %v8571 = vrcp.pop %v8565
    %v8572 = vmul.f32 1.0, %v8571
    %v8573 = vrcp.pop %v8566
    %v8574 = vmul.f32 1.0, %v8573
    %v8575 = vadd.f32 %v8539, %v7753
    %v8576 = vadd.f32 %v8540, %v7754
    %v8577 = vadd.f32 %v8541, %v7755
    %v8578 = vadd.f32 %v8542, %v7756
    %v8579 = vxor.u32 %v8575, 2147483648
    %v8580 = vxor.u32 %v8576, 2147483648
    %v8581 = vxor.u32 %v8577, 2147483648
    %v8582 = vxor.u32 %v8578, 2147483648
    %v8583 = vmul.f32 %v8579, 1.442695
    %v8584 = vpow.pop %v8583
    %v8585 = vmul.f32 %v8580, 1.442695
    %v8586 = vpow.pop %v8585
    %v8587 = vmul.f32 %v8581, 1.442695
    %v8588 = vpow.pop %v8587
    %v8589 = vmul.f32 %v8582, 1.442695
    %v8590 = vpow.pop %v8589
    %v8591 = vadd.f32 %v8584, 1.0
    %v8592 = vadd.f32 %v8586, 1.0
    %v8593 = vadd.f32 %v8588, 1.0
    %v8594 = vadd.f32 %v8590, 1.0
    %v8595 = vrcp.pop %v8591
    %v8596 = vmul.f32 1.0, %v8595
    %v8597 = vrcp.pop %v8592
    %v8598 = vmul.f32 1.0, %v8597
    %v8599 = vrcp.pop %v8593
    %v8600 = vmul.f32 1.0, %v8599
    %v8601 = vrcp.pop %v8594
    %v8602 = vmul.f32 1.0, %v8601
    %v8603 = vmul.f32 %v8568, %v7757
    %v8604 = vmul.f32 %v8570, %v7758
    %v8605 = vmul.f32 %v8572, %v7759
    %v8606 = vmul.f32 %v8574, %v7760
    %v8607 = vadd.f32 %v8543, %v8603
    %v8608 = vadd.f32 %v8544, %v8604
    %v8609 = vadd.f32 %v8545, %v8605
    %v8610 = vadd.f32 %v8546, %v8606
    %v8611 = vtanh.pop %v8607
    %v8612 = vtanh.pop %v8608
    %v8613 = vtanh.pop %v8609
    %v8614 = vtanh.pop %v8610
    %v8615 = vsub.f32 1.0, %v8596
    %v8616 = vsub.f32 1.0, %v8598
    %v8617 = vsub.f32 1.0, %v8600
    %v8618 = vsub.f32 1.0, %v8602
    %v8619 = vmul.f32 %v8615, %v8611
    %v8620 = vmul.f32 %v8616, %v8612
    %v8621 = vmul.f32 %v8617, %v8613
    %v8622 = vmul.f32 %v8618, %v8614
    %v8623 = vmul.f32 %v8596, %v7600
    %v8624 = vmul.f32 %v8598, %v7601
    %v8625 = vmul.f32 %v8600, %v7602
    %v8626 = vmul.f32 %v8602, %v7603
    %v8627 = vadd.f32 %v8619, %v8623
    %v8628 = vadd.f32 %v8620, %v8624
    %v8629 = vadd.f32 %v8621, %v8625
    %v8630 = vadd.f32 %v8622, %v8626
    %8631 = vmatprep.subr.mxu0 0.0
    %8632 = vmatpush1.msra.mxu0 %v8627
    %8633 = vmatprep.subr.mxu0 0.0
    %8634 = vmatpush1.msra.mxu0 %v8628
    %8635 = vmatprep.subr.mxu0 0.0
    %8636 = vmatpush1.msra.mxu0 %v8629
    %8637 = vmatprep.subr.mxu0 0.0
    %8638 = vmatpush1.msra.mxu0 %v8630
    %8639 = vmatprep.subr.mxu0 0.0
    %8640 = vmatpush1.msra.mxu0 0.0
    %8641 = vmatprep.subr.mxu0 0.0
    %8642 = vmatpush1.msra.mxu0 0.0
    %8643 = vmatprep.subr.mxu0 0.0
    %8644 = vmatpush1.msra.mxu0 0.0
    %8645 = vmatprep.subr.mxu0 0.0
    %8646 = vmatpush1.msra.mxu0 0.0
    %8647 = vmatprep.subr.mxu0 0.0
    %8648 = vmatpush1.msra.mxu0 0.0
    %8649 = vmatprep.subr.mxu0 0.0
    %8650 = vmatpush1.msra.mxu0 0.0
    %8651 = vmatprep.subr.mxu0 0.0
    %8652 = vmatpush1.msra.mxu0 0.0
    %8653 = vmatprep.subr.mxu0 0.0
    %8654 = vmatpush1.msra.mxu0 0.0
    %8655 = vmatprep.subr.mxu0 0.0
    %8656 = vmatpush1.msra.mxu0 0.0
    %8657 = vmatprep.subr.mxu0 0.0
    %8658 = vmatpush1.msra.mxu0 0.0
    %8659 = vmatprep.subr.mxu0 0.0
    %8660 = vmatpush1.msra.mxu0 0.0
    %8661 = vmatprep.subr.mxu0 0.0
    %8662 = vmatpush1.msra.mxu0 0.0
    %8663 = vmatprep.subr.mxu0 0.0
    %8664 = vmatpush1.msra.mxu0 0.0
    %8665 = vmatprep.subr.mxu0 0.0
    %8666 = vmatpush1.msra.mxu0 0.0
    %8667 = vmatprep.subr.mxu0 0.0
    %8668 = vmatpush1.msra.mxu0 0.0
    %8669 = vmatprep.subr.mxu0 0.0
    %8670 = vmatpush1.msra.mxu0 0.0
    %8671 = vmatprep.subr.mxu0 0.0
    %8672 = vmatpush1.msra.mxu0 0.0
    %8673 = vmatprep.subr.mxu0 0.0
    %8674 = vmatpush1.msra.mxu0 0.0
    %8675 = vmatprep.subr.mxu0 0.0
    %8676 = vmatpush1.msra.mxu0 0.0
    %8677 = vmatprep.subr.mxu0 0.0
    %8678 = vmatpush1.msra.mxu0 0.0
    %8679 = vmatprep.subr.mxu0 0.0
    %8680 = vmatpush1.msra.mxu0 0.0
    %8681 = vmatprep.subr.mxu0 0.0
    %8682 = vmatpush1.msra.mxu0 0.0
    %8683 = vmatprep.subr.mxu0 0.0
    %8684 = vmatpush1.msra.mxu0 0.0
    %8685 = vmatprep.subr.mxu0 0.0
    %8686 = vmatpush1.msra.mxu0 0.0
    %8687 = vmatprep.subr.mxu0 0.0
    %8688 = vmatpush1.msra.mxu0 0.0
    %8689 = vmatprep.subr.mxu0 0.0
    %8690 = vmatpush1.msra.mxu0 0.0
    %8691 = vmatprep.subr.mxu0 0.0
    %8692 = vmatpush1.msra.mxu0 0.0
    %8693 = vmatprep.subr.mxu0 0.0
    %8694 = vmatpush1.msra.mxu0 0.0
    %8695 = vmatprep.mubr.f32.mxu0 0.0
    %8696 = vmatmul.mubr.f32.gmra.mrb[0].mxu0 %v1339
    %v8697 = vpop.f32.mrb[0].mxu0
    %v8698 = vpop.f32.mrb[0].mxu0
    %8699 = vmatprep.mubr.f32.mxu0 0.0
    %8700 = vmatmul.mubr.f32.gmra.mrb[0].mxu0 %v1342
    %v8701 = vpop.f32.mrb[0].mxu0
    %v8702 = vpop.f32.mrb[0].mxu0
    %8703 = vmatprep.mubr.f32.mxu0 0.0
    %8704 = vmatmul.mubr.f32.gmra.mrb[0].mxu0 %v1345
    %v8705 = vpop.f32.mrb[0].mxu0
    %v8706 = vpop.f32.mrb[0].mxu0
    %8707 = vmatprep.mubr.f32.mxu0 0.0
    %8708 = vmatmul.mubr.f32.gmra.mrb[0].mxu0 %v1348
    %v8709 = vpop.f32.mrb[0].mxu0
    %v8710 = vpop.f32.mrb[0].mxu0
    %8711 = vmatprep.mubr.f32.mxu0 0.0
    %8712 = vmatmul.mubr.f32.gmra.mrb[0].mxu0 %v1351
    %v8713 = vpop.f32.mrb[0].mxu0
    %v8714 = vpop.f32.mrb[0].mxu0
    %8715 = vmatprep.mubr.f32.mxu0 0.0
    %8716 = vmatmul.mubr.f32.gmra.mrb[0].mxu0 %v1354
    %v8717 = vpop.f32.mrb[0].mxu0
    %v8718 = vpop.f32.mrb[0].mxu0
    %8719 = vmatprep.mubr.f32.mxu0 0.0
    %8720 = vmatmul.mubr.f32.gmra.mrb[0].mxu0 %v1357
    %v8721 = vpop.f32.mrb[0].mxu0
    %v8722 = vpop.f32.mrb[0].mxu0
    %8723 = vmatprep.mubr.f32.mxu0 0.0
    %8724 = vmatmul.mubr.f32.gmra.mrb[0].mxu0 %v1360
    %v8725 = vpop.f32.mrb[0].mxu0
    %v8726 = vpop.f32.mrb[0].mxu0
    %8727 = vmatprep.mubr.f32.mxu0 0.0
    %8728 = vmatmul.mubr.f32.gmra.mrb[0].mxu0 %v1363
    %v8729 = vpop.f32.mrb[0].mxu0
    %v8730 = vpop.f32.mrb[0].mxu0
    %8731 = vmatprep.mubr.f32.mxu0 0.0
    %8732 = vmatmul.mubr.f32.gmra.mrb[0].mxu0 %v1366
    %v8733 = vpop.f32.mrb[0].mxu0
    %v8734 = vpop.f32.mrb[0].mxu0
    %8735 = vmatprep.mubr.f32.mxu0 0.0
    %8736 = vmatmul.mubr.f32.gmra.mrb[0].mxu0 %v1369
    %v8737 = vpop.f32.mrb[0].mxu0
    %v8738 = vpop.f32.mrb[0].mxu0
    %8739 = vmatprep.mubr.f32.mxu0 0.0
    %8740 = vmatmul.mubr.f32.gmra.mrb[0].mxu0 %v1372
    %v8741 = vpop.f32.mrb[0].mxu0
    %v8742 = vpop.f32.mrb[0].mxu0
    %8743 = vmatprep.mubr.f32.mxu0 0.0
    %8744 = vmatmul.mubr.f32.gmra.mrb[0].mxu0 %v1375
    %v8745 = vpop.f32.mrb[0].mxu0
    %v8746 = vadd.f32 0.0, %v8745
    %v8747 = vpop.f32.mrb[0].mxu0
    %8748 = vmatprep.mubr.f32.mxu0 0.0
    %8749 = vmatmul.mubr.f32.gmra.mrb[0].mxu0 %v1378
    %v8750 = vpop.f32.mrb[0].mxu0
    %v8751 = vadd.f32 0.0, %v8750
    %v8752 = vpop.f32.mrb[0].mxu0
    %8753 = vmatprep.mubr.f32.mxu0 0.0
    %8754 = vmatmul.mubr.f32.gmra.mrb[0].mxu0 %v1381
    %v8755 = vpop.f32.mrb[0].mxu0
    %v8756 = vadd.f32 0.0, %v8755
    %v8757 = vpop.f32.mrb[0].mxu0
    %8758 = vmatprep.mubr.f32.mxu0 0.0
    %8759 = vmatmul.mubr.f32.gmra.mrb[0].mxu0 %v1384
    %v8760 = vpop.f32.mrb[0].mxu0
    %v8761 = vadd.f32 0.0, %v8760
    %v8762 = vpop.f32.mrb[0].mxu0
    %8763 = vdwg.mxu0
    %v8764 = vadd.f32 %v803, %v8746
    %v8765 = vadd.f32 %v804, %v8751
    %v8766 = vadd.f32 %v805, %v8756
    %v8767 = vadd.f32 %v806, %v8761
    %v8768 = vadd.f32 %v807, %v8746
    %v8769 = vadd.f32 %v808, %v8751
    %v8770 = vadd.f32 %v809, %v8756
    %v8771 = vadd.f32 %v810, %v8761
    %v8772 = vadd.f32 %v811, %v8746
    %v8773 = vadd.f32 %v812, %v8751
    %v8774 = vadd.f32 %v813, %v8756
    %v8775 = vadd.f32 %v814, %v8761
    %v8776 = vadd.f32 %v815, %v8746
    %v8777 = vadd.f32 %v816, %v8751
    %v8778 = vadd.f32 %v817, %v8756
    %v8779 = vadd.f32 %v818, %v8761
    %v8780 = vadd.f32 %v819, %v8746
    %v8781 = vadd.f32 %v820, %v8751
    %v8782 = vadd.f32 %v821, %v8756
    %v8783 = vadd.f32 %v822, %v8761
    %v8784 = vadd.f32 %v823, %v8746
    %v8785 = vadd.f32 %v824, %v8751
    %v8786 = vadd.f32 %v825, %v8756
    %v8787 = vadd.f32 %v826, %v8761
    %v8788 = vadd.f32 %v827, %v8746
    %v8789 = vadd.f32 %v828, %v8751
    %v8790 = vadd.f32 %v829, %v8756
    %v8791 = vadd.f32 %v830, %v8761
    %v8792 = vadd.f32 %v831, %v8746
    %v8793 = vadd.f32 %v832, %v8751
    %v8794 = vadd.f32 %v833, %v8756
    %v8795 = vadd.f32 %v834, %v8761
    %v8796 = vtanh.pop %v8764
    %v8797 = vtanh.pop %v8765
    %v8798 = vtanh.pop %v8766
    %v8799 = vtanh.pop %v8767
    %v8800 = vtanh.pop %v8768
    %v8801 = vtanh.pop %v8769
    %v8802 = vtanh.pop %v8770
    %v8803 = vtanh.pop %v8771
    %v8804 = vtanh.pop %v8772
    %v8805 = vtanh.pop %v8773
    %v8806 = vtanh.pop %v8774
    %v8807 = vtanh.pop %v8775
    %v8808 = vtanh.pop %v8776
    %v8809 = vtanh.pop %v8777
    %v8810 = vtanh.pop %v8778
    %v8811 = vtanh.pop %v8779
    %v8812 = vtanh.pop %v8780
    %v8813 = vtanh.pop %v8781
    %v8814 = vtanh.pop %v8782
    %v8815 = vtanh.pop %v8783
    %v8816 = vtanh.pop %v8784
    %v8817 = vtanh.pop %v8785
    %v8818 = vtanh.pop %v8786
    %v8819 = vtanh.pop %v8787
    %v8820 = vtanh.pop %v8788
    %v8821 = vtanh.pop %v8789
    %v8822 = vtanh.pop %v8790
    %v8823 = vtanh.pop %v8791
    %v8824 = vtanh.pop %v8792
    %v8825 = vtanh.pop %v8793
    %v8826 = vtanh.pop %v8794
    %v8827 = vtanh.pop %v8795
    %v8828 = vmul.f32 %v1610, %v8796
    %v8829 = vmul.f32 %v1615, %v8797
    %v8830 = vmul.f32 %v1620, %v8798
    %v8831 = vmul.f32 %v1625, %v8799
    %v8832 = vmul.f32 %v1610, %v8800
    %v8833 = vmul.f32 %v1615, %v8801
    %v8834 = vmul.f32 %v1620, %v8802
    %v8835 = vmul.f32 %v1625, %v8803
    %v8836 = vmul.f32 %v1610, %v8804
    %v8837 = vmul.f32 %v1615, %v8805
    %v8838 = vmul.f32 %v1620, %v8806
    %v8839 = vmul.f32 %v1625, %v8807
    %v8840 = vmul.f32 %v1610, %v8808
    %v8841 = vmul.f32 %v1615, %v8809
    %v8842 = vmul.f32 %v1620, %v8810
    %v8843 = vmul.f32 %v1625, %v8811
    %v8844 = vmul.f32 %v1610, %v8812
    %v8845 = vmul.f32 %v1615, %v8813
    %v8846 = vmul.f32 %v1620, %v8814
    %v8847 = vmul.f32 %v1625, %v8815
    %v8848 = vmul.f32 %v1610, %v8816
    %v8849 = vmul.f32 %v1615, %v8817
    %v8850 = vmul.f32 %v1620, %v8818
    %v8851 = vmul.f32 %v1625, %v8819
    %v8852 = vmul.f32 %v1610, %v8820
    %v8853 = vmul.f32 %v1615, %v8821
    %v8854 = vmul.f32 %v1620, %v8822
    %v8855 = vmul.f32 %v1625, %v8823
    %v8856 = vmul.f32 %v1610, %v8824
    %v8857 = vmul.f32 %v1615, %v8825
    %v8858 = vmul.f32 %v1620, %v8826
    %v8859 = vmul.f32 %v1625, %v8827
    %v8860 = vadd.f32 %v8828, %v8829
    %v8861 = vadd.f32 %v8860, %v8830
    %v8862 = vadd.f32 %v8861, %v8831
    %v8863 = vrot.slane %v8862, 4
    %v8864 = vadd.f32 %v8862, %v8863
    %v8865 = vrot.slane %v8864, 2
    %v8866 = vadd.f32 %v8864, %v8865
    %v8867 = vrot.slane %v8866, 1
    %v8868 = vadd.f32 %v8866, %v8867
    %v8869 = vadd.f32 %v8832, %v8833
    %v8870 = vadd.f32 %v8869, %v8834
    %v8871 = vadd.f32 %v8870, %v8835
    %v8872 = vrot.slane %v8871, 4
    %v8873 = vadd.f32 %v8871, %v8872
    %v8874 = vrot.slane %v8873, 2
    %v8875 = vadd.f32 %v8873, %v8874
    %v8876 = vrot.slane %v8875, 1
    %v8877 = vadd.f32 %v8875, %v8876
    %v8878 = vadd.f32 %v8836, %v8837
    %v8879 = vadd.f32 %v8878, %v8838
    %v8880 = vadd.f32 %v8879, %v8839
    %v8881 = vrot.slane %v8880, 4
    %v8882 = vadd.f32 %v8880, %v8881
    %v8883 = vrot.slane %v8882, 2
    %v8884 = vadd.f32 %v8882, %v8883
    %v8885 = vrot.slane %v8884, 1
    %v8886 = vadd.f32 %v8884, %v8885
    %v8887 = vadd.f32 %v8840, %v8841
    %v8888 = vadd.f32 %v8887, %v8842
    %v8889 = vadd.f32 %v8888, %v8843
    %v8890 = vrot.slane %v8889, 4
    %v8891 = vadd.f32 %v8889, %v8890
    %v8892 = vrot.slane %v8891, 2
    %v8893 = vadd.f32 %v8891, %v8892
    %v8894 = vrot.slane %v8893, 1
    %v8895 = vadd.f32 %v8893, %v8894
    %v8896 = vadd.f32 %v8844, %v8845
    %v8897 = vadd.f32 %v8896, %v8846
    %v8898 = vadd.f32 %v8897, %v8847
    %v8899 = vrot.slane %v8898, 4
    %v8900 = vadd.f32 %v8898, %v8899
    %v8901 = vrot.slane %v8900, 2
    %v8902 = vadd.f32 %v8900, %v8901
    %v8903 = vrot.slane %v8902, 1
    %v8904 = vadd.f32 %v8902, %v8903
    %v8905 = vadd.f32 %v8848, %v8849
    %v8906 = vadd.f32 %v8905, %v8850
    %v8907 = vadd.f32 %v8906, %v8851
    %v8908 = vrot.slane %v8907, 4
    %v8909 = vadd.f32 %v8907, %v8908
    %v8910 = vrot.slane %v8909, 2
    %v8911 = vadd.f32 %v8909, %v8910
    %v8912 = vrot.slane %v8911, 1
    %v8913 = vadd.f32 %v8911, %v8912
    %v8914 = vadd.f32 %v8852, %v8853
    %v8915 = vadd.f32 %v8914, %v8854
    %v8916 = vadd.f32 %v8915, %v8855
    %v8917 = vrot.slane %v8916, 4
    %v8918 = vadd.f32 %v8916, %v8917
    %v8919 = vrot.slane %v8918, 2
    %v8920 = vadd.f32 %v8918, %v8919
    %v8921 = vrot.slane %v8920, 1
    %v8922 = vadd.f32 %v8920, %v8921
    %v8923 = vadd.f32 %v8856, %v8857
    %v8924 = vadd.f32 %v8923, %v8858
    %v8925 = vadd.f32 %v8924, %v8859
    %v8926 = vrot.slane %v8925, 4
    %v8927 = vadd.f32 %v8925, %v8926
    %v8928 = vrot.slane %v8927, 2
    %v8929 = vadd.f32 %v8927, %v8928
    %v8930 = vrot.slane %v8929, 1
    %v8931 = vadd.f32 %v8929, %v8930
    %v8932 = vmax.f32 %v8868, %v8904
    %v8933 = vmax.f32 %v8877, %v8913
    %v8934 = vmax.f32 %v8886, %v8922
    %v8935 = vmax.f32 %v8895, %v8931
    %v8936 = vmax.f32 %v8932, %v8933
    %v8937 = vmax.f32 %v8934, %v8935
    %v8938 = vmax.f32 %v8936, %v8937
    %v8939 = vsub.f32 %v8868, %v8938
    %v8940 = vsub.f32 %v8877, %v8938
    %v8941 = vsub.f32 %v8886, %v8938
    %v8942 = vsub.f32 %v8895, %v8938
    %v8943 = vsub.f32 %v8904, %v8938
    %v8944 = vsub.f32 %v8913, %v8938
    %v8945 = vsub.f32 %v8922, %v8938
    %v8946 = vsub.f32 %v8931, %v8938
    %v8947 = vmul.f32 %v8939, 1.442695
    %v8948 = vpow.pop %v8947
    %v8949 = vmul.f32 %v8940, 1.442695
    %v8950 = vpow.pop %v8949
    %v8951 = vmul.f32 %v8941, 1.442695
    %v8952 = vpow.pop %v8951
    %v8953 = vmul.f32 %v8942, 1.442695
    %v8954 = vpow.pop %v8953
    %v8955 = vmul.f32 %v8943, 1.442695
    %v8956 = vpow.pop %v8955
    %v8957 = vmul.f32 %v8944, 1.442695
    %v8958 = vpow.pop %v8957
    %v8959 = vmul.f32 %v8945, 1.442695
    %v8960 = vpow.pop %v8959
    %v8961 = vmul.f32 %v8946, 1.442695
    %v8962 = vpow.pop %v8961
    %v8971 = vrot.slane %v8950, 7
    %v8972 = vsel %vm1771, %v8971, %v8948
    %v8973 = vrot.slane %v8952, 6
    %v8974 = vsel %vm1774, %v8973, %v8972
    %v8975 = vrot.slane %v8954, 5
    %v8976 = vsel %vm1777, %v8975, %v8974
    %v8977 = vrot.slane %v8956, 4
    %v8978 = vsel %vm1780, %v8977, %v8976
    %v8979 = vrot.slane %v8958, 3
    %v8980 = vsel %vm1783, %v8979, %v8978
    %v8981 = vrot.slane %v8960, 2
    %v8982 = vsel %vm1786, %v8981, %v8980
    %v8983 = vrot.slane %v8962, 1
    %v8984 = vsel %vm1789, %v8983, %v8982
    %v8986 = vrot.slane %v8984, 4
    %v8987 = vadd.f32 %v8984, %v8986
    %v8988 = vrot.slane %v8987, 2
    %v8989 = vadd.f32 %v8987, %v8988
    %v8990 = vrot.slane %v8989, 1
    %v8991 = vadd.f32 %v8989, %v8990
    %v8992 = vlaneseq
    %v8993 = vshrl.u32 %v8992, 7
    %v8994 = vsub.s32 0, %v8993
    %v8995 = vrot.slane %v8991, %v8994
    %v8996 = vrcp.pop %v8995
    %v8997 = vmul.f32 %v8948, %v8996
    %v8998 = vmul.f32 %v8950, %v8996
    %v8999 = vmul.f32 %v8952, %v8996
    %v9000 = vmul.f32 %v8954, %v8996
    %v9001 = vmul.f32 %v8956, %v8996
    %v9002 = vmul.f32 %v8958, %v8996
    %v9003 = vmul.f32 %v8960, %v8996
    %v9004 = vmul.f32 %v8962, %v8996
    %v9005 = vlaneseq
    %v9006 = vshrl.u32 %v9005, 7
    %v9007 = vsub.s32 0, %v9006
    %v9008 = vrot.slane %v8997, %v9007
    %v9009 = vlaneseq
    %v9010 = vshrl.u32 %v9009, 7
    %v9011 = vsub.s32 0, %v9010
    %v9012 = vrot.slane %v8998, %v9011
    %v9013 = vlaneseq
    %v9014 = vshrl.u32 %v9013, 7
    %v9015 = vsub.s32 0, %v9014
    %v9016 = vrot.slane %v8999, %v9015
    %v9017 = vlaneseq
    %v9018 = vshrl.u32 %v9017, 7
    %v9019 = vsub.s32 0, %v9018
    %v9020 = vrot.slane %v9000, %v9019
    %v9021 = vlaneseq
    %v9022 = vshrl.u32 %v9021, 7
    %v9023 = vsub.s32 0, %v9022
    %v9024 = vrot.slane %v9001, %v9023
    %v9025 = vlaneseq
    %v9026 = vshrl.u32 %v9025, 7
    %v9027 = vsub.s32 0, %v9026
    %v9028 = vrot.slane %v9002, %v9027
    %v9029 = vlaneseq
    %v9030 = vshrl.u32 %v9029, 7
    %v9031 = vsub.s32 0, %v9030
    %v9032 = vrot.slane %v9003, %v9031
    %v9033 = vlaneseq
    %v9034 = vshrl.u32 %v9033, 7
    %v9035 = vsub.s32 0, %v9034
    %v9036 = vrot.slane %v9004, %v9035
    %v9037 = vmul.f32 %v1171, %v9008
    %v9038 = vmul.f32 %v1172, %v9008
    %v9039 = vmul.f32 %v1173, %v9008
    %v9040 = vmul.f32 %v1174, %v9008
    %v9041 = vmul.f32 %v1175, %v9012
    %v9042 = vmul.f32 %v1176, %v9012
    %v9043 = vmul.f32 %v1177, %v9012
    %v9044 = vmul.f32 %v1178, %v9012
    %v9045 = vmul.f32 %v1179, %v9016
    %v9046 = vmul.f32 %v1180, %v9016
    %v9047 = vmul.f32 %v1181, %v9016
    %v9048 = vmul.f32 %v1182, %v9016
    %v9049 = vmul.f32 %v1183, %v9020
    %v9050 = vmul.f32 %v1184, %v9020
    %v9051 = vmul.f32 %v1185, %v9020
    %v9052 = vmul.f32 %v1186, %v9020
    %v9053 = vmul.f32 %v1187, %v9024
    %v9054 = vmul.f32 %v1188, %v9024
    %v9055 = vmul.f32 %v1189, %v9024
    %v9056 = vmul.f32 %v1190, %v9024
    %v9057 = vmul.f32 %v1191, %v9028
    %v9058 = vmul.f32 %v1192, %v9028
    %v9059 = vmul.f32 %v1193, %v9028
    %v9060 = vmul.f32 %v1194, %v9028
    %v9061 = vmul.f32 %v1195, %v9032
    %v9062 = vmul.f32 %v1196, %v9032
    %v9063 = vmul.f32 %v1197, %v9032
    %v9064 = vmul.f32 %v1198, %v9032
    %v9065 = vmul.f32 %v1199, %v9036
    %v9066 = vmul.f32 %v1200, %v9036
    %v9067 = vmul.f32 %v1201, %v9036
    %v9068 = vmul.f32 %v1202, %v9036
    %v9069 = vadd.f32 %v9037, %v9041
    %v9070 = vadd.f32 %v9069, %v9045
    %v9071 = vadd.f32 %v9070, %v9049
    %v9072 = vadd.f32 %v9071, %v9053
    %v9073 = vadd.f32 %v9072, %v9057
    %v9074 = vadd.f32 %v9073, %v9061
    %v9075 = vadd.f32 %v9074, %v9065
    %v9076 = vadd.f32 %v9038, %v9042
    %v9077 = vadd.f32 %v9076, %v9046
    %v9078 = vadd.f32 %v9077, %v9050
    %v9079 = vadd.f32 %v9078, %v9054
    %v9080 = vadd.f32 %v9079, %v9058
    %v9081 = vadd.f32 %v9080, %v9062
    %v9082 = vadd.f32 %v9081, %v9066
    %v9083 = vadd.f32 %v9039, %v9043
    %v9084 = vadd.f32 %v9083, %v9047
    %v9085 = vadd.f32 %v9084, %v9051
    %v9086 = vadd.f32 %v9085, %v9055
    %v9087 = vadd.f32 %v9086, %v9059
    %v9088 = vadd.f32 %v9087, %v9063
    %v9089 = vadd.f32 %v9088, %v9067
    %v9090 = vadd.f32 %v9040, %v9044
    %v9091 = vadd.f32 %v9090, %v9048
    %v9092 = vadd.f32 %v9091, %v9052
    %v9093 = vadd.f32 %v9092, %v9056
    %v9094 = vadd.f32 %v9093, %v9060
    %v9095 = vadd.f32 %v9094, %v9064
    %v9096 = vadd.f32 %v9095, %v9068
    %v9097 = vadd.f32 %v9075, 0.0
    %v9098 = vadd.f32 %v9082, 0.0
    %v9099 = vadd.f32 %v9089, 0.0
    %v9100 = vadd.f32 %v9096, 0.0
    %v9101 = vadd.f32 %v987, %v9097
    %v9102 = vadd.f32 %v988, %v9098
    %v9103 = vadd.f32 %v989, %v9099
    %v9104 = vadd.f32 %v990, %v9100
    %v9105 = vadd.f32 %v991, %v9097
    %v9106 = vadd.f32 %v992, %v9098
    %v9107 = vadd.f32 %v993, %v9099
    %v9108 = vadd.f32 %v994, %v9100
    %v9109 = vadd.f32 %v995, %v9097
    %v9110 = vadd.f32 %v996, %v9098
    %v9111 = vadd.f32 %v997, %v9099
    %v9112 = vadd.f32 %v998, %v9100
    %v9113 = vadd.f32 %v999, %v9097
    %v9114 = vadd.f32 %v1000, %v9098
    %v9115 = vadd.f32 %v1001, %v9099
    %v9116 = vadd.f32 %v1002, %v9100
    %v9117 = vadd.f32 %v1003, %v9097
    %v9118 = vadd.f32 %v1004, %v9098
    %v9119 = vadd.f32 %v1005, %v9099
    %v9120 = vadd.f32 %v1006, %v9100
    %v9121 = vadd.f32 %v1007, %v9097
    %v9122 = vadd.f32 %v1008, %v9098
    %v9123 = vadd.f32 %v1009, %v9099
    %v9124 = vadd.f32 %v1010, %v9100
    %v9125 = vadd.f32 %v1011, %v9097
    %v9126 = vadd.f32 %v1012, %v9098
    %v9127 = vadd.f32 %v1013, %v9099
    %v9128 = vadd.f32 %v1014, %v9100
    %v9129 = vadd.f32 %v1015, %v9097
    %v9130 = vadd.f32 %v1016, %v9098
    %v9131 = vadd.f32 %v1017, %v9099
    %v9132 = vadd.f32 %v1018, %v9100
    %v9133 = vtanh.pop %v9101
    %v9134 = vtanh.pop %v9102
    %v9135 = vtanh.pop %v9103
    %v9136 = vtanh.pop %v9104
    %v9137 = vtanh.pop %v9105
    %v9138 = vtanh.pop %v9106
    %v9139 = vtanh.pop %v9107
    %v9140 = vtanh.pop %v9108
    %v9141 = vtanh.pop %v9109
    %v9142 = vtanh.pop %v9110
    %v9143 = vtanh.pop %v9111
    %v9144 = vtanh.pop %v9112
    %v9145 = vtanh.pop %v9113
    %v9146 = vtanh.pop %v9114
    %v9147 = vtanh.pop %v9115
    %v9148 = vtanh.pop %v9116
    %v9149 = vtanh.pop %v9117
    %v9150 = vtanh.pop %v9118
    %v9151 = vtanh.pop %v9119
    %v9152 = vtanh.pop %v9120
    %v9153 = vtanh.pop %v9121
    %v9154 = vtanh.pop %v9122
    %v9155 = vtanh.pop %v9123
    %v9156 = vtanh.pop %v9124
    %v9157 = vtanh.pop %v9125
    %v9158 = vtanh.pop %v9126
    %v9159 = vtanh.pop %v9127
    %v9160 = vtanh.pop %v9128
    %v9161 = vtanh.pop %v9129
    %v9162 = vtanh.pop %v9130
    %v9163 = vtanh.pop %v9131
    %v9164 = vtanh.pop %v9132
    %v9165 = vmul.f32 %v1974, %v9133
    %v9166 = vmul.f32 %v1979, %v9134
    %v9167 = vmul.f32 %v1984, %v9135
    %v9168 = vmul.f32 %v1989, %v9136
    %v9169 = vmul.f32 %v1974, %v9137
    %v9170 = vmul.f32 %v1979, %v9138
    %v9171 = vmul.f32 %v1984, %v9139
    %v9172 = vmul.f32 %v1989, %v9140
    %v9173 = vmul.f32 %v1974, %v9141
    %v9174 = vmul.f32 %v1979, %v9142
    %v9175 = vmul.f32 %v1984, %v9143
    %v9176 = vmul.f32 %v1989, %v9144
    %v9177 = vmul.f32 %v1974, %v9145
    %v9178 = vmul.f32 %v1979, %v9146
    %v9179 = vmul.f32 %v1984, %v9147
    %v9180 = vmul.f32 %v1989, %v9148
    %v9181 = vmul.f32 %v1974, %v9149
    %v9182 = vmul.f32 %v1979, %v9150
    %v9183 = vmul.f32 %v1984, %v9151
    %v9184 = vmul.f32 %v1989, %v9152
    %v9185 = vmul.f32 %v1974, %v9153
    %v9186 = vmul.f32 %v1979, %v9154
    %v9187 = vmul.f32 %v1984, %v9155
    %v9188 = vmul.f32 %v1989, %v9156
    %v9189 = vmul.f32 %v1974, %v9157
    %v9190 = vmul.f32 %v1979, %v9158
    %v9191 = vmul.f32 %v1984, %v9159
    %v9192 = vmul.f32 %v1989, %v9160
    %v9193 = vmul.f32 %v1974, %v9161
    %v9194 = vmul.f32 %v1979, %v9162
    %v9195 = vmul.f32 %v1984, %v9163
    %v9196 = vmul.f32 %v1989, %v9164
    %v9197 = vadd.f32 %v9165, %v9166
    %v9198 = vadd.f32 %v9197, %v9167
    %v9199 = vadd.f32 %v9198, %v9168
    %v9200 = vrot.slane %v9199, 4
    %v9201 = vadd.f32 %v9199, %v9200
    %v9202 = vrot.slane %v9201, 2
    %v9203 = vadd.f32 %v9201, %v9202
    %v9204 = vrot.slane %v9203, 1
    %v9205 = vadd.f32 %v9203, %v9204
    %v9206 = vadd.f32 %v9169, %v9170
    %v9207 = vadd.f32 %v9206, %v9171
    %v9208 = vadd.f32 %v9207, %v9172
    %v9209 = vrot.slane %v9208, 4
    %v9210 = vadd.f32 %v9208, %v9209
    %v9211 = vrot.slane %v9210, 2
    %v9212 = vadd.f32 %v9210, %v9211
    %v9213 = vrot.slane %v9212, 1
    %v9214 = vadd.f32 %v9212, %v9213
    %v9215 = vadd.f32 %v9173, %v9174
    %v9216 = vadd.f32 %v9215, %v9175
    %v9217 = vadd.f32 %v9216, %v9176
    %v9218 = vrot.slane %v9217, 4
    %v9219 = vadd.f32 %v9217, %v9218
    %v9220 = vrot.slane %v9219, 2
    %v9221 = vadd.f32 %v9219, %v9220
    %v9222 = vrot.slane %v9221, 1
    %v9223 = vadd.f32 %v9221, %v9222
    %v9224 = vadd.f32 %v9177, %v9178
    %v9225 = vadd.f32 %v9224, %v9179
    %v9226 = vadd.f32 %v9225, %v9180
    %v9227 = vrot.slane %v9226, 4
    %v9228 = vadd.f32 %v9226, %v9227
    %v9229 = vrot.slane %v9228, 2
    %v9230 = vadd.f32 %v9228, %v9229
    %v9231 = vrot.slane %v9230, 1
    %v9232 = vadd.f32 %v9230, %v9231
    %v9233 = vadd.f32 %v9181, %v9182
    %v9234 = vadd.f32 %v9233, %v9183
    %v9235 = vadd.f32 %v9234, %v9184
    %v9236 = vrot.slane %v9235, 4
    %v9237 = vadd.f32 %v9235, %v9236
    %v9238 = vrot.slane %v9237, 2
    %v9239 = vadd.f32 %v9237, %v9238
    %v9240 = vrot.slane %v9239, 1
    %v9241 = vadd.f32 %v9239, %v9240
    %v9242 = vadd.f32 %v9185, %v9186
    %v9243 = vadd.f32 %v9242, %v9187
    %v9244 = vadd.f32 %v9243, %v9188
    %v9245 = vrot.slane %v9244, 4
    %v9246 = vadd.f32 %v9244, %v9245
    %v9247 = vrot.slane %v9246, 2
    %v9248 = vadd.f32 %v9246, %v9247
    %v9249 = vrot.slane %v9248, 1
    %v9250 = vadd.f32 %v9248, %v9249
    %v9251 = vadd.f32 %v9189, %v9190
    %v9252 = vadd.f32 %v9251, %v9191
    %v9253 = vadd.f32 %v9252, %v9192
    %v9254 = vrot.slane %v9253, 4
    %v9255 = vadd.f32 %v9253, %v9254
    %v9256 = vrot.slane %v9255, 2
    %v9257 = vadd.f32 %v9255, %v9256
    %v9258 = vrot.slane %v9257, 1
    %v9259 = vadd.f32 %v9257, %v9258
    %v9260 = vadd.f32 %v9193, %v9194
    %v9261 = vadd.f32 %v9260, %v9195
    %v9262 = vadd.f32 %v9261, %v9196
    %v9263 = vrot.slane %v9262, 4
    %v9264 = vadd.f32 %v9262, %v9263
    %v9265 = vrot.slane %v9264, 2
    %v9266 = vadd.f32 %v9264, %v9265
    %v9267 = vrot.slane %v9266, 1
    %v9268 = vadd.f32 %v9266, %v9267
    %v9269 = vmax.f32 %v9205, %v9241
    %v9270 = vmax.f32 %v9214, %v9250
    %v9271 = vmax.f32 %v9223, %v9259
    %v9272 = vmax.f32 %v9232, %v9268
    %v9273 = vmax.f32 %v9269, %v9270
    %v9274 = vmax.f32 %v9271, %v9272
    %v9275 = vmax.f32 %v9273, %v9274
    %vm9276 = vcmp.ge.f32.partialorder %v9205, %v9275
    %vm9277 = vcmp.ge.f32.partialorder %v9214, %v9275
    %vm9278 = vcmp.ge.f32.partialorder %v9223, %v9275
    %vm9279 = vcmp.ge.f32.partialorder %v9232, %v9275
    %vm9280 = vcmp.ge.f32.partialorder %v9241, %v9275
    %vm9281 = vcmp.ge.f32.partialorder %v9250, %v9275
    %vm9282 = vcmp.ge.f32.partialorder %v9259, %v9275
    %vm9283 = vcmp.ge.f32.partialorder %v9268, %v9275
    %v9284 = vsel %vm9276, %v1204, 8
    %v9285 = vsel %vm9277, %v2110, 8
    %v9286 = vsel %vm9278, %v2111, 8
    %v9287 = vsel %vm9279, %v2112, 8
    %v9288 = vsel %vm9280, %v2113, 8
    %v9289 = vsel %vm9281, %v2114, 8
    %v9290 = vsel %vm9282, %v2115, 8
    %v9291 = vsel %vm9283, %v2116, 8
    %v9292 = vsel %vm2125, %v9284, 2147483647
    %v9293 = vsel %vm2125, %v9285, 2147483647
    %v9294 = vsel %vm2125, %v9286, 2147483647
    %v9295 = vsel %vm2125, %v9287, 2147483647
    %v9296 = vsel %vm2125, %v9288, 2147483647
    %vm9297 = vcmp.lt.s32.totalorder %v9292, %v9296
    %v9298 = vsel %vm9297, %v9292, %v9296
    %v9299 = vsel %vm2125, %v9289, 2147483647
    %vm9300 = vcmp.lt.s32.totalorder %v9293, %v9299
    %v9301 = vsel %vm9300, %v9293, %v9299
    %v9302 = vsel %vm2125, %v9290, 2147483647
    %vm9303 = vcmp.lt.s32.totalorder %v9294, %v9302
    %v9304 = vsel %vm9303, %v9294, %v9302
    %v9305 = vsel %vm2125, %v9291, 2147483647
    %vm9306 = vcmp.lt.s32.totalorder %v9295, %v9305
    %v9307 = vsel %vm9306, %v9295, %v9305
    %vm9308 = vcmp.lt.s32.totalorder %v9298, %v9301
    %v9309 = vsel %vm9308, %v9298, %v9301
    %vm9310 = vcmp.lt.s32.totalorder %v9304, %v9307
    %v9311 = vsel %vm9310, %v9304, %v9307
    %vm9312 = vcmp.lt.s32.totalorder %v9309, %v9311
    %v9313 = vsel %vm9312, %v9309, %v9311
    %vm9314 = vcmp.lt.s32.totalorder %v9313, 7
    %v9315 = vsel %vm9314, %v9313, 7
    %v9316 = vsub.f32 %v9205, %v9275
    %v9317 = vsub.f32 %v9214, %v9275
    %v9318 = vsub.f32 %v9223, %v9275
    %v9319 = vsub.f32 %v9232, %v9275
    %v9320 = vsub.f32 %v9241, %v9275
    %v9321 = vsub.f32 %v9250, %v9275
    %v9322 = vsub.f32 %v9259, %v9275
    %v9323 = vsub.f32 %v9268, %v9275
    %v9324 = vmul.f32 %v9316, 1.442695
    %v9325 = vpow.pop %v9324
    %v9326 = vmul.f32 %v9317, 1.442695
    %v9327 = vpow.pop %v9326
    %v9328 = vmul.f32 %v9318, 1.442695
    %v9329 = vpow.pop %v9328
    %v9330 = vmul.f32 %v9319, 1.442695
    %v9331 = vpow.pop %v9330
    %v9332 = vmul.f32 %v9320, 1.442695
    %v9333 = vpow.pop %v9332
    %v9334 = vmul.f32 %v9321, 1.442695
    %v9335 = vpow.pop %v9334
    %v9336 = vmul.f32 %v9322, 1.442695
    %v9337 = vpow.pop %v9336
    %v9338 = vmul.f32 %v9323, 1.442695
    %v9339 = vpow.pop %v9338
    %v9348 = vrot.slane %v9327, 7
    %v9349 = vsel %vm1771, %v9348, %v9325
    %v9350 = vrot.slane %v9329, 6
    %v9351 = vsel %vm1774, %v9350, %v9349
    %v9352 = vrot.slane %v9331, 5
    %v9353 = vsel %vm1777, %v9352, %v9351
    %v9354 = vrot.slane %v9333, 4
    %v9355 = vsel %vm1780, %v9354, %v9353
    %v9356 = vrot.slane %v9335, 3
    %v9357 = vsel %vm1783, %v9356, %v9355
    %v9358 = vrot.slane %v9337, 2
    %v9359 = vsel %vm1786, %v9358, %v9357
    %v9360 = vrot.slane %v9339, 1
    %v9361 = vsel %vm1789, %v9360, %v9359
    %v9363 = vrot.slane %v9361, 4
    %v9364 = vadd.f32 %v9361, %v9363
    %v9365 = vrot.slane %v9364, 2
    %v9366 = vadd.f32 %v9364, %v9365
    %v9367 = vrot.slane %v9366, 1
    %v9368 = vadd.f32 %v9366, %v9367
    %v9369 = vlog2.pop %v9368
    %v9370 = vmul.f32 %v9369, 0.6931472
    %v9371 = vsub.f32 0.0, %v9370
    %9372 = vst [vmem:[#allocation2 + $0x7] sm:$0x1] %v9315
    %9373 = vst [vmem:[#allocation4 + $0x7] sm:$0x1] %v9371
    // Predicated region
    $region26: #{tpu_custom_call.1} parent=1 // pred_check
      _
    $region27: #{tpu_custom_call.1} parent=1 // pred_check_branch
      %9375 = sbr.rel (0) target = $region29
    $region28: #{tpu_custom_call.1} parent=1 // pred_region
      %s9377 = ssub.s32 128, 128
      %9378 = vsyncadd [#allocation3], %s9377
      %s9380 = sshll.u32 [#allocation2], 4
      %s9381 = int_to_ptr.vmem [resolvable:$true] %s9380
      %9383 = dma.vmem_to_hbm [thread:$0]  %s9381, 128, %s6, [#allocation3]
    $region29: #{tpu_custom_call.1} parent=1 // pred_fallthru
      _
    // Predicated region
    $region30: #{tpu_custom_call.1} parent=1 // pred_check
      _
    $region31: #{tpu_custom_call.1} parent=1 // pred_check_branch
      %9385 = sbr.rel (0) target = $region33
    $region32: #{tpu_custom_call.1} parent=1 // pred_region
      %s9387 = ssub.s32 128, 128
      %9388 = vsyncadd [#allocation5], %s9387
      %s9390 = sshll.u32 [#allocation4], 4
      %s9391 = int_to_ptr.vmem [resolvable:$true] %s9390
      %9393 = dma.vmem_to_hbm [thread:$0]  %s9391, 128, %s7, [#allocation5]
    $region33: #{tpu_custom_call.1} parent=1 // pred_fallthru
      _
    // Predicated region
    $region34: #{tpu_custom_call.1} parent=1 // pred_check
      _
    $region35: #{tpu_custom_call.1} parent=1 // pred_check_branch
      %9395 = sbr.rel (0) target = $region37
    $region36: #{tpu_custom_call.1} parent=1 // pred_region
      %9396 = dma.done [#allocation3], 128
    $region37: #{tpu_custom_call.1} parent=1 // pred_fallthru
      _
    // Predicated region
    $region38: #{tpu_custom_call.1} parent=1 // pred_check
      _
    $region39: #{tpu_custom_call.1} parent=1 // pred_check_branch
      %9398 = sbr.rel (0) target = $region41
    $region40: #{tpu_custom_call.1} parent=1 // pred_region
      %9399 = dma.done [#allocation5], 128
    $region41: #{tpu_custom_call.1} parent=1 // pred_fallthru
      _
    %9400 = vsyncpa [#allocation3], 1
    %9401 = vsyncpa [#allocation5], 1

</llo_original>
